<compile_context>
chip_gen: v6e
topology: v6e:2x2x1
jax: 0.10.0
libtpu: 0.0.40
codegen_flags: <defaults>
</compile_context>

<pallas_src>
import jax
import jax.numpy as jnp
from jax.experimental import pallas as pl
from jax.experimental.pallas import tpu as pltpu


IN_FEATURES = 12 * 500          # 6000, as in the torch module
K_PAD = 6144                    # 48 * 128: lane-dense K for fc1
H1 = 128
H2 = 64
OUT = 1
TB = 128                        # batch tile (multiple of 8 sublanes / 128 MXU rows)


def _mlp_kernel(x_ref, w1_ref, b1_ref, w2_ref, b2_ref, w3_ref, b3_ref, o_ref):
    # fc1 + ReLU  (bf16 MXU matmul, f32 accumulation)
    h1 = jnp.dot(x_ref[...], w1_ref[...], preferred_element_type=jnp.float32)
    h1 = jnp.maximum(h1 + b1_ref[...], 0.0)
    # fc2 + ReLU
    h2 = jnp.dot(h1.astype(jnp.bfloat16), w2_ref[...],
                 preferred_element_type=jnp.float32)
    h2 = jnp.maximum(h2 + b2_ref[...], 0.0)
    # fc3: N=1 -> VPU multiply + lane reduce (avoids degenerate N=1 MXU matmul)
    o_ref[...] = jnp.sum(h2 * w3_ref[...], axis=-1, keepdims=True) + b3_ref[...]


def ann_forward(x, packed_params, tb=TB):
    """x: (B, 12, 500) float32 -> (B, 1) float32."""
    w1p, b1, w2, b2, w3r, b3 = packed_params
    batch = x.shape[0]

    # TODO(synk): in a real pipeline, flatten + pad + bf16-cast x once upstream
    # instead of per forward call.
    x2d = x.reshape(batch, -1)                                   # (B, 6000)
    b_pad = pl.cdiv(batch, tb) * tb
    x2d = jnp.pad(x2d, ((0, b_pad - batch), (0, K_PAD - IN_FEATURES)))
    x2d = x2d.astype(jnp.bfloat16)                               # (B_pad, 6144)

    grid = (b_pad // tb,)

    flops = 2 * b_pad * (K_PAD * H1 + H1 * H2 + H2 * OUT)
    bytes_accessed = (x2d.size * 2 + w1p.size * 2 + w2.size * 2
                      + (b1.size + b2.size + w3r.size + b3.size) * 4
                      + b_pad * OUT * 4)

    out = pl.pallas_call(
        _mlp_kernel,
        out_shape=jax.ShapeDtypeStruct((b_pad, OUT), jnp.float32),
        grid=grid,
        in_specs=[
            pl.BlockSpec((tb, K_PAD), lambda i: (i, 0)),   # x tile, pipelined
            pl.BlockSpec((K_PAD, H1), lambda i: (0, 0)),   # W1 resident
            pl.BlockSpec((1, H1),     lambda i: (0, 0)),   # b1
            pl.BlockSpec((H1, H2),    lambda i: (0, 0)),   # W2
            pl.BlockSpec((1, H2),     lambda i: (0, 0)),   # b2
            pl.BlockSpec((1, H2),     lambda i: (0, 0)),   # w3 (as a row)
            pl.BlockSpec((1, 1),      lambda i: (0, 0)),   # b3
        ],
        out_specs=pl.BlockSpec((tb, OUT), lambda i: (i, 0)),
        compiler_params=pltpu.CompilerParams(
            dimension_semantics=("parallel",)),
        cost_estimate=pl.CostEstimate(
            flops=flops, transcendentals=0, bytes_accessed=bytes_accessed),
    )(x2d, w1p, b1, w2, b2, w3r, b3)

    return out[:batch]


def init_params(key):
    """f32 params mimicking nn.Linear's U(-1/sqrt(fan_in), 1/sqrt(fan_in))."""
    ks = jax.random.split(key, 6)

    def lin(kw, kb, fan_in, fan_out):
        bound = 1.0 / jnp.sqrt(jnp.float32(fan_in))
        w = jax.random.uniform(kw, (fan_in, fan_out), jnp.float32, -bound, bound)
        b = jax.random.uniform(kb, (1, fan_out), jnp.float32, -bound, bound)
        return w, b

    w1, b1 = lin(ks[0], ks[1], IN_FEATURES, H1)
    w2, b2 = lin(ks[2], ks[3], H1, H2)
    w3, b3 = lin(ks[4], ks[5], H2, OUT)
    return (w1, b1, w2, b2, w3, b3)


def pack_params(params):
    """Pad W1's K dim to 6144, cast matmul weights to bf16, reshape w3 to a row."""
    w1, b1, w2, b2, w3, b3 = params
    w1p = jnp.zeros((K_PAD, H1), jnp.float32).at[:IN_FEATURES].set(w1)
    return (
        w1p.astype(jnp.bfloat16),     # (6144, 128) bf16
        b1,                           # (1, 128)    f32
        w2.astype(jnp.bfloat16),      # (128, 64)   bf16
        b2,                           # (1, 64)     f32
        w3.T,                         # (1, 64)     f32  (fc3 as VPU reduce)
        b3,                           # (1, 1)      f32
    )


def _reference_forward(x, params):
    """Plain-JAX reference using the same bf16-matmul / f32-accum recipe."""
    w1, b1, w2, b2, w3, b3 = params
    h = x.reshape(x.shape[0], -1)
    h = jnp.dot(h.astype(jnp.bfloat16), w1.astype(jnp.bfloat16),
                preferred_element_type=jnp.float32) + b1
    h = jnp.maximum(h, 0.0)
    h = jnp.dot(h.astype(jnp.bfloat16), w2.astype(jnp.bfloat16),
                preferred_element_type=jnp.float32) + b2
    h = jnp.maximum(h, 0.0)
    return h @ w3 + b3


if __name__ == "__main__":
    key = jax.random.PRNGKey(0)
    k_x, k_p = jax.random.split(key)

    batch = 2
    x = jax.random.normal(k_x, (batch, 12, 500), dtype=jnp.float32)
    params = init_params(k_p)
    packed = pack_params(params)

    out = ann_forward(x, packed)
    out = jax.block_until_ready(out)

    ref = _reference_forward(x, params)
    assert out.shape == (batch, 1), out.shape
    assert jnp.allclose(out, ref, atol=2e-3, rtol=2e-3), "mismatch vs JAX reference"

    print("KERNEL_OK")
</pallas_src>

<mosaic_0001>
module attributes {stable_mosaic.version = 11 : i64} {
  func.func @_mlp_kernel(%arg0: i32, %arg1: memref<128x6144xbf16, #tpu.memory_space<vmem>>, %arg2: memref<6144x128xbf16, #tpu.memory_space<vmem>>, %arg3: memref<1x128xf32, #tpu.memory_space<vmem>>, %arg4: memref<128x64xbf16, #tpu.memory_space<vmem>>, %arg5: memref<1x64xf32, #tpu.memory_space<vmem>>, %arg6: memref<1x64xf32, #tpu.memory_space<vmem>>, %arg7: memref<1x1xf32, #tpu.memory_space<vmem>>, %arg8: memref<128x1xf32, #tpu.memory_space<vmem>>) attributes {dimension_semantics = [#tpu.dimension_semantics<parallel>], iteration_bounds = array<i64: 1>, scalar_prefetch = 0 : i64, scratch_operands = 0 : i64, tpu.core_type = #tpu.core_type<tc>, window_params = [{transform_indices = @transform_0, window_bounds = array<i64: 128, 6144>}, {pipeline_mode = #tpu.pipeline_mode<synchronous>, transform_indices = @transform_1, window_bounds = array<i64: 6144, 128>}, {pipeline_mode = #tpu.pipeline_mode<synchronous>, transform_indices = @transform_2, window_bounds = array<i64: 1, 128>}, {pipeline_mode = #tpu.pipeline_mode<synchronous>, transform_indices = @transform_3, window_bounds = array<i64: 128, 64>}, {pipeline_mode = #tpu.pipeline_mode<synchronous>, transform_indices = @transform_4, window_bounds = array<i64: 1, 64>}, {pipeline_mode = #tpu.pipeline_mode<synchronous>, transform_indices = @transform_5, window_bounds = array<i64: 1, 64>}, {pipeline_mode = #tpu.pipeline_mode<synchronous>, transform_indices = @transform_6, window_bounds = array<i64: 1, 1>}, {transform_indices = @transform_7, window_bounds = array<i64: 128, 1>}]} {
    %c0 = arith.constant 0 : index
    %c0_0 = arith.constant 0 : index
    %0 = vector.load %arg1[%c0, %c0_0] : memref<128x6144xbf16, #tpu.memory_space<vmem>>, vector<128x6144xbf16>
    %c0_1 = arith.constant 0 : index
    %c0_2 = arith.constant 0 : index
    %1 = vector.load %arg2[%c0_1, %c0_2] : memref<6144x128xbf16, #tpu.memory_space<vmem>>, vector<6144x128xbf16>
    %cst = arith.constant dense<0.000000e+00> : vector<128x128xf32>
    %2 = tpu.matmul %0, %1, %cst {dimension_numbers = #tpu.dot_dimension_numbers<[1], [0], [0], [1], [0, 0, 1, 1], [], []>} : vector<128x6144xbf16>, vector<6144x128xbf16>, vector<128x128xf32> -> vector<128x128xf32>
    %c0_3 = arith.constant 0 : index
    %c0_4 = arith.constant 0 : index
    %3 = vector.load %arg3[%c0_3, %c0_4] : memref<1x128xf32, #tpu.memory_space<vmem>>, vector<1x128xf32>
    %4 = vector.broadcast %3 : vector<1x128xf32> to vector<128x128xf32>
    %5 = arith.addf %2, %4 : vector<128x128xf32>
    %cst_5 = arith.constant 0.000000e+00 : f32
    %6 = vector.broadcast %cst_5 : f32 to vector<128x128xf32>
    %7 = arith.maximumf %5, %6 : vector<128x128xf32>
    %8 = arith.truncf %7 : vector<128x128xf32> to vector<128x128xbf16>
    %c0_6 = arith.constant 0 : index
    %c0_7 = arith.constant 0 : index
    %9 = vector.load %arg4[%c0_6, %c0_7] : memref<128x64xbf16, #tpu.memory_space<vmem>>, vector<128x64xbf16>
    %cst_8 = arith.constant dense<0.000000e+00> : vector<128x64xf32>
    %10 = tpu.matmul %8, %9, %cst_8 {dimension_numbers = #tpu.dot_dimension_numbers<[1], [0], [0], [1], [0, 0, 1, 1], [], []>} : vector<128x128xbf16>, vector<128x64xbf16>, vector<128x64xf32> -> vector<128x64xf32>
    %c0_9 = arith.constant 0 : index
    %c0_10 = arith.constant 0 : index
    %11 = vector.load %arg5[%c0_9, %c0_10] : memref<1x64xf32, #tpu.memory_space<vmem>>, vector<1x64xf32>
    %12 = vector.broadcast %11 : vector<1x64xf32> to vector<128x64xf32>
    %13 = arith.addf %10, %12 : vector<128x64xf32>
    %cst_11 = arith.constant 0.000000e+00 : f32
    %14 = vector.broadcast %cst_11 : f32 to vector<128x64xf32>
    %15 = arith.maximumf %13, %14 : vector<128x64xf32>
    %c0_12 = arith.constant 0 : index
    %c0_13 = arith.constant 0 : index
    %16 = vector.load %arg6[%c0_12, %c0_13] : memref<1x64xf32, #tpu.memory_space<vmem>>, vector<1x64xf32>
    %17 = vector.broadcast %16 : vector<1x64xf32> to vector<128x64xf32>
    %18 = arith.mulf %15, %17 : vector<128x64xf32>
    %cst_14 = arith.constant dense<0.000000e+00> : vector<128xf32>
    %19 = vector.multi_reduction <add>, %18, %cst_14 [1] : vector<128x64xf32> to vector<128xf32>
    %20 = vector.shape_cast %19 : vector<128xf32> to vector<128x1xf32>
    %c0_15 = arith.constant 0 : index
    %c0_16 = arith.constant 0 : index
    %21 = vector.load %arg7[%c0_15, %c0_16] : memref<1x1xf32, #tpu.memory_space<vmem>>, vector<1x1xf32>
    %22 = vector.broadcast %21 : vector<1x1xf32> to vector<128x1xf32>
    %23 = arith.addf %20, %22 : vector<128x1xf32>
    %c0_17 = arith.constant 0 : index
    %c0_18 = arith.constant 0 : index
    %24 = vector.load %arg8[%c0_17, %c0_18] : memref<128x1xf32, #tpu.memory_space<vmem>>, vector<128x1xf32>
    tpu.vector_store %arg8[%c0_17, %c0_18], %23 {strides = array<i32>} : memref<128x1xf32, #tpu.memory_space<vmem>>, vector<128x1xf32>,
    return
  }
  func.func @transform_0(%arg0: i32) -> (i32, i32) {
    %c0_i32 = arith.constant 0 : i32
    %c0_i32_0 = arith.constant 0 : i32
    return %arg0, %c0_i32 : i32, i32
  }
  func.func @transform_1(%arg0: i32) -> (i32, i32) {
    %c0_i32 = arith.constant 0 : i32
    %c0_i32_0 = arith.constant 0 : i32
    %c0_i32_1 = arith.constant 0 : i32
    return %c0_i32, %c0_i32_0 : i32, i32
  }
  func.func @transform_2(%arg0: i32) -> (i32, i32) {
    %c0_i32 = arith.constant 0 : i32
    %c0_i32_0 = arith.constant 0 : i32
    %c0_i32_1 = arith.constant 0 : i32
    return %c0_i32, %c0_i32_0 : i32, i32
  }
  func.func @transform_3(%arg0: i32) -> (i32, i32) {
    %c0_i32 = arith.constant 0 : i32
    %c0_i32_0 = arith.constant 0 : i32
    %c0_i32_1 = arith.constant 0 : i32
    return %c0_i32, %c0_i32_0 : i32, i32
  }
  func.func @transform_4(%arg0: i32) -> (i32, i32) {
    %c0_i32 = arith.constant 0 : i32
    %c0_i32_0 = arith.constant 0 : i32
    %c0_i32_1 = arith.constant 0 : i32
    return %c0_i32, %c0_i32_0 : i32, i32
  }
  func.func @transform_5(%arg0: i32) -> (i32, i32) {
    %c0_i32 = arith.constant 0 : i32
    %c0_i32_0 = arith.constant 0 : i32
    %c0_i32_1 = arith.constant 0 : i32
    return %c0_i32, %c0_i32_0 : i32, i32
  }
  func.func @transform_6(%arg0: i32) -> (i32, i32) {
    %c0_i32 = arith.constant 0 : i32
    %c0_i32_0 = arith.constant 0 : i32
    %c0_i32_1 = arith.constant 0 : i32
    return %c0_i32, %c0_i32_0 : i32, i32
  }
  func.func @transform_7(%arg0: i32) -> (i32, i32) {
    %c0_i32 = arith.constant 0 : i32
    %c0_i32_0 = arith.constant 0 : i32
    return %arg0, %c0_i32 : i32, i32
  }
}

</mosaic_0001>

<llo_original>
// kernel: tpu_custom_call.1
$region0: #{tpu_custom_call.1}
  #allocation0 [shape = 'u32[]', space=smem, size = 0x4, offset = 0x4, fixed_abs, tag = 'smem constant byte address 0x4 - core index']
  #allocation1 [shape = 'u32[144,128]{1,0:T(1,128)}', space=vmem, size = 0x12000, scoped, tag = 'internal scratch']
  #allocation2 [shape = 'f32[1,1]{1,0:T(1,128)S(1)}', space=vmem, size = 0x200, scoped, tag = 'scoped memory for tpu_custom_call.1']
  %s0 = inlined_call_operand.hbm [shape: bf16[128,6144], index: 0, kind: input, shape index: {}]
  %s1 = inlined_call_operand.hbm [shape: bf16[6144,128], index: 1, kind: input, shape index: {}]
  %s2 = inlined_call_operand.hbm [shape: f32[1,128], index: 2, kind: input, shape index: {}]
  %s3 = inlined_call_operand.vmem [shape: bf16[128,64], index: 3, kind: input, shape index: {}]
  %s4 = inlined_call_operand.hbm [shape: f32[1,64], index: 4, kind: input, shape index: {}]
  %s5 = inlined_call_operand.hbm [shape: f32[1,64], index: 5, kind: input, shape index: {}]
  %s6 = inlined_call_operand.<no memory space> [shape: f32[1,1], index: 6, kind: input, shape index: {}]
  %s7 = inlined_call_operand.vmem [shape: f32[128,1], index: 7, kind: output, shape index: {}]
  %s8 = sld [smem:[#allocation0]]
  $region58: #{tpu_custom_call.1} parent=0
    _
  %s10 = ssub.s32 1, %s8
  %s11 = scalar_select 0, %s10, %s8
  %v12 = vstv %s6
  %13 = vst [vmem:[#allocation2] sm:$0x1] %v12
  $region1: #{tpu_custom_call.1} parent=0
    #allocation3 [shape = 'u8[1572864]{0}', space=vmem, size = 0x180000, scoped, tag = 'input window, operand 0, single buffered']
    #allocation4 [shape = 's32[1]{0}', space=sflag, size = 0x4, scoped, tag = 'scoped memory for tpu_custom_call.1']
    #allocation5 [shape = 'u8[1572864]{0}', space=vmem, size = 0x180000, scoped, tag = 'input window, operand 1, single buffered']
    #allocation6 [shape = 's32[1]{0}', space=sflag, size = 0x4, scoped, tag = 'scoped memory for tpu_custom_call.1']
    #allocation7 [shape = 'u8[512]{0}', space=vmem, size = 0x400, scoped, tag = 'input window, operand 2, single buffered']
    #allocation8 [shape = 'u8[512]{0}', space=vmem, size = 0x400, scoped, tag = 'input window, operand 4, single buffered']
    #allocation9 [shape = 's32[1]{0}', space=sflag, size = 0x4, scoped, tag = 'scoped memory for tpu_custom_call.1']
    #allocation10 [shape = 'u8[512]{0}', space=vmem, size = 0x400, scoped, tag = 'input window, operand 5, single buffered']
    %14 = vsyncpa [#allocation4], 0
    %15 = vsyncpa [#allocation6], 0
    %16 = vsyncpa [#allocation9], 0
    // Predicated region
    $region2: #{tpu_custom_call.1} parent=1 // pred_check
      _
    $region3: #{tpu_custom_call.1} parent=1 // pred_check_branch
      %18 = sbr.rel (0) target = $region5
    $region4: #{tpu_custom_call.1} parent=1 // pred_region
      %s20 = ssub.s32 49152, 49152
      %21 = vsyncadd [#allocation4], %s20
      %s22 = sshll.u32 [#allocation3], 4
      %s23 = int_to_ptr.vmem [resolvable:$true] %s22
      %28 = dma.hbm_to_vmem [thread:$0]  %s0, 49152, %s23, [#allocation4], 3072, 3072, 192
    $region5: #{tpu_custom_call.1} parent=1 // pred_fallthru
      _
    // Predicated region
    $region6: #{tpu_custom_call.1} parent=1 // pred_check
      _
    $region7: #{tpu_custom_call.1} parent=1 // pred_check_branch
      %30 = sbr.rel (0) target = $region9
    $region8: #{tpu_custom_call.1} parent=1 // pred_region
      %s32 = ssub.s32 49152, 49152
      %33 = vsyncadd [#allocation6], %s32
      %s34 = sshll.u32 [#allocation5], 4
      %s35 = int_to_ptr.vmem [resolvable:$true] %s34
      %40 = dma.hbm_to_vmem [thread:$0]  %s1, 49152, %s35, [#allocation6], 64, 64, 4
    $region9: #{tpu_custom_call.1} parent=1 // pred_fallthru
      _
    // Predicated region
    $region10: #{tpu_custom_call.1} parent=1 // pred_check
      _
    $region11: #{tpu_custom_call.1} parent=1 // pred_check_branch
      %42 = sbr.rel (0) target = $region13
    $region12: #{tpu_custom_call.1} parent=1 // pred_region
      %s44 = ssub.s32 16, 16
      %45 = vsyncadd [#allocation6], %s44
      %s47 = sshll.u32 [#allocation7], 4
      %s48 = int_to_ptr.vmem [resolvable:$true] %s47
      %50 = dma.hbm_to_vmem [thread:$0]  %s2, 16, %s48, [#allocation6]
    $region13: #{tpu_custom_call.1} parent=1 // pred_fallthru
      _
    // Predicated region
    $region14: #{tpu_custom_call.1} parent=1 // pred_check
      _
    $region15: #{tpu_custom_call.1} parent=1 // pred_check_branch
      %52 = sbr.rel (0) target = $region17
    $region16: #{tpu_custom_call.1} parent=1 // pred_region
      _
    $region17: #{tpu_custom_call.1} parent=1 // pred_fallthru
      _
    // Predicated region
    $region18: #{tpu_custom_call.1} parent=1 // pred_check
      _
    $region19: #{tpu_custom_call.1} parent=1 // pred_check_branch
      %54 = sbr.rel (0) target = $region21
    $region20: #{tpu_custom_call.1} parent=1 // pred_region
      %s56 = ssub.s32 16, 16
      %57 = vsyncadd [#allocation9], %s56
      %s59 = sshll.u32 [#allocation8], 4
      %s60 = int_to_ptr.vmem [resolvable:$true] %s59
      %62 = dma.hbm_to_vmem [thread:$0]  %s4, 16, %s60, [#allocation9]
    $region21: #{tpu_custom_call.1} parent=1 // pred_fallthru
      _
    // Predicated region
    $region22: #{tpu_custom_call.1} parent=1 // pred_check
      _
    $region23: #{tpu_custom_call.1} parent=1 // pred_check_branch
      %64 = sbr.rel (0) target = $region25
    $region24: #{tpu_custom_call.1} parent=1 // pred_region
      %s66 = ssub.s32 16, 16
      %67 = vsyncadd [#allocation9], %s66
      %s69 = sshll.u32 [#allocation10], 4
      %s70 = int_to_ptr.vmem [resolvable:$true] %s69
      %72 = dma.hbm_to_vmem [thread:$0]  %s5, 16, %s70, [#allocation9]
    $region25: #{tpu_custom_call.1} parent=1 // pred_fallthru
      _
    // Predicated region
    $region26: #{tpu_custom_call.1} parent=1 // pred_check
      _
    $region27: #{tpu_custom_call.1} parent=1 // pred_check_branch
      %74 = sbr.rel (0) target = $region29
    $region28: #{tpu_custom_call.1} parent=1 // pred_region
      _
    $region29: #{tpu_custom_call.1} parent=1 // pred_fallthru
      _
    // Predicated region
    $region30: #{tpu_custom_call.1} parent=1 // pred_check
      _
    $region31: #{tpu_custom_call.1} parent=1 // pred_check_branch
      %76 = sbr.rel (0) target = $region33
    $region32: #{tpu_custom_call.1} parent=1 // pred_region
      %77 = dma.done [#allocation4], 49152
    $region33: #{tpu_custom_call.1} parent=1 // pred_fallthru
      _
    // Predicated region
    $region34: #{tpu_custom_call.1} parent=1 // pred_check
      _
    $region35: #{tpu_custom_call.1} parent=1 // pred_check_branch
      %79 = sbr.rel (0) target = $region37
    $region36: #{tpu_custom_call.1} parent=1 // pred_region
      %80 = dma.done [#allocation6], 49152
    $region37: #{tpu_custom_call.1} parent=1 // pred_fallthru
      _
    // Predicated region
    $region38: #{tpu_custom_call.1} parent=1 // pred_check
      _
    $region39: #{tpu_custom_call.1} parent=1 // pred_check_branch
      %82 = sbr.rel (0) target = $region41
    $region40: #{tpu_custom_call.1} parent=1 // pred_region
      %83 = dma.done [#allocation6], 16
    $region41: #{tpu_custom_call.1} parent=1 // pred_fallthru
      _
    // Predicated region
    $region42: #{tpu_custom_call.1} parent=1 // pred_check
      _
    $region43: #{tpu_custom_call.1} parent=1 // pred_check_branch
      %85 = sbr.rel (0) target = $region45
    $region44: #{tpu_custom_call.1} parent=1 // pred_region
      %86 = dma.done [#allocation9], 16
    $region45: #{tpu_custom_call.1} parent=1 // pred_fallthru
      _
    // Predicated region
    $region46: #{tpu_custom_call.1} parent=1 // pred_check
      _
    $region47: #{tpu_custom_call.1} parent=1 // pred_check_branch
      %88 = sbr.rel (0) target = $region49
    $region48: #{tpu_custom_call.1} parent=1 // pred_region
      %89 = dma.done [#allocation9], 16
    $region49: #{tpu_custom_call.1} parent=1 // pred_fallthru
      _
    %v91 = vld [vmem:[#allocation3] sm:$0xff]
    %v92 = vld [vmem:[#allocation3 + $0x8] sm:$0xff]
    %v93 = vld [vmem:[#allocation3 + $0x10] sm:$0xff]
    %v94 = vld [vmem:[#allocation3 + $0x18] sm:$0xff]
    %v95 = vld [vmem:[#allocation3 + $0x20] sm:$0xff]
    %v96 = vld [vmem:[#allocation3 + $0x28] sm:$0xff]
    %v97 = vld [vmem:[#allocation3 + $0x30] sm:$0xff]
    %v98 = vld [vmem:[#allocation3 + $0x38] sm:$0xff]
    %v99 = vld [vmem:[#allocation3 + $0x40] sm:$0xff]
    %v100 = vld [vmem:[#allocation3 + $0x48] sm:$0xff]
    %v101 = vld [vmem:[#allocation3 + $0x50] sm:$0xff]
    %v102 = vld [vmem:[#allocation3 + $0x58] sm:$0xff]
    %v103 = vld [vmem:[#allocation3 + $0x60] sm:$0xff]
    %v104 = vld [vmem:[#allocation3 + $0x68] sm:$0xff]
    %v105 = vld [vmem:[#allocation3 + $0x70] sm:$0xff]
    %v106 = vld [vmem:[#allocation3 + $0x78] sm:$0xff]
    %v107 = vld [vmem:[#allocation3 + $0x80] sm:$0xff]
    %v108 = vld [vmem:[#allocation3 + $0x88] sm:$0xff]
    %v109 = vld [vmem:[#allocation3 + $0x90] sm:$0xff]
    %v110 = vld [vmem:[#allocation3 + $0x98] sm:$0xff]
    %v111 = vld [vmem:[#allocation3 + $0xa0] sm:$0xff]
    %v112 = vld [vmem:[#allocation3 + $0xa8] sm:$0xff]
    %v113 = vld [vmem:[#allocation3 + $0xb0] sm:$0xff]
    %v114 = vld [vmem:[#allocation3 + $0xb8] sm:$0xff]
    %v115 = vld [vmem:[#allocation3 + $0xc0] sm:$0xff]
    %v116 = vld [vmem:[#allocation3 + $0xc8] sm:$0xff]
    %v117 = vld [vmem:[#allocation3 + $0xd0] sm:$0xff]
    %v118 = vld [vmem:[#allocation3 + $0xd8] sm:$0xff]
    %v119 = vld [vmem:[#allocation3 + $0xe0] sm:$0xff]
    %v120 = vld [vmem:[#allocation3 + $0xe8] sm:$0xff]
    %v121 = vld [vmem:[#allocation3 + $0xf0] sm:$0xff]
    %v122 = vld [vmem:[#allocation3 + $0xf8] sm:$0xff]
    %v123 = vld [vmem:[#allocation3 + $0x100] sm:$0xff]
    %v124 = vld [vmem:[#allocation3 + $0x108] sm:$0xff]
    %v125 = vld [vmem:[#allocation3 + $0x110] sm:$0xff]
    %v126 = vld [vmem:[#allocation3 + $0x118] sm:$0xff]
    %v127 = vld [vmem:[#allocation3 + $0x120] sm:$0xff]
    %v128 = vld [vmem:[#allocation3 + $0x128] sm:$0xff]
    %v129 = vld [vmem:[#allocation3 + $0x130] sm:$0xff]
    %v130 = vld [vmem:[#allocation3 + $0x138] sm:$0xff]
    %v131 = vld [vmem:[#allocation3 + $0x140] sm:$0xff]
    %v132 = vld [vmem:[#allocation3 + $0x148] sm:$0xff]
    %v133 = vld [vmem:[#allocation3 + $0x150] sm:$0xff]
    %v134 = vld [vmem:[#allocation3 + $0x158] sm:$0xff]
    %v135 = vld [vmem:[#allocation3 + $0x160] sm:$0xff]
    %v136 = vld [vmem:[#allocation3 + $0x168] sm:$0xff]
    %v137 = vld [vmem:[#allocation3 + $0x170] sm:$0xff]
    %v138 = vld [vmem:[#allocation3 + $0x178] sm:$0xff]
    %v139 = vld [vmem:[#allocation3 + $0x180] sm:$0xff]
    %v140 = vld [vmem:[#allocation3 + $0x188] sm:$0xff]
    %v141 = vld [vmem:[#allocation3 + $0x190] sm:$0xff]
    %v142 = vld [vmem:[#allocation3 + $0x198] sm:$0xff]
    %v143 = vld [vmem:[#allocation3 + $0x1a0] sm:$0xff]
    %v144 = vld [vmem:[#allocation3 + $0x1a8] sm:$0xff]
    %v145 = vld [vmem:[#allocation3 + $0x1b0] sm:$0xff]
    %v146 = vld [vmem:[#allocation3 + $0x1b8] sm:$0xff]
    %v147 = vld [vmem:[#allocation3 + $0x1c0] sm:$0xff]
    %v148 = vld [vmem:[#allocation3 + $0x1c8] sm:$0xff]
    %v149 = vld [vmem:[#allocation3 + $0x1d0] sm:$0xff]
    %v150 = vld [vmem:[#allocation3 + $0x1d8] sm:$0xff]
    %v151 = vld [vmem:[#allocation3 + $0x1e0] sm:$0xff]
    %v152 = vld [vmem:[#allocation3 + $0x1e8] sm:$0xff]
    %v153 = vld [vmem:[#allocation3 + $0x1f0] sm:$0xff]
    %v154 = vld [vmem:[#allocation3 + $0x1f8] sm:$0xff]
    %v155 = vld [vmem:[#allocation3 + $0x200] sm:$0xff]
    %v156 = vld [vmem:[#allocation3 + $0x208] sm:$0xff]
    %v157 = vld [vmem:[#allocation3 + $0x210] sm:$0xff]
    %v158 = vld [vmem:[#allocation3 + $0x218] sm:$0xff]
    %v159 = vld [vmem:[#allocation3 + $0x220] sm:$0xff]
    %v160 = vld [vmem:[#allocation3 + $0x228] sm:$0xff]
    %v161 = vld [vmem:[#allocation3 + $0x230] sm:$0xff]
    %v162 = vld [vmem:[#allocation3 + $0x238] sm:$0xff]
    %v163 = vld [vmem:[#allocation3 + $0x240] sm:$0xff]
    %v164 = vld [vmem:[#allocation3 + $0x248] sm:$0xff]
    %v165 = vld [vmem:[#allocation3 + $0x250] sm:$0xff]
    %v166 = vld [vmem:[#allocation3 + $0x258] sm:$0xff]
    %v167 = vld [vmem:[#allocation3 + $0x260] sm:$0xff]
    %v168 = vld [vmem:[#allocation3 + $0x268] sm:$0xff]
    %v169 = vld [vmem:[#allocation3 + $0x270] sm:$0xff]
    %v170 = vld [vmem:[#allocation3 + $0x278] sm:$0xff]
    %v171 = vld [vmem:[#allocation3 + $0x280] sm:$0xff]
    %v172 = vld [vmem:[#allocation3 + $0x288] sm:$0xff]
    %v173 = vld [vmem:[#allocation3 + $0x290] sm:$0xff]
    %v174 = vld [vmem:[#allocation3 + $0x298] sm:$0xff]
    %v175 = vld [vmem:[#allocation3 + $0x2a0] sm:$0xff]
    %v176 = vld [vmem:[#allocation3 + $0x2a8] sm:$0xff]
    %v177 = vld [vmem:[#allocation3 + $0x2b0] sm:$0xff]
    %v178 = vld [vmem:[#allocation3 + $0x2b8] sm:$0xff]
    %v179 = vld [vmem:[#allocation3 + $0x2c0] sm:$0xff]
    %v180 = vld [vmem:[#allocation3 + $0x2c8] sm:$0xff]
    %v181 = vld [vmem:[#allocation3 + $0x2d0] sm:$0xff]
    %v182 = vld [vmem:[#allocation3 + $0x2d8] sm:$0xff]
    %v183 = vld [vmem:[#allocation3 + $0x2e0] sm:$0xff]
    %v184 = vld [vmem:[#allocation3 + $0x2e8] sm:$0xff]
    %v185 = vld [vmem:[#allocation3 + $0x2f0] sm:$0xff]
    %v186 = vld [vmem:[#allocation3 + $0x2f8] sm:$0xff]
    %v187 = vld [vmem:[#allocation3 + $0x300] sm:$0xff]
    %v188 = vld [vmem:[#allocation3 + $0x308] sm:$0xff]
    %v189 = vld [vmem:[#allocation3 + $0x310] sm:$0xff]
    %v190 = vld [vmem:[#allocation3 + $0x318] sm:$0xff]
    %v191 = vld [vmem:[#allocation3 + $0x320] sm:$0xff]
    %v192 = vld [vmem:[#allocation3 + $0x328] sm:$0xff]
    %v193 = vld [vmem:[#allocation3 + $0x330] sm:$0xff]
    %v194 = vld [vmem:[#allocation3 + $0x338] sm:$0xff]
    %v195 = vld [vmem:[#allocation3 + $0x340] sm:$0xff]
    %v196 = vld [vmem:[#allocation3 + $0x348] sm:$0xff]
    %v197 = vld [vmem:[#allocation3 + $0x350] sm:$0xff]
    %v198 = vld [vmem:[#allocation3 + $0x358] sm:$0xff]
    %v199 = vld [vmem:[#allocation3 + $0x360] sm:$0xff]
    %v200 = vld [vmem:[#allocation3 + $0x368] sm:$0xff]
    %v201 = vld [vmem:[#allocation3 + $0x370] sm:$0xff]
    %v202 = vld [vmem:[#allocation3 + $0x378] sm:$0xff]
    %v203 = vld [vmem:[#allocation3 + $0x380] sm:$0xff]
    %v204 = vld [vmem:[#allocation3 + $0x388] sm:$0xff]
    %v205 = vld [vmem:[#allocation3 + $0x390] sm:$0xff]
    %v206 = vld [vmem:[#allocation3 + $0x398] sm:$0xff]
    %v207 = vld [vmem:[#allocation3 + $0x3a0] sm:$0xff]
    %v208 = vld [vmem:[#allocation3 + $0x3a8] sm:$0xff]
    %v209 = vld [vmem:[#allocation3 + $0x3b0] sm:$0xff]
    %v210 = vld [vmem:[#allocation3 + $0x3b8] sm:$0xff]
    %v211 = vld [vmem:[#allocation3 + $0x3c0] sm:$0xff]
    %v212 = vld [vmem:[#allocation3 + $0x3c8] sm:$0xff]
    %v213 = vld [vmem:[#allocation3 + $0x3d0] sm:$0xff]
    %v214 = vld [vmem:[#allocation3 + $0x3d8] sm:$0xff]
    %v215 = vld [vmem:[#allocation3 + $0x3e0] sm:$0xff]
    %v216 = vld [vmem:[#allocation3 + $0x3e8] sm:$0xff]
    %v217 = vld [vmem:[#allocation3 + $0x3f0] sm:$0xff]
    %v218 = vld [vmem:[#allocation3 + $0x3f8] sm:$0xff]
    %v219 = vld [vmem:[#allocation3 + $0x400] sm:$0xff]
    %v220 = vld [vmem:[#allocation3 + $0x408] sm:$0xff]
    %v221 = vld [vmem:[#allocation3 + $0x410] sm:$0xff]
    %v222 = vld [vmem:[#allocation3 + $0x418] sm:$0xff]
    %v223 = vld [vmem:[#allocation3 + $0x420] sm:$0xff]
    %v224 = vld [vmem:[#allocation3 + $0x428] sm:$0xff]
    %v225 = vld [vmem:[#allocation3 + $0x430] sm:$0xff]
    %v226 = vld [vmem:[#allocation3 + $0x438] sm:$0xff]
    %v227 = vld [vmem:[#allocation3 + $0x440] sm:$0xff]
    %v228 = vld [vmem:[#allocation3 + $0x448] sm:$0xff]
    %v229 = vld [vmem:[#allocation3 + $0x450] sm:$0xff]
    %v230 = vld [vmem:[#allocation3 + $0x458] sm:$0xff]
    %v231 = vld [vmem:[#allocation3 + $0x460] sm:$0xff]
    %v232 = vld [vmem:[#allocation3 + $0x468] sm:$0xff]
    %v233 = vld [vmem:[#allocation3 + $0x470] sm:$0xff]
    %v234 = vld [vmem:[#allocation3 + $0x478] sm:$0xff]
    %v235 = vld [vmem:[#allocation3 + $0x480] sm:$0xff]
    %v236 = vld [vmem:[#allocation3 + $0x488] sm:$0xff]
    %v237 = vld [vmem:[#allocation3 + $0x490] sm:$0xff]
    %v238 = vld [vmem:[#allocation3 + $0x498] sm:$0xff]
    %v239 = vld [vmem:[#allocation3 + $0x4a0] sm:$0xff]
    %v240 = vld [vmem:[#allocation3 + $0x4a8] sm:$0xff]
    %v241 = vld [vmem:[#allocation3 + $0x4b0] sm:$0xff]
    %v242 = vld [vmem:[#allocation3 + $0x4b8] sm:$0xff]
    %v243 = vld [vmem:[#allocation3 + $0x4c0] sm:$0xff]
    %v244 = vld [vmem:[#allocation3 + $0x4c8] sm:$0xff]
    %v245 = vld [vmem:[#allocation3 + $0x4d0] sm:$0xff]
    %v246 = vld [vmem:[#allocation3 + $0x4d8] sm:$0xff]
    %v247 = vld [vmem:[#allocation3 + $0x4e0] sm:$0xff]
    %v248 = vld [vmem:[#allocation3 + $0x4e8] sm:$0xff]
    %v249 = vld [vmem:[#allocation3 + $0x4f0] sm:$0xff]
    %v250 = vld [vmem:[#allocation3 + $0x4f8] sm:$0xff]
    %v251 = vld [vmem:[#allocation3 + $0x500] sm:$0xff]
    %v252 = vld [vmem:[#allocation3 + $0x508] sm:$0xff]
    %v253 = vld [vmem:[#allocation3 + $0x510] sm:$0xff]
    %v254 = vld [vmem:[#allocation3 + $0x518] sm:$0xff]
    %v255 = vld [vmem:[#allocation3 + $0x520] sm:$0xff]
    %v256 = vld [vmem:[#allocation3 + $0x528] sm:$0xff]
    %v257 = vld [vmem:[#allocation3 + $0x530] sm:$0xff]
    %v258 = vld [vmem:[#allocation3 + $0x538] sm:$0xff]
    %v259 = vld [vmem:[#allocation3 + $0x540] sm:$0xff]
    %v260 = vld [vmem:[#allocation3 + $0x548] sm:$0xff]
    %v261 = vld [vmem:[#allocation3 + $0x550] sm:$0xff]
    %v262 = vld [vmem:[#allocation3 + $0x558] sm:$0xff]
    %v263 = vld [vmem:[#allocation3 + $0x560] sm:$0xff]
    %v264 = vld [vmem:[#allocation3 + $0x568] sm:$0xff]
    %v265 = vld [vmem:[#allocation3 + $0x570] sm:$0xff]
    %v266 = vld [vmem:[#allocation3 + $0x578] sm:$0xff]
    %v267 = vld [vmem:[#allocation3 + $0x580] sm:$0xff]
    %v268 = vld [vmem:[#allocation3 + $0x588] sm:$0xff]
    %v269 = vld [vmem:[#allocation3 + $0x590] sm:$0xff]
    %v270 = vld [vmem:[#allocation3 + $0x598] sm:$0xff]
    %v271 = vld [vmem:[#allocation3 + $0x5a0] sm:$0xff]
    %v272 = vld [vmem:[#allocation3 + $0x5a8] sm:$0xff]
    %v273 = vld [vmem:[#allocation3 + $0x5b0] sm:$0xff]
    %v274 = vld [vmem:[#allocation3 + $0x5b8] sm:$0xff]
    %v275 = vld [vmem:[#allocation3 + $0x5c0] sm:$0xff]
    %v276 = vld [vmem:[#allocation3 + $0x5c8] sm:$0xff]
    %v277 = vld [vmem:[#allocation3 + $0x5d0] sm:$0xff]
    %v278 = vld [vmem:[#allocation3 + $0x5d8] sm:$0xff]
    %v279 = vld [vmem:[#allocation3 + $0x5e0] sm:$0xff]
    %v280 = vld [vmem:[#allocation3 + $0x5e8] sm:$0xff]
    %v281 = vld [vmem:[#allocation3 + $0x5f0] sm:$0xff]
    %v282 = vld [vmem:[#allocation3 + $0x5f8] sm:$0xff]
    %v283 = vld [vmem:[#allocation3 + $0x600] sm:$0xff]
    %v284 = vld [vmem:[#allocation3 + $0x608] sm:$0xff]
    %v285 = vld [vmem:[#allocation3 + $0x610] sm:$0xff]
    %v286 = vld [vmem:[#allocation3 + $0x618] sm:$0xff]
    %v287 = vld [vmem:[#allocation3 + $0x620] sm:$0xff]
    %v288 = vld [vmem:[#allocation3 + $0x628] sm:$0xff]
    %v289 = vld [vmem:[#allocation3 + $0x630] sm:$0xff]
    %v290 = vld [vmem:[#allocation3 + $0x638] sm:$0xff]
    %v291 = vld [vmem:[#allocation3 + $0x640] sm:$0xff]
    %v292 = vld [vmem:[#allocation3 + $0x648] sm:$0xff]
    %v293 = vld [vmem:[#allocation3 + $0x650] sm:$0xff]
    %v294 = vld [vmem:[#allocation3 + $0x658] sm:$0xff]
    %v295 = vld [vmem:[#allocation3 + $0x660] sm:$0xff]
    %v296 = vld [vmem:[#allocation3 + $0x668] sm:$0xff]
    %v297 = vld [vmem:[#allocation3 + $0x670] sm:$0xff]
    %v298 = vld [vmem:[#allocation3 + $0x678] sm:$0xff]
    %v299 = vld [vmem:[#allocation3 + $0x680] sm:$0xff]
    %v300 = vld [vmem:[#allocation3 + $0x688] sm:$0xff]
    %v301 = vld [vmem:[#allocation3 + $0x690] sm:$0xff]
    %v302 = vld [vmem:[#allocation3 + $0x698] sm:$0xff]
    %v303 = vld [vmem:[#allocation3 + $0x6a0] sm:$0xff]
    %v304 = vld [vmem:[#allocation3 + $0x6a8] sm:$0xff]
    %v305 = vld [vmem:[#allocation3 + $0x6b0] sm:$0xff]
    %v306 = vld [vmem:[#allocation3 + $0x6b8] sm:$0xff]
    %v307 = vld [vmem:[#allocation3 + $0x6c0] sm:$0xff]
    %v308 = vld [vmem:[#allocation3 + $0x6c8] sm:$0xff]
    %v309 = vld [vmem:[#allocation3 + $0x6d0] sm:$0xff]
    %v310 = vld [vmem:[#allocation3 + $0x6d8] sm:$0xff]
    %v311 = vld [vmem:[#allocation3 + $0x6e0] sm:$0xff]
    %v312 = vld [vmem:[#allocation3 + $0x6e8] sm:$0xff]
    %v313 = vld [vmem:[#allocation3 + $0x6f0] sm:$0xff]
    %v314 = vld [vmem:[#allocation3 + $0x6f8] sm:$0xff]
    %v315 = vld [vmem:[#allocation3 + $0x700] sm:$0xff]
    %v316 = vld [vmem:[#allocation3 + $0x708] sm:$0xff]
    %v317 = vld [vmem:[#allocation3 + $0x710] sm:$0xff]
    %v318 = vld [vmem:[#allocation3 + $0x718] sm:$0xff]
    %v319 = vld [vmem:[#allocation3 + $0x720] sm:$0xff]
    %v320 = vld [vmem:[#allocation3 + $0x728] sm:$0xff]
    %v321 = vld [vmem:[#allocation3 + $0x730] sm:$0xff]
    %v322 = vld [vmem:[#allocation3 + $0x738] sm:$0xff]
    %v323 = vld [vmem:[#allocation3 + $0x740] sm:$0xff]
    %v324 = vld [vmem:[#allocation3 + $0x748] sm:$0xff]
    %v325 = vld [vmem:[#allocation3 + $0x750] sm:$0xff]
    %v326 = vld [vmem:[#allocation3 + $0x758] sm:$0xff]
    %v327 = vld [vmem:[#allocation3 + $0x760] sm:$0xff]
    %v328 = vld [vmem:[#allocation3 + $0x768] sm:$0xff]
    %v329 = vld [vmem:[#allocation3 + $0x770] sm:$0xff]
    %v330 = vld [vmem:[#allocation3 + $0x778] sm:$0xff]
    %v331 = vld [vmem:[#allocation3 + $0x780] sm:$0xff]
    %v332 = vld [vmem:[#allocation3 + $0x788] sm:$0xff]
    %v333 = vld [vmem:[#allocation3 + $0x790] sm:$0xff]
    %v334 = vld [vmem:[#allocation3 + $0x798] sm:$0xff]
    %v335 = vld [vmem:[#allocation3 + $0x7a0] sm:$0xff]
    %v336 = vld [vmem:[#allocation3 + $0x7a8] sm:$0xff]
    %v337 = vld [vmem:[#allocation3 + $0x7b0] sm:$0xff]
    %v338 = vld [vmem:[#allocation3 + $0x7b8] sm:$0xff]
    %v339 = vld [vmem:[#allocation3 + $0x7c0] sm:$0xff]
    %v340 = vld [vmem:[#allocation3 + $0x7c8] sm:$0xff]
    %v341 = vld [vmem:[#allocation3 + $0x7d0] sm:$0xff]
    %v342 = vld [vmem:[#allocation3 + $0x7d8] sm:$0xff]
    %v343 = vld [vmem:[#allocation3 + $0x7e0] sm:$0xff]
    %v344 = vld [vmem:[#allocation3 + $0x7e8] sm:$0xff]
    %v345 = vld [vmem:[#allocation3 + $0x7f0] sm:$0xff]
    %v346 = vld [vmem:[#allocation3 + $0x7f8] sm:$0xff]
    %v347 = vld [vmem:[#allocation3 + $0x800] sm:$0xff]
    %v348 = vld [vmem:[#allocation3 + $0x808] sm:$0xff]
    %v349 = vld [vmem:[#allocation3 + $0x810] sm:$0xff]
    %v350 = vld [vmem:[#allocation3 + $0x818] sm:$0xff]
    %v351 = vld [vmem:[#allocation3 + $0x820] sm:$0xff]
    %v352 = vld [vmem:[#allocation3 + $0x828] sm:$0xff]
    %v353 = vld [vmem:[#allocation3 + $0x830] sm:$0xff]
    %v354 = vld [vmem:[#allocation3 + $0x838] sm:$0xff]
    %v355 = vld [vmem:[#allocation3 + $0x840] sm:$0xff]
    %v356 = vld [vmem:[#allocation3 + $0x848] sm:$0xff]
    %v357 = vld [vmem:[#allocation3 + $0x850] sm:$0xff]
    %v358 = vld [vmem:[#allocation3 + $0x858] sm:$0xff]
    %v359 = vld [vmem:[#allocation3 + $0x860] sm:$0xff]
    %v360 = vld [vmem:[#allocation3 + $0x868] sm:$0xff]
    %v361 = vld [vmem:[#allocation3 + $0x870] sm:$0xff]
    %v362 = vld [vmem:[#allocation3 + $0x878] sm:$0xff]
    %v363 = vld [vmem:[#allocation3 + $0x880] sm:$0xff]
    %v364 = vld [vmem:[#allocation3 + $0x888] sm:$0xff]
    %v365 = vld [vmem:[#allocation3 + $0x890] sm:$0xff]
    %v366 = vld [vmem:[#allocation3 + $0x898] sm:$0xff]
    %v367 = vld [vmem:[#allocation3 + $0x8a0] sm:$0xff]
    %v368 = vld [vmem:[#allocation3 + $0x8a8] sm:$0xff]
    %v369 = vld [vmem:[#allocation3 + $0x8b0] sm:$0xff]
    %v370 = vld [vmem:[#allocation3 + $0x8b8] sm:$0xff]
    %v371 = vld [vmem:[#allocation3 + $0x8c0] sm:$0xff]
    %v372 = vld [vmem:[#allocation3 + $0x8c8] sm:$0xff]
    %v373 = vld [vmem:[#allocation3 + $0x8d0] sm:$0xff]
    %v374 = vld [vmem:[#allocation3 + $0x8d8] sm:$0xff]
    %v375 = vld [vmem:[#allocation3 + $0x8e0] sm:$0xff]
    %v376 = vld [vmem:[#allocation3 + $0x8e8] sm:$0xff]
    %v377 = vld [vmem:[#allocation3 + $0x8f0] sm:$0xff]
    %v378 = vld [vmem:[#allocation3 + $0x8f8] sm:$0xff]
    %v379 = vld [vmem:[#allocation3 + $0x900] sm:$0xff]
    %v380 = vld [vmem:[#allocation3 + $0x908] sm:$0xff]
    %v381 = vld [vmem:[#allocation3 + $0x910] sm:$0xff]
    %v382 = vld [vmem:[#allocation3 + $0x918] sm:$0xff]
    %v383 = vld [vmem:[#allocation3 + $0x920] sm:$0xff]
    %v384 = vld [vmem:[#allocation3 + $0x928] sm:$0xff]
    %v385 = vld [vmem:[#allocation3 + $0x930] sm:$0xff]
    %v386 = vld [vmem:[#allocation3 + $0x938] sm:$0xff]
    %v387 = vld [vmem:[#allocation3 + $0x940] sm:$0xff]
    %v388 = vld [vmem:[#allocation3 + $0x948] sm:$0xff]
    %v389 = vld [vmem:[#allocation3 + $0x950] sm:$0xff]
    %v390 = vld [vmem:[#allocation3 + $0x958] sm:$0xff]
    %v391 = vld [vmem:[#allocation3 + $0x960] sm:$0xff]
    %v392 = vld [vmem:[#allocation3 + $0x968] sm:$0xff]
    %v393 = vld [vmem:[#allocation3 + $0x970] sm:$0xff]
    %v394 = vld [vmem:[#allocation3 + $0x978] sm:$0xff]
    %v395 = vld [vmem:[#allocation3 + $0x980] sm:$0xff]
    %v396 = vld [vmem:[#allocation3 + $0x988] sm:$0xff]
    %v397 = vld [vmem:[#allocation3 + $0x990] sm:$0xff]
    %v398 = vld [vmem:[#allocation3 + $0x998] sm:$0xff]
    %v399 = vld [vmem:[#allocation3 + $0x9a0] sm:$0xff]
    %v400 = vld [vmem:[#allocation3 + $0x9a8] sm:$0xff]
    %v401 = vld [vmem:[#allocation3 + $0x9b0] sm:$0xff]
    %v402 = vld [vmem:[#allocation3 + $0x9b8] sm:$0xff]
    %v403 = vld [vmem:[#allocation3 + $0x9c0] sm:$0xff]
    %v404 = vld [vmem:[#allocation3 + $0x9c8] sm:$0xff]
    %v405 = vld [vmem:[#allocation3 + $0x9d0] sm:$0xff]
    %v406 = vld [vmem:[#allocation3 + $0x9d8] sm:$0xff]
    %v407 = vld [vmem:[#allocation3 + $0x9e0] sm:$0xff]
    %v408 = vld [vmem:[#allocation3 + $0x9e8] sm:$0xff]
    %v409 = vld [vmem:[#allocation3 + $0x9f0] sm:$0xff]
    %v410 = vld [vmem:[#allocation3 + $0x9f8] sm:$0xff]
    %v411 = vld [vmem:[#allocation3 + $0xa00] sm:$0xff]
    %v412 = vld [vmem:[#allocation3 + $0xa08] sm:$0xff]
    %v413 = vld [vmem:[#allocation3 + $0xa10] sm:$0xff]
    %v414 = vld [vmem:[#allocation3 + $0xa18] sm:$0xff]
    %v415 = vld [vmem:[#allocation3 + $0xa20] sm:$0xff]
    %v416 = vld [vmem:[#allocation3 + $0xa28] sm:$0xff]
    %v417 = vld [vmem:[#allocation3 + $0xa30] sm:$0xff]
    %v418 = vld [vmem:[#allocation3 + $0xa38] sm:$0xff]
    %v419 = vld [vmem:[#allocation3 + $0xa40] sm:$0xff]
    %v420 = vld [vmem:[#allocation3 + $0xa48] sm:$0xff]
    %v421 = vld [vmem:[#allocation3 + $0xa50] sm:$0xff]
    %v422 = vld [vmem:[#allocation3 + $0xa58] sm:$0xff]
    %v423 = vld [vmem:[#allocation3 + $0xa60] sm:$0xff]
    %v424 = vld [vmem:[#allocation3 + $0xa68] sm:$0xff]
    %v425 = vld [vmem:[#allocation3 + $0xa70] sm:$0xff]
    %v426 = vld [vmem:[#allocation3 + $0xa78] sm:$0xff]
    %v427 = vld [vmem:[#allocation3 + $0xa80] sm:$0xff]
    %v428 = vld [vmem:[#allocation3 + $0xa88] sm:$0xff]
    %v429 = vld [vmem:[#allocation3 + $0xa90] sm:$0xff]
    %v430 = vld [vmem:[#allocation3 + $0xa98] sm:$0xff]
    %v431 = vld [vmem:[#allocation3 + $0xaa0] sm:$0xff]
    %v432 = vld [vmem:[#allocation3 + $0xaa8] sm:$0xff]
    %v433 = vld [vmem:[#allocation3 + $0xab0] sm:$0xff]
    %v434 = vld [vmem:[#allocation3 + $0xab8] sm:$0xff]
    %v435 = vld [vmem:[#allocation3 + $0xac0] sm:$0xff]
    %v436 = vld [vmem:[#allocation3 + $0xac8] sm:$0xff]
    %v437 = vld [vmem:[#allocation3 + $0xad0] sm:$0xff]
    %v438 = vld [vmem:[#allocation3 + $0xad8] sm:$0xff]
    %v439 = vld [vmem:[#allocation3 + $0xae0] sm:$0xff]
    %v440 = vld [vmem:[#allocation3 + $0xae8] sm:$0xff]
    %v441 = vld [vmem:[#allocation3 + $0xaf0] sm:$0xff]
    %v442 = vld [vmem:[#allocation3 + $0xaf8] sm:$0xff]
    %v443 = vld [vmem:[#allocation3 + $0xb00] sm:$0xff]
    %v444 = vld [vmem:[#allocation3 + $0xb08] sm:$0xff]
    %v445 = vld [vmem:[#allocation3 + $0xb10] sm:$0xff]
    %v446 = vld [vmem:[#allocation3 + $0xb18] sm:$0xff]
    %v447 = vld [vmem:[#allocation3 + $0xb20] sm:$0xff]
    %v448 = vld [vmem:[#allocation3 + $0xb28] sm:$0xff]
    %v449 = vld [vmem:[#allocation3 + $0xb30] sm:$0xff]
    %v450 = vld [vmem:[#allocation3 + $0xb38] sm:$0xff]
    %v451 = vld [vmem:[#allocation3 + $0xb40] sm:$0xff]
    %v452 = vld [vmem:[#allocation3 + $0xb48] sm:$0xff]
    %v453 = vld [vmem:[#allocation3 + $0xb50] sm:$0xff]
    %v454 = vld [vmem:[#allocation3 + $0xb58] sm:$0xff]
    %v455 = vld [vmem:[#allocation3 + $0xb60] sm:$0xff]
    %v456 = vld [vmem:[#allocation3 + $0xb68] sm:$0xff]
    %v457 = vld [vmem:[#allocation3 + $0xb70] sm:$0xff]
    %v458 = vld [vmem:[#allocation3 + $0xb78] sm:$0xff]
    %v459 = vld [vmem:[#allocation3 + $0xb80] sm:$0xff]
    %v460 = vld [vmem:[#allocation3 + $0xb88] sm:$0xff]
    %v461 = vld [vmem:[#allocation3 + $0xb90] sm:$0xff]
    %v462 = vld [vmem:[#allocation3 + $0xb98] sm:$0xff]
    %v463 = vld [vmem:[#allocation3 + $0xba0] sm:$0xff]
    %v464 = vld [vmem:[#allocation3 + $0xba8] sm:$0xff]
    %v465 = vld [vmem:[#allocation3 + $0xbb0] sm:$0xff]
    %v466 = vld [vmem:[#allocation3 + $0xbb8] sm:$0xff]
    %v467 = vld [vmem:[#allocation3 + $0xbc0] sm:$0xff]
    %v468 = vld [vmem:[#allocation3 + $0xbc8] sm:$0xff]
    %v469 = vld [vmem:[#allocation3 + $0xbd0] sm:$0xff]
    %v470 = vld [vmem:[#allocation3 + $0xbd8] sm:$0xff]
    %v471 = vld [vmem:[#allocation3 + $0xbe0] sm:$0xff]
    %v472 = vld [vmem:[#allocation3 + $0xbe8] sm:$0xff]
    %v473 = vld [vmem:[#allocation3 + $0xbf0] sm:$0xff]
    %v474 = vld [vmem:[#allocation3 + $0xbf8] sm:$0xff]
    %v475 = vld [vmem:[#allocation5] sm:$0xf]
    %v476 = vld [vmem:[#allocation5 + $0x4] sm:$0xf]
    %v477 = vld [vmem:[#allocation5 + $0x8] sm:$0xf]
    %v478 = vld [vmem:[#allocation5 + $0xc] sm:$0xf]
    %v479 = vld [vmem:[#allocation5 + $0x10] sm:$0xf]
    %v480 = vld [vmem:[#allocation5 + $0x14] sm:$0xf]
    %v481 = vld [vmem:[#allocation5 + $0x18] sm:$0xf]
    %v482 = vld [vmem:[#allocation5 + $0x1c] sm:$0xf]
    %v483 = vld [vmem:[#allocation5 + $0x20] sm:$0xf]
    %v484 = vld [vmem:[#allocation5 + $0x24] sm:$0xf]
    %v485 = vld [vmem:[#allocation5 + $0x28] sm:$0xf]
    %v486 = vld [vmem:[#allocation5 + $0x2c] sm:$0xf]
    %v487 = vld [vmem:[#allocation5 + $0x30] sm:$0xf]
    %v488 = vld [vmem:[#allocation5 + $0x34] sm:$0xf]
    %v489 = vld [vmem:[#allocation5 + $0x38] sm:$0xf]
    %v490 = vld [vmem:[#allocation5 + $0x3c] sm:$0xf]
    %v491 = vld [vmem:[#allocation5 + $0x40] sm:$0xf]
    %v492 = vld [vmem:[#allocation5 + $0x44] sm:$0xf]
    %v493 = vld [vmem:[#allocation5 + $0x48] sm:$0xf]
    %v494 = vld [vmem:[#allocation5 + $0x4c] sm:$0xf]
    %v495 = vld [vmem:[#allocation5 + $0x50] sm:$0xf]
    %v496 = vld [vmem:[#allocation5 + $0x54] sm:$0xf]
    %v497 = vld [vmem:[#allocation5 + $0x58] sm:$0xf]
    %v498 = vld [vmem:[#allocation5 + $0x5c] sm:$0xf]
    %v499 = vld [vmem:[#allocation5 + $0x60] sm:$0xf]
    %v500 = vld [vmem:[#allocation5 + $0x64] sm:$0xf]
    %v501 = vld [vmem:[#allocation5 + $0x68] sm:$0xf]
    %v502 = vld [vmem:[#allocation5 + $0x6c] sm:$0xf]
    %v503 = vld [vmem:[#allocation5 + $0x70] sm:$0xf]
    %v504 = vld [vmem:[#allocation5 + $0x74] sm:$0xf]
    %v505 = vld [vmem:[#allocation5 + $0x78] sm:$0xf]
    %v506 = vld [vmem:[#allocation5 + $0x7c] sm:$0xf]
    %v507 = vld [vmem:[#allocation5 + $0x80] sm:$0xf]
    %v508 = vld [vmem:[#allocation5 + $0x84] sm:$0xf]
    %v509 = vld [vmem:[#allocation5 + $0x88] sm:$0xf]
    %v510 = vld [vmem:[#allocation5 + $0x8c] sm:$0xf]
    %v511 = vld [vmem:[#allocation5 + $0x90] sm:$0xf]
    %v512 = vld [vmem:[#allocation5 + $0x94] sm:$0xf]
    %v513 = vld [vmem:[#allocation5 + $0x98] sm:$0xf]
    %v514 = vld [vmem:[#allocation5 + $0x9c] sm:$0xf]
    %v515 = vld [vmem:[#allocation5 + $0xa0] sm:$0xf]
    %v516 = vld [vmem:[#allocation5 + $0xa4] sm:$0xf]
    %v517 = vld [vmem:[#allocation5 + $0xa8] sm:$0xf]
    %v518 = vld [vmem:[#allocation5 + $0xac] sm:$0xf]
    %v519 = vld [vmem:[#allocation5 + $0xb0] sm:$0xf]
    %v520 = vld [vmem:[#allocation5 + $0xb4] sm:$0xf]
    %v521 = vld [vmem:[#allocation5 + $0xb8] sm:$0xf]
    %v522 = vld [vmem:[#allocation5 + $0xbc] sm:$0xf]
    %v523 = vld [vmem:[#allocation5 + $0xc0] sm:$0xf]
    %v524 = vld [vmem:[#allocation5 + $0xc4] sm:$0xf]
    %v525 = vld [vmem:[#allocation5 + $0xc8] sm:$0xf]
    %v526 = vld [vmem:[#allocation5 + $0xcc] sm:$0xf]
    %v527 = vld [vmem:[#allocation5 + $0xd0] sm:$0xf]
    %v528 = vld [vmem:[#allocation5 + $0xd4] sm:$0xf]
    %v529 = vld [vmem:[#allocation5 + $0xd8] sm:$0xf]
    %v530 = vld [vmem:[#allocation5 + $0xdc] sm:$0xf]
    %v531 = vld [vmem:[#allocation5 + $0xe0] sm:$0xf]
    %v532 = vld [vmem:[#allocation5 + $0xe4] sm:$0xf]
    %v533 = vld [vmem:[#allocation5 + $0xe8] sm:$0xf]
    %v534 = vld [vmem:[#allocation5 + $0xec] sm:$0xf]
    %v535 = vld [vmem:[#allocation5 + $0xf0] sm:$0xf]
    %v536 = vld [vmem:[#allocation5 + $0xf4] sm:$0xf]
    %v537 = vld [vmem:[#allocation5 + $0xf8] sm:$0xf]
    %v538 = vld [vmem:[#allocation5 + $0xfc] sm:$0xf]
    %v539 = vld [vmem:[#allocation5 + $0x100] sm:$0xf]
    %v540 = vld [vmem:[#allocation5 + $0x104] sm:$0xf]
    %v541 = vld [vmem:[#allocation5 + $0x108] sm:$0xf]
    %v542 = vld [vmem:[#allocation5 + $0x10c] sm:$0xf]
    %v543 = vld [vmem:[#allocation5 + $0x110] sm:$0xf]
    %v544 = vld [vmem:[#allocation5 + $0x114] sm:$0xf]
    %v545 = vld [vmem:[#allocation5 + $0x118] sm:$0xf]
    %v546 = vld [vmem:[#allocation5 + $0x11c] sm:$0xf]
    %v547 = vld [vmem:[#allocation5 + $0x120] sm:$0xf]
    %v548 = vld [vmem:[#allocation5 + $0x124] sm:$0xf]
    %v549 = vld [vmem:[#allocation5 + $0x128] sm:$0xf]
    %v550 = vld [vmem:[#allocation5 + $0x12c] sm:$0xf]
    %v551 = vld [vmem:[#allocation5 + $0x130] sm:$0xf]
    %v552 = vld [vmem:[#allocation5 + $0x134] sm:$0xf]
    %v553 = vld [vmem:[#allocation5 + $0x138] sm:$0xf]
    %v554 = vld [vmem:[#allocation5 + $0x13c] sm:$0xf]
    %v555 = vld [vmem:[#allocation5 + $0x140] sm:$0xf]
    %v556 = vld [vmem:[#allocation5 + $0x144] sm:$0xf]
    %v557 = vld [vmem:[#allocation5 + $0x148] sm:$0xf]
    %v558 = vld [vmem:[#allocation5 + $0x14c] sm:$0xf]
    %v559 = vld [vmem:[#allocation5 + $0x150] sm:$0xf]
    %v560 = vld [vmem:[#allocation5 + $0x154] sm:$0xf]
    %v561 = vld [vmem:[#allocation5 + $0x158] sm:$0xf]
    %v562 = vld [vmem:[#allocation5 + $0x15c] sm:$0xf]
    %v563 = vld [vmem:[#allocation5 + $0x160] sm:$0xf]
    %v564 = vld [vmem:[#allocation5 + $0x164] sm:$0xf]
    %v565 = vld [vmem:[#allocation5 + $0x168] sm:$0xf]
    %v566 = vld [vmem:[#allocation5 + $0x16c] sm:$0xf]
    %v567 = vld [vmem:[#allocation5 + $0x170] sm:$0xf]
    %v568 = vld [vmem:[#allocation5 + $0x174] sm:$0xf]
    %v569 = vld [vmem:[#allocation5 + $0x178] sm:$0xf]
    %v570 = vld [vmem:[#allocation5 + $0x17c] sm:$0xf]
    %v571 = vld [vmem:[#allocation5 + $0x180] sm:$0xf]
    %v572 = vld [vmem:[#allocation5 + $0x184] sm:$0xf]
    %v573 = vld [vmem:[#allocation5 + $0x188] sm:$0xf]
    %v574 = vld [vmem:[#allocation5 + $0x18c] sm:$0xf]
    %v575 = vld [vmem:[#allocation5 + $0x190] sm:$0xf]
    %v576 = vld [vmem:[#allocation5 + $0x194] sm:$0xf]
    %v577 = vld [vmem:[#allocation5 + $0x198] sm:$0xf]
    %v578 = vld [vmem:[#allocation5 + $0x19c] sm:$0xf]
    %v579 = vld [vmem:[#allocation5 + $0x1a0] sm:$0xf]
    %v580 = vld [vmem:[#allocation5 + $0x1a4] sm:$0xf]
    %v581 = vld [vmem:[#allocation5 + $0x1a8] sm:$0xf]
    %v582 = vld [vmem:[#allocation5 + $0x1ac] sm:$0xf]
    %v583 = vld [vmem:[#allocation5 + $0x1b0] sm:$0xf]
    %v584 = vld [vmem:[#allocation5 + $0x1b4] sm:$0xf]
    %v585 = vld [vmem:[#allocation5 + $0x1b8] sm:$0xf]
    %v586 = vld [vmem:[#allocation5 + $0x1bc] sm:$0xf]
    %v587 = vld [vmem:[#allocation5 + $0x1c0] sm:$0xf]
    %v588 = vld [vmem:[#allocation5 + $0x1c4] sm:$0xf]
    %v589 = vld [vmem:[#allocation5 + $0x1c8] sm:$0xf]
    %v590 = vld [vmem:[#allocation5 + $0x1cc] sm:$0xf]
    %v591 = vld [vmem:[#allocation5 + $0x1d0] sm:$0xf]
    %v592 = vld [vmem:[#allocation5 + $0x1d4] sm:$0xf]
    %v593 = vld [vmem:[#allocation5 + $0x1d8] sm:$0xf]
    %v594 = vld [vmem:[#allocation5 + $0x1dc] sm:$0xf]
    %v595 = vld [vmem:[#allocation5 + $0x1e0] sm:$0xf]
    %v596 = vld [vmem:[#allocation5 + $0x1e4] sm:$0xf]
    %v597 = vld [vmem:[#allocation5 + $0x1e8] sm:$0xf]
    %v598 = vld [vmem:[#allocation5 + $0x1ec] sm:$0xf]
    %v599 = vld [vmem:[#allocation5 + $0x1f0] sm:$0xf]
    %v600 = vld [vmem:[#allocation5 + $0x1f4] sm:$0xf]
    %v601 = vld [vmem:[#allocation5 + $0x1f8] sm:$0xf]
    %v602 = vld [vmem:[#allocation5 + $0x1fc] sm:$0xf]
    %v603 = vld [vmem:[#allocation5 + $0x200] sm:$0xf]
    %v604 = vld [vmem:[#allocation5 + $0x204] sm:$0xf]
    %v605 = vld [vmem:[#allocation5 + $0x208] sm:$0xf]
    %v606 = vld [vmem:[#allocation5 + $0x20c] sm:$0xf]
    %v607 = vld [vmem:[#allocation5 + $0x210] sm:$0xf]
    %v608 = vld [vmem:[#allocation5 + $0x214] sm:$0xf]
    %v609 = vld [vmem:[#allocation5 + $0x218] sm:$0xf]
    %v610 = vld [vmem:[#allocation5 + $0x21c] sm:$0xf]
    %v611 = vld [vmem:[#allocation5 + $0x220] sm:$0xf]
    %v612 = vld [vmem:[#allocation5 + $0x224] sm:$0xf]
    %v613 = vld [vmem:[#allocation5 + $0x228] sm:$0xf]
    %v614 = vld [vmem:[#allocation5 + $0x22c] sm:$0xf]
    %v615 = vld [vmem:[#allocation5 + $0x230] sm:$0xf]
    %v616 = vld [vmem:[#allocation5 + $0x234] sm:$0xf]
    %v617 = vld [vmem:[#allocation5 + $0x238] sm:$0xf]
    %v618 = vld [vmem:[#allocation5 + $0x23c] sm:$0xf]
    %v619 = vld [vmem:[#allocation5 + $0x240] sm:$0xf]
    %v620 = vld [vmem:[#allocation5 + $0x244] sm:$0xf]
    %v621 = vld [vmem:[#allocation5 + $0x248] sm:$0xf]
    %v622 = vld [vmem:[#allocation5 + $0x24c] sm:$0xf]
    %v623 = vld [vmem:[#allocation5 + $0x250] sm:$0xf]
    %v624 = vld [vmem:[#allocation5 + $0x254] sm:$0xf]
    %v625 = vld [vmem:[#allocation5 + $0x258] sm:$0xf]
    %v626 = vld [vmem:[#allocation5 + $0x25c] sm:$0xf]
    %v627 = vld [vmem:[#allocation5 + $0x260] sm:$0xf]
    %v628 = vld [vmem:[#allocation5 + $0x264] sm:$0xf]
    %v629 = vld [vmem:[#allocation5 + $0x268] sm:$0xf]
    %v630 = vld [vmem:[#allocation5 + $0x26c] sm:$0xf]
    %v631 = vld [vmem:[#allocation5 + $0x270] sm:$0xf]
    %v632 = vld [vmem:[#allocation5 + $0x274] sm:$0xf]
    %v633 = vld [vmem:[#allocation5 + $0x278] sm:$0xf]
    %v634 = vld [vmem:[#allocation5 + $0x27c] sm:$0xf]
    %v635 = vld [vmem:[#allocation5 + $0x280] sm:$0xf]
    %v636 = vld [vmem:[#allocation5 + $0x284] sm:$0xf]
    %v637 = vld [vmem:[#allocation5 + $0x288] sm:$0xf]
    %v638 = vld [vmem:[#allocation5 + $0x28c] sm:$0xf]
    %v639 = vld [vmem:[#allocation5 + $0x290] sm:$0xf]
    %v640 = vld [vmem:[#allocation5 + $0x294] sm:$0xf]
    %v641 = vld [vmem:[#allocation5 + $0x298] sm:$0xf]
    %v642 = vld [vmem:[#allocation5 + $0x29c] sm:$0xf]
    %v643 = vld [vmem:[#allocation5 + $0x2a0] sm:$0xf]
    %v644 = vld [vmem:[#allocation5 + $0x2a4] sm:$0xf]
    %v645 = vld [vmem:[#allocation5 + $0x2a8] sm:$0xf]
    %v646 = vld [vmem:[#allocation5 + $0x2ac] sm:$0xf]
    %v647 = vld [vmem:[#allocation5 + $0x2b0] sm:$0xf]
    %v648 = vld [vmem:[#allocation5 + $0x2b4] sm:$0xf]
    %v649 = vld [vmem:[#allocation5 + $0x2b8] sm:$0xf]
    %v650 = vld [vmem:[#allocation5 + $0x2bc] sm:$0xf]
    %v651 = vld [vmem:[#allocation5 + $0x2c0] sm:$0xf]
    %v652 = vld [vmem:[#allocation5 + $0x2c4] sm:$0xf]
    %v653 = vld [vmem:[#allocation5 + $0x2c8] sm:$0xf]
    %v654 = vld [vmem:[#allocation5 + $0x2cc] sm:$0xf]
    %v655 = vld [vmem:[#allocation5 + $0x2d0] sm:$0xf]
    %v656 = vld [vmem:[#allocation5 + $0x2d4] sm:$0xf]
    %v657 = vld [vmem:[#allocation5 + $0x2d8] sm:$0xf]
    %v658 = vld [vmem:[#allocation5 + $0x2dc] sm:$0xf]
    %v659 = vld [vmem:[#allocation5 + $0x2e0] sm:$0xf]
    %v660 = vld [vmem:[#allocation5 + $0x2e4] sm:$0xf]
    %v661 = vld [vmem:[#allocation5 + $0x2e8] sm:$0xf]
    %v662 = vld [vmem:[#allocation5 + $0x2ec] sm:$0xf]
    %v663 = vld [vmem:[#allocation5 + $0x2f0] sm:$0xf]
    %v664 = vld [vmem:[#allocation5 + $0x2f4] sm:$0xf]
    %v665 = vld [vmem:[#allocation5 + $0x2f8] sm:$0xf]
    %v666 = vld [vmem:[#allocation5 + $0x2fc] sm:$0xf]
    %v667 = vld [vmem:[#allocation5 + $0x300] sm:$0xf]
    %v668 = vld [vmem:[#allocation5 + $0x304] sm:$0xf]
    %v669 = vld [vmem:[#allocation5 + $0x308] sm:$0xf]
    %v670 = vld [vmem:[#allocation5 + $0x30c] sm:$0xf]
    %v671 = vld [vmem:[#allocation5 + $0x310] sm:$0xf]
    %v672 = vld [vmem:[#allocation5 + $0x314] sm:$0xf]
    %v673 = vld [vmem:[#allocation5 + $0x318] sm:$0xf]
    %v674 = vld [vmem:[#allocation5 + $0x31c] sm:$0xf]
    %v675 = vld [vmem:[#allocation5 + $0x320] sm:$0xf]
    %v676 = vld [vmem:[#allocation5 + $0x324] sm:$0xf]
    %v677 = vld [vmem:[#allocation5 + $0x328] sm:$0xf]
    %v678 = vld [vmem:[#allocation5 + $0x32c] sm:$0xf]
    %v679 = vld [vmem:[#allocation5 + $0x330] sm:$0xf]
    %v680 = vld [vmem:[#allocation5 + $0x334] sm:$0xf]
    %v681 = vld [vmem:[#allocation5 + $0x338] sm:$0xf]
    %v682 = vld [vmem:[#allocation5 + $0x33c] sm:$0xf]
    %v683 = vld [vmem:[#allocation5 + $0x340] sm:$0xf]
    %v684 = vld [vmem:[#allocation5 + $0x344] sm:$0xf]
    %v685 = vld [vmem:[#allocation5 + $0x348] sm:$0xf]
    %v686 = vld [vmem:[#allocation5 + $0x34c] sm:$0xf]
    %v687 = vld [vmem:[#allocation5 + $0x350] sm:$0xf]
    %v688 = vld [vmem:[#allocation5 + $0x354] sm:$0xf]
    %v689 = vld [vmem:[#allocation5 + $0x358] sm:$0xf]
    %v690 = vld [vmem:[#allocation5 + $0x35c] sm:$0xf]
    %v691 = vld [vmem:[#allocation5 + $0x360] sm:$0xf]
    %v692 = vld [vmem:[#allocation5 + $0x364] sm:$0xf]
    %v693 = vld [vmem:[#allocation5 + $0x368] sm:$0xf]
    %v694 = vld [vmem:[#allocation5 + $0x36c] sm:$0xf]
    %v695 = vld [vmem:[#allocation5 + $0x370] sm:$0xf]
    %v696 = vld [vmem:[#allocation5 + $0x374] sm:$0xf]
    %v697 = vld [vmem:[#allocation5 + $0x378] sm:$0xf]
    %v698 = vld [vmem:[#allocation5 + $0x37c] sm:$0xf]
    %v699 = vld [vmem:[#allocation5 + $0x380] sm:$0xf]
    %v700 = vld [vmem:[#allocation5 + $0x384] sm:$0xf]
    %v701 = vld [vmem:[#allocation5 + $0x388] sm:$0xf]
    %v702 = vld [vmem:[#allocation5 + $0x38c] sm:$0xf]
    %v703 = vld [vmem:[#allocation5 + $0x390] sm:$0xf]
    %v704 = vld [vmem:[#allocation5 + $0x394] sm:$0xf]
    %v705 = vld [vmem:[#allocation5 + $0x398] sm:$0xf]
    %v706 = vld [vmem:[#allocation5 + $0x39c] sm:$0xf]
    %v707 = vld [vmem:[#allocation5 + $0x3a0] sm:$0xf]
    %v708 = vld [vmem:[#allocation5 + $0x3a4] sm:$0xf]
    %v709 = vld [vmem:[#allocation5 + $0x3a8] sm:$0xf]
    %v710 = vld [vmem:[#allocation5 + $0x3ac] sm:$0xf]
    %v711 = vld [vmem:[#allocation5 + $0x3b0] sm:$0xf]
    %v712 = vld [vmem:[#allocation5 + $0x3b4] sm:$0xf]
    %v713 = vld [vmem:[#allocation5 + $0x3b8] sm:$0xf]
    %v714 = vld [vmem:[#allocation5 + $0x3bc] sm:$0xf]
    %v715 = vld [vmem:[#allocation5 + $0x3c0] sm:$0xf]
    %v716 = vld [vmem:[#allocation5 + $0x3c4] sm:$0xf]
    %v717 = vld [vmem:[#allocation5 + $0x3c8] sm:$0xf]
    %v718 = vld [vmem:[#allocation5 + $0x3cc] sm:$0xf]
    %v719 = vld [vmem:[#allocation5 + $0x3d0] sm:$0xf]
    %v720 = vld [vmem:[#allocation5 + $0x3d4] sm:$0xf]
    %v721 = vld [vmem:[#allocation5 + $0x3d8] sm:$0xf]
    %v722 = vld [vmem:[#allocation5 + $0x3dc] sm:$0xf]
    %v723 = vld [vmem:[#allocation5 + $0x3e0] sm:$0xf]
    %v724 = vld [vmem:[#allocation5 + $0x3e4] sm:$0xf]
    %v725 = vld [vmem:[#allocation5 + $0x3e8] sm:$0xf]
    %v726 = vld [vmem:[#allocation5 + $0x3ec] sm:$0xf]
    %v727 = vld [vmem:[#allocation5 + $0x3f0] sm:$0xf]
    %v728 = vld [vmem:[#allocation5 + $0x3f4] sm:$0xf]
    %v729 = vld [vmem:[#allocation5 + $0x3f8] sm:$0xf]
    %v730 = vld [vmem:[#allocation5 + $0x3fc] sm:$0xf]
    %v731 = vld [vmem:[#allocation5 + $0x400] sm:$0xf]
    %v732 = vld [vmem:[#allocation5 + $0x404] sm:$0xf]
    %v733 = vld [vmem:[#allocation5 + $0x408] sm:$0xf]
    %v734 = vld [vmem:[#allocation5 + $0x40c] sm:$0xf]
    %v735 = vld [vmem:[#allocation5 + $0x410] sm:$0xf]
    %v736 = vld [vmem:[#allocation5 + $0x414] sm:$0xf]
    %v737 = vld [vmem:[#allocation5 + $0x418] sm:$0xf]
    %v738 = vld [vmem:[#allocation5 + $0x41c] sm:$0xf]
    %v739 = vld [vmem:[#allocation5 + $0x420] sm:$0xf]
    %v740 = vld [vmem:[#allocation5 + $0x424] sm:$0xf]
    %v741 = vld [vmem:[#allocation5 + $0x428] sm:$0xf]
    %v742 = vld [vmem:[#allocation5 + $0x42c] sm:$0xf]
    %v743 = vld [vmem:[#allocation5 + $0x430] sm:$0xf]
    %v744 = vld [vmem:[#allocation5 + $0x434] sm:$0xf]
    %v745 = vld [vmem:[#allocation5 + $0x438] sm:$0xf]
    %v746 = vld [vmem:[#allocation5 + $0x43c] sm:$0xf]
    %v747 = vld [vmem:[#allocation5 + $0x440] sm:$0xf]
    %v748 = vld [vmem:[#allocation5 + $0x444] sm:$0xf]
    %v749 = vld [vmem:[#allocation5 + $0x448] sm:$0xf]
    %v750 = vld [vmem:[#allocation5 + $0x44c] sm:$0xf]
    %v751 = vld [vmem:[#allocation5 + $0x450] sm:$0xf]
    %v752 = vld [vmem:[#allocation5 + $0x454] sm:$0xf]
    %v753 = vld [vmem:[#allocation5 + $0x458] sm:$0xf]
    %v754 = vld [vmem:[#allocation5 + $0x45c] sm:$0xf]
    %v755 = vld [vmem:[#allocation5 + $0x460] sm:$0xf]
    %v756 = vld [vmem:[#allocation5 + $0x464] sm:$0xf]
    %v757 = vld [vmem:[#allocation5 + $0x468] sm:$0xf]
    %v758 = vld [vmem:[#allocation5 + $0x46c] sm:$0xf]
    %v759 = vld [vmem:[#allocation5 + $0x470] sm:$0xf]
    %v760 = vld [vmem:[#allocation5 + $0x474] sm:$0xf]
    %v761 = vld [vmem:[#allocation5 + $0x478] sm:$0xf]
    %v762 = vld [vmem:[#allocation5 + $0x47c] sm:$0xf]
    %v763 = vld [vmem:[#allocation5 + $0x480] sm:$0xf]
    %v764 = vld [vmem:[#allocation5 + $0x484] sm:$0xf]
    %v765 = vld [vmem:[#allocation5 + $0x488] sm:$0xf]
    %v766 = vld [vmem:[#allocation5 + $0x48c] sm:$0xf]
    %v767 = vld [vmem:[#allocation5 + $0x490] sm:$0xf]
    %v768 = vld [vmem:[#allocation5 + $0x494] sm:$0xf]
    %v769 = vld [vmem:[#allocation5 + $0x498] sm:$0xf]
    %v770 = vld [vmem:[#allocation5 + $0x49c] sm:$0xf]
    %v771 = vld [vmem:[#allocation5 + $0x4a0] sm:$0xf]
    %v772 = vld [vmem:[#allocation5 + $0x4a4] sm:$0xf]
    %v773 = vld [vmem:[#allocation5 + $0x4a8] sm:$0xf]
    %v774 = vld [vmem:[#allocation5 + $0x4ac] sm:$0xf]
    %v775 = vld [vmem:[#allocation5 + $0x4b0] sm:$0xf]
    %v776 = vld [vmem:[#allocation5 + $0x4b4] sm:$0xf]
    %v777 = vld [vmem:[#allocation5 + $0x4b8] sm:$0xf]
    %v778 = vld [vmem:[#allocation5 + $0x4bc] sm:$0xf]
    %v779 = vld [vmem:[#allocation5 + $0x4c0] sm:$0xf]
    %v780 = vld [vmem:[#allocation5 + $0x4c4] sm:$0xf]
    %v781 = vld [vmem:[#allocation5 + $0x4c8] sm:$0xf]
    %v782 = vld [vmem:[#allocation5 + $0x4cc] sm:$0xf]
    %v783 = vld [vmem:[#allocation5 + $0x4d0] sm:$0xf]
    %v784 = vld [vmem:[#allocation5 + $0x4d4] sm:$0xf]
    %v785 = vld [vmem:[#allocation5 + $0x4d8] sm:$0xf]
    %v786 = vld [vmem:[#allocation5 + $0x4dc] sm:$0xf]
    %v787 = vld [vmem:[#allocation5 + $0x4e0] sm:$0xf]
    %v788 = vld [vmem:[#allocation5 + $0x4e4] sm:$0xf]
    %v789 = vld [vmem:[#allocation5 + $0x4e8] sm:$0xf]
    %v790 = vld [vmem:[#allocation5 + $0x4ec] sm:$0xf]
    %v791 = vld [vmem:[#allocation5 + $0x4f0] sm:$0xf]
    %v792 = vld [vmem:[#allocation5 + $0x4f4] sm:$0xf]
    %v793 = vld [vmem:[#allocation5 + $0x4f8] sm:$0xf]
    %v794 = vld [vmem:[#allocation5 + $0x4fc] sm:$0xf]
    %v795 = vld [vmem:[#allocation5 + $0x500] sm:$0xf]
    %v796 = vld [vmem:[#allocation5 + $0x504] sm:$0xf]
    %v797 = vld [vmem:[#allocation5 + $0x508] sm:$0xf]
    %v798 = vld [vmem:[#allocation5 + $0x50c] sm:$0xf]
    %v799 = vld [vmem:[#allocation5 + $0x510] sm:$0xf]
    %v800 = vld [vmem:[#allocation5 + $0x514] sm:$0xf]
    %v801 = vld [vmem:[#allocation5 + $0x518] sm:$0xf]
    %v802 = vld [vmem:[#allocation5 + $0x51c] sm:$0xf]
    %v803 = vld [vmem:[#allocation5 + $0x520] sm:$0xf]
    %v804 = vld [vmem:[#allocation5 + $0x524] sm:$0xf]
    %v805 = vld [vmem:[#allocation5 + $0x528] sm:$0xf]
    %v806 = vld [vmem:[#allocation5 + $0x52c] sm:$0xf]
    %v807 = vld [vmem:[#allocation5 + $0x530] sm:$0xf]
    %v808 = vld [vmem:[#allocation5 + $0x534] sm:$0xf]
    %v809 = vld [vmem:[#allocation5 + $0x538] sm:$0xf]
    %v810 = vld [vmem:[#allocation5 + $0x53c] sm:$0xf]
    %v811 = vld [vmem:[#allocation5 + $0x540] sm:$0xf]
    %v812 = vld [vmem:[#allocation5 + $0x544] sm:$0xf]
    %v813 = vld [vmem:[#allocation5 + $0x548] sm:$0xf]
    %v814 = vld [vmem:[#allocation5 + $0x54c] sm:$0xf]
    %v815 = vld [vmem:[#allocation5 + $0x550] sm:$0xf]
    %v816 = vld [vmem:[#allocation5 + $0x554] sm:$0xf]
    %v817 = vld [vmem:[#allocation5 + $0x558] sm:$0xf]
    %v818 = vld [vmem:[#allocation5 + $0x55c] sm:$0xf]
    %v819 = vld [vmem:[#allocation5 + $0x560] sm:$0xf]
    %v820 = vld [vmem:[#allocation5 + $0x564] sm:$0xf]
    %v821 = vld [vmem:[#allocation5 + $0x568] sm:$0xf]
    %v822 = vld [vmem:[#allocation5 + $0x56c] sm:$0xf]
    %v823 = vld [vmem:[#allocation5 + $0x570] sm:$0xf]
    %v824 = vld [vmem:[#allocation5 + $0x574] sm:$0xf]
    %v825 = vld [vmem:[#allocation5 + $0x578] sm:$0xf]
    %v826 = vld [vmem:[#allocation5 + $0x57c] sm:$0xf]
    %v827 = vld [vmem:[#allocation5 + $0x580] sm:$0xf]
    %v828 = vld [vmem:[#allocation5 + $0x584] sm:$0xf]
    %v829 = vld [vmem:[#allocation5 + $0x588] sm:$0xf]
    %v830 = vld [vmem:[#allocation5 + $0x58c] sm:$0xf]
    %v831 = vld [vmem:[#allocation5 + $0x590] sm:$0xf]
    %v832 = vld [vmem:[#allocation5 + $0x594] sm:$0xf]
    %v833 = vld [vmem:[#allocation5 + $0x598] sm:$0xf]
    %v834 = vld [vmem:[#allocation5 + $0x59c] sm:$0xf]
    %v835 = vld [vmem:[#allocation5 + $0x5a0] sm:$0xf]
    %v836 = vld [vmem:[#allocation5 + $0x5a4] sm:$0xf]
    %v837 = vld [vmem:[#allocation5 + $0x5a8] sm:$0xf]
    %v838 = vld [vmem:[#allocation5 + $0x5ac] sm:$0xf]
    %v839 = vld [vmem:[#allocation5 + $0x5b0] sm:$0xf]
    %v840 = vld [vmem:[#allocation5 + $0x5b4] sm:$0xf]
    %v841 = vld [vmem:[#allocation5 + $0x5b8] sm:$0xf]
    %v842 = vld [vmem:[#allocation5 + $0x5bc] sm:$0xf]
    %v843 = vld [vmem:[#allocation5 + $0x5c0] sm:$0xf]
    %v844 = vld [vmem:[#allocation5 + $0x5c4] sm:$0xf]
    %v845 = vld [vmem:[#allocation5 + $0x5c8] sm:$0xf]
    %v846 = vld [vmem:[#allocation5 + $0x5cc] sm:$0xf]
    %v847 = vld [vmem:[#allocation5 + $0x5d0] sm:$0xf]
    %v848 = vld [vmem:[#allocation5 + $0x5d4] sm:$0xf]
    %v849 = vld [vmem:[#allocation5 + $0x5d8] sm:$0xf]
    %v850 = vld [vmem:[#allocation5 + $0x5dc] sm:$0xf]
    %v851 = vld [vmem:[#allocation5 + $0x5e0] sm:$0xf]
    %v852 = vld [vmem:[#allocation5 + $0x5e4] sm:$0xf]
    %v853 = vld [vmem:[#allocation5 + $0x5e8] sm:$0xf]
    %v854 = vld [vmem:[#allocation5 + $0x5ec] sm:$0xf]
    %v855 = vld [vmem:[#allocation5 + $0x5f0] sm:$0xf]
    %v856 = vld [vmem:[#allocation5 + $0x5f4] sm:$0xf]
    %v857 = vld [vmem:[#allocation5 + $0x5f8] sm:$0xf]
    %v858 = vld [vmem:[#allocation5 + $0x5fc] sm:$0xf]
    %v859 = vld [vmem:[#allocation5 + $0x600] sm:$0xf]
    %v860 = vld [vmem:[#allocation5 + $0x604] sm:$0xf]
    %v861 = vld [vmem:[#allocation5 + $0x608] sm:$0xf]
    %v862 = vld [vmem:[#allocation5 + $0x60c] sm:$0xf]
    %v863 = vld [vmem:[#allocation5 + $0x610] sm:$0xf]
    %v864 = vld [vmem:[#allocation5 + $0x614] sm:$0xf]
    %v865 = vld [vmem:[#allocation5 + $0x618] sm:$0xf]
    %v866 = vld [vmem:[#allocation5 + $0x61c] sm:$0xf]
    %v867 = vld [vmem:[#allocation5 + $0x620] sm:$0xf]
    %v868 = vld [vmem:[#allocation5 + $0x624] sm:$0xf]
    %v869 = vld [vmem:[#allocation5 + $0x628] sm:$0xf]
    %v870 = vld [vmem:[#allocation5 + $0x62c] sm:$0xf]
    %v871 = vld [vmem:[#allocation5 + $0x630] sm:$0xf]
    %v872 = vld [vmem:[#allocation5 + $0x634] sm:$0xf]
    %v873 = vld [vmem:[#allocation5 + $0x638] sm:$0xf]
    %v874 = vld [vmem:[#allocation5 + $0x63c] sm:$0xf]
    %v875 = vld [vmem:[#allocation5 + $0x640] sm:$0xf]
    %v876 = vld [vmem:[#allocation5 + $0x644] sm:$0xf]
    %v877 = vld [vmem:[#allocation5 + $0x648] sm:$0xf]
    %v878 = vld [vmem:[#allocation5 + $0x64c] sm:$0xf]
    %v879 = vld [vmem:[#allocation5 + $0x650] sm:$0xf]
    %v880 = vld [vmem:[#allocation5 + $0x654] sm:$0xf]
    %v881 = vld [vmem:[#allocation5 + $0x658] sm:$0xf]
    %v882 = vld [vmem:[#allocation5 + $0x65c] sm:$0xf]
    %v883 = vld [vmem:[#allocation5 + $0x660] sm:$0xf]
    %v884 = vld [vmem:[#allocation5 + $0x664] sm:$0xf]
    %v885 = vld [vmem:[#allocation5 + $0x668] sm:$0xf]
    %v886 = vld [vmem:[#allocation5 + $0x66c] sm:$0xf]
    %v887 = vld [vmem:[#allocation5 + $0x670] sm:$0xf]
    %v888 = vld [vmem:[#allocation5 + $0x674] sm:$0xf]
    %v889 = vld [vmem:[#allocation5 + $0x678] sm:$0xf]
    %v890 = vld [vmem:[#allocation5 + $0x67c] sm:$0xf]
    %v891 = vld [vmem:[#allocation5 + $0x680] sm:$0xf]
    %v892 = vld [vmem:[#allocation5 + $0x684] sm:$0xf]
    %v893 = vld [vmem:[#allocation5 + $0x688] sm:$0xf]
    %v894 = vld [vmem:[#allocation5 + $0x68c] sm:$0xf]
    %v895 = vld [vmem:[#allocation5 + $0x690] sm:$0xf]
    %v896 = vld [vmem:[#allocation5 + $0x694] sm:$0xf]
    %v897 = vld [vmem:[#allocation5 + $0x698] sm:$0xf]
    %v898 = vld [vmem:[#allocation5 + $0x69c] sm:$0xf]
    %v899 = vld [vmem:[#allocation5 + $0x6a0] sm:$0xf]
    %v900 = vld [vmem:[#allocation5 + $0x6a4] sm:$0xf]
    %v901 = vld [vmem:[#allocation5 + $0x6a8] sm:$0xf]
    %v902 = vld [vmem:[#allocation5 + $0x6ac] sm:$0xf]
    %v903 = vld [vmem:[#allocation5 + $0x6b0] sm:$0xf]
    %v904 = vld [vmem:[#allocation5 + $0x6b4] sm:$0xf]
    %v905 = vld [vmem:[#allocation5 + $0x6b8] sm:$0xf]
    %v906 = vld [vmem:[#allocation5 + $0x6bc] sm:$0xf]
    %v907 = vld [vmem:[#allocation5 + $0x6c0] sm:$0xf]
    %v908 = vld [vmem:[#allocation5 + $0x6c4] sm:$0xf]
    %v909 = vld [vmem:[#allocation5 + $0x6c8] sm:$0xf]
    %v910 = vld [vmem:[#allocation5 + $0x6cc] sm:$0xf]
    %v911 = vld [vmem:[#allocation5 + $0x6d0] sm:$0xf]
    %v912 = vld [vmem:[#allocation5 + $0x6d4] sm:$0xf]
    %v913 = vld [vmem:[#allocation5 + $0x6d8] sm:$0xf]
    %v914 = vld [vmem:[#allocation5 + $0x6dc] sm:$0xf]
    %v915 = vld [vmem:[#allocation5 + $0x6e0] sm:$0xf]
    %v916 = vld [vmem:[#allocation5 + $0x6e4] sm:$0xf]
    %v917 = vld [vmem:[#allocation5 + $0x6e8] sm:$0xf]
    %v918 = vld [vmem:[#allocation5 + $0x6ec] sm:$0xf]
    %v919 = vld [vmem:[#allocation5 + $0x6f0] sm:$0xf]
    %v920 = vld [vmem:[#allocation5 + $0x6f4] sm:$0xf]
    %v921 = vld [vmem:[#allocation5 + $0x6f8] sm:$0xf]
    %v922 = vld [vmem:[#allocation5 + $0x6fc] sm:$0xf]
    %v923 = vld [vmem:[#allocation5 + $0x700] sm:$0xf]
    %v924 = vld [vmem:[#allocation5 + $0x704] sm:$0xf]
    %v925 = vld [vmem:[#allocation5 + $0x708] sm:$0xf]
    %v926 = vld [vmem:[#allocation5 + $0x70c] sm:$0xf]
    %v927 = vld [vmem:[#allocation5 + $0x710] sm:$0xf]
    %v928 = vld [vmem:[#allocation5 + $0x714] sm:$0xf]
    %v929 = vld [vmem:[#allocation5 + $0x718] sm:$0xf]
    %v930 = vld [vmem:[#allocation5 + $0x71c] sm:$0xf]
    %v931 = vld [vmem:[#allocation5 + $0x720] sm:$0xf]
    %v932 = vld [vmem:[#allocation5 + $0x724] sm:$0xf]
    %v933 = vld [vmem:[#allocation5 + $0x728] sm:$0xf]
    %v934 = vld [vmem:[#allocation5 + $0x72c] sm:$0xf]
    %v935 = vld [vmem:[#allocation5 + $0x730] sm:$0xf]
    %v936 = vld [vmem:[#allocation5 + $0x734] sm:$0xf]
    %v937 = vld [vmem:[#allocation5 + $0x738] sm:$0xf]
    %v938 = vld [vmem:[#allocation5 + $0x73c] sm:$0xf]
    %v939 = vld [vmem:[#allocation5 + $0x740] sm:$0xf]
    %v940 = vld [vmem:[#allocation5 + $0x744] sm:$0xf]
    %v941 = vld [vmem:[#allocation5 + $0x748] sm:$0xf]
    %v942 = vld [vmem:[#allocation5 + $0x74c] sm:$0xf]
    %v943 = vld [vmem:[#allocation5 + $0x750] sm:$0xf]
    %v944 = vld [vmem:[#allocation5 + $0x754] sm:$0xf]
    %v945 = vld [vmem:[#allocation5 + $0x758] sm:$0xf]
    %v946 = vld [vmem:[#allocation5 + $0x75c] sm:$0xf]
    %v947 = vld [vmem:[#allocation5 + $0x760] sm:$0xf]
    %v948 = vld [vmem:[#allocation5 + $0x764] sm:$0xf]
    %v949 = vld [vmem:[#allocation5 + $0x768] sm:$0xf]
    %v950 = vld [vmem:[#allocation5 + $0x76c] sm:$0xf]
    %v951 = vld [vmem:[#allocation5 + $0x770] sm:$0xf]
    %v952 = vld [vmem:[#allocation5 + $0x774] sm:$0xf]
    %v953 = vld [vmem:[#allocation5 + $0x778] sm:$0xf]
    %v954 = vld [vmem:[#allocation5 + $0x77c] sm:$0xf]
    %v955 = vld [vmem:[#allocation5 + $0x780] sm:$0xf]
    %v956 = vld [vmem:[#allocation5 + $0x784] sm:$0xf]
    %v957 = vld [vmem:[#allocation5 + $0x788] sm:$0xf]
    %v958 = vld [vmem:[#allocation5 + $0x78c] sm:$0xf]
    %v959 = vld [vmem:[#allocation5 + $0x790] sm:$0xf]
    %v960 = vld [vmem:[#allocation5 + $0x794] sm:$0xf]
    %v961 = vld [vmem:[#allocation5 + $0x798] sm:$0xf]
    %v962 = vld [vmem:[#allocation5 + $0x79c] sm:$0xf]
    %v963 = vld [vmem:[#allocation5 + $0x7a0] sm:$0xf]
    %v964 = vld [vmem:[#allocation5 + $0x7a4] sm:$0xf]
    %v965 = vld [vmem:[#allocation5 + $0x7a8] sm:$0xf]
    %v966 = vld [vmem:[#allocation5 + $0x7ac] sm:$0xf]
    %v967 = vld [vmem:[#allocation5 + $0x7b0] sm:$0xf]
    %v968 = vld [vmem:[#allocation5 + $0x7b4] sm:$0xf]
    %v969 = vld [vmem:[#allocation5 + $0x7b8] sm:$0xf]
    %v970 = vld [vmem:[#allocation5 + $0x7bc] sm:$0xf]
    %v971 = vld [vmem:[#allocation5 + $0x7c0] sm:$0xf]
    %v972 = vld [vmem:[#allocation5 + $0x7c4] sm:$0xf]
    %v973 = vld [vmem:[#allocation5 + $0x7c8] sm:$0xf]
    %v974 = vld [vmem:[#allocation5 + $0x7cc] sm:$0xf]
    %v975 = vld [vmem:[#allocation5 + $0x7d0] sm:$0xf]
    %v976 = vld [vmem:[#allocation5 + $0x7d4] sm:$0xf]
    %v977 = vld [vmem:[#allocation5 + $0x7d8] sm:$0xf]
    %v978 = vld [vmem:[#allocation5 + $0x7dc] sm:$0xf]
    %v979 = vld [vmem:[#allocation5 + $0x7e0] sm:$0xf]
    %v980 = vld [vmem:[#allocation5 + $0x7e4] sm:$0xf]
    %v981 = vld [vmem:[#allocation5 + $0x7e8] sm:$0xf]
    %v982 = vld [vmem:[#allocation5 + $0x7ec] sm:$0xf]
    %v983 = vld [vmem:[#allocation5 + $0x7f0] sm:$0xf]
    %v984 = vld [vmem:[#allocation5 + $0x7f4] sm:$0xf]
    %v985 = vld [vmem:[#allocation5 + $0x7f8] sm:$0xf]
    %v986 = vld [vmem:[#allocation5 + $0x7fc] sm:$0xf]
    %v987 = vld [vmem:[#allocation5 + $0x800] sm:$0xf]
    %v988 = vld [vmem:[#allocation5 + $0x804] sm:$0xf]
    %v989 = vld [vmem:[#allocation5 + $0x808] sm:$0xf]
    %v990 = vld [vmem:[#allocation5 + $0x80c] sm:$0xf]
    %v991 = vld [vmem:[#allocation5 + $0x810] sm:$0xf]
    %v992 = vld [vmem:[#allocation5 + $0x814] sm:$0xf]
    %v993 = vld [vmem:[#allocation5 + $0x818] sm:$0xf]
    %v994 = vld [vmem:[#allocation5 + $0x81c] sm:$0xf]
    %v995 = vld [vmem:[#allocation5 + $0x820] sm:$0xf]
    %v996 = vld [vmem:[#allocation5 + $0x824] sm:$0xf]
    %v997 = vld [vmem:[#allocation5 + $0x828] sm:$0xf]
    %v998 = vld [vmem:[#allocation5 + $0x82c] sm:$0xf]
    %v999 = vld [vmem:[#allocation5 + $0x830] sm:$0xf]
    %v1000 = vld [vmem:[#allocation5 + $0x834] sm:$0xf]
    %v1001 = vld [vmem:[#allocation5 + $0x838] sm:$0xf]
    %v1002 = vld [vmem:[#allocation5 + $0x83c] sm:$0xf]
    %v1003 = vld [vmem:[#allocation5 + $0x840] sm:$0xf]
    %v1004 = vld [vmem:[#allocation5 + $0x844] sm:$0xf]
    %v1005 = vld [vmem:[#allocation5 + $0x848] sm:$0xf]
    %v1006 = vld [vmem:[#allocation5 + $0x84c] sm:$0xf]
    %v1007 = vld [vmem:[#allocation5 + $0x850] sm:$0xf]
    %v1008 = vld [vmem:[#allocation5 + $0x854] sm:$0xf]
    %v1009 = vld [vmem:[#allocation5 + $0x858] sm:$0xf]
    %v1010 = vld [vmem:[#allocation5 + $0x85c] sm:$0xf]
    %v1011 = vld [vmem:[#allocation5 + $0x860] sm:$0xf]
    %v1012 = vld [vmem:[#allocation5 + $0x864] sm:$0xf]
    %v1013 = vld [vmem:[#allocation5 + $0x868] sm:$0xf]
    %v1014 = vld [vmem:[#allocation5 + $0x86c] sm:$0xf]
    %v1015 = vld [vmem:[#allocation5 + $0x870] sm:$0xf]
    %v1016 = vld [vmem:[#allocation5 + $0x874] sm:$0xf]
    %v1017 = vld [vmem:[#allocation5 + $0x878] sm:$0xf]
    %v1018 = vld [vmem:[#allocation5 + $0x87c] sm:$0xf]
    %v1019 = vld [vmem:[#allocation5 + $0x880] sm:$0xf]
    %v1020 = vld [vmem:[#allocation5 + $0x884] sm:$0xf]
    %v1021 = vld [vmem:[#allocation5 + $0x888] sm:$0xf]
    %v1022 = vld [vmem:[#allocation5 + $0x88c] sm:$0xf]
    %v1023 = vld [vmem:[#allocation5 + $0x890] sm:$0xf]
    %v1024 = vld [vmem:[#allocation5 + $0x894] sm:$0xf]
    %v1025 = vld [vmem:[#allocation5 + $0x898] sm:$0xf]
    %v1026 = vld [vmem:[#allocation5 + $0x89c] sm:$0xf]
    %v1027 = vld [vmem:[#allocation5 + $0x8a0] sm:$0xf]
    %v1028 = vld [vmem:[#allocation5 + $0x8a4] sm:$0xf]
    %v1029 = vld [vmem:[#allocation5 + $0x8a8] sm:$0xf]
    %v1030 = vld [vmem:[#allocation5 + $0x8ac] sm:$0xf]
    %v1031 = vld [vmem:[#allocation5 + $0x8b0] sm:$0xf]
    %v1032 = vld [vmem:[#allocation5 + $0x8b4] sm:$0xf]
    %v1033 = vld [vmem:[#allocation5 + $0x8b8] sm:$0xf]
    %v1034 = vld [vmem:[#allocation5 + $0x8bc] sm:$0xf]
    %v1035 = vld [vmem:[#allocation5 + $0x8c0] sm:$0xf]
    %v1036 = vld [vmem:[#allocation5 + $0x8c4] sm:$0xf]
    %v1037 = vld [vmem:[#allocation5 + $0x8c8] sm:$0xf]
    %v1038 = vld [vmem:[#allocation5 + $0x8cc] sm:$0xf]
    %v1039 = vld [vmem:[#allocation5 + $0x8d0] sm:$0xf]
    %v1040 = vld [vmem:[#allocation5 + $0x8d4] sm:$0xf]
    %v1041 = vld [vmem:[#allocation5 + $0x8d8] sm:$0xf]
    %v1042 = vld [vmem:[#allocation5 + $0x8dc] sm:$0xf]
    %v1043 = vld [vmem:[#allocation5 + $0x8e0] sm:$0xf]
    %v1044 = vld [vmem:[#allocation5 + $0x8e4] sm:$0xf]
    %v1045 = vld [vmem:[#allocation5 + $0x8e8] sm:$0xf]
    %v1046 = vld [vmem:[#allocation5 + $0x8ec] sm:$0xf]
    %v1047 = vld [vmem:[#allocation5 + $0x8f0] sm:$0xf]
    %v1048 = vld [vmem:[#allocation5 + $0x8f4] sm:$0xf]
    %v1049 = vld [vmem:[#allocation5 + $0x8f8] sm:$0xf]
    %v1050 = vld [vmem:[#allocation5 + $0x8fc] sm:$0xf]
    %v1051 = vld [vmem:[#allocation5 + $0x900] sm:$0xf]
    %v1052 = vld [vmem:[#allocation5 + $0x904] sm:$0xf]
    %v1053 = vld [vmem:[#allocation5 + $0x908] sm:$0xf]
    %v1054 = vld [vmem:[#allocation5 + $0x90c] sm:$0xf]
    %v1055 = vld [vmem:[#allocation5 + $0x910] sm:$0xf]
    %v1056 = vld [vmem:[#allocation5 + $0x914] sm:$0xf]
    %v1057 = vld [vmem:[#allocation5 + $0x918] sm:$0xf]
    %v1058 = vld [vmem:[#allocation5 + $0x91c] sm:$0xf]
    %v1059 = vld [vmem:[#allocation5 + $0x920] sm:$0xf]
    %v1060 = vld [vmem:[#allocation5 + $0x924] sm:$0xf]
    %v1061 = vld [vmem:[#allocation5 + $0x928] sm:$0xf]
    %v1062 = vld [vmem:[#allocation5 + $0x92c] sm:$0xf]
    %v1063 = vld [vmem:[#allocation5 + $0x930] sm:$0xf]
    %v1064 = vld [vmem:[#allocation5 + $0x934] sm:$0xf]
    %v1065 = vld [vmem:[#allocation5 + $0x938] sm:$0xf]
    %v1066 = vld [vmem:[#allocation5 + $0x93c] sm:$0xf]
    %v1067 = vld [vmem:[#allocation5 + $0x940] sm:$0xf]
    %v1068 = vld [vmem:[#allocation5 + $0x944] sm:$0xf]
    %v1069 = vld [vmem:[#allocation5 + $0x948] sm:$0xf]
    %v1070 = vld [vmem:[#allocation5 + $0x94c] sm:$0xf]
    %v1071 = vld [vmem:[#allocation5 + $0x950] sm:$0xf]
    %v1072 = vld [vmem:[#allocation5 + $0x954] sm:$0xf]
    %v1073 = vld [vmem:[#allocation5 + $0x958] sm:$0xf]
    %v1074 = vld [vmem:[#allocation5 + $0x95c] sm:$0xf]
    %v1075 = vld [vmem:[#allocation5 + $0x960] sm:$0xf]
    %v1076 = vld [vmem:[#allocation5 + $0x964] sm:$0xf]
    %v1077 = vld [vmem:[#allocation5 + $0x968] sm:$0xf]
    %v1078 = vld [vmem:[#allocation5 + $0x96c] sm:$0xf]
    %v1079 = vld [vmem:[#allocation5 + $0x970] sm:$0xf]
    %v1080 = vld [vmem:[#allocation5 + $0x974] sm:$0xf]
    %v1081 = vld [vmem:[#allocation5 + $0x978] sm:$0xf]
    %v1082 = vld [vmem:[#allocation5 + $0x97c] sm:$0xf]
    %v1083 = vld [vmem:[#allocation5 + $0x980] sm:$0xf]
    %v1084 = vld [vmem:[#allocation5 + $0x984] sm:$0xf]
    %v1085 = vld [vmem:[#allocation5 + $0x988] sm:$0xf]
    %v1086 = vld [vmem:[#allocation5 + $0x98c] sm:$0xf]
    %v1087 = vld [vmem:[#allocation5 + $0x990] sm:$0xf]
    %v1088 = vld [vmem:[#allocation5 + $0x994] sm:$0xf]
    %v1089 = vld [vmem:[#allocation5 + $0x998] sm:$0xf]
    %v1090 = vld [vmem:[#allocation5 + $0x99c] sm:$0xf]
    %v1091 = vld [vmem:[#allocation5 + $0x9a0] sm:$0xf]
    %v1092 = vld [vmem:[#allocation5 + $0x9a4] sm:$0xf]
    %v1093 = vld [vmem:[#allocation5 + $0x9a8] sm:$0xf]
    %v1094 = vld [vmem:[#allocation5 + $0x9ac] sm:$0xf]
    %v1095 = vld [vmem:[#allocation5 + $0x9b0] sm:$0xf]
    %v1096 = vld [vmem:[#allocation5 + $0x9b4] sm:$0xf]
    %v1097 = vld [vmem:[#allocation5 + $0x9b8] sm:$0xf]
    %v1098 = vld [vmem:[#allocation5 + $0x9bc] sm:$0xf]
    %v1099 = vld [vmem:[#allocation5 + $0x9c0] sm:$0xf]
    %v1100 = vld [vmem:[#allocation5 + $0x9c4] sm:$0xf]
    %v1101 = vld [vmem:[#allocation5 + $0x9c8] sm:$0xf]
    %v1102 = vld [vmem:[#allocation5 + $0x9cc] sm:$0xf]
    %v1103 = vld [vmem:[#allocation5 + $0x9d0] sm:$0xf]
    %v1104 = vld [vmem:[#allocation5 + $0x9d4] sm:$0xf]
    %v1105 = vld [vmem:[#allocation5 + $0x9d8] sm:$0xf]
    %v1106 = vld [vmem:[#allocation5 + $0x9dc] sm:$0xf]
    %v1107 = vld [vmem:[#allocation5 + $0x9e0] sm:$0xf]
    %v1108 = vld [vmem:[#allocation5 + $0x9e4] sm:$0xf]
    %v1109 = vld [vmem:[#allocation5 + $0x9e8] sm:$0xf]
    %v1110 = vld [vmem:[#allocation5 + $0x9ec] sm:$0xf]
    %v1111 = vld [vmem:[#allocation5 + $0x9f0] sm:$0xf]
    %v1112 = vld [vmem:[#allocation5 + $0x9f4] sm:$0xf]
    %v1113 = vld [vmem:[#allocation5 + $0x9f8] sm:$0xf]
    %v1114 = vld [vmem:[#allocation5 + $0x9fc] sm:$0xf]
    %v1115 = vld [vmem:[#allocation5 + $0xa00] sm:$0xf]
    %v1116 = vld [vmem:[#allocation5 + $0xa04] sm:$0xf]
    %v1117 = vld [vmem:[#allocation5 + $0xa08] sm:$0xf]
    %v1118 = vld [vmem:[#allocation5 + $0xa0c] sm:$0xf]
    %v1119 = vld [vmem:[#allocation5 + $0xa10] sm:$0xf]
    %v1120 = vld [vmem:[#allocation5 + $0xa14] sm:$0xf]
    %v1121 = vld [vmem:[#allocation5 + $0xa18] sm:$0xf]
    %v1122 = vld [vmem:[#allocation5 + $0xa1c] sm:$0xf]
    %v1123 = vld [vmem:[#allocation5 + $0xa20] sm:$0xf]
    %v1124 = vld [vmem:[#allocation5 + $0xa24] sm:$0xf]
    %v1125 = vld [vmem:[#allocation5 + $0xa28] sm:$0xf]
    %v1126 = vld [vmem:[#allocation5 + $0xa2c] sm:$0xf]
    %v1127 = vld [vmem:[#allocation5 + $0xa30] sm:$0xf]
    %v1128 = vld [vmem:[#allocation5 + $0xa34] sm:$0xf]
    %v1129 = vld [vmem:[#allocation5 + $0xa38] sm:$0xf]
    %v1130 = vld [vmem:[#allocation5 + $0xa3c] sm:$0xf]
    %v1131 = vld [vmem:[#allocation5 + $0xa40] sm:$0xf]
    %v1132 = vld [vmem:[#allocation5 + $0xa44] sm:$0xf]
    %v1133 = vld [vmem:[#allocation5 + $0xa48] sm:$0xf]
    %v1134 = vld [vmem:[#allocation5 + $0xa4c] sm:$0xf]
    %v1135 = vld [vmem:[#allocation5 + $0xa50] sm:$0xf]
    %v1136 = vld [vmem:[#allocation5 + $0xa54] sm:$0xf]
    %v1137 = vld [vmem:[#allocation5 + $0xa58] sm:$0xf]
    %v1138 = vld [vmem:[#allocation5 + $0xa5c] sm:$0xf]
    %v1139 = vld [vmem:[#allocation5 + $0xa60] sm:$0xf]
    %v1140 = vld [vmem:[#allocation5 + $0xa64] sm:$0xf]
    %v1141 = vld [vmem:[#allocation5 + $0xa68] sm:$0xf]
    %v1142 = vld [vmem:[#allocation5 + $0xa6c] sm:$0xf]
    %v1143 = vld [vmem:[#allocation5 + $0xa70] sm:$0xf]
    %v1144 = vld [vmem:[#allocation5 + $0xa74] sm:$0xf]
    %v1145 = vld [vmem:[#allocation5 + $0xa78] sm:$0xf]
    %v1146 = vld [vmem:[#allocation5 + $0xa7c] sm:$0xf]
    %v1147 = vld [vmem:[#allocation5 + $0xa80] sm:$0xf]
    %v1148 = vld [vmem:[#allocation5 + $0xa84] sm:$0xf]
    %v1149 = vld [vmem:[#allocation5 + $0xa88] sm:$0xf]
    %v1150 = vld [vmem:[#allocation5 + $0xa8c] sm:$0xf]
    %v1151 = vld [vmem:[#allocation5 + $0xa90] sm:$0xf]
    %v1152 = vld [vmem:[#allocation5 + $0xa94] sm:$0xf]
    %v1153 = vld [vmem:[#allocation5 + $0xa98] sm:$0xf]
    %v1154 = vld [vmem:[#allocation5 + $0xa9c] sm:$0xf]
    %v1155 = vld [vmem:[#allocation5 + $0xaa0] sm:$0xf]
    %v1156 = vld [vmem:[#allocation5 + $0xaa4] sm:$0xf]
    %v1157 = vld [vmem:[#allocation5 + $0xaa8] sm:$0xf]
    %v1158 = vld [vmem:[#allocation5 + $0xaac] sm:$0xf]
    %v1159 = vld [vmem:[#allocation5 + $0xab0] sm:$0xf]
    %v1160 = vld [vmem:[#allocation5 + $0xab4] sm:$0xf]
    %v1161 = vld [vmem:[#allocation5 + $0xab8] sm:$0xf]
    %v1162 = vld [vmem:[#allocation5 + $0xabc] sm:$0xf]
    %v1163 = vld [vmem:[#allocation5 + $0xac0] sm:$0xf]
    %v1164 = vld [vmem:[#allocation5 + $0xac4] sm:$0xf]
    %v1165 = vld [vmem:[#allocation5 + $0xac8] sm:$0xf]
    %v1166 = vld [vmem:[#allocation5 + $0xacc] sm:$0xf]
    %v1167 = vld [vmem:[#allocation5 + $0xad0] sm:$0xf]
    %v1168 = vld [vmem:[#allocation5 + $0xad4] sm:$0xf]
    %v1169 = vld [vmem:[#allocation5 + $0xad8] sm:$0xf]
    %v1170 = vld [vmem:[#allocation5 + $0xadc] sm:$0xf]
    %v1171 = vld [vmem:[#allocation5 + $0xae0] sm:$0xf]
    %v1172 = vld [vmem:[#allocation5 + $0xae4] sm:$0xf]
    %v1173 = vld [vmem:[#allocation5 + $0xae8] sm:$0xf]
    %v1174 = vld [vmem:[#allocation5 + $0xaec] sm:$0xf]
    %v1175 = vld [vmem:[#allocation5 + $0xaf0] sm:$0xf]
    %v1176 = vld [vmem:[#allocation5 + $0xaf4] sm:$0xf]
    %v1177 = vld [vmem:[#allocation5 + $0xaf8] sm:$0xf]
    %v1178 = vld [vmem:[#allocation5 + $0xafc] sm:$0xf]
    %v1179 = vld [vmem:[#allocation5 + $0xb00] sm:$0xf]
    %v1180 = vld [vmem:[#allocation5 + $0xb04] sm:$0xf]
    %v1181 = vld [vmem:[#allocation5 + $0xb08] sm:$0xf]
    %v1182 = vld [vmem:[#allocation5 + $0xb0c] sm:$0xf]
    %v1183 = vld [vmem:[#allocation5 + $0xb10] sm:$0xf]
    %v1184 = vld [vmem:[#allocation5 + $0xb14] sm:$0xf]
    %v1185 = vld [vmem:[#allocation5 + $0xb18] sm:$0xf]
    %v1186 = vld [vmem:[#allocation5 + $0xb1c] sm:$0xf]
    %v1187 = vld [vmem:[#allocation5 + $0xb20] sm:$0xf]
    %v1188 = vld [vmem:[#allocation5 + $0xb24] sm:$0xf]
    %v1189 = vld [vmem:[#allocation5 + $0xb28] sm:$0xf]
    %v1190 = vld [vmem:[#allocation5 + $0xb2c] sm:$0xf]
    %v1191 = vld [vmem:[#allocation5 + $0xb30] sm:$0xf]
    %v1192 = vld [vmem:[#allocation5 + $0xb34] sm:$0xf]
    %v1193 = vld [vmem:[#allocation5 + $0xb38] sm:$0xf]
    %v1194 = vld [vmem:[#allocation5 + $0xb3c] sm:$0xf]
    %v1195 = vld [vmem:[#allocation5 + $0xb40] sm:$0xf]
    %v1196 = vld [vmem:[#allocation5 + $0xb44] sm:$0xf]
    %v1197 = vld [vmem:[#allocation5 + $0xb48] sm:$0xf]
    %v1198 = vld [vmem:[#allocation5 + $0xb4c] sm:$0xf]
    %v1199 = vld [vmem:[#allocation5 + $0xb50] sm:$0xf]
    %v1200 = vld [vmem:[#allocation5 + $0xb54] sm:$0xf]
    %v1201 = vld [vmem:[#allocation5 + $0xb58] sm:$0xf]
    %v1202 = vld [vmem:[#allocation5 + $0xb5c] sm:$0xf]
    %v1203 = vld [vmem:[#allocation5 + $0xb60] sm:$0xf]
    %v1204 = vld [vmem:[#allocation5 + $0xb64] sm:$0xf]
    %v1205 = vld [vmem:[#allocation5 + $0xb68] sm:$0xf]
    %v1206 = vld [vmem:[#allocation5 + $0xb6c] sm:$0xf]
    %v1207 = vld [vmem:[#allocation5 + $0xb70] sm:$0xf]
    %v1208 = vld [vmem:[#allocation5 + $0xb74] sm:$0xf]
    %v1209 = vld [vmem:[#allocation5 + $0xb78] sm:$0xf]
    %v1210 = vld [vmem:[#allocation5 + $0xb7c] sm:$0xf]
    %v1211 = vld [vmem:[#allocation5 + $0xb80] sm:$0xf]
    %v1212 = vld [vmem:[#allocation5 + $0xb84] sm:$0xf]
    %v1213 = vld [vmem:[#allocation5 + $0xb88] sm:$0xf]
    %v1214 = vld [vmem:[#allocation5 + $0xb8c] sm:$0xf]
    %v1215 = vld [vmem:[#allocation5 + $0xb90] sm:$0xf]
    %v1216 = vld [vmem:[#allocation5 + $0xb94] sm:$0xf]
    %v1217 = vld [vmem:[#allocation5 + $0xb98] sm:$0xf]
    %v1218 = vld [vmem:[#allocation5 + $0xb9c] sm:$0xf]
    %v1219 = vld [vmem:[#allocation5 + $0xba0] sm:$0xf]
    %v1220 = vld [vmem:[#allocation5 + $0xba4] sm:$0xf]
    %v1221 = vld [vmem:[#allocation5 + $0xba8] sm:$0xf]
    %v1222 = vld [vmem:[#allocation5 + $0xbac] sm:$0xf]
    %v1223 = vld [vmem:[#allocation5 + $0xbb0] sm:$0xf]
    %v1224 = vld [vmem:[#allocation5 + $0xbb4] sm:$0xf]
    %v1225 = vld [vmem:[#allocation5 + $0xbb8] sm:$0xf]
    %v1226 = vld [vmem:[#allocation5 + $0xbbc] sm:$0xf]
    %v1227 = vld [vmem:[#allocation5 + $0xbc0] sm:$0xf]
    %v1228 = vld [vmem:[#allocation5 + $0xbc4] sm:$0xf]
    %v1229 = vld [vmem:[#allocation5 + $0xbc8] sm:$0xf]
    %v1230 = vld [vmem:[#allocation5 + $0xbcc] sm:$0xf]
    %v1231 = vld [vmem:[#allocation5 + $0xbd0] sm:$0xf]
    %v1232 = vld [vmem:[#allocation5 + $0xbd4] sm:$0xf]
    %v1233 = vld [vmem:[#allocation5 + $0xbd8] sm:$0xf]
    %v1234 = vld [vmem:[#allocation5 + $0xbdc] sm:$0xf]
    %v1235 = vld [vmem:[#allocation5 + $0xbe0] sm:$0xf]
    %v1236 = vld [vmem:[#allocation5 + $0xbe4] sm:$0xf]
    %v1237 = vld [vmem:[#allocation5 + $0xbe8] sm:$0xf]
    %v1238 = vld [vmem:[#allocation5 + $0xbec] sm:$0xf]
    %v1239 = vld [vmem:[#allocation5 + $0xbf0] sm:$0xf]
    %v1240 = vld [vmem:[#allocation5 + $0xbf4] sm:$0xf]
    %v1241 = vld [vmem:[#allocation5 + $0xbf8] sm:$0xf]
    %v1242 = vld [vmem:[#allocation5 + $0xbfc] sm:$0xf]
    %v1243 = vld [vmem:[#allocation7] sm:$0x1]
    %v1245 = vlaneseq
    %v1246 = vshrl.u32 %v1245, 7
    %v1247 = vsub.s32 0, %v1246
    %v1248 = vrot.slane %v1243, %v1247
    %v1634 = vunpack.c.l.b16 %v91
    %v1635 = vunpack.c.h.b16 %v91
    %v1636 = vunpack.c.l.b16 %v92
    %v1637 = vunpack.c.h.b16 %v92
    %v1638 = vunpack.c.l.b16 %v93
    %v1639 = vunpack.c.h.b16 %v93
    %v1640 = vunpack.c.l.b16 %v94
    %v1641 = vunpack.c.h.b16 %v94
    %v1642 = vunpack.c.l.b16 %v95
    %v1643 = vunpack.c.h.b16 %v95
    %v1644 = vunpack.c.l.b16 %v96
    %v1645 = vunpack.c.h.b16 %v96
    %v1646 = vunpack.c.l.b16 %v97
    %v1647 = vunpack.c.h.b16 %v97
    %v1648 = vunpack.c.l.b16 %v98
    %v1649 = vunpack.c.h.b16 %v98
    %v1650 = vunpack.c.l.b16 %v99
    %v1651 = vunpack.c.h.b16 %v99
    %v1652 = vunpack.c.l.b16 %v100
    %v1653 = vunpack.c.h.b16 %v100
    %v1654 = vunpack.c.l.b16 %v101
    %v1655 = vunpack.c.h.b16 %v101
    %v1656 = vunpack.c.l.b16 %v102
    %v1657 = vunpack.c.h.b16 %v102
    %v1658 = vunpack.c.l.b16 %v103
    %v1659 = vunpack.c.h.b16 %v103
    %v1660 = vunpack.c.l.b16 %v104
    %v1661 = vunpack.c.h.b16 %v104
    %v1662 = vunpack.c.l.b16 %v105
    %v1663 = vunpack.c.h.b16 %v105
    %v1664 = vunpack.c.l.b16 %v106
    %v1665 = vunpack.c.h.b16 %v106
    %v1666 = vunpack.c.l.b16 %v107
    %v1667 = vunpack.c.h.b16 %v107
    %v1668 = vunpack.c.l.b16 %v108
    %v1669 = vunpack.c.h.b16 %v108
    %v1670 = vunpack.c.l.b16 %v109
    %v1671 = vunpack.c.h.b16 %v109
    %v1672 = vunpack.c.l.b16 %v110
    %v1673 = vunpack.c.h.b16 %v110
    %v1674 = vunpack.c.l.b16 %v111
    %v1675 = vunpack.c.h.b16 %v111
    %v1676 = vunpack.c.l.b16 %v112
    %v1677 = vunpack.c.h.b16 %v112
    %v1678 = vunpack.c.l.b16 %v113
    %v1679 = vunpack.c.h.b16 %v113
    %v1680 = vunpack.c.l.b16 %v114
    %v1681 = vunpack.c.h.b16 %v114
    %v1682 = vunpack.c.l.b16 %v115
    %v1683 = vunpack.c.h.b16 %v115
    %v1684 = vunpack.c.l.b16 %v116
    %v1685 = vunpack.c.h.b16 %v116
    %v1686 = vunpack.c.l.b16 %v117
    %v1687 = vunpack.c.h.b16 %v117
    %v1688 = vunpack.c.l.b16 %v118
    %v1689 = vunpack.c.h.b16 %v118
    %v1690 = vunpack.c.l.b16 %v119
    %v1691 = vunpack.c.h.b16 %v119
    %v1692 = vunpack.c.l.b16 %v120
    %v1693 = vunpack.c.h.b16 %v120
    %v1694 = vunpack.c.l.b16 %v121
    %v1695 = vunpack.c.h.b16 %v121
    %v1696 = vunpack.c.l.b16 %v122
    %v1697 = vunpack.c.h.b16 %v122
    %v1698 = vunpack.c.l.b16 %v123
    %v1699 = vunpack.c.h.b16 %v123
    %v1700 = vunpack.c.l.b16 %v124
    %v1701 = vunpack.c.h.b16 %v124
    %v1702 = vunpack.c.l.b16 %v125
    %v1703 = vunpack.c.h.b16 %v125
    %v1704 = vunpack.c.l.b16 %v126
    %v1705 = vunpack.c.h.b16 %v126
    %v1706 = vunpack.c.l.b16 %v127
    %v1707 = vunpack.c.h.b16 %v127
    %v1708 = vunpack.c.l.b16 %v128
    %v1709 = vunpack.c.h.b16 %v128
    %v1710 = vunpack.c.l.b16 %v129
    %v1711 = vunpack.c.h.b16 %v129
    %v1712 = vunpack.c.l.b16 %v130
    %v1713 = vunpack.c.h.b16 %v130
    %v1714 = vunpack.c.l.b16 %v131
    %v1715 = vunpack.c.h.b16 %v131
    %v1716 = vunpack.c.l.b16 %v132
    %v1717 = vunpack.c.h.b16 %v132
    %v1718 = vunpack.c.l.b16 %v133
    %v1719 = vunpack.c.h.b16 %v133
    %v1720 = vunpack.c.l.b16 %v134
    %v1721 = vunpack.c.h.b16 %v134
    %v1722 = vunpack.c.l.b16 %v135
    %v1723 = vunpack.c.h.b16 %v135
    %v1724 = vunpack.c.l.b16 %v136
    %v1725 = vunpack.c.h.b16 %v136
    %v1726 = vunpack.c.l.b16 %v137
    %v1727 = vunpack.c.h.b16 %v137
    %v1728 = vunpack.c.l.b16 %v138
    %v1729 = vunpack.c.h.b16 %v138
    %v1730 = vunpack.c.l.b16 %v139
    %v1731 = vunpack.c.h.b16 %v139
    %v1732 = vunpack.c.l.b16 %v140
    %v1733 = vunpack.c.h.b16 %v140
    %v1734 = vunpack.c.l.b16 %v141
    %v1735 = vunpack.c.h.b16 %v141
    %v1736 = vunpack.c.l.b16 %v142
    %v1737 = vunpack.c.h.b16 %v142
    %v1738 = vunpack.c.l.b16 %v143
    %v1739 = vunpack.c.h.b16 %v143
    %v1740 = vunpack.c.l.b16 %v144
    %v1741 = vunpack.c.h.b16 %v144
    %v1742 = vunpack.c.l.b16 %v145
    %v1743 = vunpack.c.h.b16 %v145
    %v1744 = vunpack.c.l.b16 %v146
    %v1745 = vunpack.c.h.b16 %v146
    %v1746 = vunpack.c.l.b16 %v147
    %v1747 = vunpack.c.h.b16 %v147
    %v1748 = vunpack.c.l.b16 %v148
    %v1749 = vunpack.c.h.b16 %v148
    %v1750 = vunpack.c.l.b16 %v149
    %v1751 = vunpack.c.h.b16 %v149
    %v1752 = vunpack.c.l.b16 %v150
    %v1753 = vunpack.c.h.b16 %v150
    %v1754 = vunpack.c.l.b16 %v151
    %v1755 = vunpack.c.h.b16 %v151
    %v1756 = vunpack.c.l.b16 %v152
    %v1757 = vunpack.c.h.b16 %v152
    %v1758 = vunpack.c.l.b16 %v153
    %v1759 = vunpack.c.h.b16 %v153
    %v1760 = vunpack.c.l.b16 %v154
    %v1761 = vunpack.c.h.b16 %v154
    %v1762 = vunpack.c.l.b16 %v155
    %v1763 = vunpack.c.h.b16 %v155
    %v1764 = vunpack.c.l.b16 %v156
    %v1765 = vunpack.c.h.b16 %v156
    %v1766 = vunpack.c.l.b16 %v157
    %v1767 = vunpack.c.h.b16 %v157
    %v1768 = vunpack.c.l.b16 %v158
    %v1769 = vunpack.c.h.b16 %v158
    %v1770 = vunpack.c.l.b16 %v159
    %v1771 = vunpack.c.h.b16 %v159
    %v1772 = vunpack.c.l.b16 %v160
    %v1773 = vunpack.c.h.b16 %v160
    %v1774 = vunpack.c.l.b16 %v161
    %v1775 = vunpack.c.h.b16 %v161
    %v1776 = vunpack.c.l.b16 %v162
    %v1777 = vunpack.c.h.b16 %v162
    %v1778 = vunpack.c.l.b16 %v163
    %v1779 = vunpack.c.h.b16 %v163
    %v1780 = vunpack.c.l.b16 %v164
    %v1781 = vunpack.c.h.b16 %v164
    %v1782 = vunpack.c.l.b16 %v165
    %v1783 = vunpack.c.h.b16 %v165
    %v1784 = vunpack.c.l.b16 %v166
    %v1785 = vunpack.c.h.b16 %v166
    %v1786 = vunpack.c.l.b16 %v167
    %v1787 = vunpack.c.h.b16 %v167
    %v1788 = vunpack.c.l.b16 %v168
    %v1789 = vunpack.c.h.b16 %v168
    %v1790 = vunpack.c.l.b16 %v169
    %v1791 = vunpack.c.h.b16 %v169
    %v1792 = vunpack.c.l.b16 %v170
    %v1793 = vunpack.c.h.b16 %v170
    %v1794 = vunpack.c.l.b16 %v171
    %v1795 = vunpack.c.h.b16 %v171
    %v1796 = vunpack.c.l.b16 %v172
    %v1797 = vunpack.c.h.b16 %v172
    %v1798 = vunpack.c.l.b16 %v173
    %v1799 = vunpack.c.h.b16 %v173
    %v1800 = vunpack.c.l.b16 %v174
    %v1801 = vunpack.c.h.b16 %v174
    %v1802 = vunpack.c.l.b16 %v175
    %v1803 = vunpack.c.h.b16 %v175
    %v1804 = vunpack.c.l.b16 %v176
    %v1805 = vunpack.c.h.b16 %v176
    %v1806 = vunpack.c.l.b16 %v177
    %v1807 = vunpack.c.h.b16 %v177
    %v1808 = vunpack.c.l.b16 %v178
    %v1809 = vunpack.c.h.b16 %v178
    %v1810 = vunpack.c.l.b16 %v179
    %v1811 = vunpack.c.h.b16 %v179
    %v1812 = vunpack.c.l.b16 %v180
    %v1813 = vunpack.c.h.b16 %v180
    %v1814 = vunpack.c.l.b16 %v181
    %v1815 = vunpack.c.h.b16 %v181
    %v1816 = vunpack.c.l.b16 %v182
    %v1817 = vunpack.c.h.b16 %v182
    %v1818 = vunpack.c.l.b16 %v183
    %v1819 = vunpack.c.h.b16 %v183
    %v1820 = vunpack.c.l.b16 %v184
    %v1821 = vunpack.c.h.b16 %v184
    %v1822 = vunpack.c.l.b16 %v185
    %v1823 = vunpack.c.h.b16 %v185
    %v1824 = vunpack.c.l.b16 %v186
    %v1825 = vunpack.c.h.b16 %v186
    %v1826 = vunpack.c.l.b16 %v187
    %v1827 = vunpack.c.h.b16 %v187
    %v1828 = vunpack.c.l.b16 %v188
    %v1829 = vunpack.c.h.b16 %v188
    %v1830 = vunpack.c.l.b16 %v189
    %v1831 = vunpack.c.h.b16 %v189
    %v1832 = vunpack.c.l.b16 %v190
    %v1833 = vunpack.c.h.b16 %v190
    %v1834 = vunpack.c.l.b16 %v191
    %v1835 = vunpack.c.h.b16 %v191
    %v1836 = vunpack.c.l.b16 %v192
    %v1837 = vunpack.c.h.b16 %v192
    %v1838 = vunpack.c.l.b16 %v193
    %v1839 = vunpack.c.h.b16 %v193
    %v1840 = vunpack.c.l.b16 %v194
    %v1841 = vunpack.c.h.b16 %v194
    %v1842 = vunpack.c.l.b16 %v195
    %v1843 = vunpack.c.h.b16 %v195
    %v1844 = vunpack.c.l.b16 %v196
    %v1845 = vunpack.c.h.b16 %v196
    %v1846 = vunpack.c.l.b16 %v197
    %v1847 = vunpack.c.h.b16 %v197
    %v1848 = vunpack.c.l.b16 %v198
    %v1849 = vunpack.c.h.b16 %v198
    %v1850 = vunpack.c.l.b16 %v199
    %v1851 = vunpack.c.h.b16 %v199
    %v1852 = vunpack.c.l.b16 %v200
    %v1853 = vunpack.c.h.b16 %v200
    %v1854 = vunpack.c.l.b16 %v201
    %v1855 = vunpack.c.h.b16 %v201
    %v1856 = vunpack.c.l.b16 %v202
    %v1857 = vunpack.c.h.b16 %v202
    %v1858 = vunpack.c.l.b16 %v203
    %v1859 = vunpack.c.h.b16 %v203
    %v1860 = vunpack.c.l.b16 %v204
    %v1861 = vunpack.c.h.b16 %v204
    %v1862 = vunpack.c.l.b16 %v205
    %v1863 = vunpack.c.h.b16 %v205
    %v1864 = vunpack.c.l.b16 %v206
    %v1865 = vunpack.c.h.b16 %v206
    %v1866 = vunpack.c.l.b16 %v207
    %v1867 = vunpack.c.h.b16 %v207
    %v1868 = vunpack.c.l.b16 %v208
    %v1869 = vunpack.c.h.b16 %v208
    %v1870 = vunpack.c.l.b16 %v209
    %v1871 = vunpack.c.h.b16 %v209
    %v1872 = vunpack.c.l.b16 %v210
    %v1873 = vunpack.c.h.b16 %v210
    %v1874 = vunpack.c.l.b16 %v211
    %v1875 = vunpack.c.h.b16 %v211
    %v1876 = vunpack.c.l.b16 %v212
    %v1877 = vunpack.c.h.b16 %v212
    %v1878 = vunpack.c.l.b16 %v213
    %v1879 = vunpack.c.h.b16 %v213
    %v1880 = vunpack.c.l.b16 %v214
    %v1881 = vunpack.c.h.b16 %v214
    %v1882 = vunpack.c.l.b16 %v215
    %v1883 = vunpack.c.h.b16 %v215
    %v1884 = vunpack.c.l.b16 %v216
    %v1885 = vunpack.c.h.b16 %v216
    %v1886 = vunpack.c.l.b16 %v217
    %v1887 = vunpack.c.h.b16 %v217
    %v1888 = vunpack.c.l.b16 %v218
    %v1889 = vunpack.c.h.b16 %v218
    %v1890 = vunpack.c.l.b16 %v219
    %v1891 = vunpack.c.h.b16 %v219
    %v1892 = vunpack.c.l.b16 %v220
    %v1893 = vunpack.c.h.b16 %v220
    %v1894 = vunpack.c.l.b16 %v221
    %v1895 = vunpack.c.h.b16 %v221
    %v1896 = vunpack.c.l.b16 %v222
    %v1897 = vunpack.c.h.b16 %v222
    %v1898 = vunpack.c.l.b16 %v223
    %v1899 = vunpack.c.h.b16 %v223
    %v1900 = vunpack.c.l.b16 %v224
    %v1901 = vunpack.c.h.b16 %v224
    %v1902 = vunpack.c.l.b16 %v225
    %v1903 = vunpack.c.h.b16 %v225
    %v1904 = vunpack.c.l.b16 %v226
    %v1905 = vunpack.c.h.b16 %v226
    %v1906 = vunpack.c.l.b16 %v227
    %v1907 = vunpack.c.h.b16 %v227
    %v1908 = vunpack.c.l.b16 %v228
    %v1909 = vunpack.c.h.b16 %v228
    %v1910 = vunpack.c.l.b16 %v229
    %v1911 = vunpack.c.h.b16 %v229
    %v1912 = vunpack.c.l.b16 %v230
    %v1913 = vunpack.c.h.b16 %v230
    %v1914 = vunpack.c.l.b16 %v231
    %v1915 = vunpack.c.h.b16 %v231
    %v1916 = vunpack.c.l.b16 %v232
    %v1917 = vunpack.c.h.b16 %v232
    %v1918 = vunpack.c.l.b16 %v233
    %v1919 = vunpack.c.h.b16 %v233
    %v1920 = vunpack.c.l.b16 %v234
    %v1921 = vunpack.c.h.b16 %v234
    %v1922 = vunpack.c.l.b16 %v235
    %v1923 = vunpack.c.h.b16 %v235
    %v1924 = vunpack.c.l.b16 %v236
    %v1925 = vunpack.c.h.b16 %v236
    %v1926 = vunpack.c.l.b16 %v237
    %v1927 = vunpack.c.h.b16 %v237
    %v1928 = vunpack.c.l.b16 %v238
    %v1929 = vunpack.c.h.b16 %v238
    %v1930 = vunpack.c.l.b16 %v239
    %v1931 = vunpack.c.h.b16 %v239
    %v1932 = vunpack.c.l.b16 %v240
    %v1933 = vunpack.c.h.b16 %v240
    %v1934 = vunpack.c.l.b16 %v241
    %v1935 = vunpack.c.h.b16 %v241
    %v1936 = vunpack.c.l.b16 %v242
    %v1937 = vunpack.c.h.b16 %v242
    %v1938 = vunpack.c.l.b16 %v243
    %v1939 = vunpack.c.h.b16 %v243
    %v1940 = vunpack.c.l.b16 %v244
    %v1941 = vunpack.c.h.b16 %v244
    %v1942 = vunpack.c.l.b16 %v245
    %v1943 = vunpack.c.h.b16 %v245
    %v1944 = vunpack.c.l.b16 %v246
    %v1945 = vunpack.c.h.b16 %v246
    %v1946 = vunpack.c.l.b16 %v247
    %v1947 = vunpack.c.h.b16 %v247
    %v1948 = vunpack.c.l.b16 %v248
    %v1949 = vunpack.c.h.b16 %v248
    %v1950 = vunpack.c.l.b16 %v249
    %v1951 = vunpack.c.h.b16 %v249
    %v1952 = vunpack.c.l.b16 %v250
    %v1953 = vunpack.c.h.b16 %v250
    %v1954 = vunpack.c.l.b16 %v251
    %v1955 = vunpack.c.h.b16 %v251
    %v1956 = vunpack.c.l.b16 %v252
    %v1957 = vunpack.c.h.b16 %v252
    %v1958 = vunpack.c.l.b16 %v253
    %v1959 = vunpack.c.h.b16 %v253
    %v1960 = vunpack.c.l.b16 %v254
    %v1961 = vunpack.c.h.b16 %v254
    %v1962 = vunpack.c.l.b16 %v255
    %v1963 = vunpack.c.h.b16 %v255
    %v1964 = vunpack.c.l.b16 %v256
    %v1965 = vunpack.c.h.b16 %v256
    %v1966 = vunpack.c.l.b16 %v257
    %v1967 = vunpack.c.h.b16 %v257
    %v1968 = vunpack.c.l.b16 %v258
    %v1969 = vunpack.c.h.b16 %v258
    %v1970 = vunpack.c.l.b16 %v259
    %v1971 = vunpack.c.h.b16 %v259
    %v1972 = vunpack.c.l.b16 %v260
    %v1973 = vunpack.c.h.b16 %v260
    %v1974 = vunpack.c.l.b16 %v261
    %v1975 = vunpack.c.h.b16 %v261
    %v1976 = vunpack.c.l.b16 %v262
    %v1977 = vunpack.c.h.b16 %v262
    %v1978 = vunpack.c.l.b16 %v263
    %v1979 = vunpack.c.h.b16 %v263
    %v1980 = vunpack.c.l.b16 %v264
    %v1981 = vunpack.c.h.b16 %v264
    %v1982 = vunpack.c.l.b16 %v265
    %v1983 = vunpack.c.h.b16 %v265
    %v1984 = vunpack.c.l.b16 %v266
    %v1985 = vunpack.c.h.b16 %v266
    %v1986 = vunpack.c.l.b16 %v267
    %v1987 = vunpack.c.h.b16 %v267
    %v1988 = vunpack.c.l.b16 %v268
    %v1989 = vunpack.c.h.b16 %v268
    %v1990 = vunpack.c.l.b16 %v269
    %v1991 = vunpack.c.h.b16 %v269
    %v1992 = vunpack.c.l.b16 %v270
    %v1993 = vunpack.c.h.b16 %v270
    %v1994 = vunpack.c.l.b16 %v271
    %v1995 = vunpack.c.h.b16 %v271
    %v1996 = vunpack.c.l.b16 %v272
    %v1997 = vunpack.c.h.b16 %v272
    %v1998 = vunpack.c.l.b16 %v273
    %v1999 = vunpack.c.h.b16 %v273
    %v2000 = vunpack.c.l.b16 %v274
    %v2001 = vunpack.c.h.b16 %v274
    %v2002 = vunpack.c.l.b16 %v275
    %v2003 = vunpack.c.h.b16 %v275
    %v2004 = vunpack.c.l.b16 %v276
    %v2005 = vunpack.c.h.b16 %v276
    %v2006 = vunpack.c.l.b16 %v277
    %v2007 = vunpack.c.h.b16 %v277
    %v2008 = vunpack.c.l.b16 %v278
    %v2009 = vunpack.c.h.b16 %v278
    %v2010 = vunpack.c.l.b16 %v279
    %v2011 = vunpack.c.h.b16 %v279
    %v2012 = vunpack.c.l.b16 %v280
    %v2013 = vunpack.c.h.b16 %v280
    %v2014 = vunpack.c.l.b16 %v281
    %v2015 = vunpack.c.h.b16 %v281
    %v2016 = vunpack.c.l.b16 %v282
    %v2017 = vunpack.c.h.b16 %v282
    %v2018 = vunpack.c.l.b16 %v283
    %v2019 = vunpack.c.h.b16 %v283
    %v2020 = vunpack.c.l.b16 %v284
    %v2021 = vunpack.c.h.b16 %v284
    %v2022 = vunpack.c.l.b16 %v285
    %v2023 = vunpack.c.h.b16 %v285
    %v2024 = vunpack.c.l.b16 %v286
    %v2025 = vunpack.c.h.b16 %v286
    %v2026 = vunpack.c.l.b16 %v287
    %v2027 = vunpack.c.h.b16 %v287
    %v2028 = vunpack.c.l.b16 %v288
    %v2029 = vunpack.c.h.b16 %v288
    %v2030 = vunpack.c.l.b16 %v289
    %v2031 = vunpack.c.h.b16 %v289
    %v2032 = vunpack.c.l.b16 %v290
    %v2033 = vunpack.c.h.b16 %v290
    %v2034 = vunpack.c.l.b16 %v291
    %v2035 = vunpack.c.h.b16 %v291
    %v2036 = vunpack.c.l.b16 %v292
    %v2037 = vunpack.c.h.b16 %v292
    %v2038 = vunpack.c.l.b16 %v293
    %v2039 = vunpack.c.h.b16 %v293
    %v2040 = vunpack.c.l.b16 %v294
    %v2041 = vunpack.c.h.b16 %v294
    %v2042 = vunpack.c.l.b16 %v295
    %v2043 = vunpack.c.h.b16 %v295
    %v2044 = vunpack.c.l.b16 %v296
    %v2045 = vunpack.c.h.b16 %v296
    %v2046 = vunpack.c.l.b16 %v297
    %v2047 = vunpack.c.h.b16 %v297
    %v2048 = vunpack.c.l.b16 %v298
    %v2049 = vunpack.c.h.b16 %v298
    %v2050 = vunpack.c.l.b16 %v299
    %v2051 = vunpack.c.h.b16 %v299
    %v2052 = vunpack.c.l.b16 %v300
    %v2053 = vunpack.c.h.b16 %v300
    %v2054 = vunpack.c.l.b16 %v301
    %v2055 = vunpack.c.h.b16 %v301
    %v2056 = vunpack.c.l.b16 %v302
    %v2057 = vunpack.c.h.b16 %v302
    %v2058 = vunpack.c.l.b16 %v303
    %v2059 = vunpack.c.h.b16 %v303
    %v2060 = vunpack.c.l.b16 %v304
    %v2061 = vunpack.c.h.b16 %v304
    %v2062 = vunpack.c.l.b16 %v305
    %v2063 = vunpack.c.h.b16 %v305
    %v2064 = vunpack.c.l.b16 %v306
    %v2065 = vunpack.c.h.b16 %v306
    %v2066 = vunpack.c.l.b16 %v307
    %v2067 = vunpack.c.h.b16 %v307
    %v2068 = vunpack.c.l.b16 %v308
    %v2069 = vunpack.c.h.b16 %v308
    %v2070 = vunpack.c.l.b16 %v309
    %v2071 = vunpack.c.h.b16 %v309
    %v2072 = vunpack.c.l.b16 %v310
    %v2073 = vunpack.c.h.b16 %v310
    %v2074 = vunpack.c.l.b16 %v311
    %v2075 = vunpack.c.h.b16 %v311
    %v2076 = vunpack.c.l.b16 %v312
    %v2077 = vunpack.c.h.b16 %v312
    %v2078 = vunpack.c.l.b16 %v313
    %v2079 = vunpack.c.h.b16 %v313
    %v2080 = vunpack.c.l.b16 %v314
    %v2081 = vunpack.c.h.b16 %v314
    %v2082 = vunpack.c.l.b16 %v315
    %v2083 = vunpack.c.h.b16 %v315
    %v2084 = vunpack.c.l.b16 %v316
    %v2085 = vunpack.c.h.b16 %v316
    %v2086 = vunpack.c.l.b16 %v317
    %v2087 = vunpack.c.h.b16 %v317
    %v2088 = vunpack.c.l.b16 %v318
    %v2089 = vunpack.c.h.b16 %v318
    %v2090 = vunpack.c.l.b16 %v319
    %v2091 = vunpack.c.h.b16 %v319
    %v2092 = vunpack.c.l.b16 %v320
    %v2093 = vunpack.c.h.b16 %v320
    %v2094 = vunpack.c.l.b16 %v321
    %v2095 = vunpack.c.h.b16 %v321
    %v2096 = vunpack.c.l.b16 %v322
    %v2097 = vunpack.c.h.b16 %v322
    %v2098 = vunpack.c.l.b16 %v323
    %v2099 = vunpack.c.h.b16 %v323
    %v2100 = vunpack.c.l.b16 %v324
    %v2101 = vunpack.c.h.b16 %v324
    %v2102 = vunpack.c.l.b16 %v325
    %v2103 = vunpack.c.h.b16 %v325
    %v2104 = vunpack.c.l.b16 %v326
    %v2105 = vunpack.c.h.b16 %v326
    %v2106 = vunpack.c.l.b16 %v327
    %v2107 = vunpack.c.h.b16 %v327
    %v2108 = vunpack.c.l.b16 %v328
    %v2109 = vunpack.c.h.b16 %v328
    %v2110 = vunpack.c.l.b16 %v329
    %v2111 = vunpack.c.h.b16 %v329
    %v2112 = vunpack.c.l.b16 %v330
    %v2113 = vunpack.c.h.b16 %v330
    %v2114 = vunpack.c.l.b16 %v331
    %v2115 = vunpack.c.h.b16 %v331
    %v2116 = vunpack.c.l.b16 %v332
    %v2117 = vunpack.c.h.b16 %v332
    %v2118 = vunpack.c.l.b16 %v333
    %v2119 = vunpack.c.h.b16 %v333
    %v2120 = vunpack.c.l.b16 %v334
    %v2121 = vunpack.c.h.b16 %v334
    %v2122 = vunpack.c.l.b16 %v335
    %v2123 = vunpack.c.h.b16 %v335
    %v2124 = vunpack.c.l.b16 %v336
    %v2125 = vunpack.c.h.b16 %v336
    %v2126 = vunpack.c.l.b16 %v337
    %v2127 = vunpack.c.h.b16 %v337
    %v2128 = vunpack.c.l.b16 %v338
    %v2129 = vunpack.c.h.b16 %v338
    %v2130 = vunpack.c.l.b16 %v339
    %v2131 = vunpack.c.h.b16 %v339
    %v2132 = vunpack.c.l.b16 %v340
    %v2133 = vunpack.c.h.b16 %v340
    %v2134 = vunpack.c.l.b16 %v341
    %v2135 = vunpack.c.h.b16 %v341
    %v2136 = vunpack.c.l.b16 %v342
    %v2137 = vunpack.c.h.b16 %v342
    %v2138 = vunpack.c.l.b16 %v343
    %v2139 = vunpack.c.h.b16 %v343
    %v2140 = vunpack.c.l.b16 %v344
    %v2141 = vunpack.c.h.b16 %v344
    %v2142 = vunpack.c.l.b16 %v345
    %v2143 = vunpack.c.h.b16 %v345
    %v2144 = vunpack.c.l.b16 %v346
    %v2145 = vunpack.c.h.b16 %v346
    %v2146 = vunpack.c.l.b16 %v347
    %v2147 = vunpack.c.h.b16 %v347
    %v2148 = vunpack.c.l.b16 %v348
    %v2149 = vunpack.c.h.b16 %v348
    %v2150 = vunpack.c.l.b16 %v349
    %v2151 = vunpack.c.h.b16 %v349
    %v2152 = vunpack.c.l.b16 %v350
    %v2153 = vunpack.c.h.b16 %v350
    %v2154 = vunpack.c.l.b16 %v351
    %v2155 = vunpack.c.h.b16 %v351
    %v2156 = vunpack.c.l.b16 %v352
    %v2157 = vunpack.c.h.b16 %v352
    %v2158 = vunpack.c.l.b16 %v353
    %v2159 = vunpack.c.h.b16 %v353
    %v2160 = vunpack.c.l.b16 %v354
    %v2161 = vunpack.c.h.b16 %v354
    %v2162 = vunpack.c.l.b16 %v355
    %v2163 = vunpack.c.h.b16 %v355
    %v2164 = vunpack.c.l.b16 %v356
    %v2165 = vunpack.c.h.b16 %v356
    %v2166 = vunpack.c.l.b16 %v357
    %v2167 = vunpack.c.h.b16 %v357
    %v2168 = vunpack.c.l.b16 %v358
    %v2169 = vunpack.c.h.b16 %v358
    %v2170 = vunpack.c.l.b16 %v359
    %v2171 = vunpack.c.h.b16 %v359
    %v2172 = vunpack.c.l.b16 %v360
    %v2173 = vunpack.c.h.b16 %v360
    %v2174 = vunpack.c.l.b16 %v361
    %v2175 = vunpack.c.h.b16 %v361
    %v2176 = vunpack.c.l.b16 %v362
    %v2177 = vunpack.c.h.b16 %v362
    %v2178 = vunpack.c.l.b16 %v363
    %v2179 = vunpack.c.h.b16 %v363
    %v2180 = vunpack.c.l.b16 %v364
    %v2181 = vunpack.c.h.b16 %v364
    %v2182 = vunpack.c.l.b16 %v365
    %v2183 = vunpack.c.h.b16 %v365
    %v2184 = vunpack.c.l.b16 %v366
    %v2185 = vunpack.c.h.b16 %v366
    %v2186 = vunpack.c.l.b16 %v367
    %v2187 = vunpack.c.h.b16 %v367
    %v2188 = vunpack.c.l.b16 %v368
    %v2189 = vunpack.c.h.b16 %v368
    %v2190 = vunpack.c.l.b16 %v369
    %v2191 = vunpack.c.h.b16 %v369
    %v2192 = vunpack.c.l.b16 %v370
    %v2193 = vunpack.c.h.b16 %v370
    %v2194 = vunpack.c.l.b16 %v371
    %v2195 = vunpack.c.h.b16 %v371
    %v2196 = vunpack.c.l.b16 %v372
    %v2197 = vunpack.c.h.b16 %v372
    %v2198 = vunpack.c.l.b16 %v373
    %v2199 = vunpack.c.h.b16 %v373
    %v2200 = vunpack.c.l.b16 %v374
    %v2201 = vunpack.c.h.b16 %v374
    %v2202 = vunpack.c.l.b16 %v375
    %v2203 = vunpack.c.h.b16 %v375
    %v2204 = vunpack.c.l.b16 %v376
    %v2205 = vunpack.c.h.b16 %v376
    %v2206 = vunpack.c.l.b16 %v377
    %v2207 = vunpack.c.h.b16 %v377
    %v2208 = vunpack.c.l.b16 %v378
    %v2209 = vunpack.c.h.b16 %v378
    %v2210 = vunpack.c.l.b16 %v379
    %v2211 = vunpack.c.h.b16 %v379
    %v2212 = vunpack.c.l.b16 %v380
    %v2213 = vunpack.c.h.b16 %v380
    %v2214 = vunpack.c.l.b16 %v381
    %v2215 = vunpack.c.h.b16 %v381
    %v2216 = vunpack.c.l.b16 %v382
    %v2217 = vunpack.c.h.b16 %v382
    %v2218 = vunpack.c.l.b16 %v383
    %v2219 = vunpack.c.h.b16 %v383
    %v2220 = vunpack.c.l.b16 %v384
    %v2221 = vunpack.c.h.b16 %v384
    %v2222 = vunpack.c.l.b16 %v385
    %v2223 = vunpack.c.h.b16 %v385
    %v2224 = vunpack.c.l.b16 %v386
    %v2225 = vunpack.c.h.b16 %v386
    %v2226 = vunpack.c.l.b16 %v387
    %v2227 = vunpack.c.h.b16 %v387
    %v2228 = vunpack.c.l.b16 %v388
    %v2229 = vunpack.c.h.b16 %v388
    %v2230 = vunpack.c.l.b16 %v389
    %v2231 = vunpack.c.h.b16 %v389
    %v2232 = vunpack.c.l.b16 %v390
    %v2233 = vunpack.c.h.b16 %v390
    %v2234 = vunpack.c.l.b16 %v391
    %v2235 = vunpack.c.h.b16 %v391
    %v2236 = vunpack.c.l.b16 %v392
    %v2237 = vunpack.c.h.b16 %v392
    %v2238 = vunpack.c.l.b16 %v393
    %v2239 = vunpack.c.h.b16 %v393
    %v2240 = vunpack.c.l.b16 %v394
    %v2241 = vunpack.c.h.b16 %v394
    %v2242 = vunpack.c.l.b16 %v395
    %v2243 = vunpack.c.h.b16 %v395
    %v2244 = vunpack.c.l.b16 %v396
    %v2245 = vunpack.c.h.b16 %v396
    %v2246 = vunpack.c.l.b16 %v397
    %v2247 = vunpack.c.h.b16 %v397
    %v2248 = vunpack.c.l.b16 %v398
    %v2249 = vunpack.c.h.b16 %v398
    %v2250 = vunpack.c.l.b16 %v399
    %v2251 = vunpack.c.h.b16 %v399
    %v2252 = vunpack.c.l.b16 %v400
    %v2253 = vunpack.c.h.b16 %v400
    %v2254 = vunpack.c.l.b16 %v401
    %v2255 = vunpack.c.h.b16 %v401
    %v2256 = vunpack.c.l.b16 %v402
    %v2257 = vunpack.c.h.b16 %v402
    %v2258 = vunpack.c.l.b16 %v403
    %v2259 = vunpack.c.h.b16 %v403
    %v2260 = vunpack.c.l.b16 %v404
    %v2261 = vunpack.c.h.b16 %v404
    %v2262 = vunpack.c.l.b16 %v405
    %v2263 = vunpack.c.h.b16 %v405
    %v2264 = vunpack.c.l.b16 %v406
    %v2265 = vunpack.c.h.b16 %v406
    %v2266 = vunpack.c.l.b16 %v407
    %v2267 = vunpack.c.h.b16 %v407
    %v2268 = vunpack.c.l.b16 %v408
    %v2269 = vunpack.c.h.b16 %v408
    %v2270 = vunpack.c.l.b16 %v409
    %v2271 = vunpack.c.h.b16 %v409
    %v2272 = vunpack.c.l.b16 %v410
    %v2273 = vunpack.c.h.b16 %v410
    %v2274 = vunpack.c.l.b16 %v411
    %v2275 = vunpack.c.h.b16 %v411
    %v2276 = vunpack.c.l.b16 %v412
    %v2277 = vunpack.c.h.b16 %v412
    %v2278 = vunpack.c.l.b16 %v413
    %v2279 = vunpack.c.h.b16 %v413
    %v2280 = vunpack.c.l.b16 %v414
    %v2281 = vunpack.c.h.b16 %v414
    %v2282 = vunpack.c.l.b16 %v415
    %v2283 = vunpack.c.h.b16 %v415
    %v2284 = vunpack.c.l.b16 %v416
    %v2285 = vunpack.c.h.b16 %v416
    %v2286 = vunpack.c.l.b16 %v417
    %v2287 = vunpack.c.h.b16 %v417
    %v2288 = vunpack.c.l.b16 %v418
    %v2289 = vunpack.c.h.b16 %v418
    %v2290 = vunpack.c.l.b16 %v419
    %v2291 = vunpack.c.h.b16 %v419
    %v2292 = vunpack.c.l.b16 %v420
    %v2293 = vunpack.c.h.b16 %v420
    %v2294 = vunpack.c.l.b16 %v421
    %v2295 = vunpack.c.h.b16 %v421
    %v2296 = vunpack.c.l.b16 %v422
    %v2297 = vunpack.c.h.b16 %v422
    %v2298 = vunpack.c.l.b16 %v423
    %v2299 = vunpack.c.h.b16 %v423
    %v2300 = vunpack.c.l.b16 %v424
    %v2301 = vunpack.c.h.b16 %v424
    %v2302 = vunpack.c.l.b16 %v425
    %v2303 = vunpack.c.h.b16 %v425
    %v2304 = vunpack.c.l.b16 %v426
    %v2305 = vunpack.c.h.b16 %v426
    %v2306 = vunpack.c.l.b16 %v427
    %v2307 = vunpack.c.h.b16 %v427
    %v2308 = vunpack.c.l.b16 %v428
    %v2309 = vunpack.c.h.b16 %v428
    %v2310 = vunpack.c.l.b16 %v429
    %v2311 = vunpack.c.h.b16 %v429
    %v2312 = vunpack.c.l.b16 %v430
    %v2313 = vunpack.c.h.b16 %v430
    %v2314 = vunpack.c.l.b16 %v431
    %v2315 = vunpack.c.h.b16 %v431
    %v2316 = vunpack.c.l.b16 %v432
    %v2317 = vunpack.c.h.b16 %v432
    %v2318 = vunpack.c.l.b16 %v433
    %v2319 = vunpack.c.h.b16 %v433
    %v2320 = vunpack.c.l.b16 %v434
    %v2321 = vunpack.c.h.b16 %v434
    %v2322 = vunpack.c.l.b16 %v435
    %v2323 = vunpack.c.h.b16 %v435
    %v2324 = vunpack.c.l.b16 %v436
    %v2325 = vunpack.c.h.b16 %v436
    %v2326 = vunpack.c.l.b16 %v437
    %v2327 = vunpack.c.h.b16 %v437
    %v2328 = vunpack.c.l.b16 %v438
    %v2329 = vunpack.c.h.b16 %v438
    %v2330 = vunpack.c.l.b16 %v439
    %v2331 = vunpack.c.h.b16 %v439
    %v2332 = vunpack.c.l.b16 %v440
    %v2333 = vunpack.c.h.b16 %v440
    %v2334 = vunpack.c.l.b16 %v441
    %v2335 = vunpack.c.h.b16 %v441
    %v2336 = vunpack.c.l.b16 %v442
    %v2337 = vunpack.c.h.b16 %v442
    %v2338 = vunpack.c.l.b16 %v443
    %v2339 = vunpack.c.h.b16 %v443
    %v2340 = vunpack.c.l.b16 %v444
    %v2341 = vunpack.c.h.b16 %v444
    %v2342 = vunpack.c.l.b16 %v445
    %v2343 = vunpack.c.h.b16 %v445
    %v2344 = vunpack.c.l.b16 %v446
    %v2345 = vunpack.c.h.b16 %v446
    %v2346 = vunpack.c.l.b16 %v447
    %v2347 = vunpack.c.h.b16 %v447
    %v2348 = vunpack.c.l.b16 %v448
    %v2349 = vunpack.c.h.b16 %v448
    %v2350 = vunpack.c.l.b16 %v449
    %v2351 = vunpack.c.h.b16 %v449
    %v2352 = vunpack.c.l.b16 %v450
    %v2353 = vunpack.c.h.b16 %v450
    %v2354 = vunpack.c.l.b16 %v451
    %v2355 = vunpack.c.h.b16 %v451
    %v2356 = vunpack.c.l.b16 %v452
    %v2357 = vunpack.c.h.b16 %v452
    %v2358 = vunpack.c.l.b16 %v453
    %v2359 = vunpack.c.h.b16 %v453
    %v2360 = vunpack.c.l.b16 %v454
    %v2361 = vunpack.c.h.b16 %v454
    %v2362 = vunpack.c.l.b16 %v455
    %v2363 = vunpack.c.h.b16 %v455
    %v2364 = vunpack.c.l.b16 %v456
    %v2365 = vunpack.c.h.b16 %v456
    %v2366 = vunpack.c.l.b16 %v457
    %v2367 = vunpack.c.h.b16 %v457
    %v2368 = vunpack.c.l.b16 %v458
    %v2369 = vunpack.c.h.b16 %v458
    %v2370 = vunpack.c.l.b16 %v459
    %v2371 = vunpack.c.h.b16 %v459
    %v2372 = vunpack.c.l.b16 %v460
    %v2373 = vunpack.c.h.b16 %v460
    %v2374 = vunpack.c.l.b16 %v461
    %v2375 = vunpack.c.h.b16 %v461
    %v2376 = vunpack.c.l.b16 %v462
    %v2377 = vunpack.c.h.b16 %v462
    %v2378 = vunpack.c.l.b16 %v463
    %v2379 = vunpack.c.h.b16 %v463
    %v2380 = vunpack.c.l.b16 %v464
    %v2381 = vunpack.c.h.b16 %v464
    %v2382 = vunpack.c.l.b16 %v465
    %v2383 = vunpack.c.h.b16 %v465
    %v2384 = vunpack.c.l.b16 %v466
    %v2385 = vunpack.c.h.b16 %v466
    %v2386 = vunpack.c.l.b16 %v467
    %v2387 = vunpack.c.h.b16 %v467
    %v2388 = vunpack.c.l.b16 %v468
    %v2389 = vunpack.c.h.b16 %v468
    %v2390 = vunpack.c.l.b16 %v469
    %v2391 = vunpack.c.h.b16 %v469
    %v2392 = vunpack.c.l.b16 %v470
    %v2393 = vunpack.c.h.b16 %v470
    %v2394 = vunpack.c.l.b16 %v471
    %v2395 = vunpack.c.h.b16 %v471
    %v2396 = vunpack.c.l.b16 %v472
    %v2397 = vunpack.c.h.b16 %v472
    %v2398 = vunpack.c.l.b16 %v473
    %v2399 = vunpack.c.h.b16 %v473
    %v2400 = vunpack.c.l.b16 %v474
    %v2401 = vunpack.c.h.b16 %v474
    %v2402 = vpack.c.b16 %v1682, %v1634
    %v2403 = vpack.c.b16 %v1683, %v1635
    %v2404 = vpack.c.b16 %v1684, %v1636
    %v2405 = vpack.c.b16 %v1685, %v1637
    %v2406 = vpack.c.b16 %v1686, %v1638
    %v2407 = vpack.c.b16 %v1687, %v1639
    %v2408 = vpack.c.b16 %v1688, %v1640
    %v2409 = vpack.c.b16 %v1689, %v1641
    %v2410 = vpack.c.b16 %v1690, %v1642
    %v2411 = vpack.c.b16 %v1691, %v1643
    %v2412 = vpack.c.b16 %v1692, %v1644
    %v2413 = vpack.c.b16 %v1693, %v1645
    %v2414 = vpack.c.b16 %v1694, %v1646
    %v2415 = vpack.c.b16 %v1695, %v1647
    %v2416 = vpack.c.b16 %v1696, %v1648
    %v2417 = vpack.c.b16 %v1697, %v1649
    %v2418 = vpack.c.b16 %v1698, %v1650
    %v2419 = vpack.c.b16 %v1699, %v1651
    %v2420 = vpack.c.b16 %v1700, %v1652
    %v2421 = vpack.c.b16 %v1701, %v1653
    %v2422 = vpack.c.b16 %v1702, %v1654
    %v2423 = vpack.c.b16 %v1703, %v1655
    %v2424 = vpack.c.b16 %v1704, %v1656
    %v2425 = vpack.c.b16 %v1705, %v1657
    %v2426 = vpack.c.b16 %v1706, %v1658
    %v2427 = vpack.c.b16 %v1707, %v1659
    %v2428 = vpack.c.b16 %v1708, %v1660
    %v2429 = vpack.c.b16 %v1709, %v1661
    %v2430 = vpack.c.b16 %v1710, %v1662
    %v2431 = vpack.c.b16 %v1711, %v1663
    %v2432 = vpack.c.b16 %v1712, %v1664
    %v2433 = vpack.c.b16 %v1713, %v1665
    %v2434 = vpack.c.b16 %v1714, %v1666
    %v2435 = vpack.c.b16 %v1715, %v1667
    %v2436 = vpack.c.b16 %v1716, %v1668
    %v2437 = vpack.c.b16 %v1717, %v1669
    %v2438 = vpack.c.b16 %v1718, %v1670
    %v2439 = vpack.c.b16 %v1719, %v1671
    %v2440 = vpack.c.b16 %v1720, %v1672
    %v2441 = vpack.c.b16 %v1721, %v1673
    %v2442 = vpack.c.b16 %v1722, %v1674
    %v2443 = vpack.c.b16 %v1723, %v1675
    %v2444 = vpack.c.b16 %v1724, %v1676
    %v2445 = vpack.c.b16 %v1725, %v1677
    %v2446 = vpack.c.b16 %v1726, %v1678
    %v2447 = vpack.c.b16 %v1727, %v1679
    %v2448 = vpack.c.b16 %v1728, %v1680
    %v2449 = vpack.c.b16 %v1729, %v1681
    %v2450 = vpack.c.b16 %v1778, %v1730
    %v2451 = vpack.c.b16 %v1779, %v1731
    %v2452 = vpack.c.b16 %v1780, %v1732
    %v2453 = vpack.c.b16 %v1781, %v1733
    %v2454 = vpack.c.b16 %v1782, %v1734
    %v2455 = vpack.c.b16 %v1783, %v1735
    %v2456 = vpack.c.b16 %v1784, %v1736
    %v2457 = vpack.c.b16 %v1785, %v1737
    %v2458 = vpack.c.b16 %v1786, %v1738
    %v2459 = vpack.c.b16 %v1787, %v1739
    %v2460 = vpack.c.b16 %v1788, %v1740
    %v2461 = vpack.c.b16 %v1789, %v1741
    %v2462 = vpack.c.b16 %v1790, %v1742
    %v2463 = vpack.c.b16 %v1791, %v1743
    %v2464 = vpack.c.b16 %v1792, %v1744
    %v2465 = vpack.c.b16 %v1793, %v1745
    %v2466 = vpack.c.b16 %v1794, %v1746
    %v2467 = vpack.c.b16 %v1795, %v1747
    %v2468 = vpack.c.b16 %v1796, %v1748
    %v2469 = vpack.c.b16 %v1797, %v1749
    %v2470 = vpack.c.b16 %v1798, %v1750
    %v2471 = vpack.c.b16 %v1799, %v1751
    %v2472 = vpack.c.b16 %v1800, %v1752
    %v2473 = vpack.c.b16 %v1801, %v1753
    %v2474 = vpack.c.b16 %v1802, %v1754
    %v2475 = vpack.c.b16 %v1803, %v1755
    %v2476 = vpack.c.b16 %v1804, %v1756
    %v2477 = vpack.c.b16 %v1805, %v1757
    %v2478 = vpack.c.b16 %v1806, %v1758
    %v2479 = vpack.c.b16 %v1807, %v1759
    %v2480 = vpack.c.b16 %v1808, %v1760
    %v2481 = vpack.c.b16 %v1809, %v1761
    %v2482 = vpack.c.b16 %v1810, %v1762
    %v2483 = vpack.c.b16 %v1811, %v1763
    %v2484 = vpack.c.b16 %v1812, %v1764
    %v2485 = vpack.c.b16 %v1813, %v1765
    %v2486 = vpack.c.b16 %v1814, %v1766
    %v2487 = vpack.c.b16 %v1815, %v1767
    %v2488 = vpack.c.b16 %v1816, %v1768
    %v2489 = vpack.c.b16 %v1817, %v1769
    %v2490 = vpack.c.b16 %v1818, %v1770
    %v2491 = vpack.c.b16 %v1819, %v1771
    %v2492 = vpack.c.b16 %v1820, %v1772
    %v2493 = vpack.c.b16 %v1821, %v1773
    %v2494 = vpack.c.b16 %v1822, %v1774
    %v2495 = vpack.c.b16 %v1823, %v1775
    %v2496 = vpack.c.b16 %v1824, %v1776
    %v2497 = vpack.c.b16 %v1825, %v1777
    %v2498 = vpack.c.b16 %v1874, %v1826
    %v2499 = vpack.c.b16 %v1875, %v1827
    %v2500 = vpack.c.b16 %v1876, %v1828
    %v2501 = vpack.c.b16 %v1877, %v1829
    %v2502 = vpack.c.b16 %v1878, %v1830
    %v2503 = vpack.c.b16 %v1879, %v1831
    %v2504 = vpack.c.b16 %v1880, %v1832
    %v2505 = vpack.c.b16 %v1881, %v1833
    %v2506 = vpack.c.b16 %v1882, %v1834
    %v2507 = vpack.c.b16 %v1883, %v1835
    %v2508 = vpack.c.b16 %v1884, %v1836
    %v2509 = vpack.c.b16 %v1885, %v1837
    %v2510 = vpack.c.b16 %v1886, %v1838
    %v2511 = vpack.c.b16 %v1887, %v1839
    %v2512 = vpack.c.b16 %v1888, %v1840
    %v2513 = vpack.c.b16 %v1889, %v1841
    %v2514 = vpack.c.b16 %v1890, %v1842
    %v2515 = vpack.c.b16 %v1891, %v1843
    %v2516 = vpack.c.b16 %v1892, %v1844
    %v2517 = vpack.c.b16 %v1893, %v1845
    %v2518 = vpack.c.b16 %v1894, %v1846
    %v2519 = vpack.c.b16 %v1895, %v1847
    %v2520 = vpack.c.b16 %v1896, %v1848
    %v2521 = vpack.c.b16 %v1897, %v1849
    %v2522 = vpack.c.b16 %v1898, %v1850
    %v2523 = vpack.c.b16 %v1899, %v1851
    %v2524 = vpack.c.b16 %v1900, %v1852
    %v2525 = vpack.c.b16 %v1901, %v1853
    %v2526 = vpack.c.b16 %v1902, %v1854
    %v2527 = vpack.c.b16 %v1903, %v1855
    %v2528 = vpack.c.b16 %v1904, %v1856
    %v2529 = vpack.c.b16 %v1905, %v1857
    %v2530 = vpack.c.b16 %v1906, %v1858
    %v2531 = vpack.c.b16 %v1907, %v1859
    %v2532 = vpack.c.b16 %v1908, %v1860
    %v2533 = vpack.c.b16 %v1909, %v1861
    %v2534 = vpack.c.b16 %v1910, %v1862
    %v2535 = vpack.c.b16 %v1911, %v1863
    %v2536 = vpack.c.b16 %v1912, %v1864
    %v2537 = vpack.c.b16 %v1913, %v1865
    %v2538 = vpack.c.b16 %v1914, %v1866
    %v2539 = vpack.c.b16 %v1915, %v1867
    %v2540 = vpack.c.b16 %v1916, %v1868
    %v2541 = vpack.c.b16 %v1917, %v1869
    %v2542 = vpack.c.b16 %v1918, %v1870
    %v2543 = vpack.c.b16 %v1919, %v1871
    %v2544 = vpack.c.b16 %v1920, %v1872
    %v2545 = vpack.c.b16 %v1921, %v1873
    %v2546 = vpack.c.b16 %v1970, %v1922
    %v2547 = vpack.c.b16 %v1971, %v1923
    %v2548 = vpack.c.b16 %v1972, %v1924
    %v2549 = vpack.c.b16 %v1973, %v1925
    %v2550 = vpack.c.b16 %v1974, %v1926
    %v2551 = vpack.c.b16 %v1975, %v1927
    %v2552 = vpack.c.b16 %v1976, %v1928
    %v2553 = vpack.c.b16 %v1977, %v1929
    %v2554 = vpack.c.b16 %v1978, %v1930
    %v2555 = vpack.c.b16 %v1979, %v1931
    %v2556 = vpack.c.b16 %v1980, %v1932
    %v2557 = vpack.c.b16 %v1981, %v1933
    %v2558 = vpack.c.b16 %v1982, %v1934
    %v2559 = vpack.c.b16 %v1983, %v1935
    %v2560 = vpack.c.b16 %v1984, %v1936
    %v2561 = vpack.c.b16 %v1985, %v1937
    %v2562 = vpack.c.b16 %v1986, %v1938
    %v2563 = vpack.c.b16 %v1987, %v1939
    %v2564 = vpack.c.b16 %v1988, %v1940
    %v2565 = vpack.c.b16 %v1989, %v1941
    %v2566 = vpack.c.b16 %v1990, %v1942
    %v2567 = vpack.c.b16 %v1991, %v1943
    %v2568 = vpack.c.b16 %v1992, %v1944
    %v2569 = vpack.c.b16 %v1993, %v1945
    %v2570 = vpack.c.b16 %v1994, %v1946
    %v2571 = vpack.c.b16 %v1995, %v1947
    %v2572 = vpack.c.b16 %v1996, %v1948
    %v2573 = vpack.c.b16 %v1997, %v1949
    %v2574 = vpack.c.b16 %v1998, %v1950
    %v2575 = vpack.c.b16 %v1999, %v1951
    %v2576 = vpack.c.b16 %v2000, %v1952
    %v2577 = vpack.c.b16 %v2001, %v1953
    %v2578 = vpack.c.b16 %v2002, %v1954
    %v2579 = vpack.c.b16 %v2003, %v1955
    %v2580 = vpack.c.b16 %v2004, %v1956
    %v2581 = vpack.c.b16 %v2005, %v1957
    %v2582 = vpack.c.b16 %v2006, %v1958
    %v2583 = vpack.c.b16 %v2007, %v1959
    %v2584 = vpack.c.b16 %v2008, %v1960
    %v2585 = vpack.c.b16 %v2009, %v1961
    %v2586 = vpack.c.b16 %v2010, %v1962
    %v2587 = vpack.c.b16 %v2011, %v1963
    %v2588 = vpack.c.b16 %v2012, %v1964
    %v2589 = vpack.c.b16 %v2013, %v1965
    %v2590 = vpack.c.b16 %v2014, %v1966
    %v2591 = vpack.c.b16 %v2015, %v1967
    %v2592 = vpack.c.b16 %v2016, %v1968
    %v2593 = vpack.c.b16 %v2017, %v1969
    %v2594 = vpack.c.b16 %v2066, %v2018
    %v2595 = vpack.c.b16 %v2067, %v2019
    %v2596 = vpack.c.b16 %v2068, %v2020
    %v2597 = vpack.c.b16 %v2069, %v2021
    %v2598 = vpack.c.b16 %v2070, %v2022
    %v2599 = vpack.c.b16 %v2071, %v2023
    %v2600 = vpack.c.b16 %v2072, %v2024
    %v2601 = vpack.c.b16 %v2073, %v2025
    %v2602 = vpack.c.b16 %v2074, %v2026
    %v2603 = vpack.c.b16 %v2075, %v2027
    %v2604 = vpack.c.b16 %v2076, %v2028
    %v2605 = vpack.c.b16 %v2077, %v2029
    %v2606 = vpack.c.b16 %v2078, %v2030
    %v2607 = vpack.c.b16 %v2079, %v2031
    %v2608 = vpack.c.b16 %v2080, %v2032
    %v2609 = vpack.c.b16 %v2081, %v2033
    %v2610 = vpack.c.b16 %v2082, %v2034
    %v2611 = vpack.c.b16 %v2083, %v2035
    %v2612 = vpack.c.b16 %v2084, %v2036
    %v2613 = vpack.c.b16 %v2085, %v2037
    %v2614 = vpack.c.b16 %v2086, %v2038
    %v2615 = vpack.c.b16 %v2087, %v2039
    %v2616 = vpack.c.b16 %v2088, %v2040
    %v2617 = vpack.c.b16 %v2089, %v2041
    %v2618 = vpack.c.b16 %v2090, %v2042
    %v2619 = vpack.c.b16 %v2091, %v2043
    %v2620 = vpack.c.b16 %v2092, %v2044
    %v2621 = vpack.c.b16 %v2093, %v2045
    %v2622 = vpack.c.b16 %v2094, %v2046
    %v2623 = vpack.c.b16 %v2095, %v2047
    %v2624 = vpack.c.b16 %v2096, %v2048
    %v2625 = vpack.c.b16 %v2097, %v2049
    %v2626 = vpack.c.b16 %v2098, %v2050
    %v2627 = vpack.c.b16 %v2099, %v2051
    %v2628 = vpack.c.b16 %v2100, %v2052
    %v2629 = vpack.c.b16 %v2101, %v2053
    %v2630 = vpack.c.b16 %v2102, %v2054
    %v2631 = vpack.c.b16 %v2103, %v2055
    %v2632 = vpack.c.b16 %v2104, %v2056
    %v2633 = vpack.c.b16 %v2105, %v2057
    %v2634 = vpack.c.b16 %v2106, %v2058
    %v2635 = vpack.c.b16 %v2107, %v2059
    %v2636 = vpack.c.b16 %v2108, %v2060
    %v2637 = vpack.c.b16 %v2109, %v2061
    %v2638 = vpack.c.b16 %v2110, %v2062
    %v2639 = vpack.c.b16 %v2111, %v2063
    %v2640 = vpack.c.b16 %v2112, %v2064
    %v2641 = vpack.c.b16 %v2113, %v2065
    %v2642 = vpack.c.b16 %v2162, %v2114
    %v2643 = vpack.c.b16 %v2163, %v2115
    %v2644 = vpack.c.b16 %v2164, %v2116
    %v2645 = vpack.c.b16 %v2165, %v2117
    %v2646 = vpack.c.b16 %v2166, %v2118
    %v2647 = vpack.c.b16 %v2167, %v2119
    %v2648 = vpack.c.b16 %v2168, %v2120
    %v2649 = vpack.c.b16 %v2169, %v2121
    %v2650 = vpack.c.b16 %v2170, %v2122
    %v2651 = vpack.c.b16 %v2171, %v2123
    %v2652 = vpack.c.b16 %v2172, %v2124
    %v2653 = vpack.c.b16 %v2173, %v2125
    %v2654 = vpack.c.b16 %v2174, %v2126
    %v2655 = vpack.c.b16 %v2175, %v2127
    %v2656 = vpack.c.b16 %v2176, %v2128
    %v2657 = vpack.c.b16 %v2177, %v2129
    %v2658 = vpack.c.b16 %v2178, %v2130
    %v2659 = vpack.c.b16 %v2179, %v2131
    %v2660 = vpack.c.b16 %v2180, %v2132
    %v2661 = vpack.c.b16 %v2181, %v2133
    %v2662 = vpack.c.b16 %v2182, %v2134
    %v2663 = vpack.c.b16 %v2183, %v2135
    %v2664 = vpack.c.b16 %v2184, %v2136
    %v2665 = vpack.c.b16 %v2185, %v2137
    %v2666 = vpack.c.b16 %v2186, %v2138
    %v2667 = vpack.c.b16 %v2187, %v2139
    %v2668 = vpack.c.b16 %v2188, %v2140
    %v2669 = vpack.c.b16 %v2189, %v2141
    %v2670 = vpack.c.b16 %v2190, %v2142
    %v2671 = vpack.c.b16 %v2191, %v2143
    %v2672 = vpack.c.b16 %v2192, %v2144
    %v2673 = vpack.c.b16 %v2193, %v2145
    %v2674 = vpack.c.b16 %v2194, %v2146
    %v2675 = vpack.c.b16 %v2195, %v2147
    %v2676 = vpack.c.b16 %v2196, %v2148
    %v2677 = vpack.c.b16 %v2197, %v2149
    %v2678 = vpack.c.b16 %v2198, %v2150
    %v2679 = vpack.c.b16 %v2199, %v2151
    %v2680 = vpack.c.b16 %v2200, %v2152
    %v2681 = vpack.c.b16 %v2201, %v2153
    %v2682 = vpack.c.b16 %v2202, %v2154
    %v2683 = vpack.c.b16 %v2203, %v2155
    %v2684 = vpack.c.b16 %v2204, %v2156
    %v2685 = vpack.c.b16 %v2205, %v2157
    %v2686 = vpack.c.b16 %v2206, %v2158
    %v2687 = vpack.c.b16 %v2207, %v2159
    %v2688 = vpack.c.b16 %v2208, %v2160
    %v2689 = vpack.c.b16 %v2209, %v2161
    %v2690 = vpack.c.b16 %v2258, %v2210
    %v2691 = vpack.c.b16 %v2259, %v2211
    %v2692 = vpack.c.b16 %v2260, %v2212
    %v2693 = vpack.c.b16 %v2261, %v2213
    %v2694 = vpack.c.b16 %v2262, %v2214
    %v2695 = vpack.c.b16 %v2263, %v2215
    %v2696 = vpack.c.b16 %v2264, %v2216
    %v2697 = vpack.c.b16 %v2265, %v2217
    %v2698 = vpack.c.b16 %v2266, %v2218
    %v2699 = vpack.c.b16 %v2267, %v2219
    %v2700 = vpack.c.b16 %v2268, %v2220
    %v2701 = vpack.c.b16 %v2269, %v2221
    %v2702 = vpack.c.b16 %v2270, %v2222
    %v2703 = vpack.c.b16 %v2271, %v2223
    %v2704 = vpack.c.b16 %v2272, %v2224
    %v2705 = vpack.c.b16 %v2273, %v2225
    %v2706 = vpack.c.b16 %v2274, %v2226
    %v2707 = vpack.c.b16 %v2275, %v2227
    %v2708 = vpack.c.b16 %v2276, %v2228
    %v2709 = vpack.c.b16 %v2277, %v2229
    %v2710 = vpack.c.b16 %v2278, %v2230
    %v2711 = vpack.c.b16 %v2279, %v2231
    %v2712 = vpack.c.b16 %v2280, %v2232
    %v2713 = vpack.c.b16 %v2281, %v2233
    %v2714 = vpack.c.b16 %v2282, %v2234
    %v2715 = vpack.c.b16 %v2283, %v2235
    %v2716 = vpack.c.b16 %v2284, %v2236
    %v2717 = vpack.c.b16 %v2285, %v2237
    %v2718 = vpack.c.b16 %v2286, %v2238
    %v2719 = vpack.c.b16 %v2287, %v2239
    %v2720 = vpack.c.b16 %v2288, %v2240
    %v2721 = vpack.c.b16 %v2289, %v2241
    %v2722 = vpack.c.b16 %v2290, %v2242
    %v2723 = vpack.c.b16 %v2291, %v2243
    %v2724 = vpack.c.b16 %v2292, %v2244
    %v2725 = vpack.c.b16 %v2293, %v2245
    %v2726 = vpack.c.b16 %v2294, %v2246
    %v2727 = vpack.c.b16 %v2295, %v2247
    %v2728 = vpack.c.b16 %v2296, %v2248
    %v2729 = vpack.c.b16 %v2297, %v2249
    %v2730 = vpack.c.b16 %v2298, %v2250
    %v2731 = vpack.c.b16 %v2299, %v2251
    %v2732 = vpack.c.b16 %v2300, %v2252
    %v2733 = vpack.c.b16 %v2301, %v2253
    %v2734 = vpack.c.b16 %v2302, %v2254
    %v2735 = vpack.c.b16 %v2303, %v2255
    %v2736 = vpack.c.b16 %v2304, %v2256
    %v2737 = vpack.c.b16 %v2305, %v2257
    %v2738 = vpack.c.b16 %v2354, %v2306
    %v2739 = vpack.c.b16 %v2355, %v2307
    %v2740 = vpack.c.b16 %v2356, %v2308
    %v2741 = vpack.c.b16 %v2357, %v2309
    %v2742 = vpack.c.b16 %v2358, %v2310
    %v2743 = vpack.c.b16 %v2359, %v2311
    %v2744 = vpack.c.b16 %v2360, %v2312
    %v2745 = vpack.c.b16 %v2361, %v2313
    %v2746 = vpack.c.b16 %v2362, %v2314
    %v2747 = vpack.c.b16 %v2363, %v2315
    %v2748 = vpack.c.b16 %v2364, %v2316
    %v2749 = vpack.c.b16 %v2365, %v2317
    %v2750 = vpack.c.b16 %v2366, %v2318
    %v2751 = vpack.c.b16 %v2367, %v2319
    %v2752 = vpack.c.b16 %v2368, %v2320
    %v2753 = vpack.c.b16 %v2369, %v2321
    %v2754 = vpack.c.b16 %v2370, %v2322
    %v2755 = vpack.c.b16 %v2371, %v2323
    %v2756 = vpack.c.b16 %v2372, %v2324
    %v2757 = vpack.c.b16 %v2373, %v2325
    %v2758 = vpack.c.b16 %v2374, %v2326
    %v2759 = vpack.c.b16 %v2375, %v2327
    %v2760 = vpack.c.b16 %v2376, %v2328
    %v2761 = vpack.c.b16 %v2377, %v2329
    %v2762 = vpack.c.b16 %v2378, %v2330
    %v2763 = vpack.c.b16 %v2379, %v2331
    %v2764 = vpack.c.b16 %v2380, %v2332
    %v2765 = vpack.c.b16 %v2381, %v2333
    %v2766 = vpack.c.b16 %v2382, %v2334
    %v2767 = vpack.c.b16 %v2383, %v2335
    %v2768 = vpack.c.b16 %v2384, %v2336
    %v2769 = vpack.c.b16 %v2385, %v2337
    %v2770 = vpack.c.b16 %v2386, %v2338
    %v2771 = vpack.c.b16 %v2387, %v2339
    %v2772 = vpack.c.b16 %v2388, %v2340
    %v2773 = vpack.c.b16 %v2389, %v2341
    %v2774 = vpack.c.b16 %v2390, %v2342
    %v2775 = vpack.c.b16 %v2391, %v2343
    %v2776 = vpack.c.b16 %v2392, %v2344
    %v2777 = vpack.c.b16 %v2393, %v2345
    %v2778 = vpack.c.b16 %v2394, %v2346
    %v2779 = vpack.c.b16 %v2395, %v2347
    %v2780 = vpack.c.b16 %v2396, %v2348
    %v2781 = vpack.c.b16 %v2397, %v2349
    %v2782 = vpack.c.b16 %v2398, %v2350
    %v2783 = vpack.c.b16 %v2399, %v2351
    %v2784 = vpack.c.b16 %v2400, %v2352
    %v2785 = vpack.c.b16 %v2401, %v2353
    %v3938 = vunpack.c.l.b16 %v475
    %v3939 = vunpack.c.l.b16 %v476
    %v3940 = vunpack.c.l.b16 %v477
    %v3941 = vunpack.c.l.b16 %v478
    %v3942 = vunpack.c.l.b16 %v479
    %v3943 = vunpack.c.l.b16 %v480
    %v3944 = vunpack.c.l.b16 %v481
    %v3945 = vunpack.c.l.b16 %v482
    %v3946 = vunpack.c.l.b16 %v483
    %v3947 = vunpack.c.l.b16 %v484
    %v3948 = vunpack.c.l.b16 %v485
    %v3949 = vunpack.c.l.b16 %v486
    %v3950 = vunpack.c.l.b16 %v487
    %v3951 = vunpack.c.l.b16 %v488
    %v3952 = vunpack.c.l.b16 %v489
    %v3953 = vunpack.c.l.b16 %v490
    %v3954 = vunpack.c.l.b16 %v491
    %v3955 = vunpack.c.l.b16 %v492
    %v3956 = vunpack.c.l.b16 %v493
    %v3957 = vunpack.c.l.b16 %v494
    %v3958 = vunpack.c.l.b16 %v495
    %v3959 = vunpack.c.l.b16 %v496
    %v3960 = vunpack.c.l.b16 %v497
    %v3961 = vunpack.c.l.b16 %v498
    %v3962 = vunpack.c.l.b16 %v499
    %v3963 = vunpack.c.l.b16 %v500
    %v3964 = vunpack.c.l.b16 %v501
    %v3965 = vunpack.c.l.b16 %v502
    %v3966 = vunpack.c.l.b16 %v503
    %v3967 = vunpack.c.l.b16 %v504
    %v3968 = vunpack.c.l.b16 %v505
    %v3969 = vunpack.c.l.b16 %v506
    %v3970 = vunpack.c.l.b16 %v507
    %v3971 = vunpack.c.l.b16 %v508
    %v3972 = vunpack.c.l.b16 %v509
    %v3973 = vunpack.c.l.b16 %v510
    %v3974 = vunpack.c.l.b16 %v511
    %v3975 = vunpack.c.l.b16 %v512
    %v3976 = vunpack.c.l.b16 %v513
    %v3977 = vunpack.c.l.b16 %v514
    %v3978 = vunpack.c.l.b16 %v515
    %v3979 = vunpack.c.l.b16 %v516
    %v3980 = vunpack.c.l.b16 %v517
    %v3981 = vunpack.c.l.b16 %v518
    %v3982 = vunpack.c.l.b16 %v519
    %v3983 = vunpack.c.l.b16 %v520
    %v3984 = vunpack.c.l.b16 %v521
    %v3985 = vunpack.c.l.b16 %v522
    %v3986 = vunpack.c.l.b16 %v523
    %v3987 = vunpack.c.l.b16 %v524
    %v3988 = vunpack.c.l.b16 %v525
    %v3989 = vunpack.c.l.b16 %v526
    %v3990 = vunpack.c.l.b16 %v527
    %v3991 = vunpack.c.l.b16 %v528
    %v3992 = vunpack.c.l.b16 %v529
    %v3993 = vunpack.c.l.b16 %v530
    %v3994 = vunpack.c.l.b16 %v531
    %v3995 = vunpack.c.l.b16 %v532
    %v3996 = vunpack.c.l.b16 %v533
    %v3997 = vunpack.c.l.b16 %v534
    %v3998 = vunpack.c.l.b16 %v535
    %v3999 = vunpack.c.l.b16 %v536
    %v4000 = vunpack.c.l.b16 %v537
    %v4001 = vunpack.c.l.b16 %v538
    %v4002 = vunpack.c.l.b16 %v539
    %v4003 = vunpack.c.l.b16 %v540
    %v4004 = vunpack.c.l.b16 %v541
    %v4005 = vunpack.c.l.b16 %v542
    %v4006 = vunpack.c.l.b16 %v543
    %v4007 = vunpack.c.l.b16 %v544
    %v4008 = vunpack.c.l.b16 %v545
    %v4009 = vunpack.c.l.b16 %v546
    %v4010 = vunpack.c.l.b16 %v547
    %v4011 = vunpack.c.l.b16 %v548
    %v4012 = vunpack.c.l.b16 %v549
    %v4013 = vunpack.c.l.b16 %v550
    %v4014 = vunpack.c.l.b16 %v551
    %v4015 = vunpack.c.l.b16 %v552
    %v4016 = vunpack.c.l.b16 %v553
    %v4017 = vunpack.c.l.b16 %v554
    %v4018 = vunpack.c.l.b16 %v555
    %v4019 = vunpack.c.l.b16 %v556
    %v4020 = vunpack.c.l.b16 %v557
    %v4021 = vunpack.c.l.b16 %v558
    %v4022 = vunpack.c.l.b16 %v559
    %v4023 = vunpack.c.l.b16 %v560
    %v4024 = vunpack.c.l.b16 %v561
    %v4025 = vunpack.c.l.b16 %v562
    %v4026 = vunpack.c.l.b16 %v563
    %v4027 = vunpack.c.l.b16 %v564
    %v4028 = vunpack.c.l.b16 %v565
    %v4029 = vunpack.c.l.b16 %v566
    %v4030 = vunpack.c.l.b16 %v567
    %v4031 = vunpack.c.l.b16 %v568
    %v4032 = vunpack.c.l.b16 %v569
    %v4033 = vunpack.c.l.b16 %v570
    %v4034 = vunpack.c.l.b16 %v571
    %v4035 = vunpack.c.l.b16 %v572
    %v4036 = vunpack.c.l.b16 %v573
    %v4037 = vunpack.c.l.b16 %v574
    %v4038 = vunpack.c.l.b16 %v575
    %v4039 = vunpack.c.l.b16 %v576
    %v4040 = vunpack.c.l.b16 %v577
    %v4041 = vunpack.c.l.b16 %v578
    %v4042 = vunpack.c.l.b16 %v579
    %v4043 = vunpack.c.l.b16 %v580
    %v4044 = vunpack.c.l.b16 %v581
    %v4045 = vunpack.c.l.b16 %v582
    %v4046 = vunpack.c.l.b16 %v583
    %v4047 = vunpack.c.l.b16 %v584
    %v4048 = vunpack.c.l.b16 %v585
    %v4049 = vunpack.c.l.b16 %v586
    %v4050 = vunpack.c.l.b16 %v587
    %v4051 = vunpack.c.l.b16 %v588
    %v4052 = vunpack.c.l.b16 %v589
    %v4053 = vunpack.c.l.b16 %v590
    %v4054 = vunpack.c.l.b16 %v591
    %v4055 = vunpack.c.l.b16 %v592
    %v4056 = vunpack.c.l.b16 %v593
    %v4057 = vunpack.c.l.b16 %v594
    %v4058 = vunpack.c.l.b16 %v595
    %v4059 = vunpack.c.l.b16 %v596
    %v4060 = vunpack.c.l.b16 %v597
    %v4061 = vunpack.c.l.b16 %v598
    %v4062 = vunpack.c.l.b16 %v599
    %v4063 = vunpack.c.l.b16 %v600
    %v4064 = vunpack.c.l.b16 %v601
    %v4065 = vunpack.c.l.b16 %v602
    %v4066 = vunpack.c.l.b16 %v603
    %v4067 = vunpack.c.l.b16 %v604
    %v4068 = vunpack.c.l.b16 %v605
    %v4069 = vunpack.c.l.b16 %v606
    %v4070 = vunpack.c.l.b16 %v607
    %v4071 = vunpack.c.l.b16 %v608
    %v4072 = vunpack.c.l.b16 %v609
    %v4073 = vunpack.c.l.b16 %v610
    %v4074 = vunpack.c.l.b16 %v611
    %v4075 = vunpack.c.l.b16 %v612
    %v4076 = vunpack.c.l.b16 %v613
    %v4077 = vunpack.c.l.b16 %v614
    %v4078 = vunpack.c.l.b16 %v615
    %v4079 = vunpack.c.l.b16 %v616
    %v4080 = vunpack.c.l.b16 %v617
    %v4081 = vunpack.c.l.b16 %v618
    %v4082 = vunpack.c.l.b16 %v619
    %v4083 = vunpack.c.l.b16 %v620
    %v4084 = vunpack.c.l.b16 %v621
    %v4085 = vunpack.c.l.b16 %v622
    %v4086 = vunpack.c.l.b16 %v623
    %v4087 = vunpack.c.l.b16 %v624
    %v4088 = vunpack.c.l.b16 %v625
    %v4089 = vunpack.c.l.b16 %v626
    %v4090 = vunpack.c.l.b16 %v627
    %v4091 = vunpack.c.l.b16 %v628
    %v4092 = vunpack.c.l.b16 %v629
    %v4093 = vunpack.c.l.b16 %v630
    %v4094 = vunpack.c.l.b16 %v631
    %v4095 = vunpack.c.l.b16 %v632
    %v4096 = vunpack.c.l.b16 %v633
    %v4097 = vunpack.c.l.b16 %v634
    %v4098 = vunpack.c.l.b16 %v635
    %v4099 = vunpack.c.l.b16 %v636
    %v4100 = vunpack.c.l.b16 %v637
    %v4101 = vunpack.c.l.b16 %v638
    %v4102 = vunpack.c.l.b16 %v639
    %v4103 = vunpack.c.l.b16 %v640
    %v4104 = vunpack.c.l.b16 %v641
    %v4105 = vunpack.c.l.b16 %v642
    %v4106 = vunpack.c.l.b16 %v643
    %v4107 = vunpack.c.l.b16 %v644
    %v4108 = vunpack.c.l.b16 %v645
    %v4109 = vunpack.c.l.b16 %v646
    %v4110 = vunpack.c.l.b16 %v647
    %v4111 = vunpack.c.l.b16 %v648
    %v4112 = vunpack.c.l.b16 %v649
    %v4113 = vunpack.c.l.b16 %v650
    %v4114 = vunpack.c.l.b16 %v651
    %v4115 = vunpack.c.l.b16 %v652
    %v4116 = vunpack.c.l.b16 %v653
    %v4117 = vunpack.c.l.b16 %v654
    %v4118 = vunpack.c.l.b16 %v655
    %v4119 = vunpack.c.l.b16 %v656
    %v4120 = vunpack.c.l.b16 %v657
    %v4121 = vunpack.c.l.b16 %v658
    %v4122 = vunpack.c.l.b16 %v659
    %v4123 = vunpack.c.l.b16 %v660
    %v4124 = vunpack.c.l.b16 %v661
    %v4125 = vunpack.c.l.b16 %v662
    %v4126 = vunpack.c.l.b16 %v663
    %v4127 = vunpack.c.l.b16 %v664
    %v4128 = vunpack.c.l.b16 %v665
    %v4129 = vunpack.c.l.b16 %v666
    %v4130 = vunpack.c.l.b16 %v667
    %v4131 = vunpack.c.l.b16 %v668
    %v4132 = vunpack.c.l.b16 %v669
    %v4133 = vunpack.c.l.b16 %v670
    %v4134 = vunpack.c.l.b16 %v671
    %v4135 = vunpack.c.l.b16 %v672
    %v4136 = vunpack.c.l.b16 %v673
    %v4137 = vunpack.c.l.b16 %v674
    %v4138 = vunpack.c.l.b16 %v675
    %v4139 = vunpack.c.l.b16 %v676
    %v4140 = vunpack.c.l.b16 %v677
    %v4141 = vunpack.c.l.b16 %v678
    %v4142 = vunpack.c.l.b16 %v679
    %v4143 = vunpack.c.l.b16 %v680
    %v4144 = vunpack.c.l.b16 %v681
    %v4145 = vunpack.c.l.b16 %v682
    %v4146 = vunpack.c.l.b16 %v683
    %v4147 = vunpack.c.l.b16 %v684
    %v4148 = vunpack.c.l.b16 %v685
    %v4149 = vunpack.c.l.b16 %v686
    %v4150 = vunpack.c.l.b16 %v687
    %v4151 = vunpack.c.l.b16 %v688
    %v4152 = vunpack.c.l.b16 %v689
    %v4153 = vunpack.c.l.b16 %v690
    %v4154 = vunpack.c.l.b16 %v691
    %v4155 = vunpack.c.l.b16 %v692
    %v4156 = vunpack.c.l.b16 %v693
    %v4157 = vunpack.c.l.b16 %v694
    %v4158 = vunpack.c.l.b16 %v695
    %v4159 = vunpack.c.l.b16 %v696
    %v4160 = vunpack.c.l.b16 %v697
    %v4161 = vunpack.c.l.b16 %v698
    %v4162 = vunpack.c.l.b16 %v699
    %v4163 = vunpack.c.l.b16 %v700
    %v4164 = vunpack.c.l.b16 %v701
    %v4165 = vunpack.c.l.b16 %v702
    %v4166 = vunpack.c.l.b16 %v703
    %v4167 = vunpack.c.l.b16 %v704
    %v4168 = vunpack.c.l.b16 %v705
    %v4169 = vunpack.c.l.b16 %v706
    %v4170 = vunpack.c.l.b16 %v707
    %v4171 = vunpack.c.l.b16 %v708
    %v4172 = vunpack.c.l.b16 %v709
    %v4173 = vunpack.c.l.b16 %v710
    %v4174 = vunpack.c.l.b16 %v711
    %v4175 = vunpack.c.l.b16 %v712
    %v4176 = vunpack.c.l.b16 %v713
    %v4177 = vunpack.c.l.b16 %v714
    %v4178 = vunpack.c.l.b16 %v715
    %v4179 = vunpack.c.l.b16 %v716
    %v4180 = vunpack.c.l.b16 %v717
    %v4181 = vunpack.c.l.b16 %v718
    %v4182 = vunpack.c.l.b16 %v719
    %v4183 = vunpack.c.l.b16 %v720
    %v4184 = vunpack.c.l.b16 %v721
    %v4185 = vunpack.c.l.b16 %v722
    %v4186 = vunpack.c.l.b16 %v723
    %v4187 = vunpack.c.l.b16 %v724
    %v4188 = vunpack.c.l.b16 %v725
    %v4189 = vunpack.c.l.b16 %v726
    %v4190 = vunpack.c.l.b16 %v727
    %v4191 = vunpack.c.l.b16 %v728
    %v4192 = vunpack.c.l.b16 %v729
    %v4193 = vunpack.c.l.b16 %v730
    %v4194 = vunpack.c.l.b16 %v731
    %v4195 = vunpack.c.l.b16 %v732
    %v4196 = vunpack.c.l.b16 %v733
    %v4197 = vunpack.c.l.b16 %v734
    %v4198 = vunpack.c.l.b16 %v735
    %v4199 = vunpack.c.l.b16 %v736
    %v4200 = vunpack.c.l.b16 %v737
    %v4201 = vunpack.c.l.b16 %v738
    %v4202 = vunpack.c.l.b16 %v739
    %v4203 = vunpack.c.l.b16 %v740
    %v4204 = vunpack.c.l.b16 %v741
    %v4205 = vunpack.c.l.b16 %v742
    %v4206 = vunpack.c.l.b16 %v743
    %v4207 = vunpack.c.l.b16 %v744
    %v4208 = vunpack.c.l.b16 %v745
    %v4209 = vunpack.c.l.b16 %v746
    %v4210 = vunpack.c.l.b16 %v747
    %v4211 = vunpack.c.l.b16 %v748
    %v4212 = vunpack.c.l.b16 %v749
    %v4213 = vunpack.c.l.b16 %v750
    %v4214 = vunpack.c.l.b16 %v751
    %v4215 = vunpack.c.l.b16 %v752
    %v4216 = vunpack.c.l.b16 %v753
    %v4217 = vunpack.c.l.b16 %v754
    %v4218 = vunpack.c.l.b16 %v755
    %v4219 = vunpack.c.l.b16 %v756
    %v4220 = vunpack.c.l.b16 %v757
    %v4221 = vunpack.c.l.b16 %v758
    %v4222 = vunpack.c.l.b16 %v759
    %v4223 = vunpack.c.l.b16 %v760
    %v4224 = vunpack.c.l.b16 %v761
    %v4225 = vunpack.c.l.b16 %v762
    %v4226 = vunpack.c.l.b16 %v763
    %v4227 = vunpack.c.l.b16 %v764
    %v4228 = vunpack.c.l.b16 %v765
    %v4229 = vunpack.c.l.b16 %v766
    %v4230 = vunpack.c.l.b16 %v767
    %v4231 = vunpack.c.l.b16 %v768
    %v4232 = vunpack.c.l.b16 %v769
    %v4233 = vunpack.c.l.b16 %v770
    %v4234 = vunpack.c.l.b16 %v771
    %v4235 = vunpack.c.l.b16 %v772
    %v4236 = vunpack.c.l.b16 %v773
    %v4237 = vunpack.c.l.b16 %v774
    %v4238 = vunpack.c.l.b16 %v775
    %v4239 = vunpack.c.l.b16 %v776
    %v4240 = vunpack.c.l.b16 %v777
    %v4241 = vunpack.c.l.b16 %v778
    %v4242 = vunpack.c.l.b16 %v779
    %v4243 = vunpack.c.l.b16 %v780
    %v4244 = vunpack.c.l.b16 %v781
    %v4245 = vunpack.c.l.b16 %v782
    %v4246 = vunpack.c.l.b16 %v783
    %v4247 = vunpack.c.l.b16 %v784
    %v4248 = vunpack.c.l.b16 %v785
    %v4249 = vunpack.c.l.b16 %v786
    %v4250 = vunpack.c.l.b16 %v787
    %v4251 = vunpack.c.l.b16 %v788
    %v4252 = vunpack.c.l.b16 %v789
    %v4253 = vunpack.c.l.b16 %v790
    %v4254 = vunpack.c.l.b16 %v791
    %v4255 = vunpack.c.l.b16 %v792
    %v4256 = vunpack.c.l.b16 %v793
    %v4257 = vunpack.c.l.b16 %v794
    %v4258 = vunpack.c.l.b16 %v795
    %v4259 = vunpack.c.l.b16 %v796
    %v4260 = vunpack.c.l.b16 %v797
    %v4261 = vunpack.c.l.b16 %v798
    %v4262 = vunpack.c.l.b16 %v799
    %v4263 = vunpack.c.l.b16 %v800
    %v4264 = vunpack.c.l.b16 %v801
    %v4265 = vunpack.c.l.b16 %v802
    %v4266 = vunpack.c.l.b16 %v803
    %v4267 = vunpack.c.l.b16 %v804
    %v4268 = vunpack.c.l.b16 %v805
    %v4269 = vunpack.c.l.b16 %v806
    %v4270 = vunpack.c.l.b16 %v807
    %v4271 = vunpack.c.l.b16 %v808
    %v4272 = vunpack.c.l.b16 %v809
    %v4273 = vunpack.c.l.b16 %v810
    %v4274 = vunpack.c.l.b16 %v811
    %v4275 = vunpack.c.l.b16 %v812
    %v4276 = vunpack.c.l.b16 %v813
    %v4277 = vunpack.c.l.b16 %v814
    %v4278 = vunpack.c.l.b16 %v815
    %v4279 = vunpack.c.l.b16 %v816
    %v4280 = vunpack.c.l.b16 %v817
    %v4281 = vunpack.c.l.b16 %v818
    %v4282 = vunpack.c.l.b16 %v819
    %v4283 = vunpack.c.l.b16 %v820
    %v4284 = vunpack.c.l.b16 %v821
    %v4285 = vunpack.c.l.b16 %v822
    %v4286 = vunpack.c.l.b16 %v823
    %v4287 = vunpack.c.l.b16 %v824
    %v4288 = vunpack.c.l.b16 %v825
    %v4289 = vunpack.c.l.b16 %v826
    %v4290 = vunpack.c.l.b16 %v827
    %v4291 = vunpack.c.l.b16 %v828
    %v4292 = vunpack.c.l.b16 %v829
    %v4293 = vunpack.c.l.b16 %v830
    %v4294 = vunpack.c.l.b16 %v831
    %v4295 = vunpack.c.l.b16 %v832
    %v4296 = vunpack.c.l.b16 %v833
    %v4297 = vunpack.c.l.b16 %v834
    %v4298 = vunpack.c.l.b16 %v835
    %v4299 = vunpack.c.l.b16 %v836
    %v4300 = vunpack.c.l.b16 %v837
    %v4301 = vunpack.c.l.b16 %v838
    %v4302 = vunpack.c.l.b16 %v839
    %v4303 = vunpack.c.l.b16 %v840
    %v4304 = vunpack.c.l.b16 %v841
    %v4305 = vunpack.c.l.b16 %v842
    %v4306 = vunpack.c.l.b16 %v843
    %v4307 = vunpack.c.l.b16 %v844
    %v4308 = vunpack.c.l.b16 %v845
    %v4309 = vunpack.c.l.b16 %v846
    %v4310 = vunpack.c.l.b16 %v847
    %v4311 = vunpack.c.l.b16 %v848
    %v4312 = vunpack.c.l.b16 %v849
    %v4313 = vunpack.c.l.b16 %v850
    %v4314 = vunpack.c.l.b16 %v851
    %v4315 = vunpack.c.l.b16 %v852
    %v4316 = vunpack.c.l.b16 %v853
    %v4317 = vunpack.c.l.b16 %v854
    %v4318 = vunpack.c.l.b16 %v855
    %v4319 = vunpack.c.l.b16 %v856
    %v4320 = vunpack.c.l.b16 %v857
    %v4321 = vunpack.c.l.b16 %v858
    %v4322 = vunpack.c.l.b16 %v859
    %v4323 = vunpack.c.l.b16 %v860
    %v4324 = vunpack.c.l.b16 %v861
    %v4325 = vunpack.c.l.b16 %v862
    %v4326 = vunpack.c.l.b16 %v863
    %v4327 = vunpack.c.l.b16 %v864
    %v4328 = vunpack.c.l.b16 %v865
    %v4329 = vunpack.c.l.b16 %v866
    %v4330 = vunpack.c.l.b16 %v867
    %v4331 = vunpack.c.l.b16 %v868
    %v4332 = vunpack.c.l.b16 %v869
    %v4333 = vunpack.c.l.b16 %v870
    %v4334 = vunpack.c.l.b16 %v871
    %v4335 = vunpack.c.l.b16 %v872
    %v4336 = vunpack.c.l.b16 %v873
    %v4337 = vunpack.c.l.b16 %v874
    %v4338 = vunpack.c.l.b16 %v875
    %v4339 = vunpack.c.l.b16 %v876
    %v4340 = vunpack.c.l.b16 %v877
    %v4341 = vunpack.c.l.b16 %v878
    %v4342 = vunpack.c.l.b16 %v879
    %v4343 = vunpack.c.l.b16 %v880
    %v4344 = vunpack.c.l.b16 %v881
    %v4345 = vunpack.c.l.b16 %v882
    %v4346 = vunpack.c.l.b16 %v883
    %v4347 = vunpack.c.l.b16 %v884
    %v4348 = vunpack.c.l.b16 %v885
    %v4349 = vunpack.c.l.b16 %v886
    %v4350 = vunpack.c.l.b16 %v887
    %v4351 = vunpack.c.l.b16 %v888
    %v4352 = vunpack.c.l.b16 %v889
    %v4353 = vunpack.c.l.b16 %v890
    %v4354 = vunpack.c.l.b16 %v891
    %v4355 = vunpack.c.l.b16 %v892
    %v4356 = vunpack.c.l.b16 %v893
    %v4357 = vunpack.c.l.b16 %v894
    %v4358 = vunpack.c.l.b16 %v895
    %v4359 = vunpack.c.l.b16 %v896
    %v4360 = vunpack.c.l.b16 %v897
    %v4361 = vunpack.c.l.b16 %v898
    %v4362 = vunpack.c.l.b16 %v899
    %v4363 = vunpack.c.l.b16 %v900
    %v4364 = vunpack.c.l.b16 %v901
    %v4365 = vunpack.c.l.b16 %v902
    %v4366 = vunpack.c.l.b16 %v903
    %v4367 = vunpack.c.l.b16 %v904
    %v4368 = vunpack.c.l.b16 %v905
    %v4369 = vunpack.c.l.b16 %v906
    %v4370 = vunpack.c.l.b16 %v907
    %v4371 = vunpack.c.l.b16 %v908
    %v4372 = vunpack.c.l.b16 %v909
    %v4373 = vunpack.c.l.b16 %v910
    %v4374 = vunpack.c.l.b16 %v911
    %v4375 = vunpack.c.l.b16 %v912
    %v4376 = vunpack.c.l.b16 %v913
    %v4377 = vunpack.c.l.b16 %v914
    %v4378 = vunpack.c.l.b16 %v915
    %v4379 = vunpack.c.l.b16 %v916
    %v4380 = vunpack.c.l.b16 %v917
    %v4381 = vunpack.c.l.b16 %v918
    %v4382 = vunpack.c.l.b16 %v919
    %v4383 = vunpack.c.l.b16 %v920
    %v4384 = vunpack.c.l.b16 %v921
    %v4385 = vunpack.c.l.b16 %v922
    %v4386 = vunpack.c.l.b16 %v923
    %v4387 = vunpack.c.l.b16 %v924
    %v4388 = vunpack.c.l.b16 %v925
    %v4389 = vunpack.c.l.b16 %v926
    %v4390 = vunpack.c.l.b16 %v927
    %v4391 = vunpack.c.l.b16 %v928
    %v4392 = vunpack.c.l.b16 %v929
    %v4393 = vunpack.c.l.b16 %v930
    %v4394 = vunpack.c.l.b16 %v931
    %v4395 = vunpack.c.l.b16 %v932
    %v4396 = vunpack.c.l.b16 %v933
    %v4397 = vunpack.c.l.b16 %v934
    %v4398 = vunpack.c.l.b16 %v935
    %v4399 = vunpack.c.l.b16 %v936
    %v4400 = vunpack.c.l.b16 %v937
    %v4401 = vunpack.c.l.b16 %v938
    %v4402 = vunpack.c.l.b16 %v939
    %v4403 = vunpack.c.l.b16 %v940
    %v4404 = vunpack.c.l.b16 %v941
    %v4405 = vunpack.c.l.b16 %v942
    %v4406 = vunpack.c.l.b16 %v943
    %v4407 = vunpack.c.l.b16 %v944
    %v4408 = vunpack.c.l.b16 %v945
    %v4409 = vunpack.c.l.b16 %v946
    %v4410 = vunpack.c.l.b16 %v947
    %v4411 = vunpack.c.l.b16 %v948
    %v4412 = vunpack.c.l.b16 %v949
    %v4413 = vunpack.c.l.b16 %v950
    %v4414 = vunpack.c.l.b16 %v951
    %v4415 = vunpack.c.l.b16 %v952
    %v4416 = vunpack.c.l.b16 %v953
    %v4417 = vunpack.c.l.b16 %v954
    %v4418 = vunpack.c.l.b16 %v955
    %v4419 = vunpack.c.l.b16 %v956
    %v4420 = vunpack.c.l.b16 %v957
    %v4421 = vunpack.c.l.b16 %v958
    %v4422 = vunpack.c.l.b16 %v959
    %v4423 = vunpack.c.l.b16 %v960
    %v4424 = vunpack.c.l.b16 %v961
    %v4425 = vunpack.c.l.b16 %v962
    %v4426 = vunpack.c.l.b16 %v963
    %v4427 = vunpack.c.l.b16 %v964
    %v4428 = vunpack.c.l.b16 %v965
    %v4429 = vunpack.c.l.b16 %v966
    %v4430 = vunpack.c.l.b16 %v967
    %v4431 = vunpack.c.l.b16 %v968
    %v4432 = vunpack.c.l.b16 %v969
    %v4433 = vunpack.c.l.b16 %v970
    %v4434 = vunpack.c.l.b16 %v971
    %v4435 = vunpack.c.l.b16 %v972
    %v4436 = vunpack.c.l.b16 %v973
    %v4437 = vunpack.c.l.b16 %v974
    %v4438 = vunpack.c.l.b16 %v975
    %v4439 = vunpack.c.l.b16 %v976
    %v4440 = vunpack.c.l.b16 %v977
    %v4441 = vunpack.c.l.b16 %v978
    %v4442 = vunpack.c.l.b16 %v979
    %v4443 = vunpack.c.l.b16 %v980
    %v4444 = vunpack.c.l.b16 %v981
    %v4445 = vunpack.c.l.b16 %v982
    %v4446 = vunpack.c.l.b16 %v983
    %v4447 = vunpack.c.l.b16 %v984
    %v4448 = vunpack.c.l.b16 %v985
    %v4449 = vunpack.c.l.b16 %v986
    %v4450 = vunpack.c.l.b16 %v987
    %v4451 = vunpack.c.l.b16 %v988
    %v4452 = vunpack.c.l.b16 %v989
    %v4453 = vunpack.c.l.b16 %v990
    %v4454 = vunpack.c.l.b16 %v991
    %v4455 = vunpack.c.l.b16 %v992
    %v4456 = vunpack.c.l.b16 %v993
    %v4457 = vunpack.c.l.b16 %v994
    %v4458 = vunpack.c.l.b16 %v995
    %v4459 = vunpack.c.l.b16 %v996
    %v4460 = vunpack.c.l.b16 %v997
    %v4461 = vunpack.c.l.b16 %v998
    %v4462 = vunpack.c.l.b16 %v999
    %v4463 = vunpack.c.l.b16 %v1000
    %v4464 = vunpack.c.l.b16 %v1001
    %v4465 = vunpack.c.l.b16 %v1002
    %v4466 = vunpack.c.l.b16 %v1003
    %v4467 = vunpack.c.l.b16 %v1004
    %v4468 = vunpack.c.l.b16 %v1005
    %v4469 = vunpack.c.l.b16 %v1006
    %v4470 = vunpack.c.l.b16 %v1007
    %v4471 = vunpack.c.l.b16 %v1008
    %v4472 = vunpack.c.l.b16 %v1009
    %v4473 = vunpack.c.l.b16 %v1010
    %v4474 = vunpack.c.l.b16 %v1011
    %v4475 = vunpack.c.l.b16 %v1012
    %v4476 = vunpack.c.l.b16 %v1013
    %v4477 = vunpack.c.l.b16 %v1014
    %v4478 = vunpack.c.l.b16 %v1015
    %v4479 = vunpack.c.l.b16 %v1016
    %v4480 = vunpack.c.l.b16 %v1017
    %v4481 = vunpack.c.l.b16 %v1018
    %v4482 = vunpack.c.l.b16 %v1019
    %v4483 = vunpack.c.l.b16 %v1020
    %v4484 = vunpack.c.l.b16 %v1021
    %v4485 = vunpack.c.l.b16 %v1022
    %v4486 = vunpack.c.l.b16 %v1023
    %v4487 = vunpack.c.l.b16 %v1024
    %v4488 = vunpack.c.l.b16 %v1025
    %v4489 = vunpack.c.l.b16 %v1026
    %v4490 = vunpack.c.l.b16 %v1027
    %v4491 = vunpack.c.l.b16 %v1028
    %v4492 = vunpack.c.l.b16 %v1029
    %v4493 = vunpack.c.l.b16 %v1030
    %v4494 = vunpack.c.l.b16 %v1031
    %v4495 = vunpack.c.l.b16 %v1032
    %v4496 = vunpack.c.l.b16 %v1033
    %v4497 = vunpack.c.l.b16 %v1034
    %v4498 = vunpack.c.l.b16 %v1035
    %v4499 = vunpack.c.l.b16 %v1036
    %v4500 = vunpack.c.l.b16 %v1037
    %v4501 = vunpack.c.l.b16 %v1038
    %v4502 = vunpack.c.l.b16 %v1039
    %v4503 = vunpack.c.l.b16 %v1040
    %v4504 = vunpack.c.l.b16 %v1041
    %v4505 = vunpack.c.l.b16 %v1042
    %v4506 = vunpack.c.l.b16 %v1043
    %v4507 = vunpack.c.l.b16 %v1044
    %v4508 = vunpack.c.l.b16 %v1045
    %v4509 = vunpack.c.l.b16 %v1046
    %v4510 = vunpack.c.l.b16 %v1047
    %v4511 = vunpack.c.l.b16 %v1048
    %v4512 = vunpack.c.l.b16 %v1049
    %v4513 = vunpack.c.l.b16 %v1050
    %v4514 = vunpack.c.l.b16 %v1051
    %v4515 = vunpack.c.l.b16 %v1052
    %v4516 = vunpack.c.l.b16 %v1053
    %v4517 = vunpack.c.l.b16 %v1054
    %v4518 = vunpack.c.l.b16 %v1055
    %v4519 = vunpack.c.l.b16 %v1056
    %v4520 = vunpack.c.l.b16 %v1057
    %v4521 = vunpack.c.l.b16 %v1058
    %v4522 = vunpack.c.l.b16 %v1059
    %v4523 = vunpack.c.l.b16 %v1060
    %v4524 = vunpack.c.l.b16 %v1061
    %v4525 = vunpack.c.l.b16 %v1062
    %v4526 = vunpack.c.l.b16 %v1063
    %v4527 = vunpack.c.l.b16 %v1064
    %v4528 = vunpack.c.l.b16 %v1065
    %v4529 = vunpack.c.l.b16 %v1066
    %v4530 = vunpack.c.l.b16 %v1067
    %v4531 = vunpack.c.l.b16 %v1068
    %v4532 = vunpack.c.l.b16 %v1069
    %v4533 = vunpack.c.l.b16 %v1070
    %v4534 = vunpack.c.l.b16 %v1071
    %v4535 = vunpack.c.l.b16 %v1072
    %v4536 = vunpack.c.l.b16 %v1073
    %v4537 = vunpack.c.l.b16 %v1074
    %v4538 = vunpack.c.l.b16 %v1075
    %v4539 = vunpack.c.l.b16 %v1076
    %v4540 = vunpack.c.l.b16 %v1077
    %v4541 = vunpack.c.l.b16 %v1078
    %v4542 = vunpack.c.l.b16 %v1079
    %v4543 = vunpack.c.l.b16 %v1080
    %v4544 = vunpack.c.l.b16 %v1081
    %v4545 = vunpack.c.l.b16 %v1082
    %v4546 = vunpack.c.l.b16 %v1083
    %v4547 = vunpack.c.l.b16 %v1084
    %v4548 = vunpack.c.l.b16 %v1085
    %v4549 = vunpack.c.l.b16 %v1086
    %v4550 = vunpack.c.l.b16 %v1087
    %v4551 = vunpack.c.l.b16 %v1088
    %v4552 = vunpack.c.l.b16 %v1089
    %v4553 = vunpack.c.l.b16 %v1090
    %v4554 = vunpack.c.l.b16 %v1091
    %v4555 = vunpack.c.l.b16 %v1092
    %v4556 = vunpack.c.l.b16 %v1093
    %v4557 = vunpack.c.l.b16 %v1094
    %v4558 = vunpack.c.l.b16 %v1095
    %v4559 = vunpack.c.l.b16 %v1096
    %v4560 = vunpack.c.l.b16 %v1097
    %v4561 = vunpack.c.l.b16 %v1098
    %v4562 = vunpack.c.l.b16 %v1099
    %v4563 = vunpack.c.l.b16 %v1100
    %v4564 = vunpack.c.l.b16 %v1101
    %v4565 = vunpack.c.l.b16 %v1102
    %v4566 = vunpack.c.l.b16 %v1103
    %v4567 = vunpack.c.l.b16 %v1104
    %v4568 = vunpack.c.l.b16 %v1105
    %v4569 = vunpack.c.l.b16 %v1106
    %v4570 = vunpack.c.l.b16 %v1107
    %v4571 = vunpack.c.l.b16 %v1108
    %v4572 = vunpack.c.l.b16 %v1109
    %v4573 = vunpack.c.l.b16 %v1110
    %v4574 = vunpack.c.l.b16 %v1111
    %v4575 = vunpack.c.l.b16 %v1112
    %v4576 = vunpack.c.l.b16 %v1113
    %v4577 = vunpack.c.l.b16 %v1114
    %v4578 = vunpack.c.l.b16 %v1115
    %v4579 = vunpack.c.l.b16 %v1116
    %v4580 = vunpack.c.l.b16 %v1117
    %v4581 = vunpack.c.l.b16 %v1118
    %v4582 = vunpack.c.l.b16 %v1119
    %v4583 = vunpack.c.l.b16 %v1120
    %v4584 = vunpack.c.l.b16 %v1121
    %v4585 = vunpack.c.l.b16 %v1122
    %v4586 = vunpack.c.l.b16 %v1123
    %v4587 = vunpack.c.l.b16 %v1124
    %v4588 = vunpack.c.l.b16 %v1125
    %v4589 = vunpack.c.l.b16 %v1126
    %v4590 = vunpack.c.l.b16 %v1127
    %v4591 = vunpack.c.l.b16 %v1128
    %v4592 = vunpack.c.l.b16 %v1129
    %v4593 = vunpack.c.l.b16 %v1130
    %v4594 = vunpack.c.l.b16 %v1131
    %v4595 = vunpack.c.l.b16 %v1132
    %v4596 = vunpack.c.l.b16 %v1133
    %v4597 = vunpack.c.l.b16 %v1134
    %v4598 = vunpack.c.l.b16 %v1135
    %v4599 = vunpack.c.l.b16 %v1136
    %v4600 = vunpack.c.l.b16 %v1137
    %v4601 = vunpack.c.l.b16 %v1138
    %v4602 = vunpack.c.l.b16 %v1139
    %v4603 = vunpack.c.l.b16 %v1140
    %v4604 = vunpack.c.l.b16 %v1141
    %v4605 = vunpack.c.l.b16 %v1142
    %v4606 = vunpack.c.l.b16 %v1143
    %v4607 = vunpack.c.l.b16 %v1144
    %v4608 = vunpack.c.l.b16 %v1145
    %v4609 = vunpack.c.l.b16 %v1146
    %v4610 = vunpack.c.l.b16 %v1147
    %v4611 = vunpack.c.l.b16 %v1148
    %v4612 = vunpack.c.l.b16 %v1149
    %v4613 = vunpack.c.l.b16 %v1150
    %v4614 = vunpack.c.l.b16 %v1151
    %v4615 = vunpack.c.l.b16 %v1152
    %v4616 = vunpack.c.l.b16 %v1153
    %v4617 = vunpack.c.l.b16 %v1154
    %v4618 = vunpack.c.l.b16 %v1155
    %v4619 = vunpack.c.l.b16 %v1156
    %v4620 = vunpack.c.l.b16 %v1157
    %v4621 = vunpack.c.l.b16 %v1158
    %v4622 = vunpack.c.l.b16 %v1159
    %v4623 = vunpack.c.l.b16 %v1160
    %v4624 = vunpack.c.l.b16 %v1161
    %v4625 = vunpack.c.l.b16 %v1162
    %v4626 = vunpack.c.l.b16 %v1163
    %v4627 = vunpack.c.l.b16 %v1164
    %v4628 = vunpack.c.l.b16 %v1165
    %v4629 = vunpack.c.l.b16 %v1166
    %v4630 = vunpack.c.l.b16 %v1167
    %v4631 = vunpack.c.l.b16 %v1168
    %v4632 = vunpack.c.l.b16 %v1169
    %v4633 = vunpack.c.l.b16 %v1170
    %v4634 = vunpack.c.l.b16 %v1171
    %v4635 = vunpack.c.l.b16 %v1172
    %v4636 = vunpack.c.l.b16 %v1173
    %v4637 = vunpack.c.l.b16 %v1174
    %v4638 = vunpack.c.l.b16 %v1175
    %v4639 = vunpack.c.l.b16 %v1176
    %v4640 = vunpack.c.l.b16 %v1177
    %v4641 = vunpack.c.l.b16 %v1178
    %v4642 = vunpack.c.l.b16 %v1179
    %v4643 = vunpack.c.l.b16 %v1180
    %v4644 = vunpack.c.l.b16 %v1181
    %v4645 = vunpack.c.l.b16 %v1182
    %v4646 = vunpack.c.l.b16 %v1183
    %v4647 = vunpack.c.l.b16 %v1184
    %v4648 = vunpack.c.l.b16 %v1185
    %v4649 = vunpack.c.l.b16 %v1186
    %v4650 = vunpack.c.l.b16 %v1187
    %v4651 = vunpack.c.l.b16 %v1188
    %v4652 = vunpack.c.l.b16 %v1189
    %v4653 = vunpack.c.l.b16 %v1190
    %v4654 = vunpack.c.l.b16 %v1191
    %v4655 = vunpack.c.l.b16 %v1192
    %v4656 = vunpack.c.l.b16 %v1193
    %v4657 = vunpack.c.l.b16 %v1194
    %v4658 = vunpack.c.l.b16 %v1195
    %v4659 = vunpack.c.l.b16 %v1196
    %v4660 = vunpack.c.l.b16 %v1197
    %v4661 = vunpack.c.l.b16 %v1198
    %v4662 = vunpack.c.l.b16 %v1199
    %v4663 = vunpack.c.l.b16 %v1200
    %v4664 = vunpack.c.l.b16 %v1201
    %v4665 = vunpack.c.l.b16 %v1202
    %v4666 = vunpack.c.l.b16 %v1203
    %v4667 = vunpack.c.l.b16 %v1204
    %v4668 = vunpack.c.l.b16 %v1205
    %v4669 = vunpack.c.l.b16 %v1206
    %v4670 = vunpack.c.l.b16 %v1207
    %v4671 = vunpack.c.l.b16 %v1208
    %v4672 = vunpack.c.l.b16 %v1209
    %v4673 = vunpack.c.l.b16 %v1210
    %v4674 = vunpack.c.l.b16 %v1211
    %v4675 = vunpack.c.l.b16 %v1212
    %v4676 = vunpack.c.l.b16 %v1213
    %v4677 = vunpack.c.l.b16 %v1214
    %v4678 = vunpack.c.l.b16 %v1215
    %v4679 = vunpack.c.l.b16 %v1216
    %v4680 = vunpack.c.l.b16 %v1217
    %v4681 = vunpack.c.l.b16 %v1218
    %v4682 = vunpack.c.l.b16 %v1219
    %v4683 = vunpack.c.l.b16 %v1220
    %v4684 = vunpack.c.l.b16 %v1221
    %v4685 = vunpack.c.l.b16 %v1222
    %v4686 = vunpack.c.l.b16 %v1223
    %v4687 = vunpack.c.l.b16 %v1224
    %v4688 = vunpack.c.l.b16 %v1225
    %v4689 = vunpack.c.l.b16 %v1226
    %v4690 = vunpack.c.l.b16 %v1227
    %v4691 = vunpack.c.l.b16 %v1228
    %v4692 = vunpack.c.l.b16 %v1229
    %v4693 = vunpack.c.l.b16 %v1230
    %v4694 = vunpack.c.l.b16 %v1231
    %v4695 = vunpack.c.l.b16 %v1232
    %v4696 = vunpack.c.l.b16 %v1233
    %v4697 = vunpack.c.l.b16 %v1234
    %v4698 = vunpack.c.l.b16 %v1235
    %v4699 = vunpack.c.l.b16 %v1236
    %v4700 = vunpack.c.l.b16 %v1237
    %v4701 = vunpack.c.l.b16 %v1238
    %v4702 = vunpack.c.l.b16 %v1239
    %v4703 = vunpack.c.l.b16 %v1240
    %v4704 = vunpack.c.l.b16 %v1241
    %v4705 = vunpack.c.l.b16 %v1242
    %v4706 = vpack.c.b16 %v3939, %v3938
    %v4707 = vpack.c.b16 %v3941, %v3940
    %v4708 = vpack.c.b16 %v3943, %v3942
    %v4709 = vpack.c.b16 %v3945, %v3944
    %v4710 = vpack.c.b16 %v3947, %v3946
    %v4711 = vpack.c.b16 %v3949, %v3948
    %v4712 = vpack.c.b16 %v3951, %v3950
    %v4713 = vpack.c.b16 %v3953, %v3952
    %v4714 = vpack.c.b16 %v3955, %v3954
    %v4715 = vpack.c.b16 %v3957, %v3956
    %v4716 = vpack.c.b16 %v3959, %v3958
    %v4717 = vpack.c.b16 %v3961, %v3960
    %v4718 = vpack.c.b16 %v3963, %v3962
    %v4719 = vpack.c.b16 %v3965, %v3964
    %v4720 = vpack.c.b16 %v3967, %v3966
    %v4721 = vpack.c.b16 %v3969, %v3968
    %v4722 = vpack.c.b16 %v3971, %v3970
    %v4723 = vpack.c.b16 %v3973, %v3972
    %v4724 = vpack.c.b16 %v3975, %v3974
    %v4725 = vpack.c.b16 %v3977, %v3976
    %v4726 = vpack.c.b16 %v3979, %v3978
    %v4727 = vpack.c.b16 %v3981, %v3980
    %v4728 = vpack.c.b16 %v3983, %v3982
    %v4729 = vpack.c.b16 %v3985, %v3984
    %v4730 = vpack.c.b16 %v3987, %v3986
    %v4731 = vpack.c.b16 %v3989, %v3988
    %v4732 = vpack.c.b16 %v3991, %v3990
    %v4733 = vpack.c.b16 %v3993, %v3992
    %v4734 = vpack.c.b16 %v3995, %v3994
    %v4735 = vpack.c.b16 %v3997, %v3996
    %v4736 = vpack.c.b16 %v3999, %v3998
    %v4737 = vpack.c.b16 %v4001, %v4000
    %v4738 = vpack.c.b16 %v4003, %v4002
    %v4739 = vpack.c.b16 %v4005, %v4004
    %v4740 = vpack.c.b16 %v4007, %v4006
    %v4741 = vpack.c.b16 %v4009, %v4008
    %v4742 = vpack.c.b16 %v4011, %v4010
    %v4743 = vpack.c.b16 %v4013, %v4012
    %v4744 = vpack.c.b16 %v4015, %v4014
    %v4745 = vpack.c.b16 %v4017, %v4016
    %v4746 = vpack.c.b16 %v4019, %v4018
    %v4747 = vpack.c.b16 %v4021, %v4020
    %v4748 = vpack.c.b16 %v4023, %v4022
    %v4749 = vpack.c.b16 %v4025, %v4024
    %v4750 = vpack.c.b16 %v4027, %v4026
    %v4751 = vpack.c.b16 %v4029, %v4028
    %v4752 = vpack.c.b16 %v4031, %v4030
    %v4753 = vpack.c.b16 %v4033, %v4032
    %v4754 = vpack.c.b16 %v4035, %v4034
    %v4755 = vpack.c.b16 %v4037, %v4036
    %v4756 = vpack.c.b16 %v4039, %v4038
    %v4757 = vpack.c.b16 %v4041, %v4040
    %v4758 = vpack.c.b16 %v4043, %v4042
    %v4759 = vpack.c.b16 %v4045, %v4044
    %v4760 = vpack.c.b16 %v4047, %v4046
    %v4761 = vpack.c.b16 %v4049, %v4048
    %v4762 = vpack.c.b16 %v4051, %v4050
    %v4763 = vpack.c.b16 %v4053, %v4052
    %v4764 = vpack.c.b16 %v4055, %v4054
    %v4765 = vpack.c.b16 %v4057, %v4056
    %v4766 = vpack.c.b16 %v4059, %v4058
    %v4767 = vpack.c.b16 %v4061, %v4060
    %v4768 = vpack.c.b16 %v4063, %v4062
    %v4769 = vpack.c.b16 %v4065, %v4064
    %v4770 = vpack.c.b16 %v4067, %v4066
    %v4771 = vpack.c.b16 %v4069, %v4068
    %v4772 = vpack.c.b16 %v4071, %v4070
    %v4773 = vpack.c.b16 %v4073, %v4072
    %v4774 = vpack.c.b16 %v4075, %v4074
    %v4775 = vpack.c.b16 %v4077, %v4076
    %v4776 = vpack.c.b16 %v4079, %v4078
    %v4777 = vpack.c.b16 %v4081, %v4080
    %v4778 = vpack.c.b16 %v4083, %v4082
    %v4779 = vpack.c.b16 %v4085, %v4084
    %v4780 = vpack.c.b16 %v4087, %v4086
    %v4781 = vpack.c.b16 %v4089, %v4088
    %v4782 = vpack.c.b16 %v4091, %v4090
    %v4783 = vpack.c.b16 %v4093, %v4092
    %v4784 = vpack.c.b16 %v4095, %v4094
    %v4785 = vpack.c.b16 %v4097, %v4096
    %v4786 = vpack.c.b16 %v4099, %v4098
    %v4787 = vpack.c.b16 %v4101, %v4100
    %v4788 = vpack.c.b16 %v4103, %v4102
    %v4789 = vpack.c.b16 %v4105, %v4104
    %v4790 = vpack.c.b16 %v4107, %v4106
    %v4791 = vpack.c.b16 %v4109, %v4108
    %v4792 = vpack.c.b16 %v4111, %v4110
    %v4793 = vpack.c.b16 %v4113, %v4112
    %v4794 = vpack.c.b16 %v4115, %v4114
    %v4795 = vpack.c.b16 %v4117, %v4116
    %v4796 = vpack.c.b16 %v4119, %v4118
    %v4797 = vpack.c.b16 %v4121, %v4120
    %v4798 = vpack.c.b16 %v4123, %v4122
    %v4799 = vpack.c.b16 %v4125, %v4124
    %v4800 = vpack.c.b16 %v4127, %v4126
    %v4801 = vpack.c.b16 %v4129, %v4128
    %v4802 = vpack.c.b16 %v4131, %v4130
    %v4803 = vpack.c.b16 %v4133, %v4132
    %v4804 = vpack.c.b16 %v4135, %v4134
    %v4805 = vpack.c.b16 %v4137, %v4136
    %v4806 = vpack.c.b16 %v4139, %v4138
    %v4807 = vpack.c.b16 %v4141, %v4140
    %v4808 = vpack.c.b16 %v4143, %v4142
    %v4809 = vpack.c.b16 %v4145, %v4144
    %v4810 = vpack.c.b16 %v4147, %v4146
    %v4811 = vpack.c.b16 %v4149, %v4148
    %v4812 = vpack.c.b16 %v4151, %v4150
    %v4813 = vpack.c.b16 %v4153, %v4152
    %v4814 = vpack.c.b16 %v4155, %v4154
    %v4815 = vpack.c.b16 %v4157, %v4156
    %v4816 = vpack.c.b16 %v4159, %v4158
    %v4817 = vpack.c.b16 %v4161, %v4160
    %v4818 = vpack.c.b16 %v4163, %v4162
    %v4819 = vpack.c.b16 %v4165, %v4164
    %v4820 = vpack.c.b16 %v4167, %v4166
    %v4821 = vpack.c.b16 %v4169, %v4168
    %v4822 = vpack.c.b16 %v4171, %v4170
    %v4823 = vpack.c.b16 %v4173, %v4172
    %v4824 = vpack.c.b16 %v4175, %v4174
    %v4825 = vpack.c.b16 %v4177, %v4176
    %v4826 = vpack.c.b16 %v4179, %v4178
    %v4827 = vpack.c.b16 %v4181, %v4180
    %v4828 = vpack.c.b16 %v4183, %v4182
    %v4829 = vpack.c.b16 %v4185, %v4184
    %v4830 = vpack.c.b16 %v4187, %v4186
    %v4831 = vpack.c.b16 %v4189, %v4188
    %v4832 = vpack.c.b16 %v4191, %v4190
    %v4833 = vpack.c.b16 %v4193, %v4192
    %v4834 = vpack.c.b16 %v4195, %v4194
    %v4835 = vpack.c.b16 %v4197, %v4196
    %v4836 = vpack.c.b16 %v4199, %v4198
    %v4837 = vpack.c.b16 %v4201, %v4200
    %v4838 = vpack.c.b16 %v4203, %v4202
    %v4839 = vpack.c.b16 %v4205, %v4204
    %v4840 = vpack.c.b16 %v4207, %v4206
    %v4841 = vpack.c.b16 %v4209, %v4208
    %v4842 = vpack.c.b16 %v4211, %v4210
    %v4843 = vpack.c.b16 %v4213, %v4212
    %v4844 = vpack.c.b16 %v4215, %v4214
    %v4845 = vpack.c.b16 %v4217, %v4216
    %v4846 = vpack.c.b16 %v4219, %v4218
    %v4847 = vpack.c.b16 %v4221, %v4220
    %v4848 = vpack.c.b16 %v4223, %v4222
    %v4849 = vpack.c.b16 %v4225, %v4224
    %v4850 = vpack.c.b16 %v4227, %v4226
    %v4851 = vpack.c.b16 %v4229, %v4228
    %v4852 = vpack.c.b16 %v4231, %v4230
    %v4853 = vpack.c.b16 %v4233, %v4232
    %v4854 = vpack.c.b16 %v4235, %v4234
    %v4855 = vpack.c.b16 %v4237, %v4236
    %v4856 = vpack.c.b16 %v4239, %v4238
    %v4857 = vpack.c.b16 %v4241, %v4240
    %v4858 = vpack.c.b16 %v4243, %v4242
    %v4859 = vpack.c.b16 %v4245, %v4244
    %v4860 = vpack.c.b16 %v4247, %v4246
    %v4861 = vpack.c.b16 %v4249, %v4248
    %v4862 = vpack.c.b16 %v4251, %v4250
    %v4863 = vpack.c.b16 %v4253, %v4252
    %v4864 = vpack.c.b16 %v4255, %v4254
    %v4865 = vpack.c.b16 %v4257, %v4256
    %v4866 = vpack.c.b16 %v4259, %v4258
    %v4867 = vpack.c.b16 %v4261, %v4260
    %v4868 = vpack.c.b16 %v4263, %v4262
    %v4869 = vpack.c.b16 %v4265, %v4264
    %v4870 = vpack.c.b16 %v4267, %v4266
    %v4871 = vpack.c.b16 %v4269, %v4268
    %v4872 = vpack.c.b16 %v4271, %v4270
    %v4873 = vpack.c.b16 %v4273, %v4272
    %v4874 = vpack.c.b16 %v4275, %v4274
    %v4875 = vpack.c.b16 %v4277, %v4276
    %v4876 = vpack.c.b16 %v4279, %v4278
    %v4877 = vpack.c.b16 %v4281, %v4280
    %v4878 = vpack.c.b16 %v4283, %v4282
    %v4879 = vpack.c.b16 %v4285, %v4284
    %v4880 = vpack.c.b16 %v4287, %v4286
    %v4881 = vpack.c.b16 %v4289, %v4288
    %v4882 = vpack.c.b16 %v4291, %v4290
    %v4883 = vpack.c.b16 %v4293, %v4292
    %v4884 = vpack.c.b16 %v4295, %v4294
    %v4885 = vpack.c.b16 %v4297, %v4296
    %v4886 = vpack.c.b16 %v4299, %v4298
    %v4887 = vpack.c.b16 %v4301, %v4300
    %v4888 = vpack.c.b16 %v4303, %v4302
    %v4889 = vpack.c.b16 %v4305, %v4304
    %v4890 = vpack.c.b16 %v4307, %v4306
    %v4891 = vpack.c.b16 %v4309, %v4308
    %v4892 = vpack.c.b16 %v4311, %v4310
    %v4893 = vpack.c.b16 %v4313, %v4312
    %v4894 = vpack.c.b16 %v4315, %v4314
    %v4895 = vpack.c.b16 %v4317, %v4316
    %v4896 = vpack.c.b16 %v4319, %v4318
    %v4897 = vpack.c.b16 %v4321, %v4320
    %v4898 = vpack.c.b16 %v4323, %v4322
    %v4899 = vpack.c.b16 %v4325, %v4324
    %v4900 = vpack.c.b16 %v4327, %v4326
    %v4901 = vpack.c.b16 %v4329, %v4328
    %v4902 = vpack.c.b16 %v4331, %v4330
    %v4903 = vpack.c.b16 %v4333, %v4332
    %v4904 = vpack.c.b16 %v4335, %v4334
    %v4905 = vpack.c.b16 %v4337, %v4336
    %v4906 = vpack.c.b16 %v4339, %v4338
    %v4907 = vpack.c.b16 %v4341, %v4340
    %v4908 = vpack.c.b16 %v4343, %v4342
    %v4909 = vpack.c.b16 %v4345, %v4344
    %v4910 = vpack.c.b16 %v4347, %v4346
    %v4911 = vpack.c.b16 %v4349, %v4348
    %v4912 = vpack.c.b16 %v4351, %v4350
    %v4913 = vpack.c.b16 %v4353, %v4352
    %v4914 = vpack.c.b16 %v4355, %v4354
    %v4915 = vpack.c.b16 %v4357, %v4356
    %v4916 = vpack.c.b16 %v4359, %v4358
    %v4917 = vpack.c.b16 %v4361, %v4360
    %v4918 = vpack.c.b16 %v4363, %v4362
    %v4919 = vpack.c.b16 %v4365, %v4364
    %v4920 = vpack.c.b16 %v4367, %v4366
    %v4921 = vpack.c.b16 %v4369, %v4368
    %v4922 = vpack.c.b16 %v4371, %v4370
    %v4923 = vpack.c.b16 %v4373, %v4372
    %v4924 = vpack.c.b16 %v4375, %v4374
    %v4925 = vpack.c.b16 %v4377, %v4376
    %v4926 = vpack.c.b16 %v4379, %v4378
    %v4927 = vpack.c.b16 %v4381, %v4380
    %v4928 = vpack.c.b16 %v4383, %v4382
    %v4929 = vpack.c.b16 %v4385, %v4384
    %v4930 = vpack.c.b16 %v4387, %v4386
    %v4931 = vpack.c.b16 %v4389, %v4388
    %v4932 = vpack.c.b16 %v4391, %v4390
    %v4933 = vpack.c.b16 %v4393, %v4392
    %v4934 = vpack.c.b16 %v4395, %v4394
    %v4935 = vpack.c.b16 %v4397, %v4396
    %v4936 = vpack.c.b16 %v4399, %v4398
    %v4937 = vpack.c.b16 %v4401, %v4400
    %v4938 = vpack.c.b16 %v4403, %v4402
    %v4939 = vpack.c.b16 %v4405, %v4404
    %v4940 = vpack.c.b16 %v4407, %v4406
    %v4941 = vpack.c.b16 %v4409, %v4408
    %v4942 = vpack.c.b16 %v4411, %v4410
    %v4943 = vpack.c.b16 %v4413, %v4412
    %v4944 = vpack.c.b16 %v4415, %v4414
    %v4945 = vpack.c.b16 %v4417, %v4416
    %v4946 = vpack.c.b16 %v4419, %v4418
    %v4947 = vpack.c.b16 %v4421, %v4420
    %v4948 = vpack.c.b16 %v4423, %v4422
    %v4949 = vpack.c.b16 %v4425, %v4424
    %v4950 = vpack.c.b16 %v4427, %v4426
    %v4951 = vpack.c.b16 %v4429, %v4428
    %v4952 = vpack.c.b16 %v4431, %v4430
    %v4953 = vpack.c.b16 %v4433, %v4432
    %v4954 = vpack.c.b16 %v4435, %v4434
    %v4955 = vpack.c.b16 %v4437, %v4436
    %v4956 = vpack.c.b16 %v4439, %v4438
    %v4957 = vpack.c.b16 %v4441, %v4440
    %v4958 = vpack.c.b16 %v4443, %v4442
    %v4959 = vpack.c.b16 %v4445, %v4444
    %v4960 = vpack.c.b16 %v4447, %v4446
    %v4961 = vpack.c.b16 %v4449, %v4448
    %v4962 = vpack.c.b16 %v4451, %v4450
    %v4963 = vpack.c.b16 %v4453, %v4452
    %v4964 = vpack.c.b16 %v4455, %v4454
    %v4965 = vpack.c.b16 %v4457, %v4456
    %v4966 = vpack.c.b16 %v4459, %v4458
    %v4967 = vpack.c.b16 %v4461, %v4460
    %v4968 = vpack.c.b16 %v4463, %v4462
    %v4969 = vpack.c.b16 %v4465, %v4464
    %v4970 = vpack.c.b16 %v4467, %v4466
    %v4971 = vpack.c.b16 %v4469, %v4468
    %v4972 = vpack.c.b16 %v4471, %v4470
    %v4973 = vpack.c.b16 %v4473, %v4472
    %v4974 = vpack.c.b16 %v4475, %v4474
    %v4975 = vpack.c.b16 %v4477, %v4476
    %v4976 = vpack.c.b16 %v4479, %v4478
    %v4977 = vpack.c.b16 %v4481, %v4480
    %v4978 = vpack.c.b16 %v4483, %v4482
    %v4979 = vpack.c.b16 %v4485, %v4484
    %v4980 = vpack.c.b16 %v4487, %v4486
    %v4981 = vpack.c.b16 %v4489, %v4488
    %v4982 = vpack.c.b16 %v4491, %v4490
    %v4983 = vpack.c.b16 %v4493, %v4492
    %v4984 = vpack.c.b16 %v4495, %v4494
    %v4985 = vpack.c.b16 %v4497, %v4496
    %v4986 = vpack.c.b16 %v4499, %v4498
    %v4987 = vpack.c.b16 %v4501, %v4500
    %v4988 = vpack.c.b16 %v4503, %v4502
    %v4989 = vpack.c.b16 %v4505, %v4504
    %v4990 = vpack.c.b16 %v4507, %v4506
    %v4991 = vpack.c.b16 %v4509, %v4508
    %v4992 = vpack.c.b16 %v4511, %v4510
    %v4993 = vpack.c.b16 %v4513, %v4512
    %v4994 = vpack.c.b16 %v4515, %v4514
    %v4995 = vpack.c.b16 %v4517, %v4516
    %v4996 = vpack.c.b16 %v4519, %v4518
    %v4997 = vpack.c.b16 %v4521, %v4520
    %v4998 = vpack.c.b16 %v4523, %v4522
    %v4999 = vpack.c.b16 %v4525, %v4524
    %v5000 = vpack.c.b16 %v4527, %v4526
    %v5001 = vpack.c.b16 %v4529, %v4528
    %v5002 = vpack.c.b16 %v4531, %v4530
    %v5003 = vpack.c.b16 %v4533, %v4532
    %v5004 = vpack.c.b16 %v4535, %v4534
    %v5005 = vpack.c.b16 %v4537, %v4536
    %v5006 = vpack.c.b16 %v4539, %v4538
    %v5007 = vpack.c.b16 %v4541, %v4540
    %v5008 = vpack.c.b16 %v4543, %v4542
    %v5009 = vpack.c.b16 %v4545, %v4544
    %v5010 = vpack.c.b16 %v4547, %v4546
    %v5011 = vpack.c.b16 %v4549, %v4548
    %v5012 = vpack.c.b16 %v4551, %v4550
    %v5013 = vpack.c.b16 %v4553, %v4552
    %v5014 = vpack.c.b16 %v4555, %v4554
    %v5015 = vpack.c.b16 %v4557, %v4556
    %v5016 = vpack.c.b16 %v4559, %v4558
    %v5017 = vpack.c.b16 %v4561, %v4560
    %v5018 = vpack.c.b16 %v4563, %v4562
    %v5019 = vpack.c.b16 %v4565, %v4564
    %v5020 = vpack.c.b16 %v4567, %v4566
    %v5021 = vpack.c.b16 %v4569, %v4568
    %v5022 = vpack.c.b16 %v4571, %v4570
    %v5023 = vpack.c.b16 %v4573, %v4572
    %v5024 = vpack.c.b16 %v4575, %v4574
    %v5025 = vpack.c.b16 %v4577, %v4576
    %v5026 = vpack.c.b16 %v4579, %v4578
    %v5027 = vpack.c.b16 %v4581, %v4580
    %v5028 = vpack.c.b16 %v4583, %v4582
    %v5029 = vpack.c.b16 %v4585, %v4584
    %v5030 = vpack.c.b16 %v4587, %v4586
    %v5031 = vpack.c.b16 %v4589, %v4588
    %v5032 = vpack.c.b16 %v4591, %v4590
    %v5033 = vpack.c.b16 %v4593, %v4592
    %v5034 = vpack.c.b16 %v4595, %v4594
    %v5035 = vpack.c.b16 %v4597, %v4596
    %v5036 = vpack.c.b16 %v4599, %v4598
    %v5037 = vpack.c.b16 %v4601, %v4600
    %v5038 = vpack.c.b16 %v4603, %v4602
    %v5039 = vpack.c.b16 %v4605, %v4604
    %v5040 = vpack.c.b16 %v4607, %v4606
    %v5041 = vpack.c.b16 %v4609, %v4608
    %v5042 = vpack.c.b16 %v4611, %v4610
    %v5043 = vpack.c.b16 %v4613, %v4612
    %v5044 = vpack.c.b16 %v4615, %v4614
    %v5045 = vpack.c.b16 %v4617, %v4616
    %v5046 = vpack.c.b16 %v4619, %v4618
    %v5047 = vpack.c.b16 %v4621, %v4620
    %v5048 = vpack.c.b16 %v4623, %v4622
    %v5049 = vpack.c.b16 %v4625, %v4624
    %v5050 = vpack.c.b16 %v4627, %v4626
    %v5051 = vpack.c.b16 %v4629, %v4628
    %v5052 = vpack.c.b16 %v4631, %v4630
    %v5053 = vpack.c.b16 %v4633, %v4632
    %v5054 = vpack.c.b16 %v4635, %v4634
    %v5055 = vpack.c.b16 %v4637, %v4636
    %v5056 = vpack.c.b16 %v4639, %v4638
    %v5057 = vpack.c.b16 %v4641, %v4640
    %v5058 = vpack.c.b16 %v4643, %v4642
    %v5059 = vpack.c.b16 %v4645, %v4644
    %v5060 = vpack.c.b16 %v4647, %v4646
    %v5061 = vpack.c.b16 %v4649, %v4648
    %v5062 = vpack.c.b16 %v4651, %v4650
    %v5063 = vpack.c.b16 %v4653, %v4652
    %v5064 = vpack.c.b16 %v4655, %v4654
    %v5065 = vpack.c.b16 %v4657, %v4656
    %v5066 = vpack.c.b16 %v4659, %v4658
    %v5067 = vpack.c.b16 %v4661, %v4660
    %v5068 = vpack.c.b16 %v4663, %v4662
    %v5069 = vpack.c.b16 %v4665, %v4664
    %v5070 = vpack.c.b16 %v4667, %v4666
    %v5071 = vpack.c.b16 %v4669, %v4668
    %v5072 = vpack.c.b16 %v4671, %v4670
    %v5073 = vpack.c.b16 %v4673, %v4672
    %v5074 = vpack.c.b16 %v4675, %v4674
    %v5075 = vpack.c.b16 %v4677, %v4676
    %v5076 = vpack.c.b16 %v4679, %v4678
    %v5077 = vpack.c.b16 %v4681, %v4680
    %v5078 = vpack.c.b16 %v4683, %v4682
    %v5079 = vpack.c.b16 %v4685, %v4684
    %v5080 = vpack.c.b16 %v4687, %v4686
    %v5081 = vpack.c.b16 %v4689, %v4688
    %v5082 = vpack.c.b16 %v4691, %v4690
    %v5083 = vpack.c.b16 %v4693, %v4692
    %v5084 = vpack.c.b16 %v4695, %v4694
    %v5085 = vpack.c.b16 %v4697, %v4696
    %v5086 = vpack.c.b16 %v4699, %v4698
    %v5087 = vpack.c.b16 %v4701, %v4700
    %v5088 = vpack.c.b16 %v4703, %v4702
    %v5089 = vpack.c.b16 %v4705, %v4704
    %5474 = vmatprep.subr.bf16.mxu0 0
    %5475 = vmatpush1.bf16.msra.mxu0 %v4713
    %5476 = vmatprep.subr.bf16.mxu0 0
    %5477 = vmatpush1.bf16.msra.mxu0 %v4712
    %5478 = vmatprep.subr.bf16.mxu0 0
    %5479 = vmatpush1.bf16.msra.mxu0 %v4711
    %5480 = vmatprep.subr.bf16.mxu0 0
    %5481 = vmatpush1.bf16.msra.mxu0 %v4710
    %5482 = vmatprep.subr.bf16.mxu0 0
    %5483 = vmatpush1.bf16.msra.mxu0 %v4709
    %5484 = vmatprep.subr.bf16.mxu0 0
    %5485 = vmatpush1.bf16.msra.mxu0 %v4708
    %5486 = vmatprep.subr.bf16.mxu0 0
    %5487 = vmatpush1.bf16.msra.mxu0 %v4707
    %5488 = vmatprep.subr.bf16.mxu0 0
    %5489 = vmatpush1.bf16.msra.mxu0 %v4706
    %5490 = vmatprep.subr.bf16.mxu0 0
    %5491 = vmatpush2.bf16.msra.mxu0 %v4721
    %5492 = vmatprep.subr.bf16.mxu0 0
    %5493 = vmatpush2.bf16.msra.mxu0 %v4720
    %5494 = vmatprep.subr.bf16.mxu0 0
    %5495 = vmatpush2.bf16.msra.mxu0 %v4719
    %5496 = vmatprep.subr.bf16.mxu0 0
    %5497 = vmatpush2.bf16.msra.mxu0 %v4718
    %5498 = vmatprep.subr.bf16.mxu0 0
    %5499 = vmatpush2.bf16.msra.mxu0 %v4717
    %5500 = vmatprep.subr.bf16.mxu0 0
    %5501 = vmatpush2.bf16.msra.mxu0 %v4716
    %5502 = vmatprep.subr.bf16.mxu0 0
    %5503 = vmatpush2.bf16.msra.mxu0 %v4715
    %5504 = vmatprep.subr.bf16.mxu0 0
    %5505 = vmatpush2.bf16.msra.mxu0 %v4714
    %5506 = vmatprep.mubr.bf16.mxu0 %v2403
    %5507 = vmatmul.mubr.bf16.gmra.mxu0 %v2402
    %v5508 = vpop.f32.mrf.mxu0
    %v5509 = vadd.f32 %v1248, %v5508
    %v5510 = vpop.f32.mrf.mxu0
    %v5511 = vpop.f32.mrf.mxu0
    %v5512 = vadd.f32 %v1248, %v5511
    %v5513 = vpop.f32.mrf.mxu0
    %5514 = vmatprep.mubr.bf16.mxu0 %v2451
    %5515 = vmatmul.mubr.bf16.gmra.mxu0 %v2450
    %v5516 = vpop.f32.mrf.mxu0
    %v5517 = vadd.f32 %v1248, %v5516
    %v5518 = vpop.f32.mrf.mxu0
    %v5519 = vpop.f32.mrf.mxu0
    %v5520 = vadd.f32 %v1248, %v5519
    %v5521 = vpop.f32.mrf.mxu0
    %5522 = vmatprep.mubr.bf16.mxu0 %v2499
    %5523 = vmatmul.mubr.bf16.gmra.mxu0 %v2498
    %v5524 = vpop.f32.mrf.mxu0
    %v5525 = vadd.f32 %v1248, %v5524
    %v5526 = vpop.f32.mrf.mxu0
    %v5527 = vpop.f32.mrf.mxu0
    %v5528 = vadd.f32 %v1248, %v5527
    %v5529 = vpop.f32.mrf.mxu0
    %5530 = vmatprep.mubr.bf16.mxu0 %v2547
    %5531 = vmatmul.mubr.bf16.gmra.mxu0 %v2546
    %v5532 = vpop.f32.mrf.mxu0
    %v5533 = vadd.f32 %v1248, %v5532
    %v5534 = vpop.f32.mrf.mxu0
    %v5535 = vpop.f32.mrf.mxu0
    %v5536 = vadd.f32 %v1248, %v5535
    %v5537 = vpop.f32.mrf.mxu0
    %5538 = vmatprep.mubr.bf16.mxu0 %v2595
    %5539 = vmatmul.mubr.bf16.gmra.mxu0 %v2594
    %v5540 = vpop.f32.mrf.mxu0
    %v5541 = vadd.f32 %v1248, %v5540
    %v5542 = vpop.f32.mrf.mxu0
    %v5543 = vpop.f32.mrf.mxu0
    %v5544 = vadd.f32 %v1248, %v5543
    %v5545 = vpop.f32.mrf.mxu0
    %5546 = vmatprep.mubr.bf16.mxu0 %v2643
    %5547 = vmatmul.mubr.bf16.gmra.mxu0 %v2642
    %v5548 = vpop.f32.mrf.mxu0
    %v5549 = vadd.f32 %v1248, %v5548
    %v5550 = vpop.f32.mrf.mxu0
    %v5551 = vpop.f32.mrf.mxu0
    %v5552 = vadd.f32 %v1248, %v5551
    %v5553 = vpop.f32.mrf.mxu0
    %5554 = vmatprep.mubr.bf16.mxu0 %v2691
    %5555 = vmatmul.mubr.bf16.gmra.mxu0 %v2690
    %v5556 = vpop.f32.mrf.mxu0
    %v5557 = vadd.f32 %v1248, %v5556
    %v5558 = vpop.f32.mrf.mxu0
    %v5559 = vpop.f32.mrf.mxu0
    %v5560 = vadd.f32 %v1248, %v5559
    %v5561 = vpop.f32.mrf.mxu0
    %5562 = vmatprep.mubr.bf16.mxu0 %v2739
    %5563 = vmatmul.mubr.bf16.gmra.mxu0 %v2738
    %v5564 = vpop.f32.mrf.mxu0
    %v5565 = vadd.f32 %v1248, %v5564
    %v5566 = vpop.f32.mrf.mxu0
    %v5567 = vpop.f32.mrf.mxu0
    %v5568 = vadd.f32 %v1248, %v5567
    %v5569 = vpop.f32.mrf.mxu0
    %5570 = vdwg.mxu0
    %5571 = vmatprep.subr.bf16.mxu0 0
    %5572 = vmatpush1.bf16.msra.mxu0 %v4729
    %5573 = vmatprep.subr.bf16.mxu0 0
    %5574 = vmatpush1.bf16.msra.mxu0 %v4728
    %5575 = vmatprep.subr.bf16.mxu0 0
    %5576 = vmatpush1.bf16.msra.mxu0 %v4727
    %5577 = vmatprep.subr.bf16.mxu0 0
    %5578 = vmatpush1.bf16.msra.mxu0 %v4726
    %5579 = vmatprep.subr.bf16.mxu0 0
    %5580 = vmatpush1.bf16.msra.mxu0 %v4725
    %5581 = vmatprep.subr.bf16.mxu0 0
    %5582 = vmatpush1.bf16.msra.mxu0 %v4724
    %5583 = vmatprep.subr.bf16.mxu0 0
    %5584 = vmatpush1.bf16.msra.mxu0 %v4723
    %5585 = vmatprep.subr.bf16.mxu0 0
    %5586 = vmatpush1.bf16.msra.mxu0 %v4722
    %5587 = vmatprep.subr.bf16.mxu0 0
    %5588 = vmatpush2.bf16.msra.mxu0 %v4737
    %5589 = vmatprep.subr.bf16.mxu0 0
    %5590 = vmatpush2.bf16.msra.mxu0 %v4736
    %5591 = vmatprep.subr.bf16.mxu0 0
    %5592 = vmatpush2.bf16.msra.mxu0 %v4735
    %5593 = vmatprep.subr.bf16.mxu0 0
    %5594 = vmatpush2.bf16.msra.mxu0 %v4734
    %5595 = vmatprep.subr.bf16.mxu0 0
    %5596 = vmatpush2.bf16.msra.mxu0 %v4733
    %5597 = vmatprep.subr.bf16.mxu0 0
    %5598 = vmatpush2.bf16.msra.mxu0 %v4732
    %5599 = vmatprep.subr.bf16.mxu0 0
    %5600 = vmatpush2.bf16.msra.mxu0 %v4731
    %5601 = vmatprep.subr.bf16.mxu0 0
    %5602 = vmatpush2.bf16.msra.mxu0 %v4730
    %5603 = vmatprep.mubr.bf16.mxu0 %v2405
    %5604 = vmatmul.mubr.bf16.gmra.mxu0 %v2404
    %v5605 = vpop.f32.mrf.mxu0
    %v5606 = vadd.f32 %v5509, %v5605
    %v5607 = vpop.f32.mrf.mxu0
    %v5608 = vpop.f32.mrf.mxu0
    %v5609 = vadd.f32 %v5512, %v5608
    %v5610 = vpop.f32.mrf.mxu0
    %5611 = vmatprep.mubr.bf16.mxu0 %v2453
    %5612 = vmatmul.mubr.bf16.gmra.mxu0 %v2452
    %v5613 = vpop.f32.mrf.mxu0
    %v5614 = vadd.f32 %v5517, %v5613
    %v5615 = vpop.f32.mrf.mxu0
    %v5616 = vpop.f32.mrf.mxu0
    %v5617 = vadd.f32 %v5520, %v5616
    %v5618 = vpop.f32.mrf.mxu0
    %5619 = vmatprep.mubr.bf16.mxu0 %v2501
    %5620 = vmatmul.mubr.bf16.gmra.mxu0 %v2500
    %v5621 = vpop.f32.mrf.mxu0
    %v5622 = vadd.f32 %v5525, %v5621
    %v5623 = vpop.f32.mrf.mxu0
    %v5624 = vpop.f32.mrf.mxu0
    %v5625 = vadd.f32 %v5528, %v5624
    %v5626 = vpop.f32.mrf.mxu0
    %5627 = vmatprep.mubr.bf16.mxu0 %v2549
    %5628 = vmatmul.mubr.bf16.gmra.mxu0 %v2548
    %v5629 = vpop.f32.mrf.mxu0
    %v5630 = vadd.f32 %v5533, %v5629
    %v5631 = vpop.f32.mrf.mxu0
    %v5632 = vpop.f32.mrf.mxu0
    %v5633 = vadd.f32 %v5536, %v5632
    %v5634 = vpop.f32.mrf.mxu0
    %5635 = vmatprep.mubr.bf16.mxu0 %v2597
    %5636 = vmatmul.mubr.bf16.gmra.mxu0 %v2596
    %v5637 = vpop.f32.mrf.mxu0
    %v5638 = vadd.f32 %v5541, %v5637
    %v5639 = vpop.f32.mrf.mxu0
    %v5640 = vpop.f32.mrf.mxu0
    %v5641 = vadd.f32 %v5544, %v5640
    %v5642 = vpop.f32.mrf.mxu0
    %5643 = vmatprep.mubr.bf16.mxu0 %v2645
    %5644 = vmatmul.mubr.bf16.gmra.mxu0 %v2644
    %v5645 = vpop.f32.mrf.mxu0
    %v5646 = vadd.f32 %v5549, %v5645
    %v5647 = vpop.f32.mrf.mxu0
    %v5648 = vpop.f32.mrf.mxu0
    %v5649 = vadd.f32 %v5552, %v5648
    %v5650 = vpop.f32.mrf.mxu0
    %5651 = vmatprep.mubr.bf16.mxu0 %v2693
    %5652 = vmatmul.mubr.bf16.gmra.mxu0 %v2692
    %v5653 = vpop.f32.mrf.mxu0
    %v5654 = vadd.f32 %v5557, %v5653
    %v5655 = vpop.f32.mrf.mxu0
    %v5656 = vpop.f32.mrf.mxu0
    %v5657 = vadd.f32 %v5560, %v5656
    %v5658 = vpop.f32.mrf.mxu0
    %5659 = vmatprep.mubr.bf16.mxu0 %v2741
    %5660 = vmatmul.mubr.bf16.gmra.mxu0 %v2740
    %v5661 = vpop.f32.mrf.mxu0
    %v5662 = vadd.f32 %v5565, %v5661
    %v5663 = vpop.f32.mrf.mxu0
    %v5664 = vpop.f32.mrf.mxu0
    %v5665 = vadd.f32 %v5568, %v5664
    %v5666 = vpop.f32.mrf.mxu0
    %5667 = vdwg.mxu0
    %5668 = vmatprep.subr.bf16.mxu0 0
    %5669 = vmatpush1.bf16.msra.mxu0 %v4745
    %5670 = vmatprep.subr.bf16.mxu0 0
    %5671 = vmatpush1.bf16.msra.mxu0 %v4744
    %5672 = vmatprep.subr.bf16.mxu0 0
    %5673 = vmatpush1.bf16.msra.mxu0 %v4743
    %5674 = vmatprep.subr.bf16.mxu0 0
    %5675 = vmatpush1.bf16.msra.mxu0 %v4742
    %5676 = vmatprep.subr.bf16.mxu0 0
    %5677 = vmatpush1.bf16.msra.mxu0 %v4741
    %5678 = vmatprep.subr.bf16.mxu0 0
    %5679 = vmatpush1.bf16.msra.mxu0 %v4740
    %5680 = vmatprep.subr.bf16.mxu0 0
    %5681 = vmatpush1.bf16.msra.mxu0 %v4739
    %5682 = vmatprep.subr.bf16.mxu0 0
    %5683 = vmatpush1.bf16.msra.mxu0 %v4738
    %5684 = vmatprep.subr.bf16.mxu0 0
    %5685 = vmatpush2.bf16.msra.mxu0 %v4753
    %5686 = vmatprep.subr.bf16.mxu0 0
    %5687 = vmatpush2.bf16.msra.mxu0 %v4752
    %5688 = vmatprep.subr.bf16.mxu0 0
    %5689 = vmatpush2.bf16.msra.mxu0 %v4751
    %5690 = vmatprep.subr.bf16.mxu0 0
    %5691 = vmatpush2.bf16.msra.mxu0 %v4750
    %5692 = vmatprep.subr.bf16.mxu0 0
    %5693 = vmatpush2.bf16.msra.mxu0 %v4749
    %5694 = vmatprep.subr.bf16.mxu0 0
    %5695 = vmatpush2.bf16.msra.mxu0 %v4748
    %5696 = vmatprep.subr.bf16.mxu0 0
    %5697 = vmatpush2.bf16.msra.mxu0 %v4747
    %5698 = vmatprep.subr.bf16.mxu0 0
    %5699 = vmatpush2.bf16.msra.mxu0 %v4746
    %5700 = vmatprep.mubr.bf16.mxu0 %v2407
    %5701 = vmatmul.mubr.bf16.gmra.mxu0 %v2406
    %v5702 = vpop.f32.mrf.mxu0
    %v5703 = vadd.f32 %v5606, %v5702
    %v5704 = vpop.f32.mrf.mxu0
    %v5705 = vpop.f32.mrf.mxu0
    %v5706 = vadd.f32 %v5609, %v5705
    %v5707 = vpop.f32.mrf.mxu0
    %5708 = vmatprep.mubr.bf16.mxu0 %v2455
    %5709 = vmatmul.mubr.bf16.gmra.mxu0 %v2454
    %v5710 = vpop.f32.mrf.mxu0
    %v5711 = vadd.f32 %v5614, %v5710
    %v5712 = vpop.f32.mrf.mxu0
    %v5713 = vpop.f32.mrf.mxu0
    %v5714 = vadd.f32 %v5617, %v5713
    %v5715 = vpop.f32.mrf.mxu0
    %5716 = vmatprep.mubr.bf16.mxu0 %v2503
    %5717 = vmatmul.mubr.bf16.gmra.mxu0 %v2502
    %v5718 = vpop.f32.mrf.mxu0
    %v5719 = vadd.f32 %v5622, %v5718
    %v5720 = vpop.f32.mrf.mxu0
    %v5721 = vpop.f32.mrf.mxu0
    %v5722 = vadd.f32 %v5625, %v5721
    %v5723 = vpop.f32.mrf.mxu0
    %5724 = vmatprep.mubr.bf16.mxu0 %v2551
    %5725 = vmatmul.mubr.bf16.gmra.mxu0 %v2550
    %v5726 = vpop.f32.mrf.mxu0
    %v5727 = vadd.f32 %v5630, %v5726
    %v5728 = vpop.f32.mrf.mxu0
    %v5729 = vpop.f32.mrf.mxu0
    %v5730 = vadd.f32 %v5633, %v5729
    %v5731 = vpop.f32.mrf.mxu0
    %5732 = vmatprep.mubr.bf16.mxu0 %v2599
    %5733 = vmatmul.mubr.bf16.gmra.mxu0 %v2598
    %v5734 = vpop.f32.mrf.mxu0
    %v5735 = vadd.f32 %v5638, %v5734
    %v5736 = vpop.f32.mrf.mxu0
    %v5737 = vpop.f32.mrf.mxu0
    %v5738 = vadd.f32 %v5641, %v5737
    %v5739 = vpop.f32.mrf.mxu0
    %5740 = vmatprep.mubr.bf16.mxu0 %v2647
    %5741 = vmatmul.mubr.bf16.gmra.mxu0 %v2646
    %v5742 = vpop.f32.mrf.mxu0
    %v5743 = vadd.f32 %v5646, %v5742
    %v5744 = vpop.f32.mrf.mxu0
    %v5745 = vpop.f32.mrf.mxu0
    %v5746 = vadd.f32 %v5649, %v5745
    %v5747 = vpop.f32.mrf.mxu0
    %5748 = vmatprep.mubr.bf16.mxu0 %v2695
    %5749 = vmatmul.mubr.bf16.gmra.mxu0 %v2694
    %v5750 = vpop.f32.mrf.mxu0
    %v5751 = vadd.f32 %v5654, %v5750
    %v5752 = vpop.f32.mrf.mxu0
    %v5753 = vpop.f32.mrf.mxu0
    %v5754 = vadd.f32 %v5657, %v5753
    %v5755 = vpop.f32.mrf.mxu0
    %5756 = vmatprep.mubr.bf16.mxu0 %v2743
    %5757 = vmatmul.mubr.bf16.gmra.mxu0 %v2742
    %v5758 = vpop.f32.mrf.mxu0
    %v5759 = vadd.f32 %v5662, %v5758
    %v5760 = vpop.f32.mrf.mxu0
    %v5761 = vpop.f32.mrf.mxu0
    %v5762 = vadd.f32 %v5665, %v5761
    %v5763 = vpop.f32.mrf.mxu0
    %5764 = vdwg.mxu0
    %5765 = vmatprep.subr.bf16.mxu0 0
    %5766 = vmatpush1.bf16.msra.mxu0 %v4761
    %5767 = vmatprep.subr.bf16.mxu0 0
    %5768 = vmatpush1.bf16.msra.mxu0 %v4760
    %5769 = vmatprep.subr.bf16.mxu0 0
    %5770 = vmatpush1.bf16.msra.mxu0 %v4759
    %5771 = vmatprep.subr.bf16.mxu0 0
    %5772 = vmatpush1.bf16.msra.mxu0 %v4758
    %5773 = vmatprep.subr.bf16.mxu0 0
    %5774 = vmatpush1.bf16.msra.mxu0 %v4757
    %5775 = vmatprep.subr.bf16.mxu0 0
    %5776 = vmatpush1.bf16.msra.mxu0 %v4756
    %5777 = vmatprep.subr.bf16.mxu0 0
    %5778 = vmatpush1.bf16.msra.mxu0 %v4755
    %5779 = vmatprep.subr.bf16.mxu0 0
    %5780 = vmatpush1.bf16.msra.mxu0 %v4754
    %5781 = vmatprep.subr.bf16.mxu0 0
    %5782 = vmatpush2.bf16.msra.mxu0 %v4769
    %5783 = vmatprep.subr.bf16.mxu0 0
    %5784 = vmatpush2.bf16.msra.mxu0 %v4768
    %5785 = vmatprep.subr.bf16.mxu0 0
    %5786 = vmatpush2.bf16.msra.mxu0 %v4767
    %5787 = vmatprep.subr.bf16.mxu0 0
    %5788 = vmatpush2.bf16.msra.mxu0 %v4766
    %5789 = vmatprep.subr.bf16.mxu0 0
    %5790 = vmatpush2.bf16.msra.mxu0 %v4765
    %5791 = vmatprep.subr.bf16.mxu0 0
    %5792 = vmatpush2.bf16.msra.mxu0 %v4764
    %5793 = vmatprep.subr.bf16.mxu0 0
    %5794 = vmatpush2.bf16.msra.mxu0 %v4763
    %5795 = vmatprep.subr.bf16.mxu0 0
    %5796 = vmatpush2.bf16.msra.mxu0 %v4762
    %5797 = vmatprep.mubr.bf16.mxu0 %v2409
    %5798 = vmatmul.mubr.bf16.gmra.mxu0 %v2408
    %v5799 = vpop.f32.mrf.mxu0
    %v5800 = vadd.f32 %v5703, %v5799
    %v5801 = vpop.f32.mrf.mxu0
    %v5802 = vpop.f32.mrf.mxu0
    %v5803 = vadd.f32 %v5706, %v5802
    %v5804 = vpop.f32.mrf.mxu0
    %5805 = vmatprep.mubr.bf16.mxu0 %v2457
    %5806 = vmatmul.mubr.bf16.gmra.mxu0 %v2456
    %v5807 = vpop.f32.mrf.mxu0
    %v5808 = vadd.f32 %v5711, %v5807
    %v5809 = vpop.f32.mrf.mxu0
    %v5810 = vpop.f32.mrf.mxu0
    %v5811 = vadd.f32 %v5714, %v5810
    %v5812 = vpop.f32.mrf.mxu0
    %5813 = vmatprep.mubr.bf16.mxu0 %v2505
    %5814 = vmatmul.mubr.bf16.gmra.mxu0 %v2504
    %v5815 = vpop.f32.mrf.mxu0
    %v5816 = vadd.f32 %v5719, %v5815
    %v5817 = vpop.f32.mrf.mxu0
    %v5818 = vpop.f32.mrf.mxu0
    %v5819 = vadd.f32 %v5722, %v5818
    %v5820 = vpop.f32.mrf.mxu0
    %5821 = vmatprep.mubr.bf16.mxu0 %v2553
    %5822 = vmatmul.mubr.bf16.gmra.mxu0 %v2552
    %v5823 = vpop.f32.mrf.mxu0
    %v5824 = vadd.f32 %v5727, %v5823
    %v5825 = vpop.f32.mrf.mxu0
    %v5826 = vpop.f32.mrf.mxu0
    %v5827 = vadd.f32 %v5730, %v5826
    %v5828 = vpop.f32.mrf.mxu0
    %5829 = vmatprep.mubr.bf16.mxu0 %v2601
    %5830 = vmatmul.mubr.bf16.gmra.mxu0 %v2600
    %v5831 = vpop.f32.mrf.mxu0
    %v5832 = vadd.f32 %v5735, %v5831
    %v5833 = vpop.f32.mrf.mxu0
    %v5834 = vpop.f32.mrf.mxu0
    %v5835 = vadd.f32 %v5738, %v5834
    %v5836 = vpop.f32.mrf.mxu0
    %5837 = vmatprep.mubr.bf16.mxu0 %v2649
    %5838 = vmatmul.mubr.bf16.gmra.mxu0 %v2648
    %v5839 = vpop.f32.mrf.mxu0
    %v5840 = vadd.f32 %v5743, %v5839
    %v5841 = vpop.f32.mrf.mxu0
    %v5842 = vpop.f32.mrf.mxu0
    %v5843 = vadd.f32 %v5746, %v5842
    %v5844 = vpop.f32.mrf.mxu0
    %5845 = vmatprep.mubr.bf16.mxu0 %v2697
    %5846 = vmatmul.mubr.bf16.gmra.mxu0 %v2696
    %v5847 = vpop.f32.mrf.mxu0
    %v5848 = vadd.f32 %v5751, %v5847
    %v5849 = vpop.f32.mrf.mxu0
    %v5850 = vpop.f32.mrf.mxu0
    %v5851 = vadd.f32 %v5754, %v5850
    %v5852 = vpop.f32.mrf.mxu0
    %5853 = vmatprep.mubr.bf16.mxu0 %v2745
    %5854 = vmatmul.mubr.bf16.gmra.mxu0 %v2744
    %v5855 = vpop.f32.mrf.mxu0
    %v5856 = vadd.f32 %v5759, %v5855
    %v5857 = vpop.f32.mrf.mxu0
    %v5858 = vpop.f32.mrf.mxu0
    %v5859 = vadd.f32 %v5762, %v5858
    %v5860 = vpop.f32.mrf.mxu0
    %5861 = vdwg.mxu0
    %5862 = vmatprep.subr.bf16.mxu0 0
    %5863 = vmatpush1.bf16.msra.mxu0 %v4777
    %5864 = vmatprep.subr.bf16.mxu0 0
    %5865 = vmatpush1.bf16.msra.mxu0 %v4776
    %5866 = vmatprep.subr.bf16.mxu0 0
    %5867 = vmatpush1.bf16.msra.mxu0 %v4775
    %5868 = vmatprep.subr.bf16.mxu0 0
    %5869 = vmatpush1.bf16.msra.mxu0 %v4774
    %5870 = vmatprep.subr.bf16.mxu0 0
    %5871 = vmatpush1.bf16.msra.mxu0 %v4773
    %5872 = vmatprep.subr.bf16.mxu0 0
    %5873 = vmatpush1.bf16.msra.mxu0 %v4772
    %5874 = vmatprep.subr.bf16.mxu0 0
    %5875 = vmatpush1.bf16.msra.mxu0 %v4771
    %5876 = vmatprep.subr.bf16.mxu0 0
    %5877 = vmatpush1.bf16.msra.mxu0 %v4770
    %5878 = vmatprep.subr.bf16.mxu0 0
    %5879 = vmatpush2.bf16.msra.mxu0 %v4785
    %5880 = vmatprep.subr.bf16.mxu0 0
    %5881 = vmatpush2.bf16.msra.mxu0 %v4784
    %5882 = vmatprep.subr.bf16.mxu0 0
    %5883 = vmatpush2.bf16.msra.mxu0 %v4783
    %5884 = vmatprep.subr.bf16.mxu0 0
    %5885 = vmatpush2.bf16.msra.mxu0 %v4782
    %5886 = vmatprep.subr.bf16.mxu0 0
    %5887 = vmatpush2.bf16.msra.mxu0 %v4781
    %5888 = vmatprep.subr.bf16.mxu0 0
    %5889 = vmatpush2.bf16.msra.mxu0 %v4780
    %5890 = vmatprep.subr.bf16.mxu0 0
    %5891 = vmatpush2.bf16.msra.mxu0 %v4779
    %5892 = vmatprep.subr.bf16.mxu0 0
    %5893 = vmatpush2.bf16.msra.mxu0 %v4778
    %5894 = vmatprep.mubr.bf16.mxu0 %v2411
    %5895 = vmatmul.mubr.bf16.gmra.mxu0 %v2410
    %v5896 = vpop.f32.mrf.mxu0
    %v5897 = vadd.f32 %v5800, %v5896
    %v5898 = vpop.f32.mrf.mxu0
    %v5899 = vpop.f32.mrf.mxu0
    %v5900 = vadd.f32 %v5803, %v5899
    %v5901 = vpop.f32.mrf.mxu0
    %5902 = vmatprep.mubr.bf16.mxu0 %v2459
    %5903 = vmatmul.mubr.bf16.gmra.mxu0 %v2458
    %v5904 = vpop.f32.mrf.mxu0
    %v5905 = vadd.f32 %v5808, %v5904
    %v5906 = vpop.f32.mrf.mxu0
    %v5907 = vpop.f32.mrf.mxu0
    %v5908 = vadd.f32 %v5811, %v5907
    %v5909 = vpop.f32.mrf.mxu0
    %5910 = vmatprep.mubr.bf16.mxu0 %v2507
    %5911 = vmatmul.mubr.bf16.gmra.mxu0 %v2506
    %v5912 = vpop.f32.mrf.mxu0
    %v5913 = vadd.f32 %v5816, %v5912
    %v5914 = vpop.f32.mrf.mxu0
    %v5915 = vpop.f32.mrf.mxu0
    %v5916 = vadd.f32 %v5819, %v5915
    %v5917 = vpop.f32.mrf.mxu0
    %5918 = vmatprep.mubr.bf16.mxu0 %v2555
    %5919 = vmatmul.mubr.bf16.gmra.mxu0 %v2554
    %v5920 = vpop.f32.mrf.mxu0
    %v5921 = vadd.f32 %v5824, %v5920
    %v5922 = vpop.f32.mrf.mxu0
    %v5923 = vpop.f32.mrf.mxu0
    %v5924 = vadd.f32 %v5827, %v5923
    %v5925 = vpop.f32.mrf.mxu0
    %5926 = vmatprep.mubr.bf16.mxu0 %v2603
    %5927 = vmatmul.mubr.bf16.gmra.mxu0 %v2602
    %v5928 = vpop.f32.mrf.mxu0
    %v5929 = vadd.f32 %v5832, %v5928
    %v5930 = vpop.f32.mrf.mxu0
    %v5931 = vpop.f32.mrf.mxu0
    %v5932 = vadd.f32 %v5835, %v5931
    %v5933 = vpop.f32.mrf.mxu0
    %5934 = vmatprep.mubr.bf16.mxu0 %v2651
    %5935 = vmatmul.mubr.bf16.gmra.mxu0 %v2650
    %v5936 = vpop.f32.mrf.mxu0
    %v5937 = vadd.f32 %v5840, %v5936
    %v5938 = vpop.f32.mrf.mxu0
    %v5939 = vpop.f32.mrf.mxu0
    %v5940 = vadd.f32 %v5843, %v5939
    %v5941 = vpop.f32.mrf.mxu0
    %5942 = vmatprep.mubr.bf16.mxu0 %v2699
    %5943 = vmatmul.mubr.bf16.gmra.mxu0 %v2698
    %v5944 = vpop.f32.mrf.mxu0
    %v5945 = vadd.f32 %v5848, %v5944
    %v5946 = vpop.f32.mrf.mxu0
    %v5947 = vpop.f32.mrf.mxu0
    %v5948 = vadd.f32 %v5851, %v5947
    %v5949 = vpop.f32.mrf.mxu0
    %5950 = vmatprep.mubr.bf16.mxu0 %v2747
    %5951 = vmatmul.mubr.bf16.gmra.mxu0 %v2746
    %v5952 = vpop.f32.mrf.mxu0
    %v5953 = vadd.f32 %v5856, %v5952
    %v5954 = vpop.f32.mrf.mxu0
    %v5955 = vpop.f32.mrf.mxu0
    %v5956 = vadd.f32 %v5859, %v5955
    %v5957 = vpop.f32.mrf.mxu0
    %5958 = vdwg.mxu0
    %5959 = vmatprep.subr.bf16.mxu0 0
    %5960 = vmatpush1.bf16.msra.mxu0 %v4793
    %5961 = vmatprep.subr.bf16.mxu0 0
    %5962 = vmatpush1.bf16.msra.mxu0 %v4792
    %5963 = vmatprep.subr.bf16.mxu0 0
    %5964 = vmatpush1.bf16.msra.mxu0 %v4791
    %5965 = vmatprep.subr.bf16.mxu0 0
    %5966 = vmatpush1.bf16.msra.mxu0 %v4790
    %5967 = vmatprep.subr.bf16.mxu0 0
    %5968 = vmatpush1.bf16.msra.mxu0 %v4789
    %5969 = vmatprep.subr.bf16.mxu0 0
    %5970 = vmatpush1.bf16.msra.mxu0 %v4788
    %5971 = vmatprep.subr.bf16.mxu0 0
    %5972 = vmatpush1.bf16.msra.mxu0 %v4787
    %5973 = vmatprep.subr.bf16.mxu0 0
    %5974 = vmatpush1.bf16.msra.mxu0 %v4786
    %5975 = vmatprep.subr.bf16.mxu0 0
    %5976 = vmatpush2.bf16.msra.mxu0 %v4801
    %5977 = vmatprep.subr.bf16.mxu0 0
    %5978 = vmatpush2.bf16.msra.mxu0 %v4800
    %5979 = vmatprep.subr.bf16.mxu0 0
    %5980 = vmatpush2.bf16.msra.mxu0 %v4799
    %5981 = vmatprep.subr.bf16.mxu0 0
    %5982 = vmatpush2.bf16.msra.mxu0 %v4798
    %5983 = vmatprep.subr.bf16.mxu0 0
    %5984 = vmatpush2.bf16.msra.mxu0 %v4797
    %5985 = vmatprep.subr.bf16.mxu0 0
    %5986 = vmatpush2.bf16.msra.mxu0 %v4796
    %5987 = vmatprep.subr.bf16.mxu0 0
    %5988 = vmatpush2.bf16.msra.mxu0 %v4795
    %5989 = vmatprep.subr.bf16.mxu0 0
    %5990 = vmatpush2.bf16.msra.mxu0 %v4794
    %5991 = vmatprep.mubr.bf16.mxu0 %v2413
    %5992 = vmatmul.mubr.bf16.gmra.mxu0 %v2412
    %v5993 = vpop.f32.mrf.mxu0
    %v5994 = vadd.f32 %v5897, %v5993
    %v5995 = vpop.f32.mrf.mxu0
    %v5996 = vpop.f32.mrf.mxu0
    %v5997 = vadd.f32 %v5900, %v5996
    %v5998 = vpop.f32.mrf.mxu0
    %5999 = vmatprep.mubr.bf16.mxu0 %v2461
    %6000 = vmatmul.mubr.bf16.gmra.mxu0 %v2460
    %v6001 = vpop.f32.mrf.mxu0
    %v6002 = vadd.f32 %v5905, %v6001
    %v6003 = vpop.f32.mrf.mxu0
    %v6004 = vpop.f32.mrf.mxu0
    %v6005 = vadd.f32 %v5908, %v6004
    %v6006 = vpop.f32.mrf.mxu0
    %6007 = vmatprep.mubr.bf16.mxu0 %v2509
    %6008 = vmatmul.mubr.bf16.gmra.mxu0 %v2508
    %v6009 = vpop.f32.mrf.mxu0
    %v6010 = vadd.f32 %v5913, %v6009
    %v6011 = vpop.f32.mrf.mxu0
    %v6012 = vpop.f32.mrf.mxu0
    %v6013 = vadd.f32 %v5916, %v6012
    %v6014 = vpop.f32.mrf.mxu0
    %6015 = vmatprep.mubr.bf16.mxu0 %v2557
    %6016 = vmatmul.mubr.bf16.gmra.mxu0 %v2556
    %v6017 = vpop.f32.mrf.mxu0
    %v6018 = vadd.f32 %v5921, %v6017
    %v6019 = vpop.f32.mrf.mxu0
    %v6020 = vpop.f32.mrf.mxu0
    %v6021 = vadd.f32 %v5924, %v6020
    %v6022 = vpop.f32.mrf.mxu0
    %6023 = vmatprep.mubr.bf16.mxu0 %v2605
    %6024 = vmatmul.mubr.bf16.gmra.mxu0 %v2604
    %v6025 = vpop.f32.mrf.mxu0
    %v6026 = vadd.f32 %v5929, %v6025
    %v6027 = vpop.f32.mrf.mxu0
    %v6028 = vpop.f32.mrf.mxu0
    %v6029 = vadd.f32 %v5932, %v6028
    %v6030 = vpop.f32.mrf.mxu0
    %6031 = vmatprep.mubr.bf16.mxu0 %v2653
    %6032 = vmatmul.mubr.bf16.gmra.mxu0 %v2652
    %v6033 = vpop.f32.mrf.mxu0
    %v6034 = vadd.f32 %v5937, %v6033
    %v6035 = vpop.f32.mrf.mxu0
    %v6036 = vpop.f32.mrf.mxu0
    %v6037 = vadd.f32 %v5940, %v6036
    %v6038 = vpop.f32.mrf.mxu0
    %6039 = vmatprep.mubr.bf16.mxu0 %v2701
    %6040 = vmatmul.mubr.bf16.gmra.mxu0 %v2700
    %v6041 = vpop.f32.mrf.mxu0
    %v6042 = vadd.f32 %v5945, %v6041
    %v6043 = vpop.f32.mrf.mxu0
    %v6044 = vpop.f32.mrf.mxu0
    %v6045 = vadd.f32 %v5948, %v6044
    %v6046 = vpop.f32.mrf.mxu0
    %6047 = vmatprep.mubr.bf16.mxu0 %v2749
    %6048 = vmatmul.mubr.bf16.gmra.mxu0 %v2748
    %v6049 = vpop.f32.mrf.mxu0
    %v6050 = vadd.f32 %v5953, %v6049
    %v6051 = vpop.f32.mrf.mxu0
    %v6052 = vpop.f32.mrf.mxu0
    %v6053 = vadd.f32 %v5956, %v6052
    %v6054 = vpop.f32.mrf.mxu0
    %6055 = vdwg.mxu0
    %6056 = vmatprep.subr.bf16.mxu0 0
    %6057 = vmatpush1.bf16.msra.mxu0 %v4809
    %6058 = vmatprep.subr.bf16.mxu0 0
    %6059 = vmatpush1.bf16.msra.mxu0 %v4808
    %6060 = vmatprep.subr.bf16.mxu0 0
    %6061 = vmatpush1.bf16.msra.mxu0 %v4807
    %6062 = vmatprep.subr.bf16.mxu0 0
    %6063 = vmatpush1.bf16.msra.mxu0 %v4806
    %6064 = vmatprep.subr.bf16.mxu0 0
    %6065 = vmatpush1.bf16.msra.mxu0 %v4805
    %6066 = vmatprep.subr.bf16.mxu0 0
    %6067 = vmatpush1.bf16.msra.mxu0 %v4804
    %6068 = vmatprep.subr.bf16.mxu0 0
    %6069 = vmatpush1.bf16.msra.mxu0 %v4803
    %6070 = vmatprep.subr.bf16.mxu0 0
    %6071 = vmatpush1.bf16.msra.mxu0 %v4802
    %6072 = vmatprep.subr.bf16.mxu0 0
    %6073 = vmatpush2.bf16.msra.mxu0 %v4817
    %6074 = vmatprep.subr.bf16.mxu0 0
    %6075 = vmatpush2.bf16.msra.mxu0 %v4816
    %6076 = vmatprep.subr.bf16.mxu0 0
    %6077 = vmatpush2.bf16.msra.mxu0 %v4815
    %6078 = vmatprep.subr.bf16.mxu0 0
    %6079 = vmatpush2.bf16.msra.mxu0 %v4814
    %6080 = vmatprep.subr.bf16.mxu0 0
    %6081 = vmatpush2.bf16.msra.mxu0 %v4813
    %6082 = vmatprep.subr.bf16.mxu0 0
    %6083 = vmatpush2.bf16.msra.mxu0 %v4812
    %6084 = vmatprep.subr.bf16.mxu0 0
    %6085 = vmatpush2.bf16.msra.mxu0 %v4811
    %6086 = vmatprep.subr.bf16.mxu0 0
    %6087 = vmatpush2.bf16.msra.mxu0 %v4810
    %6088 = vmatprep.mubr.bf16.mxu0 %v2415
    %6089 = vmatmul.mubr.bf16.gmra.mxu0 %v2414
    %v6090 = vpop.f32.mrf.mxu0
    %v6091 = vadd.f32 %v5994, %v6090
    %v6092 = vpop.f32.mrf.mxu0
    %v6093 = vpop.f32.mrf.mxu0
    %v6094 = vadd.f32 %v5997, %v6093
    %v6095 = vpop.f32.mrf.mxu0
    %6096 = vmatprep.mubr.bf16.mxu0 %v2463
    %6097 = vmatmul.mubr.bf16.gmra.mxu0 %v2462
    %v6098 = vpop.f32.mrf.mxu0
    %v6099 = vadd.f32 %v6002, %v6098
    %v6100 = vpop.f32.mrf.mxu0
    %v6101 = vpop.f32.mrf.mxu0
    %v6102 = vadd.f32 %v6005, %v6101
    %v6103 = vpop.f32.mrf.mxu0
    %6104 = vmatprep.mubr.bf16.mxu0 %v2511
    %6105 = vmatmul.mubr.bf16.gmra.mxu0 %v2510
    %v6106 = vpop.f32.mrf.mxu0
    %v6107 = vadd.f32 %v6010, %v6106
    %v6108 = vpop.f32.mrf.mxu0
    %v6109 = vpop.f32.mrf.mxu0
    %v6110 = vadd.f32 %v6013, %v6109
    %v6111 = vpop.f32.mrf.mxu0
    %6112 = vmatprep.mubr.bf16.mxu0 %v2559
    %6113 = vmatmul.mubr.bf16.gmra.mxu0 %v2558
    %v6114 = vpop.f32.mrf.mxu0
    %v6115 = vadd.f32 %v6018, %v6114
    %v6116 = vpop.f32.mrf.mxu0
    %v6117 = vpop.f32.mrf.mxu0
    %v6118 = vadd.f32 %v6021, %v6117
    %v6119 = vpop.f32.mrf.mxu0
    %6120 = vmatprep.mubr.bf16.mxu0 %v2607
    %6121 = vmatmul.mubr.bf16.gmra.mxu0 %v2606
    %v6122 = vpop.f32.mrf.mxu0
    %v6123 = vadd.f32 %v6026, %v6122
    %v6124 = vpop.f32.mrf.mxu0
    %v6125 = vpop.f32.mrf.mxu0
    %v6126 = vadd.f32 %v6029, %v6125
    %v6127 = vpop.f32.mrf.mxu0
    %6128 = vmatprep.mubr.bf16.mxu0 %v2655
    %6129 = vmatmul.mubr.bf16.gmra.mxu0 %v2654
    %v6130 = vpop.f32.mrf.mxu0
    %v6131 = vadd.f32 %v6034, %v6130
    %v6132 = vpop.f32.mrf.mxu0
    %v6133 = vpop.f32.mrf.mxu0
    %v6134 = vadd.f32 %v6037, %v6133
    %v6135 = vpop.f32.mrf.mxu0
    %6136 = vmatprep.mubr.bf16.mxu0 %v2703
    %6137 = vmatmul.mubr.bf16.gmra.mxu0 %v2702
    %v6138 = vpop.f32.mrf.mxu0
    %v6139 = vadd.f32 %v6042, %v6138
    %v6140 = vpop.f32.mrf.mxu0
    %v6141 = vpop.f32.mrf.mxu0
    %v6142 = vadd.f32 %v6045, %v6141
    %v6143 = vpop.f32.mrf.mxu0
    %6144 = vmatprep.mubr.bf16.mxu0 %v2751
    %6145 = vmatmul.mubr.bf16.gmra.mxu0 %v2750
    %v6146 = vpop.f32.mrf.mxu0
    %v6147 = vadd.f32 %v6050, %v6146
    %v6148 = vpop.f32.mrf.mxu0
    %v6149 = vpop.f32.mrf.mxu0
    %v6150 = vadd.f32 %v6053, %v6149
    %v6151 = vpop.f32.mrf.mxu0
    %6152 = vdwg.mxu0
    %6153 = vmatprep.subr.bf16.mxu0 0
    %6154 = vmatpush1.bf16.msra.mxu0 %v4825
    %6155 = vmatprep.subr.bf16.mxu0 0
    %6156 = vmatpush1.bf16.msra.mxu0 %v4824
    %6157 = vmatprep.subr.bf16.mxu0 0
    %6158 = vmatpush1.bf16.msra.mxu0 %v4823
    %6159 = vmatprep.subr.bf16.mxu0 0
    %6160 = vmatpush1.bf16.msra.mxu0 %v4822
    %6161 = vmatprep.subr.bf16.mxu0 0
    %6162 = vmatpush1.bf16.msra.mxu0 %v4821
    %6163 = vmatprep.subr.bf16.mxu0 0
    %6164 = vmatpush1.bf16.msra.mxu0 %v4820
    %6165 = vmatprep.subr.bf16.mxu0 0
    %6166 = vmatpush1.bf16.msra.mxu0 %v4819
    %6167 = vmatprep.subr.bf16.mxu0 0
    %6168 = vmatpush1.bf16.msra.mxu0 %v4818
    %6169 = vmatprep.subr.bf16.mxu0 0
    %6170 = vmatpush2.bf16.msra.mxu0 %v4833
    %6171 = vmatprep.subr.bf16.mxu0 0
    %6172 = vmatpush2.bf16.msra.mxu0 %v4832
    %6173 = vmatprep.subr.bf16.mxu0 0
    %6174 = vmatpush2.bf16.msra.mxu0 %v4831
    %6175 = vmatprep.subr.bf16.mxu0 0
    %6176 = vmatpush2.bf16.msra.mxu0 %v4830
    %6177 = vmatprep.subr.bf16.mxu0 0
    %6178 = vmatpush2.bf16.msra.mxu0 %v4829
    %6179 = vmatprep.subr.bf16.mxu0 0
    %6180 = vmatpush2.bf16.msra.mxu0 %v4828
    %6181 = vmatprep.subr.bf16.mxu0 0
    %6182 = vmatpush2.bf16.msra.mxu0 %v4827
    %6183 = vmatprep.subr.bf16.mxu0 0
    %6184 = vmatpush2.bf16.msra.mxu0 %v4826
    %6185 = vmatprep.mubr.bf16.mxu0 %v2417
    %6186 = vmatmul.mubr.bf16.gmra.mxu0 %v2416
    %v6187 = vpop.f32.mrf.mxu0
    %v6188 = vadd.f32 %v6091, %v6187
    %v6189 = vpop.f32.mrf.mxu0
    %v6190 = vpop.f32.mrf.mxu0
    %v6191 = vadd.f32 %v6094, %v6190
    %v6192 = vpop.f32.mrf.mxu0
    %6193 = vmatprep.mubr.bf16.mxu0 %v2465
    %6194 = vmatmul.mubr.bf16.gmra.mxu0 %v2464
    %v6195 = vpop.f32.mrf.mxu0
    %v6196 = vadd.f32 %v6099, %v6195
    %v6197 = vpop.f32.mrf.mxu0
    %v6198 = vpop.f32.mrf.mxu0
    %v6199 = vadd.f32 %v6102, %v6198
    %v6200 = vpop.f32.mrf.mxu0
    %6201 = vmatprep.mubr.bf16.mxu0 %v2513
    %6202 = vmatmul.mubr.bf16.gmra.mxu0 %v2512
    %v6203 = vpop.f32.mrf.mxu0
    %v6204 = vadd.f32 %v6107, %v6203
    %v6205 = vpop.f32.mrf.mxu0
    %v6206 = vpop.f32.mrf.mxu0
    %v6207 = vadd.f32 %v6110, %v6206
    %v6208 = vpop.f32.mrf.mxu0
    %6209 = vmatprep.mubr.bf16.mxu0 %v2561
    %6210 = vmatmul.mubr.bf16.gmra.mxu0 %v2560
    %v6211 = vpop.f32.mrf.mxu0
    %v6212 = vadd.f32 %v6115, %v6211
    %v6213 = vpop.f32.mrf.mxu0
    %v6214 = vpop.f32.mrf.mxu0
    %v6215 = vadd.f32 %v6118, %v6214
    %v6216 = vpop.f32.mrf.mxu0
    %6217 = vmatprep.mubr.bf16.mxu0 %v2609
    %6218 = vmatmul.mubr.bf16.gmra.mxu0 %v2608
    %v6219 = vpop.f32.mrf.mxu0
    %v6220 = vadd.f32 %v6123, %v6219
    %v6221 = vpop.f32.mrf.mxu0
    %v6222 = vpop.f32.mrf.mxu0
    %v6223 = vadd.f32 %v6126, %v6222
    %v6224 = vpop.f32.mrf.mxu0
    %6225 = vmatprep.mubr.bf16.mxu0 %v2657
    %6226 = vmatmul.mubr.bf16.gmra.mxu0 %v2656
    %v6227 = vpop.f32.mrf.mxu0
    %v6228 = vadd.f32 %v6131, %v6227
    %v6229 = vpop.f32.mrf.mxu0
    %v6230 = vpop.f32.mrf.mxu0
    %v6231 = vadd.f32 %v6134, %v6230
    %v6232 = vpop.f32.mrf.mxu0
    %6233 = vmatprep.mubr.bf16.mxu0 %v2705
    %6234 = vmatmul.mubr.bf16.gmra.mxu0 %v2704
    %v6235 = vpop.f32.mrf.mxu0
    %v6236 = vadd.f32 %v6139, %v6235
    %v6237 = vpop.f32.mrf.mxu0
    %v6238 = vpop.f32.mrf.mxu0
    %v6239 = vadd.f32 %v6142, %v6238
    %v6240 = vpop.f32.mrf.mxu0
    %6241 = vmatprep.mubr.bf16.mxu0 %v2753
    %6242 = vmatmul.mubr.bf16.gmra.mxu0 %v2752
    %v6243 = vpop.f32.mrf.mxu0
    %v6244 = vadd.f32 %v6147, %v6243
    %v6245 = vpop.f32.mrf.mxu0
    %v6246 = vpop.f32.mrf.mxu0
    %v6247 = vadd.f32 %v6150, %v6246
    %v6248 = vpop.f32.mrf.mxu0
    %6249 = vdwg.mxu0
    %6250 = vmatprep.subr.bf16.mxu0 0
    %6251 = vmatpush1.bf16.msra.mxu0 %v4841
    %6252 = vmatprep.subr.bf16.mxu0 0
    %6253 = vmatpush1.bf16.msra.mxu0 %v4840
    %6254 = vmatprep.subr.bf16.mxu0 0
    %6255 = vmatpush1.bf16.msra.mxu0 %v4839
    %6256 = vmatprep.subr.bf16.mxu0 0
    %6257 = vmatpush1.bf16.msra.mxu0 %v4838
    %6258 = vmatprep.subr.bf16.mxu0 0
    %6259 = vmatpush1.bf16.msra.mxu0 %v4837
    %6260 = vmatprep.subr.bf16.mxu0 0
    %6261 = vmatpush1.bf16.msra.mxu0 %v4836
    %6262 = vmatprep.subr.bf16.mxu0 0
    %6263 = vmatpush1.bf16.msra.mxu0 %v4835
    %6264 = vmatprep.subr.bf16.mxu0 0
    %6265 = vmatpush1.bf16.msra.mxu0 %v4834
    %6266 = vmatprep.subr.bf16.mxu0 0
    %6267 = vmatpush2.bf16.msra.mxu0 %v4849
    %6268 = vmatprep.subr.bf16.mxu0 0
    %6269 = vmatpush2.bf16.msra.mxu0 %v4848
    %6270 = vmatprep.subr.bf16.mxu0 0
    %6271 = vmatpush2.bf16.msra.mxu0 %v4847
    %6272 = vmatprep.subr.bf16.mxu0 0
    %6273 = vmatpush2.bf16.msra.mxu0 %v4846
    %6274 = vmatprep.subr.bf16.mxu0 0
    %6275 = vmatpush2.bf16.msra.mxu0 %v4845
    %6276 = vmatprep.subr.bf16.mxu0 0
    %6277 = vmatpush2.bf16.msra.mxu0 %v4844
    %6278 = vmatprep.subr.bf16.mxu0 0
    %6279 = vmatpush2.bf16.msra.mxu0 %v4843
    %6280 = vmatprep.subr.bf16.mxu0 0
    %6281 = vmatpush2.bf16.msra.mxu0 %v4842
    %6282 = vmatprep.mubr.bf16.mxu0 %v2419
    %6283 = vmatmul.mubr.bf16.gmra.mxu0 %v2418
    %v6284 = vpop.f32.mrf.mxu0
    %v6285 = vadd.f32 %v6188, %v6284
    %v6286 = vpop.f32.mrf.mxu0
    %v6287 = vpop.f32.mrf.mxu0
    %v6288 = vadd.f32 %v6191, %v6287
    %v6289 = vpop.f32.mrf.mxu0
    %6290 = vmatprep.mubr.bf16.mxu0 %v2467
    %6291 = vmatmul.mubr.bf16.gmra.mxu0 %v2466
    %v6292 = vpop.f32.mrf.mxu0
    %v6293 = vadd.f32 %v6196, %v6292
    %v6294 = vpop.f32.mrf.mxu0
    %v6295 = vpop.f32.mrf.mxu0
    %v6296 = vadd.f32 %v6199, %v6295
    %v6297 = vpop.f32.mrf.mxu0
    %6298 = vmatprep.mubr.bf16.mxu0 %v2515
    %6299 = vmatmul.mubr.bf16.gmra.mxu0 %v2514
    %v6300 = vpop.f32.mrf.mxu0
    %v6301 = vadd.f32 %v6204, %v6300
    %v6302 = vpop.f32.mrf.mxu0
    %v6303 = vpop.f32.mrf.mxu0
    %v6304 = vadd.f32 %v6207, %v6303
    %v6305 = vpop.f32.mrf.mxu0
    %6306 = vmatprep.mubr.bf16.mxu0 %v2563
    %6307 = vmatmul.mubr.bf16.gmra.mxu0 %v2562
    %v6308 = vpop.f32.mrf.mxu0
    %v6309 = vadd.f32 %v6212, %v6308
    %v6310 = vpop.f32.mrf.mxu0
    %v6311 = vpop.f32.mrf.mxu0
    %v6312 = vadd.f32 %v6215, %v6311
    %v6313 = vpop.f32.mrf.mxu0
    %6314 = vmatprep.mubr.bf16.mxu0 %v2611
    %6315 = vmatmul.mubr.bf16.gmra.mxu0 %v2610
    %v6316 = vpop.f32.mrf.mxu0
    %v6317 = vadd.f32 %v6220, %v6316
    %v6318 = vpop.f32.mrf.mxu0
    %v6319 = vpop.f32.mrf.mxu0
    %v6320 = vadd.f32 %v6223, %v6319
    %v6321 = vpop.f32.mrf.mxu0
    %6322 = vmatprep.mubr.bf16.mxu0 %v2659
    %6323 = vmatmul.mubr.bf16.gmra.mxu0 %v2658
    %v6324 = vpop.f32.mrf.mxu0
    %v6325 = vadd.f32 %v6228, %v6324
    %v6326 = vpop.f32.mrf.mxu0
    %v6327 = vpop.f32.mrf.mxu0
    %v6328 = vadd.f32 %v6231, %v6327
    %v6329 = vpop.f32.mrf.mxu0
    %6330 = vmatprep.mubr.bf16.mxu0 %v2707
    %6331 = vmatmul.mubr.bf16.gmra.mxu0 %v2706
    %v6332 = vpop.f32.mrf.mxu0
    %v6333 = vadd.f32 %v6236, %v6332
    %v6334 = vpop.f32.mrf.mxu0
    %v6335 = vpop.f32.mrf.mxu0
    %v6336 = vadd.f32 %v6239, %v6335
    %v6337 = vpop.f32.mrf.mxu0
    %6338 = vmatprep.mubr.bf16.mxu0 %v2755
    %6339 = vmatmul.mubr.bf16.gmra.mxu0 %v2754
    %v6340 = vpop.f32.mrf.mxu0
    %v6341 = vadd.f32 %v6244, %v6340
    %v6342 = vpop.f32.mrf.mxu0
    %v6343 = vpop.f32.mrf.mxu0
    %v6344 = vadd.f32 %v6247, %v6343
    %v6345 = vpop.f32.mrf.mxu0
    %6346 = vdwg.mxu0
    %6347 = vmatprep.subr.bf16.mxu0 0
    %6348 = vmatpush1.bf16.msra.mxu0 %v4857
    %6349 = vmatprep.subr.bf16.mxu0 0
    %6350 = vmatpush1.bf16.msra.mxu0 %v4856
    %6351 = vmatprep.subr.bf16.mxu0 0
    %6352 = vmatpush1.bf16.msra.mxu0 %v4855
    %6353 = vmatprep.subr.bf16.mxu0 0
    %6354 = vmatpush1.bf16.msra.mxu0 %v4854
    %6355 = vmatprep.subr.bf16.mxu0 0
    %6356 = vmatpush1.bf16.msra.mxu0 %v4853
    %6357 = vmatprep.subr.bf16.mxu0 0
    %6358 = vmatpush1.bf16.msra.mxu0 %v4852
    %6359 = vmatprep.subr.bf16.mxu0 0
    %6360 = vmatpush1.bf16.msra.mxu0 %v4851
    %6361 = vmatprep.subr.bf16.mxu0 0
    %6362 = vmatpush1.bf16.msra.mxu0 %v4850
    %6363 = vmatprep.subr.bf16.mxu0 0
    %6364 = vmatpush2.bf16.msra.mxu0 %v4865
    %6365 = vmatprep.subr.bf16.mxu0 0
    %6366 = vmatpush2.bf16.msra.mxu0 %v4864
    %6367 = vmatprep.subr.bf16.mxu0 0
    %6368 = vmatpush2.bf16.msra.mxu0 %v4863
    %6369 = vmatprep.subr.bf16.mxu0 0
    %6370 = vmatpush2.bf16.msra.mxu0 %v4862
    %6371 = vmatprep.subr.bf16.mxu0 0
    %6372 = vmatpush2.bf16.msra.mxu0 %v4861
    %6373 = vmatprep.subr.bf16.mxu0 0
    %6374 = vmatpush2.bf16.msra.mxu0 %v4860
    %6375 = vmatprep.subr.bf16.mxu0 0
    %6376 = vmatpush2.bf16.msra.mxu0 %v4859
    %6377 = vmatprep.subr.bf16.mxu0 0
    %6378 = vmatpush2.bf16.msra.mxu0 %v4858
    %6379 = vmatprep.mubr.bf16.mxu0 %v2421
    %6380 = vmatmul.mubr.bf16.gmra.mxu0 %v2420
    %v6381 = vpop.f32.mrf.mxu0
    %v6382 = vadd.f32 %v6285, %v6381
    %v6383 = vpop.f32.mrf.mxu0
    %v6384 = vpop.f32.mrf.mxu0
    %v6385 = vadd.f32 %v6288, %v6384
    %v6386 = vpop.f32.mrf.mxu0
    %6387 = vmatprep.mubr.bf16.mxu0 %v2469
    %6388 = vmatmul.mubr.bf16.gmra.mxu0 %v2468
    %v6389 = vpop.f32.mrf.mxu0
    %v6390 = vadd.f32 %v6293, %v6389
    %v6391 = vpop.f32.mrf.mxu0
    %v6392 = vpop.f32.mrf.mxu0
    %v6393 = vadd.f32 %v6296, %v6392
    %v6394 = vpop.f32.mrf.mxu0
    %6395 = vmatprep.mubr.bf16.mxu0 %v2517
    %6396 = vmatmul.mubr.bf16.gmra.mxu0 %v2516
    %v6397 = vpop.f32.mrf.mxu0
    %v6398 = vadd.f32 %v6301, %v6397
    %v6399 = vpop.f32.mrf.mxu0
    %v6400 = vpop.f32.mrf.mxu0
    %v6401 = vadd.f32 %v6304, %v6400
    %v6402 = vpop.f32.mrf.mxu0
    %6403 = vmatprep.mubr.bf16.mxu0 %v2565
    %6404 = vmatmul.mubr.bf16.gmra.mxu0 %v2564
    %v6405 = vpop.f32.mrf.mxu0
    %v6406 = vadd.f32 %v6309, %v6405
    %v6407 = vpop.f32.mrf.mxu0
    %v6408 = vpop.f32.mrf.mxu0
    %v6409 = vadd.f32 %v6312, %v6408
    %v6410 = vpop.f32.mrf.mxu0
    %6411 = vmatprep.mubr.bf16.mxu0 %v2613
    %6412 = vmatmul.mubr.bf16.gmra.mxu0 %v2612
    %v6413 = vpop.f32.mrf.mxu0
    %v6414 = vadd.f32 %v6317, %v6413
    %v6415 = vpop.f32.mrf.mxu0
    %v6416 = vpop.f32.mrf.mxu0
    %v6417 = vadd.f32 %v6320, %v6416
    %v6418 = vpop.f32.mrf.mxu0
    %6419 = vmatprep.mubr.bf16.mxu0 %v2661
    %6420 = vmatmul.mubr.bf16.gmra.mxu0 %v2660
    %v6421 = vpop.f32.mrf.mxu0
    %v6422 = vadd.f32 %v6325, %v6421
    %v6423 = vpop.f32.mrf.mxu0
    %v6424 = vpop.f32.mrf.mxu0
    %v6425 = vadd.f32 %v6328, %v6424
    %v6426 = vpop.f32.mrf.mxu0
    %6427 = vmatprep.mubr.bf16.mxu0 %v2709
    %6428 = vmatmul.mubr.bf16.gmra.mxu0 %v2708
    %v6429 = vpop.f32.mrf.mxu0
    %v6430 = vadd.f32 %v6333, %v6429
    %v6431 = vpop.f32.mrf.mxu0
    %v6432 = vpop.f32.mrf.mxu0
    %v6433 = vadd.f32 %v6336, %v6432
    %v6434 = vpop.f32.mrf.mxu0
    %6435 = vmatprep.mubr.bf16.mxu0 %v2757
    %6436 = vmatmul.mubr.bf16.gmra.mxu0 %v2756
    %v6437 = vpop.f32.mrf.mxu0
    %v6438 = vadd.f32 %v6341, %v6437
    %v6439 = vpop.f32.mrf.mxu0
    %v6440 = vpop.f32.mrf.mxu0
    %v6441 = vadd.f32 %v6344, %v6440
    %v6442 = vpop.f32.mrf.mxu0
    %6443 = vdwg.mxu0
    %6444 = vmatprep.subr.bf16.mxu0 0
    %6445 = vmatpush1.bf16.msra.mxu0 %v4873
    %6446 = vmatprep.subr.bf16.mxu0 0
    %6447 = vmatpush1.bf16.msra.mxu0 %v4872
    %6448 = vmatprep.subr.bf16.mxu0 0
    %6449 = vmatpush1.bf16.msra.mxu0 %v4871
    %6450 = vmatprep.subr.bf16.mxu0 0
    %6451 = vmatpush1.bf16.msra.mxu0 %v4870
    %6452 = vmatprep.subr.bf16.mxu0 0
    %6453 = vmatpush1.bf16.msra.mxu0 %v4869
    %6454 = vmatprep.subr.bf16.mxu0 0
    %6455 = vmatpush1.bf16.msra.mxu0 %v4868
    %6456 = vmatprep.subr.bf16.mxu0 0
    %6457 = vmatpush1.bf16.msra.mxu0 %v4867
    %6458 = vmatprep.subr.bf16.mxu0 0
    %6459 = vmatpush1.bf16.msra.mxu0 %v4866
    %6460 = vmatprep.subr.bf16.mxu0 0
    %6461 = vmatpush2.bf16.msra.mxu0 %v4881
    %6462 = vmatprep.subr.bf16.mxu0 0
    %6463 = vmatpush2.bf16.msra.mxu0 %v4880
    %6464 = vmatprep.subr.bf16.mxu0 0
    %6465 = vmatpush2.bf16.msra.mxu0 %v4879
    %6466 = vmatprep.subr.bf16.mxu0 0
    %6467 = vmatpush2.bf16.msra.mxu0 %v4878
    %6468 = vmatprep.subr.bf16.mxu0 0
    %6469 = vmatpush2.bf16.msra.mxu0 %v4877
    %6470 = vmatprep.subr.bf16.mxu0 0
    %6471 = vmatpush2.bf16.msra.mxu0 %v4876
    %6472 = vmatprep.subr.bf16.mxu0 0
    %6473 = vmatpush2.bf16.msra.mxu0 %v4875
    %6474 = vmatprep.subr.bf16.mxu0 0
    %6475 = vmatpush2.bf16.msra.mxu0 %v4874
    %6476 = vmatprep.mubr.bf16.mxu0 %v2423
    %6477 = vmatmul.mubr.bf16.gmra.mxu0 %v2422
    %v6478 = vpop.f32.mrf.mxu0
    %v6479 = vadd.f32 %v6382, %v6478
    %v6480 = vpop.f32.mrf.mxu0
    %v6481 = vpop.f32.mrf.mxu0
    %v6482 = vadd.f32 %v6385, %v6481
    %v6483 = vpop.f32.mrf.mxu0
    %6484 = vmatprep.mubr.bf16.mxu0 %v2471
    %6485 = vmatmul.mubr.bf16.gmra.mxu0 %v2470
    %v6486 = vpop.f32.mrf.mxu0
    %v6487 = vadd.f32 %v6390, %v6486
    %v6488 = vpop.f32.mrf.mxu0
    %v6489 = vpop.f32.mrf.mxu0
    %v6490 = vadd.f32 %v6393, %v6489
    %v6491 = vpop.f32.mrf.mxu0
    %6492 = vmatprep.mubr.bf16.mxu0 %v2519
    %6493 = vmatmul.mubr.bf16.gmra.mxu0 %v2518
    %v6494 = vpop.f32.mrf.mxu0
    %v6495 = vadd.f32 %v6398, %v6494
    %v6496 = vpop.f32.mrf.mxu0
    %v6497 = vpop.f32.mrf.mxu0
    %v6498 = vadd.f32 %v6401, %v6497
    %v6499 = vpop.f32.mrf.mxu0
    %6500 = vmatprep.mubr.bf16.mxu0 %v2567
    %6501 = vmatmul.mubr.bf16.gmra.mxu0 %v2566
    %v6502 = vpop.f32.mrf.mxu0
    %v6503 = vadd.f32 %v6406, %v6502
    %v6504 = vpop.f32.mrf.mxu0
    %v6505 = vpop.f32.mrf.mxu0
    %v6506 = vadd.f32 %v6409, %v6505
    %v6507 = vpop.f32.mrf.mxu0
    %6508 = vmatprep.mubr.bf16.mxu0 %v2615
    %6509 = vmatmul.mubr.bf16.gmra.mxu0 %v2614
    %v6510 = vpop.f32.mrf.mxu0
    %v6511 = vadd.f32 %v6414, %v6510
    %v6512 = vpop.f32.mrf.mxu0
    %v6513 = vpop.f32.mrf.mxu0
    %v6514 = vadd.f32 %v6417, %v6513
    %v6515 = vpop.f32.mrf.mxu0
    %6516 = vmatprep.mubr.bf16.mxu0 %v2663
    %6517 = vmatmul.mubr.bf16.gmra.mxu0 %v2662
    %v6518 = vpop.f32.mrf.mxu0
    %v6519 = vadd.f32 %v6422, %v6518
    %v6520 = vpop.f32.mrf.mxu0
    %v6521 = vpop.f32.mrf.mxu0
    %v6522 = vadd.f32 %v6425, %v6521
    %v6523 = vpop.f32.mrf.mxu0
    %6524 = vmatprep.mubr.bf16.mxu0 %v2711
    %6525 = vmatmul.mubr.bf16.gmra.mxu0 %v2710
    %v6526 = vpop.f32.mrf.mxu0
    %v6527 = vadd.f32 %v6430, %v6526
    %v6528 = vpop.f32.mrf.mxu0
    %v6529 = vpop.f32.mrf.mxu0
    %v6530 = vadd.f32 %v6433, %v6529
    %v6531 = vpop.f32.mrf.mxu0
    %6532 = vmatprep.mubr.bf16.mxu0 %v2759
    %6533 = vmatmul.mubr.bf16.gmra.mxu0 %v2758
    %v6534 = vpop.f32.mrf.mxu0
    %v6535 = vadd.f32 %v6438, %v6534
    %v6536 = vpop.f32.mrf.mxu0
    %v6537 = vpop.f32.mrf.mxu0
    %v6538 = vadd.f32 %v6441, %v6537
    %v6539 = vpop.f32.mrf.mxu0
    %6540 = vdwg.mxu0
    %6541 = vmatprep.subr.bf16.mxu0 0
    %6542 = vmatpush1.bf16.msra.mxu0 %v4889
    %6543 = vmatprep.subr.bf16.mxu0 0
    %6544 = vmatpush1.bf16.msra.mxu0 %v4888
    %6545 = vmatprep.subr.bf16.mxu0 0
    %6546 = vmatpush1.bf16.msra.mxu0 %v4887
    %6547 = vmatprep.subr.bf16.mxu0 0
    %6548 = vmatpush1.bf16.msra.mxu0 %v4886
    %6549 = vmatprep.subr.bf16.mxu0 0
    %6550 = vmatpush1.bf16.msra.mxu0 %v4885
    %6551 = vmatprep.subr.bf16.mxu0 0
    %6552 = vmatpush1.bf16.msra.mxu0 %v4884
    %6553 = vmatprep.subr.bf16.mxu0 0
    %6554 = vmatpush1.bf16.msra.mxu0 %v4883
    %6555 = vmatprep.subr.bf16.mxu0 0
    %6556 = vmatpush1.bf16.msra.mxu0 %v4882
    %6557 = vmatprep.subr.bf16.mxu0 0
    %6558 = vmatpush2.bf16.msra.mxu0 %v4897
    %6559 = vmatprep.subr.bf16.mxu0 0
    %6560 = vmatpush2.bf16.msra.mxu0 %v4896
    %6561 = vmatprep.subr.bf16.mxu0 0
    %6562 = vmatpush2.bf16.msra.mxu0 %v4895
    %6563 = vmatprep.subr.bf16.mxu0 0
    %6564 = vmatpush2.bf16.msra.mxu0 %v4894
    %6565 = vmatprep.subr.bf16.mxu0 0
    %6566 = vmatpush2.bf16.msra.mxu0 %v4893
    %6567 = vmatprep.subr.bf16.mxu0 0
    %6568 = vmatpush2.bf16.msra.mxu0 %v4892
    %6569 = vmatprep.subr.bf16.mxu0 0
    %6570 = vmatpush2.bf16.msra.mxu0 %v4891
    %6571 = vmatprep.subr.bf16.mxu0 0
    %6572 = vmatpush2.bf16.msra.mxu0 %v4890
    %6573 = vmatprep.mubr.bf16.mxu0 %v2425
    %6574 = vmatmul.mubr.bf16.gmra.mxu0 %v2424
    %v6575 = vpop.f32.mrf.mxu0
    %v6576 = vadd.f32 %v6479, %v6575
    %v6577 = vpop.f32.mrf.mxu0
    %v6578 = vpop.f32.mrf.mxu0
    %v6579 = vadd.f32 %v6482, %v6578
    %v6580 = vpop.f32.mrf.mxu0
    %6581 = vmatprep.mubr.bf16.mxu0 %v2473
    %6582 = vmatmul.mubr.bf16.gmra.mxu0 %v2472
    %v6583 = vpop.f32.mrf.mxu0
    %v6584 = vadd.f32 %v6487, %v6583
    %v6585 = vpop.f32.mrf.mxu0
    %v6586 = vpop.f32.mrf.mxu0
    %v6587 = vadd.f32 %v6490, %v6586
    %v6588 = vpop.f32.mrf.mxu0
    %6589 = vmatprep.mubr.bf16.mxu0 %v2521
    %6590 = vmatmul.mubr.bf16.gmra.mxu0 %v2520
    %v6591 = vpop.f32.mrf.mxu0
    %v6592 = vadd.f32 %v6495, %v6591
    %v6593 = vpop.f32.mrf.mxu0
    %v6594 = vpop.f32.mrf.mxu0
    %v6595 = vadd.f32 %v6498, %v6594
    %v6596 = vpop.f32.mrf.mxu0
    %6597 = vmatprep.mubr.bf16.mxu0 %v2569
    %6598 = vmatmul.mubr.bf16.gmra.mxu0 %v2568
    %v6599 = vpop.f32.mrf.mxu0
    %v6600 = vadd.f32 %v6503, %v6599
    %v6601 = vpop.f32.mrf.mxu0
    %v6602 = vpop.f32.mrf.mxu0
    %v6603 = vadd.f32 %v6506, %v6602
    %v6604 = vpop.f32.mrf.mxu0
    %6605 = vmatprep.mubr.bf16.mxu0 %v2617
    %6606 = vmatmul.mubr.bf16.gmra.mxu0 %v2616
    %v6607 = vpop.f32.mrf.mxu0
    %v6608 = vadd.f32 %v6511, %v6607
    %v6609 = vpop.f32.mrf.mxu0
    %v6610 = vpop.f32.mrf.mxu0
    %v6611 = vadd.f32 %v6514, %v6610
    %v6612 = vpop.f32.mrf.mxu0
    %6613 = vmatprep.mubr.bf16.mxu0 %v2665
    %6614 = vmatmul.mubr.bf16.gmra.mxu0 %v2664
    %v6615 = vpop.f32.mrf.mxu0
    %v6616 = vadd.f32 %v6519, %v6615
    %v6617 = vpop.f32.mrf.mxu0
    %v6618 = vpop.f32.mrf.mxu0
    %v6619 = vadd.f32 %v6522, %v6618
    %v6620 = vpop.f32.mrf.mxu0
    %6621 = vmatprep.mubr.bf16.mxu0 %v2713
    %6622 = vmatmul.mubr.bf16.gmra.mxu0 %v2712
    %v6623 = vpop.f32.mrf.mxu0
    %v6624 = vadd.f32 %v6527, %v6623
    %v6625 = vpop.f32.mrf.mxu0
    %v6626 = vpop.f32.mrf.mxu0
    %v6627 = vadd.f32 %v6530, %v6626
    %v6628 = vpop.f32.mrf.mxu0
    %6629 = vmatprep.mubr.bf16.mxu0 %v2761
    %6630 = vmatmul.mubr.bf16.gmra.mxu0 %v2760
    %v6631 = vpop.f32.mrf.mxu0
    %v6632 = vadd.f32 %v6535, %v6631
    %v6633 = vpop.f32.mrf.mxu0
    %v6634 = vpop.f32.mrf.mxu0
    %v6635 = vadd.f32 %v6538, %v6634
    %v6636 = vpop.f32.mrf.mxu0
    %6637 = vdwg.mxu0
    %6638 = vmatprep.subr.bf16.mxu0 0
    %6639 = vmatpush1.bf16.msra.mxu0 %v4905
    %6640 = vmatprep.subr.bf16.mxu0 0
    %6641 = vmatpush1.bf16.msra.mxu0 %v4904
    %6642 = vmatprep.subr.bf16.mxu0 0
    %6643 = vmatpush1.bf16.msra.mxu0 %v4903
    %6644 = vmatprep.subr.bf16.mxu0 0
    %6645 = vmatpush1.bf16.msra.mxu0 %v4902
    %6646 = vmatprep.subr.bf16.mxu0 0
    %6647 = vmatpush1.bf16.msra.mxu0 %v4901
    %6648 = vmatprep.subr.bf16.mxu0 0
    %6649 = vmatpush1.bf16.msra.mxu0 %v4900
    %6650 = vmatprep.subr.bf16.mxu0 0
    %6651 = vmatpush1.bf16.msra.mxu0 %v4899
    %6652 = vmatprep.subr.bf16.mxu0 0
    %6653 = vmatpush1.bf16.msra.mxu0 %v4898
    %6654 = vmatprep.subr.bf16.mxu0 0
    %6655 = vmatpush2.bf16.msra.mxu0 %v4913
    %6656 = vmatprep.subr.bf16.mxu0 0
    %6657 = vmatpush2.bf16.msra.mxu0 %v4912
    %6658 = vmatprep.subr.bf16.mxu0 0
    %6659 = vmatpush2.bf16.msra.mxu0 %v4911
    %6660 = vmatprep.subr.bf16.mxu0 0
    %6661 = vmatpush2.bf16.msra.mxu0 %v4910
    %6662 = vmatprep.subr.bf16.mxu0 0
    %6663 = vmatpush2.bf16.msra.mxu0 %v4909
    %6664 = vmatprep.subr.bf16.mxu0 0
    %6665 = vmatpush2.bf16.msra.mxu0 %v4908
    %6666 = vmatprep.subr.bf16.mxu0 0
    %6667 = vmatpush2.bf16.msra.mxu0 %v4907
    %6668 = vmatprep.subr.bf16.mxu0 0
    %6669 = vmatpush2.bf16.msra.mxu0 %v4906
    %6670 = vmatprep.mubr.bf16.mxu0 %v2427
    %6671 = vmatmul.mubr.bf16.gmra.mxu0 %v2426
    %v6672 = vpop.f32.mrf.mxu0
    %v6673 = vadd.f32 %v6576, %v6672
    %v6674 = vpop.f32.mrf.mxu0
    %v6675 = vpop.f32.mrf.mxu0
    %v6676 = vadd.f32 %v6579, %v6675
    %v6677 = vpop.f32.mrf.mxu0
    %6678 = vmatprep.mubr.bf16.mxu0 %v2475
    %6679 = vmatmul.mubr.bf16.gmra.mxu0 %v2474
    %v6680 = vpop.f32.mrf.mxu0
    %v6681 = vadd.f32 %v6584, %v6680
    %v6682 = vpop.f32.mrf.mxu0
    %v6683 = vpop.f32.mrf.mxu0
    %v6684 = vadd.f32 %v6587, %v6683
    %v6685 = vpop.f32.mrf.mxu0
    %6686 = vmatprep.mubr.bf16.mxu0 %v2523
    %6687 = vmatmul.mubr.bf16.gmra.mxu0 %v2522
    %v6688 = vpop.f32.mrf.mxu0
    %v6689 = vadd.f32 %v6592, %v6688
    %v6690 = vpop.f32.mrf.mxu0
    %v6691 = vpop.f32.mrf.mxu0
    %v6692 = vadd.f32 %v6595, %v6691
    %v6693 = vpop.f32.mrf.mxu0
    %6694 = vmatprep.mubr.bf16.mxu0 %v2571
    %6695 = vmatmul.mubr.bf16.gmra.mxu0 %v2570
    %v6696 = vpop.f32.mrf.mxu0
    %v6697 = vadd.f32 %v6600, %v6696
    %v6698 = vpop.f32.mrf.mxu0
    %v6699 = vpop.f32.mrf.mxu0
    %v6700 = vadd.f32 %v6603, %v6699
    %v6701 = vpop.f32.mrf.mxu0
    %6702 = vmatprep.mubr.bf16.mxu0 %v2619
    %6703 = vmatmul.mubr.bf16.gmra.mxu0 %v2618
    %v6704 = vpop.f32.mrf.mxu0
    %v6705 = vadd.f32 %v6608, %v6704
    %v6706 = vpop.f32.mrf.mxu0
    %v6707 = vpop.f32.mrf.mxu0
    %v6708 = vadd.f32 %v6611, %v6707
    %v6709 = vpop.f32.mrf.mxu0
    %6710 = vmatprep.mubr.bf16.mxu0 %v2667
    %6711 = vmatmul.mubr.bf16.gmra.mxu0 %v2666
    %v6712 = vpop.f32.mrf.mxu0
    %v6713 = vadd.f32 %v6616, %v6712
    %v6714 = vpop.f32.mrf.mxu0
    %v6715 = vpop.f32.mrf.mxu0
    %v6716 = vadd.f32 %v6619, %v6715
    %v6717 = vpop.f32.mrf.mxu0
    %6718 = vmatprep.mubr.bf16.mxu0 %v2715
    %6719 = vmatmul.mubr.bf16.gmra.mxu0 %v2714
    %v6720 = vpop.f32.mrf.mxu0
    %v6721 = vadd.f32 %v6624, %v6720
    %v6722 = vpop.f32.mrf.mxu0
    %v6723 = vpop.f32.mrf.mxu0
    %v6724 = vadd.f32 %v6627, %v6723
    %v6725 = vpop.f32.mrf.mxu0
    %6726 = vmatprep.mubr.bf16.mxu0 %v2763
    %6727 = vmatmul.mubr.bf16.gmra.mxu0 %v2762
    %v6728 = vpop.f32.mrf.mxu0
    %v6729 = vadd.f32 %v6632, %v6728
    %v6730 = vpop.f32.mrf.mxu0
    %v6731 = vpop.f32.mrf.mxu0
    %v6732 = vadd.f32 %v6635, %v6731
    %v6733 = vpop.f32.mrf.mxu0
    %6734 = vdwg.mxu0
    %6735 = vmatprep.subr.bf16.mxu0 0
    %6736 = vmatpush1.bf16.msra.mxu0 %v4921
    %6737 = vmatprep.subr.bf16.mxu0 0
    %6738 = vmatpush1.bf16.msra.mxu0 %v4920
    %6739 = vmatprep.subr.bf16.mxu0 0
    %6740 = vmatpush1.bf16.msra.mxu0 %v4919
    %6741 = vmatprep.subr.bf16.mxu0 0
    %6742 = vmatpush1.bf16.msra.mxu0 %v4918
    %6743 = vmatprep.subr.bf16.mxu0 0
    %6744 = vmatpush1.bf16.msra.mxu0 %v4917
    %6745 = vmatprep.subr.bf16.mxu0 0
    %6746 = vmatpush1.bf16.msra.mxu0 %v4916
    %6747 = vmatprep.subr.bf16.mxu0 0
    %6748 = vmatpush1.bf16.msra.mxu0 %v4915
    %6749 = vmatprep.subr.bf16.mxu0 0
    %6750 = vmatpush1.bf16.msra.mxu0 %v4914
    %6751 = vmatprep.subr.bf16.mxu0 0
    %6752 = vmatpush2.bf16.msra.mxu0 %v4929
    %6753 = vmatprep.subr.bf16.mxu0 0
    %6754 = vmatpush2.bf16.msra.mxu0 %v4928
    %6755 = vmatprep.subr.bf16.mxu0 0
    %6756 = vmatpush2.bf16.msra.mxu0 %v4927
    %6757 = vmatprep.subr.bf16.mxu0 0
    %6758 = vmatpush2.bf16.msra.mxu0 %v4926
    %6759 = vmatprep.subr.bf16.mxu0 0
    %6760 = vmatpush2.bf16.msra.mxu0 %v4925
    %6761 = vmatprep.subr.bf16.mxu0 0
    %6762 = vmatpush2.bf16.msra.mxu0 %v4924
    %6763 = vmatprep.subr.bf16.mxu0 0
    %6764 = vmatpush2.bf16.msra.mxu0 %v4923
    %6765 = vmatprep.subr.bf16.mxu0 0
    %6766 = vmatpush2.bf16.msra.mxu0 %v4922
    %6767 = vmatprep.mubr.bf16.mxu0 %v2429
    %6768 = vmatmul.mubr.bf16.gmra.mxu0 %v2428
    %v6769 = vpop.f32.mrf.mxu0
    %v6770 = vadd.f32 %v6673, %v6769
    %v6771 = vpop.f32.mrf.mxu0
    %v6772 = vpop.f32.mrf.mxu0
    %v6773 = vadd.f32 %v6676, %v6772
    %v6774 = vpop.f32.mrf.mxu0
    %6775 = vmatprep.mubr.bf16.mxu0 %v2477
    %6776 = vmatmul.mubr.bf16.gmra.mxu0 %v2476
    %v6777 = vpop.f32.mrf.mxu0
    %v6778 = vadd.f32 %v6681, %v6777
    %v6779 = vpop.f32.mrf.mxu0
    %v6780 = vpop.f32.mrf.mxu0
    %v6781 = vadd.f32 %v6684, %v6780
    %v6782 = vpop.f32.mrf.mxu0
    %6783 = vmatprep.mubr.bf16.mxu0 %v2525
    %6784 = vmatmul.mubr.bf16.gmra.mxu0 %v2524
    %v6785 = vpop.f32.mrf.mxu0
    %v6786 = vadd.f32 %v6689, %v6785
    %v6787 = vpop.f32.mrf.mxu0
    %v6788 = vpop.f32.mrf.mxu0
    %v6789 = vadd.f32 %v6692, %v6788
    %v6790 = vpop.f32.mrf.mxu0
    %6791 = vmatprep.mubr.bf16.mxu0 %v2573
    %6792 = vmatmul.mubr.bf16.gmra.mxu0 %v2572
    %v6793 = vpop.f32.mrf.mxu0
    %v6794 = vadd.f32 %v6697, %v6793
    %v6795 = vpop.f32.mrf.mxu0
    %v6796 = vpop.f32.mrf.mxu0
    %v6797 = vadd.f32 %v6700, %v6796
    %v6798 = vpop.f32.mrf.mxu0
    %6799 = vmatprep.mubr.bf16.mxu0 %v2621
    %6800 = vmatmul.mubr.bf16.gmra.mxu0 %v2620
    %v6801 = vpop.f32.mrf.mxu0
    %v6802 = vadd.f32 %v6705, %v6801
    %v6803 = vpop.f32.mrf.mxu0
    %v6804 = vpop.f32.mrf.mxu0
    %v6805 = vadd.f32 %v6708, %v6804
    %v6806 = vpop.f32.mrf.mxu0
    %6807 = vmatprep.mubr.bf16.mxu0 %v2669
    %6808 = vmatmul.mubr.bf16.gmra.mxu0 %v2668
    %v6809 = vpop.f32.mrf.mxu0
    %v6810 = vadd.f32 %v6713, %v6809
    %v6811 = vpop.f32.mrf.mxu0
    %v6812 = vpop.f32.mrf.mxu0
    %v6813 = vadd.f32 %v6716, %v6812
    %v6814 = vpop.f32.mrf.mxu0
    %6815 = vmatprep.mubr.bf16.mxu0 %v2717
    %6816 = vmatmul.mubr.bf16.gmra.mxu0 %v2716
    %v6817 = vpop.f32.mrf.mxu0
    %v6818 = vadd.f32 %v6721, %v6817
    %v6819 = vpop.f32.mrf.mxu0
    %v6820 = vpop.f32.mrf.mxu0
    %v6821 = vadd.f32 %v6724, %v6820
    %v6822 = vpop.f32.mrf.mxu0
    %6823 = vmatprep.mubr.bf16.mxu0 %v2765
    %6824 = vmatmul.mubr.bf16.gmra.mxu0 %v2764
    %v6825 = vpop.f32.mrf.mxu0
    %v6826 = vadd.f32 %v6729, %v6825
    %v6827 = vpop.f32.mrf.mxu0
    %v6828 = vpop.f32.mrf.mxu0
    %v6829 = vadd.f32 %v6732, %v6828
    %v6830 = vpop.f32.mrf.mxu0
    %6831 = vdwg.mxu0
    %6832 = vmatprep.subr.bf16.mxu0 0
    %6833 = vmatpush1.bf16.msra.mxu0 %v4937
    %6834 = vmatprep.subr.bf16.mxu0 0
    %6835 = vmatpush1.bf16.msra.mxu0 %v4936
    %6836 = vmatprep.subr.bf16.mxu0 0
    %6837 = vmatpush1.bf16.msra.mxu0 %v4935
    %6838 = vmatprep.subr.bf16.mxu0 0
    %6839 = vmatpush1.bf16.msra.mxu0 %v4934
    %6840 = vmatprep.subr.bf16.mxu0 0
    %6841 = vmatpush1.bf16.msra.mxu0 %v4933
    %6842 = vmatprep.subr.bf16.mxu0 0
    %6843 = vmatpush1.bf16.msra.mxu0 %v4932
    %6844 = vmatprep.subr.bf16.mxu0 0
    %6845 = vmatpush1.bf16.msra.mxu0 %v4931
    %6846 = vmatprep.subr.bf16.mxu0 0
    %6847 = vmatpush1.bf16.msra.mxu0 %v4930
    %6848 = vmatprep.subr.bf16.mxu0 0
    %6849 = vmatpush2.bf16.msra.mxu0 %v4945
    %6850 = vmatprep.subr.bf16.mxu0 0
    %6851 = vmatpush2.bf16.msra.mxu0 %v4944
    %6852 = vmatprep.subr.bf16.mxu0 0
    %6853 = vmatpush2.bf16.msra.mxu0 %v4943
    %6854 = vmatprep.subr.bf16.mxu0 0
    %6855 = vmatpush2.bf16.msra.mxu0 %v4942
    %6856 = vmatprep.subr.bf16.mxu0 0
    %6857 = vmatpush2.bf16.msra.mxu0 %v4941
    %6858 = vmatprep.subr.bf16.mxu0 0
    %6859 = vmatpush2.bf16.msra.mxu0 %v4940
    %6860 = vmatprep.subr.bf16.mxu0 0
    %6861 = vmatpush2.bf16.msra.mxu0 %v4939
    %6862 = vmatprep.subr.bf16.mxu0 0
    %6863 = vmatpush2.bf16.msra.mxu0 %v4938
    %6864 = vmatprep.mubr.bf16.mxu0 %v2431
    %6865 = vmatmul.mubr.bf16.gmra.mxu0 %v2430
    %v6866 = vpop.f32.mrf.mxu0
    %v6867 = vadd.f32 %v6770, %v6866
    %v6868 = vpop.f32.mrf.mxu0
    %v6869 = vpop.f32.mrf.mxu0
    %v6870 = vadd.f32 %v6773, %v6869
    %v6871 = vpop.f32.mrf.mxu0
    %6872 = vmatprep.mubr.bf16.mxu0 %v2479
    %6873 = vmatmul.mubr.bf16.gmra.mxu0 %v2478
    %v6874 = vpop.f32.mrf.mxu0
    %v6875 = vadd.f32 %v6778, %v6874
    %v6876 = vpop.f32.mrf.mxu0
    %v6877 = vpop.f32.mrf.mxu0
    %v6878 = vadd.f32 %v6781, %v6877
    %v6879 = vpop.f32.mrf.mxu0
    %6880 = vmatprep.mubr.bf16.mxu0 %v2527
    %6881 = vmatmul.mubr.bf16.gmra.mxu0 %v2526
    %v6882 = vpop.f32.mrf.mxu0
    %v6883 = vadd.f32 %v6786, %v6882
    %v6884 = vpop.f32.mrf.mxu0
    %v6885 = vpop.f32.mrf.mxu0
    %v6886 = vadd.f32 %v6789, %v6885
    %v6887 = vpop.f32.mrf.mxu0
    %6888 = vmatprep.mubr.bf16.mxu0 %v2575
    %6889 = vmatmul.mubr.bf16.gmra.mxu0 %v2574
    %v6890 = vpop.f32.mrf.mxu0
    %v6891 = vadd.f32 %v6794, %v6890
    %v6892 = vpop.f32.mrf.mxu0
    %v6893 = vpop.f32.mrf.mxu0
    %v6894 = vadd.f32 %v6797, %v6893
    %v6895 = vpop.f32.mrf.mxu0
    %6896 = vmatprep.mubr.bf16.mxu0 %v2623
    %6897 = vmatmul.mubr.bf16.gmra.mxu0 %v2622
    %v6898 = vpop.f32.mrf.mxu0
    %v6899 = vadd.f32 %v6802, %v6898
    %v6900 = vpop.f32.mrf.mxu0
    %v6901 = vpop.f32.mrf.mxu0
    %v6902 = vadd.f32 %v6805, %v6901
    %v6903 = vpop.f32.mrf.mxu0
    %6904 = vmatprep.mubr.bf16.mxu0 %v2671
    %6905 = vmatmul.mubr.bf16.gmra.mxu0 %v2670
    %v6906 = vpop.f32.mrf.mxu0
    %v6907 = vadd.f32 %v6810, %v6906
    %v6908 = vpop.f32.mrf.mxu0
    %v6909 = vpop.f32.mrf.mxu0
    %v6910 = vadd.f32 %v6813, %v6909
    %v6911 = vpop.f32.mrf.mxu0
    %6912 = vmatprep.mubr.bf16.mxu0 %v2719
    %6913 = vmatmul.mubr.bf16.gmra.mxu0 %v2718
    %v6914 = vpop.f32.mrf.mxu0
    %v6915 = vadd.f32 %v6818, %v6914
    %v6916 = vpop.f32.mrf.mxu0
    %v6917 = vpop.f32.mrf.mxu0
    %v6918 = vadd.f32 %v6821, %v6917
    %v6919 = vpop.f32.mrf.mxu0
    %6920 = vmatprep.mubr.bf16.mxu0 %v2767
    %6921 = vmatmul.mubr.bf16.gmra.mxu0 %v2766
    %v6922 = vpop.f32.mrf.mxu0
    %v6923 = vadd.f32 %v6826, %v6922
    %v6924 = vpop.f32.mrf.mxu0
    %v6925 = vpop.f32.mrf.mxu0
    %v6926 = vadd.f32 %v6829, %v6925
    %v6927 = vpop.f32.mrf.mxu0
    %6928 = vdwg.mxu0
    %6929 = vmatprep.subr.bf16.mxu0 0
    %6930 = vmatpush1.bf16.msra.mxu0 %v4953
    %6931 = vmatprep.subr.bf16.mxu0 0
    %6932 = vmatpush1.bf16.msra.mxu0 %v4952
    %6933 = vmatprep.subr.bf16.mxu0 0
    %6934 = vmatpush1.bf16.msra.mxu0 %v4951
    %6935 = vmatprep.subr.bf16.mxu0 0
    %6936 = vmatpush1.bf16.msra.mxu0 %v4950
    %6937 = vmatprep.subr.bf16.mxu0 0
    %6938 = vmatpush1.bf16.msra.mxu0 %v4949
    %6939 = vmatprep.subr.bf16.mxu0 0
    %6940 = vmatpush1.bf16.msra.mxu0 %v4948
    %6941 = vmatprep.subr.bf16.mxu0 0
    %6942 = vmatpush1.bf16.msra.mxu0 %v4947
    %6943 = vmatprep.subr.bf16.mxu0 0
    %6944 = vmatpush1.bf16.msra.mxu0 %v4946
    %6945 = vmatprep.subr.bf16.mxu0 0
    %6946 = vmatpush2.bf16.msra.mxu0 %v4961
    %6947 = vmatprep.subr.bf16.mxu0 0
    %6948 = vmatpush2.bf16.msra.mxu0 %v4960
    %6949 = vmatprep.subr.bf16.mxu0 0
    %6950 = vmatpush2.bf16.msra.mxu0 %v4959
    %6951 = vmatprep.subr.bf16.mxu0 0
    %6952 = vmatpush2.bf16.msra.mxu0 %v4958
    %6953 = vmatprep.subr.bf16.mxu0 0
    %6954 = vmatpush2.bf16.msra.mxu0 %v4957
    %6955 = vmatprep.subr.bf16.mxu0 0
    %6956 = vmatpush2.bf16.msra.mxu0 %v4956
    %6957 = vmatprep.subr.bf16.mxu0 0
    %6958 = vmatpush2.bf16.msra.mxu0 %v4955
    %6959 = vmatprep.subr.bf16.mxu0 0
    %6960 = vmatpush2.bf16.msra.mxu0 %v4954
    %6961 = vmatprep.mubr.bf16.mxu0 %v2433
    %6962 = vmatmul.mubr.bf16.gmra.mxu0 %v2432
    %v6963 = vpop.f32.mrf.mxu0
    %v6964 = vadd.f32 %v6867, %v6963
    %v6965 = vpop.f32.mrf.mxu0
    %v6966 = vpop.f32.mrf.mxu0
    %v6967 = vadd.f32 %v6870, %v6966
    %v6968 = vpop.f32.mrf.mxu0
    %6969 = vmatprep.mubr.bf16.mxu0 %v2481
    %6970 = vmatmul.mubr.bf16.gmra.mxu0 %v2480
    %v6971 = vpop.f32.mrf.mxu0
    %v6972 = vadd.f32 %v6875, %v6971
    %v6973 = vpop.f32.mrf.mxu0
    %v6974 = vpop.f32.mrf.mxu0
    %v6975 = vadd.f32 %v6878, %v6974
    %v6976 = vpop.f32.mrf.mxu0
    %6977 = vmatprep.mubr.bf16.mxu0 %v2529
    %6978 = vmatmul.mubr.bf16.gmra.mxu0 %v2528
    %v6979 = vpop.f32.mrf.mxu0
    %v6980 = vadd.f32 %v6883, %v6979
    %v6981 = vpop.f32.mrf.mxu0
    %v6982 = vpop.f32.mrf.mxu0
    %v6983 = vadd.f32 %v6886, %v6982
    %v6984 = vpop.f32.mrf.mxu0
    %6985 = vmatprep.mubr.bf16.mxu0 %v2577
    %6986 = vmatmul.mubr.bf16.gmra.mxu0 %v2576
    %v6987 = vpop.f32.mrf.mxu0
    %v6988 = vadd.f32 %v6891, %v6987
    %v6989 = vpop.f32.mrf.mxu0
    %v6990 = vpop.f32.mrf.mxu0
    %v6991 = vadd.f32 %v6894, %v6990
    %v6992 = vpop.f32.mrf.mxu0
    %6993 = vmatprep.mubr.bf16.mxu0 %v2625
    %6994 = vmatmul.mubr.bf16.gmra.mxu0 %v2624
    %v6995 = vpop.f32.mrf.mxu0
    %v6996 = vadd.f32 %v6899, %v6995
    %v6997 = vpop.f32.mrf.mxu0
    %v6998 = vpop.f32.mrf.mxu0
    %v6999 = vadd.f32 %v6902, %v6998
    %v7000 = vpop.f32.mrf.mxu0
    %7001 = vmatprep.mubr.bf16.mxu0 %v2673
    %7002 = vmatmul.mubr.bf16.gmra.mxu0 %v2672
    %v7003 = vpop.f32.mrf.mxu0
    %v7004 = vadd.f32 %v6907, %v7003
    %v7005 = vpop.f32.mrf.mxu0
    %v7006 = vpop.f32.mrf.mxu0
    %v7007 = vadd.f32 %v6910, %v7006
    %v7008 = vpop.f32.mrf.mxu0
    %7009 = vmatprep.mubr.bf16.mxu0 %v2721
    %7010 = vmatmul.mubr.bf16.gmra.mxu0 %v2720
    %v7011 = vpop.f32.mrf.mxu0
    %v7012 = vadd.f32 %v6915, %v7011
    %v7013 = vpop.f32.mrf.mxu0
    %v7014 = vpop.f32.mrf.mxu0
    %v7015 = vadd.f32 %v6918, %v7014
    %v7016 = vpop.f32.mrf.mxu0
    %7017 = vmatprep.mubr.bf16.mxu0 %v2769
    %7018 = vmatmul.mubr.bf16.gmra.mxu0 %v2768
    %v7019 = vpop.f32.mrf.mxu0
    %v7020 = vadd.f32 %v6923, %v7019
    %v7021 = vpop.f32.mrf.mxu0
    %v7022 = vpop.f32.mrf.mxu0
    %v7023 = vadd.f32 %v6926, %v7022
    %v7024 = vpop.f32.mrf.mxu0
    %7025 = vdwg.mxu0
    %7026 = vmatprep.subr.bf16.mxu0 0
    %7027 = vmatpush1.bf16.msra.mxu0 %v4969
    %7028 = vmatprep.subr.bf16.mxu0 0
    %7029 = vmatpush1.bf16.msra.mxu0 %v4968
    %7030 = vmatprep.subr.bf16.mxu0 0
    %7031 = vmatpush1.bf16.msra.mxu0 %v4967
    %7032 = vmatprep.subr.bf16.mxu0 0
    %7033 = vmatpush1.bf16.msra.mxu0 %v4966
    %7034 = vmatprep.subr.bf16.mxu0 0
    %7035 = vmatpush1.bf16.msra.mxu0 %v4965
    %7036 = vmatprep.subr.bf16.mxu0 0
    %7037 = vmatpush1.bf16.msra.mxu0 %v4964
    %7038 = vmatprep.subr.bf16.mxu0 0
    %7039 = vmatpush1.bf16.msra.mxu0 %v4963
    %7040 = vmatprep.subr.bf16.mxu0 0
    %7041 = vmatpush1.bf16.msra.mxu0 %v4962
    %7042 = vmatprep.subr.bf16.mxu0 0
    %7043 = vmatpush2.bf16.msra.mxu0 %v4977
    %7044 = vmatprep.subr.bf16.mxu0 0
    %7045 = vmatpush2.bf16.msra.mxu0 %v4976
    %7046 = vmatprep.subr.bf16.mxu0 0
    %7047 = vmatpush2.bf16.msra.mxu0 %v4975
    %7048 = vmatprep.subr.bf16.mxu0 0
    %7049 = vmatpush2.bf16.msra.mxu0 %v4974
    %7050 = vmatprep.subr.bf16.mxu0 0
    %7051 = vmatpush2.bf16.msra.mxu0 %v4973
    %7052 = vmatprep.subr.bf16.mxu0 0
    %7053 = vmatpush2.bf16.msra.mxu0 %v4972
    %7054 = vmatprep.subr.bf16.mxu0 0
    %7055 = vmatpush2.bf16.msra.mxu0 %v4971
    %7056 = vmatprep.subr.bf16.mxu0 0
    %7057 = vmatpush2.bf16.msra.mxu0 %v4970
    %7058 = vmatprep.mubr.bf16.mxu0 %v2435
    %7059 = vmatmul.mubr.bf16.gmra.mxu0 %v2434
    %v7060 = vpop.f32.mrf.mxu0
    %v7061 = vadd.f32 %v6964, %v7060
    %v7062 = vpop.f32.mrf.mxu0
    %v7063 = vpop.f32.mrf.mxu0
    %v7064 = vadd.f32 %v6967, %v7063
    %v7065 = vpop.f32.mrf.mxu0
    %7066 = vmatprep.mubr.bf16.mxu0 %v2483
    %7067 = vmatmul.mubr.bf16.gmra.mxu0 %v2482
    %v7068 = vpop.f32.mrf.mxu0
    %v7069 = vadd.f32 %v6972, %v7068
    %v7070 = vpop.f32.mrf.mxu0
    %v7071 = vpop.f32.mrf.mxu0
    %v7072 = vadd.f32 %v6975, %v7071
    %v7073 = vpop.f32.mrf.mxu0
    %7074 = vmatprep.mubr.bf16.mxu0 %v2531
    %7075 = vmatmul.mubr.bf16.gmra.mxu0 %v2530
    %v7076 = vpop.f32.mrf.mxu0
    %v7077 = vadd.f32 %v6980, %v7076
    %v7078 = vpop.f32.mrf.mxu0
    %v7079 = vpop.f32.mrf.mxu0
    %v7080 = vadd.f32 %v6983, %v7079
    %v7081 = vpop.f32.mrf.mxu0
    %7082 = vmatprep.mubr.bf16.mxu0 %v2579
    %7083 = vmatmul.mubr.bf16.gmra.mxu0 %v2578
    %v7084 = vpop.f32.mrf.mxu0
    %v7085 = vadd.f32 %v6988, %v7084
    %v7086 = vpop.f32.mrf.mxu0
    %v7087 = vpop.f32.mrf.mxu0
    %v7088 = vadd.f32 %v6991, %v7087
    %v7089 = vpop.f32.mrf.mxu0
    %7090 = vmatprep.mubr.bf16.mxu0 %v2627
    %7091 = vmatmul.mubr.bf16.gmra.mxu0 %v2626
    %v7092 = vpop.f32.mrf.mxu0
    %v7093 = vadd.f32 %v6996, %v7092
    %v7094 = vpop.f32.mrf.mxu0
    %v7095 = vpop.f32.mrf.mxu0
    %v7096 = vadd.f32 %v6999, %v7095
    %v7097 = vpop.f32.mrf.mxu0
    %7098 = vmatprep.mubr.bf16.mxu0 %v2675
    %7099 = vmatmul.mubr.bf16.gmra.mxu0 %v2674
    %v7100 = vpop.f32.mrf.mxu0
    %v7101 = vadd.f32 %v7004, %v7100
    %v7102 = vpop.f32.mrf.mxu0
    %v7103 = vpop.f32.mrf.mxu0
    %v7104 = vadd.f32 %v7007, %v7103
    %v7105 = vpop.f32.mrf.mxu0
    %7106 = vmatprep.mubr.bf16.mxu0 %v2723
    %7107 = vmatmul.mubr.bf16.gmra.mxu0 %v2722
    %v7108 = vpop.f32.mrf.mxu0
    %v7109 = vadd.f32 %v7012, %v7108
    %v7110 = vpop.f32.mrf.mxu0
    %v7111 = vpop.f32.mrf.mxu0
    %v7112 = vadd.f32 %v7015, %v7111
    %v7113 = vpop.f32.mrf.mxu0
    %7114 = vmatprep.mubr.bf16.mxu0 %v2771
    %7115 = vmatmul.mubr.bf16.gmra.mxu0 %v2770
    %v7116 = vpop.f32.mrf.mxu0
    %v7117 = vadd.f32 %v7020, %v7116
    %v7118 = vpop.f32.mrf.mxu0
    %v7119 = vpop.f32.mrf.mxu0
    %v7120 = vadd.f32 %v7023, %v7119
    %v7121 = vpop.f32.mrf.mxu0
    %7122 = vdwg.mxu0
    %7123 = vmatprep.subr.bf16.mxu0 0
    %7124 = vmatpush1.bf16.msra.mxu0 %v4985
    %7125 = vmatprep.subr.bf16.mxu0 0
    %7126 = vmatpush1.bf16.msra.mxu0 %v4984
    %7127 = vmatprep.subr.bf16.mxu0 0
    %7128 = vmatpush1.bf16.msra.mxu0 %v4983
    %7129 = vmatprep.subr.bf16.mxu0 0
    %7130 = vmatpush1.bf16.msra.mxu0 %v4982
    %7131 = vmatprep.subr.bf16.mxu0 0
    %7132 = vmatpush1.bf16.msra.mxu0 %v4981
    %7133 = vmatprep.subr.bf16.mxu0 0
    %7134 = vmatpush1.bf16.msra.mxu0 %v4980
    %7135 = vmatprep.subr.bf16.mxu0 0
    %7136 = vmatpush1.bf16.msra.mxu0 %v4979
    %7137 = vmatprep.subr.bf16.mxu0 0
    %7138 = vmatpush1.bf16.msra.mxu0 %v4978
    %7139 = vmatprep.subr.bf16.mxu0 0
    %7140 = vmatpush2.bf16.msra.mxu0 %v4993
    %7141 = vmatprep.subr.bf16.mxu0 0
    %7142 = vmatpush2.bf16.msra.mxu0 %v4992
    %7143 = vmatprep.subr.bf16.mxu0 0
    %7144 = vmatpush2.bf16.msra.mxu0 %v4991
    %7145 = vmatprep.subr.bf16.mxu0 0
    %7146 = vmatpush2.bf16.msra.mxu0 %v4990
    %7147 = vmatprep.subr.bf16.mxu0 0
    %7148 = vmatpush2.bf16.msra.mxu0 %v4989
    %7149 = vmatprep.subr.bf16.mxu0 0
    %7150 = vmatpush2.bf16.msra.mxu0 %v4988
    %7151 = vmatprep.subr.bf16.mxu0 0
    %7152 = vmatpush2.bf16.msra.mxu0 %v4987
    %7153 = vmatprep.subr.bf16.mxu0 0
    %7154 = vmatpush2.bf16.msra.mxu0 %v4986
    %7155 = vmatprep.mubr.bf16.mxu0 %v2437
    %7156 = vmatmul.mubr.bf16.gmra.mxu0 %v2436
    %v7157 = vpop.f32.mrf.mxu0
    %v7158 = vadd.f32 %v7061, %v7157
    %v7159 = vpop.f32.mrf.mxu0
    %v7160 = vpop.f32.mrf.mxu0
    %v7161 = vadd.f32 %v7064, %v7160
    %v7162 = vpop.f32.mrf.mxu0
    %7163 = vmatprep.mubr.bf16.mxu0 %v2485
    %7164 = vmatmul.mubr.bf16.gmra.mxu0 %v2484
    %v7165 = vpop.f32.mrf.mxu0
    %v7166 = vadd.f32 %v7069, %v7165
    %v7167 = vpop.f32.mrf.mxu0
    %v7168 = vpop.f32.mrf.mxu0
    %v7169 = vadd.f32 %v7072, %v7168
    %v7170 = vpop.f32.mrf.mxu0
    %7171 = vmatprep.mubr.bf16.mxu0 %v2533
    %7172 = vmatmul.mubr.bf16.gmra.mxu0 %v2532
    %v7173 = vpop.f32.mrf.mxu0
    %v7174 = vadd.f32 %v7077, %v7173
    %v7175 = vpop.f32.mrf.mxu0
    %v7176 = vpop.f32.mrf.mxu0
    %v7177 = vadd.f32 %v7080, %v7176
    %v7178 = vpop.f32.mrf.mxu0
    %7179 = vmatprep.mubr.bf16.mxu0 %v2581
    %7180 = vmatmul.mubr.bf16.gmra.mxu0 %v2580
    %v7181 = vpop.f32.mrf.mxu0
    %v7182 = vadd.f32 %v7085, %v7181
    %v7183 = vpop.f32.mrf.mxu0
    %v7184 = vpop.f32.mrf.mxu0
    %v7185 = vadd.f32 %v7088, %v7184
    %v7186 = vpop.f32.mrf.mxu0
    %7187 = vmatprep.mubr.bf16.mxu0 %v2629
    %7188 = vmatmul.mubr.bf16.gmra.mxu0 %v2628
    %v7189 = vpop.f32.mrf.mxu0
    %v7190 = vadd.f32 %v7093, %v7189
    %v7191 = vpop.f32.mrf.mxu0
    %v7192 = vpop.f32.mrf.mxu0
    %v7193 = vadd.f32 %v7096, %v7192
    %v7194 = vpop.f32.mrf.mxu0
    %7195 = vmatprep.mubr.bf16.mxu0 %v2677
    %7196 = vmatmul.mubr.bf16.gmra.mxu0 %v2676
    %v7197 = vpop.f32.mrf.mxu0
    %v7198 = vadd.f32 %v7101, %v7197
    %v7199 = vpop.f32.mrf.mxu0
    %v7200 = vpop.f32.mrf.mxu0
    %v7201 = vadd.f32 %v7104, %v7200
    %v7202 = vpop.f32.mrf.mxu0
    %7203 = vmatprep.mubr.bf16.mxu0 %v2725
    %7204 = vmatmul.mubr.bf16.gmra.mxu0 %v2724
    %v7205 = vpop.f32.mrf.mxu0
    %v7206 = vadd.f32 %v7109, %v7205
    %v7207 = vpop.f32.mrf.mxu0
    %v7208 = vpop.f32.mrf.mxu0
    %v7209 = vadd.f32 %v7112, %v7208
    %v7210 = vpop.f32.mrf.mxu0
    %7211 = vmatprep.mubr.bf16.mxu0 %v2773
    %7212 = vmatmul.mubr.bf16.gmra.mxu0 %v2772
    %v7213 = vpop.f32.mrf.mxu0
    %v7214 = vadd.f32 %v7117, %v7213
    %v7215 = vpop.f32.mrf.mxu0
    %v7216 = vpop.f32.mrf.mxu0
    %v7217 = vadd.f32 %v7120, %v7216
    %v7218 = vpop.f32.mrf.mxu0
    %7219 = vdwg.mxu0
    %7220 = vmatprep.subr.bf16.mxu0 0
    %7221 = vmatpush1.bf16.msra.mxu0 %v5001
    %7222 = vmatprep.subr.bf16.mxu0 0
    %7223 = vmatpush1.bf16.msra.mxu0 %v5000
    %7224 = vmatprep.subr.bf16.mxu0 0
    %7225 = vmatpush1.bf16.msra.mxu0 %v4999
    %7226 = vmatprep.subr.bf16.mxu0 0
    %7227 = vmatpush1.bf16.msra.mxu0 %v4998
    %7228 = vmatprep.subr.bf16.mxu0 0
    %7229 = vmatpush1.bf16.msra.mxu0 %v4997
    %7230 = vmatprep.subr.bf16.mxu0 0
    %7231 = vmatpush1.bf16.msra.mxu0 %v4996
    %7232 = vmatprep.subr.bf16.mxu0 0
    %7233 = vmatpush1.bf16.msra.mxu0 %v4995
    %7234 = vmatprep.subr.bf16.mxu0 0
    %7235 = vmatpush1.bf16.msra.mxu0 %v4994
    %7236 = vmatprep.subr.bf16.mxu0 0
    %7237 = vmatpush2.bf16.msra.mxu0 %v5009
    %7238 = vmatprep.subr.bf16.mxu0 0
    %7239 = vmatpush2.bf16.msra.mxu0 %v5008
    %7240 = vmatprep.subr.bf16.mxu0 0
    %7241 = vmatpush2.bf16.msra.mxu0 %v5007
    %7242 = vmatprep.subr.bf16.mxu0 0
    %7243 = vmatpush2.bf16.msra.mxu0 %v5006
    %7244 = vmatprep.subr.bf16.mxu0 0
    %7245 = vmatpush2.bf16.msra.mxu0 %v5005
    %7246 = vmatprep.subr.bf16.mxu0 0
    %7247 = vmatpush2.bf16.msra.mxu0 %v5004
    %7248 = vmatprep.subr.bf16.mxu0 0
    %7249 = vmatpush2.bf16.msra.mxu0 %v5003
    %7250 = vmatprep.subr.bf16.mxu0 0
    %7251 = vmatpush2.bf16.msra.mxu0 %v5002
    %7252 = vmatprep.mubr.bf16.mxu0 %v2439
    %7253 = vmatmul.mubr.bf16.gmra.mxu0 %v2438
    %v7254 = vpop.f32.mrf.mxu0
    %v7255 = vadd.f32 %v7158, %v7254
    %v7256 = vpop.f32.mrf.mxu0
    %v7257 = vpop.f32.mrf.mxu0
    %v7258 = vadd.f32 %v7161, %v7257
    %v7259 = vpop.f32.mrf.mxu0
    %7260 = vmatprep.mubr.bf16.mxu0 %v2487
    %7261 = vmatmul.mubr.bf16.gmra.mxu0 %v2486
    %v7262 = vpop.f32.mrf.mxu0
    %v7263 = vadd.f32 %v7166, %v7262
    %v7264 = vpop.f32.mrf.mxu0
    %v7265 = vpop.f32.mrf.mxu0
    %v7266 = vadd.f32 %v7169, %v7265
    %v7267 = vpop.f32.mrf.mxu0
    %7268 = vmatprep.mubr.bf16.mxu0 %v2535
    %7269 = vmatmul.mubr.bf16.gmra.mxu0 %v2534
    %v7270 = vpop.f32.mrf.mxu0
    %v7271 = vadd.f32 %v7174, %v7270
    %v7272 = vpop.f32.mrf.mxu0
    %v7273 = vpop.f32.mrf.mxu0
    %v7274 = vadd.f32 %v7177, %v7273
    %v7275 = vpop.f32.mrf.mxu0
    %7276 = vmatprep.mubr.bf16.mxu0 %v2583
    %7277 = vmatmul.mubr.bf16.gmra.mxu0 %v2582
    %v7278 = vpop.f32.mrf.mxu0
    %v7279 = vadd.f32 %v7182, %v7278
    %v7280 = vpop.f32.mrf.mxu0
    %v7281 = vpop.f32.mrf.mxu0
    %v7282 = vadd.f32 %v7185, %v7281
    %v7283 = vpop.f32.mrf.mxu0
    %7284 = vmatprep.mubr.bf16.mxu0 %v2631
    %7285 = vmatmul.mubr.bf16.gmra.mxu0 %v2630
    %v7286 = vpop.f32.mrf.mxu0
    %v7287 = vadd.f32 %v7190, %v7286
    %v7288 = vpop.f32.mrf.mxu0
    %v7289 = vpop.f32.mrf.mxu0
    %v7290 = vadd.f32 %v7193, %v7289
    %v7291 = vpop.f32.mrf.mxu0
    %7292 = vmatprep.mubr.bf16.mxu0 %v2679
    %7293 = vmatmul.mubr.bf16.gmra.mxu0 %v2678
    %v7294 = vpop.f32.mrf.mxu0
    %v7295 = vadd.f32 %v7198, %v7294
    %v7296 = vpop.f32.mrf.mxu0
    %v7297 = vpop.f32.mrf.mxu0
    %v7298 = vadd.f32 %v7201, %v7297
    %v7299 = vpop.f32.mrf.mxu0
    %7300 = vmatprep.mubr.bf16.mxu0 %v2727
    %7301 = vmatmul.mubr.bf16.gmra.mxu0 %v2726
    %v7302 = vpop.f32.mrf.mxu0
    %v7303 = vadd.f32 %v7206, %v7302
    %v7304 = vpop.f32.mrf.mxu0
    %v7305 = vpop.f32.mrf.mxu0
    %v7306 = vadd.f32 %v7209, %v7305
    %v7307 = vpop.f32.mrf.mxu0
    %7308 = vmatprep.mubr.bf16.mxu0 %v2775
    %7309 = vmatmul.mubr.bf16.gmra.mxu0 %v2774
    %v7310 = vpop.f32.mrf.mxu0
    %v7311 = vadd.f32 %v7214, %v7310
    %v7312 = vpop.f32.mrf.mxu0
    %v7313 = vpop.f32.mrf.mxu0
    %v7314 = vadd.f32 %v7217, %v7313
    %v7315 = vpop.f32.mrf.mxu0
    %7316 = vdwg.mxu0
    %7317 = vmatprep.subr.bf16.mxu0 0
    %7318 = vmatpush1.bf16.msra.mxu0 %v5017
    %7319 = vmatprep.subr.bf16.mxu0 0
    %7320 = vmatpush1.bf16.msra.mxu0 %v5016
    %7321 = vmatprep.subr.bf16.mxu0 0
    %7322 = vmatpush1.bf16.msra.mxu0 %v5015
    %7323 = vmatprep.subr.bf16.mxu0 0
    %7324 = vmatpush1.bf16.msra.mxu0 %v5014
    %7325 = vmatprep.subr.bf16.mxu0 0
    %7326 = vmatpush1.bf16.msra.mxu0 %v5013
    %7327 = vmatprep.subr.bf16.mxu0 0
    %7328 = vmatpush1.bf16.msra.mxu0 %v5012
    %7329 = vmatprep.subr.bf16.mxu0 0
    %7330 = vmatpush1.bf16.msra.mxu0 %v5011
    %7331 = vmatprep.subr.bf16.mxu0 0
    %7332 = vmatpush1.bf16.msra.mxu0 %v5010
    %7333 = vmatprep.subr.bf16.mxu0 0
    %7334 = vmatpush2.bf16.msra.mxu0 %v5025
    %7335 = vmatprep.subr.bf16.mxu0 0
    %7336 = vmatpush2.bf16.msra.mxu0 %v5024
    %7337 = vmatprep.subr.bf16.mxu0 0
    %7338 = vmatpush2.bf16.msra.mxu0 %v5023
    %7339 = vmatprep.subr.bf16.mxu0 0
    %7340 = vmatpush2.bf16.msra.mxu0 %v5022
    %7341 = vmatprep.subr.bf16.mxu0 0
    %7342 = vmatpush2.bf16.msra.mxu0 %v5021
    %7343 = vmatprep.subr.bf16.mxu0 0
    %7344 = vmatpush2.bf16.msra.mxu0 %v5020
    %7345 = vmatprep.subr.bf16.mxu0 0
    %7346 = vmatpush2.bf16.msra.mxu0 %v5019
    %7347 = vmatprep.subr.bf16.mxu0 0
    %7348 = vmatpush2.bf16.msra.mxu0 %v5018
    %7349 = vmatprep.mubr.bf16.mxu0 %v2441
    %7350 = vmatmul.mubr.bf16.gmra.mxu0 %v2440
    %v7351 = vpop.f32.mrf.mxu0
    %v7352 = vadd.f32 %v7255, %v7351
    %v7353 = vpop.f32.mrf.mxu0
    %v7354 = vpop.f32.mrf.mxu0
    %v7355 = vadd.f32 %v7258, %v7354
    %v7356 = vpop.f32.mrf.mxu0
    %7357 = vmatprep.mubr.bf16.mxu0 %v2489
    %7358 = vmatmul.mubr.bf16.gmra.mxu0 %v2488
    %v7359 = vpop.f32.mrf.mxu0
    %v7360 = vadd.f32 %v7263, %v7359
    %v7361 = vpop.f32.mrf.mxu0
    %v7362 = vpop.f32.mrf.mxu0
    %v7363 = vadd.f32 %v7266, %v7362
    %v7364 = vpop.f32.mrf.mxu0
    %7365 = vmatprep.mubr.bf16.mxu0 %v2537
    %7366 = vmatmul.mubr.bf16.gmra.mxu0 %v2536
    %v7367 = vpop.f32.mrf.mxu0
    %v7368 = vadd.f32 %v7271, %v7367
    %v7369 = vpop.f32.mrf.mxu0
    %v7370 = vpop.f32.mrf.mxu0
    %v7371 = vadd.f32 %v7274, %v7370
    %v7372 = vpop.f32.mrf.mxu0
    %7373 = vmatprep.mubr.bf16.mxu0 %v2585
    %7374 = vmatmul.mubr.bf16.gmra.mxu0 %v2584
    %v7375 = vpop.f32.mrf.mxu0
    %v7376 = vadd.f32 %v7279, %v7375
    %v7377 = vpop.f32.mrf.mxu0
    %v7378 = vpop.f32.mrf.mxu0
    %v7379 = vadd.f32 %v7282, %v7378
    %v7380 = vpop.f32.mrf.mxu0
    %7381 = vmatprep.mubr.bf16.mxu0 %v2633
    %7382 = vmatmul.mubr.bf16.gmra.mxu0 %v2632
    %v7383 = vpop.f32.mrf.mxu0
    %v7384 = vadd.f32 %v7287, %v7383
    %v7385 = vpop.f32.mrf.mxu0
    %v7386 = vpop.f32.mrf.mxu0
    %v7387 = vadd.f32 %v7290, %v7386
    %v7388 = vpop.f32.mrf.mxu0
    %7389 = vmatprep.mubr.bf16.mxu0 %v2681
    %7390 = vmatmul.mubr.bf16.gmra.mxu0 %v2680
    %v7391 = vpop.f32.mrf.mxu0
    %v7392 = vadd.f32 %v7295, %v7391
    %v7393 = vpop.f32.mrf.mxu0
    %v7394 = vpop.f32.mrf.mxu0
    %v7395 = vadd.f32 %v7298, %v7394
    %v7396 = vpop.f32.mrf.mxu0
    %7397 = vmatprep.mubr.bf16.mxu0 %v2729
    %7398 = vmatmul.mubr.bf16.gmra.mxu0 %v2728
    %v7399 = vpop.f32.mrf.mxu0
    %v7400 = vadd.f32 %v7303, %v7399
    %v7401 = vpop.f32.mrf.mxu0
    %v7402 = vpop.f32.mrf.mxu0
    %v7403 = vadd.f32 %v7306, %v7402
    %v7404 = vpop.f32.mrf.mxu0
    %7405 = vmatprep.mubr.bf16.mxu0 %v2777
    %7406 = vmatmul.mubr.bf16.gmra.mxu0 %v2776
    %v7407 = vpop.f32.mrf.mxu0
    %v7408 = vadd.f32 %v7311, %v7407
    %v7409 = vpop.f32.mrf.mxu0
    %v7410 = vpop.f32.mrf.mxu0
    %v7411 = vadd.f32 %v7314, %v7410
    %v7412 = vpop.f32.mrf.mxu0
    %7413 = vdwg.mxu0
    %7414 = vmatprep.subr.bf16.mxu0 0
    %7415 = vmatpush1.bf16.msra.mxu0 %v5033
    %7416 = vmatprep.subr.bf16.mxu0 0
    %7417 = vmatpush1.bf16.msra.mxu0 %v5032
    %7418 = vmatprep.subr.bf16.mxu0 0
    %7419 = vmatpush1.bf16.msra.mxu0 %v5031
    %7420 = vmatprep.subr.bf16.mxu0 0
    %7421 = vmatpush1.bf16.msra.mxu0 %v5030
    %7422 = vmatprep.subr.bf16.mxu0 0
    %7423 = vmatpush1.bf16.msra.mxu0 %v5029
    %7424 = vmatprep.subr.bf16.mxu0 0
    %7425 = vmatpush1.bf16.msra.mxu0 %v5028
    %7426 = vmatprep.subr.bf16.mxu0 0
    %7427 = vmatpush1.bf16.msra.mxu0 %v5027
    %7428 = vmatprep.subr.bf16.mxu0 0
    %7429 = vmatpush1.bf16.msra.mxu0 %v5026
    %7430 = vmatprep.subr.bf16.mxu0 0
    %7431 = vmatpush2.bf16.msra.mxu0 %v5041
    %7432 = vmatprep.subr.bf16.mxu0 0
    %7433 = vmatpush2.bf16.msra.mxu0 %v5040
    %7434 = vmatprep.subr.bf16.mxu0 0
    %7435 = vmatpush2.bf16.msra.mxu0 %v5039
    %7436 = vmatprep.subr.bf16.mxu0 0
    %7437 = vmatpush2.bf16.msra.mxu0 %v5038
    %7438 = vmatprep.subr.bf16.mxu0 0
    %7439 = vmatpush2.bf16.msra.mxu0 %v5037
    %7440 = vmatprep.subr.bf16.mxu0 0
    %7441 = vmatpush2.bf16.msra.mxu0 %v5036
    %7442 = vmatprep.subr.bf16.mxu0 0
    %7443 = vmatpush2.bf16.msra.mxu0 %v5035
    %7444 = vmatprep.subr.bf16.mxu0 0
    %7445 = vmatpush2.bf16.msra.mxu0 %v5034
    %7446 = vmatprep.mubr.bf16.mxu0 %v2443
    %7447 = vmatmul.mubr.bf16.gmra.mxu0 %v2442
    %v7448 = vpop.f32.mrf.mxu0
    %v7449 = vadd.f32 %v7352, %v7448
    %v7450 = vpop.f32.mrf.mxu0
    %v7451 = vpop.f32.mrf.mxu0
    %v7452 = vadd.f32 %v7355, %v7451
    %v7453 = vpop.f32.mrf.mxu0
    %7454 = vmatprep.mubr.bf16.mxu0 %v2491
    %7455 = vmatmul.mubr.bf16.gmra.mxu0 %v2490
    %v7456 = vpop.f32.mrf.mxu0
    %v7457 = vadd.f32 %v7360, %v7456
    %v7458 = vpop.f32.mrf.mxu0
    %v7459 = vpop.f32.mrf.mxu0
    %v7460 = vadd.f32 %v7363, %v7459
    %v7461 = vpop.f32.mrf.mxu0
    %7462 = vmatprep.mubr.bf16.mxu0 %v2539
    %7463 = vmatmul.mubr.bf16.gmra.mxu0 %v2538
    %v7464 = vpop.f32.mrf.mxu0
    %v7465 = vadd.f32 %v7368, %v7464
    %v7466 = vpop.f32.mrf.mxu0
    %v7467 = vpop.f32.mrf.mxu0
    %v7468 = vadd.f32 %v7371, %v7467
    %v7469 = vpop.f32.mrf.mxu0
    %7470 = vmatprep.mubr.bf16.mxu0 %v2587
    %7471 = vmatmul.mubr.bf16.gmra.mxu0 %v2586
    %v7472 = vpop.f32.mrf.mxu0
    %v7473 = vadd.f32 %v7376, %v7472
    %v7474 = vpop.f32.mrf.mxu0
    %v7475 = vpop.f32.mrf.mxu0
    %v7476 = vadd.f32 %v7379, %v7475
    %v7477 = vpop.f32.mrf.mxu0
    %7478 = vmatprep.mubr.bf16.mxu0 %v2635
    %7479 = vmatmul.mubr.bf16.gmra.mxu0 %v2634
    %v7480 = vpop.f32.mrf.mxu0
    %v7481 = vadd.f32 %v7384, %v7480
    %v7482 = vpop.f32.mrf.mxu0
    %v7483 = vpop.f32.mrf.mxu0
    %v7484 = vadd.f32 %v7387, %v7483
    %v7485 = vpop.f32.mrf.mxu0
    %7486 = vmatprep.mubr.bf16.mxu0 %v2683
    %7487 = vmatmul.mubr.bf16.gmra.mxu0 %v2682
    %v7488 = vpop.f32.mrf.mxu0
    %v7489 = vadd.f32 %v7392, %v7488
    %v7490 = vpop.f32.mrf.mxu0
    %v7491 = vpop.f32.mrf.mxu0
    %v7492 = vadd.f32 %v7395, %v7491
    %v7493 = vpop.f32.mrf.mxu0
    %7494 = vmatprep.mubr.bf16.mxu0 %v2731
    %7495 = vmatmul.mubr.bf16.gmra.mxu0 %v2730
    %v7496 = vpop.f32.mrf.mxu0
    %v7497 = vadd.f32 %v7400, %v7496
    %v7498 = vpop.f32.mrf.mxu0
    %v7499 = vpop.f32.mrf.mxu0
    %v7500 = vadd.f32 %v7403, %v7499
    %v7501 = vpop.f32.mrf.mxu0
    %7502 = vmatprep.mubr.bf16.mxu0 %v2779
    %7503 = vmatmul.mubr.bf16.gmra.mxu0 %v2778
    %v7504 = vpop.f32.mrf.mxu0
    %v7505 = vadd.f32 %v7408, %v7504
    %v7506 = vpop.f32.mrf.mxu0
    %v7507 = vpop.f32.mrf.mxu0
    %v7508 = vadd.f32 %v7411, %v7507
    %v7509 = vpop.f32.mrf.mxu0
    %7510 = vdwg.mxu0
    %7511 = vmatprep.subr.bf16.mxu0 0
    %7512 = vmatpush1.bf16.msra.mxu0 %v5049
    %7513 = vmatprep.subr.bf16.mxu0 0
    %7514 = vmatpush1.bf16.msra.mxu0 %v5048
    %7515 = vmatprep.subr.bf16.mxu0 0
    %7516 = vmatpush1.bf16.msra.mxu0 %v5047
    %7517 = vmatprep.subr.bf16.mxu0 0
    %7518 = vmatpush1.bf16.msra.mxu0 %v5046
    %7519 = vmatprep.subr.bf16.mxu0 0
    %7520 = vmatpush1.bf16.msra.mxu0 %v5045
    %7521 = vmatprep.subr.bf16.mxu0 0
    %7522 = vmatpush1.bf16.msra.mxu0 %v5044
    %7523 = vmatprep.subr.bf16.mxu0 0
    %7524 = vmatpush1.bf16.msra.mxu0 %v5043
    %7525 = vmatprep.subr.bf16.mxu0 0
    %7526 = vmatpush1.bf16.msra.mxu0 %v5042
    %7527 = vmatprep.subr.bf16.mxu0 0
    %7528 = vmatpush2.bf16.msra.mxu0 %v5057
    %7529 = vmatprep.subr.bf16.mxu0 0
    %7530 = vmatpush2.bf16.msra.mxu0 %v5056
    %7531 = vmatprep.subr.bf16.mxu0 0
    %7532 = vmatpush2.bf16.msra.mxu0 %v5055
    %7533 = vmatprep.subr.bf16.mxu0 0
    %7534 = vmatpush2.bf16.msra.mxu0 %v5054
    %7535 = vmatprep.subr.bf16.mxu0 0
    %7536 = vmatpush2.bf16.msra.mxu0 %v5053
    %7537 = vmatprep.subr.bf16.mxu0 0
    %7538 = vmatpush2.bf16.msra.mxu0 %v5052
    %7539 = vmatprep.subr.bf16.mxu0 0
    %7540 = vmatpush2.bf16.msra.mxu0 %v5051
    %7541 = vmatprep.subr.bf16.mxu0 0
    %7542 = vmatpush2.bf16.msra.mxu0 %v5050
    %7543 = vmatprep.mubr.bf16.mxu0 %v2445
    %7544 = vmatmul.mubr.bf16.gmra.mxu0 %v2444
    %v7545 = vpop.f32.mrf.mxu0
    %v7546 = vadd.f32 %v7449, %v7545
    %v7547 = vpop.f32.mrf.mxu0
    %v7548 = vpop.f32.mrf.mxu0
    %v7549 = vadd.f32 %v7452, %v7548
    %v7550 = vpop.f32.mrf.mxu0
    %7551 = vmatprep.mubr.bf16.mxu0 %v2493
    %7552 = vmatmul.mubr.bf16.gmra.mxu0 %v2492
    %v7553 = vpop.f32.mrf.mxu0
    %v7554 = vadd.f32 %v7457, %v7553
    %v7555 = vpop.f32.mrf.mxu0
    %v7556 = vpop.f32.mrf.mxu0
    %v7557 = vadd.f32 %v7460, %v7556
    %v7558 = vpop.f32.mrf.mxu0
    %7559 = vmatprep.mubr.bf16.mxu0 %v2541
    %7560 = vmatmul.mubr.bf16.gmra.mxu0 %v2540
    %v7561 = vpop.f32.mrf.mxu0
    %v7562 = vadd.f32 %v7465, %v7561
    %v7563 = vpop.f32.mrf.mxu0
    %v7564 = vpop.f32.mrf.mxu0
    %v7565 = vadd.f32 %v7468, %v7564
    %v7566 = vpop.f32.mrf.mxu0
    %7567 = vmatprep.mubr.bf16.mxu0 %v2589
    %7568 = vmatmul.mubr.bf16.gmra.mxu0 %v2588
    %v7569 = vpop.f32.mrf.mxu0
    %v7570 = vadd.f32 %v7473, %v7569
    %v7571 = vpop.f32.mrf.mxu0
    %v7572 = vpop.f32.mrf.mxu0
    %v7573 = vadd.f32 %v7476, %v7572
    %v7574 = vpop.f32.mrf.mxu0
    %7575 = vmatprep.mubr.bf16.mxu0 %v2637
    %7576 = vmatmul.mubr.bf16.gmra.mxu0 %v2636
    %v7577 = vpop.f32.mrf.mxu0
    %v7578 = vadd.f32 %v7481, %v7577
    %v7579 = vpop.f32.mrf.mxu0
    %v7580 = vpop.f32.mrf.mxu0
    %v7581 = vadd.f32 %v7484, %v7580
    %v7582 = vpop.f32.mrf.mxu0
    %7583 = vmatprep.mubr.bf16.mxu0 %v2685
    %7584 = vmatmul.mubr.bf16.gmra.mxu0 %v2684
    %v7585 = vpop.f32.mrf.mxu0
    %v7586 = vadd.f32 %v7489, %v7585
    %v7587 = vpop.f32.mrf.mxu0
    %v7588 = vpop.f32.mrf.mxu0
    %v7589 = vadd.f32 %v7492, %v7588
    %v7590 = vpop.f32.mrf.mxu0
    %7591 = vmatprep.mubr.bf16.mxu0 %v2733
    %7592 = vmatmul.mubr.bf16.gmra.mxu0 %v2732
    %v7593 = vpop.f32.mrf.mxu0
    %v7594 = vadd.f32 %v7497, %v7593
    %v7595 = vpop.f32.mrf.mxu0
    %v7596 = vpop.f32.mrf.mxu0
    %v7597 = vadd.f32 %v7500, %v7596
    %v7598 = vpop.f32.mrf.mxu0
    %7599 = vmatprep.mubr.bf16.mxu0 %v2781
    %7600 = vmatmul.mubr.bf16.gmra.mxu0 %v2780
    %v7601 = vpop.f32.mrf.mxu0
    %v7602 = vadd.f32 %v7505, %v7601
    %v7603 = vpop.f32.mrf.mxu0
    %v7604 = vpop.f32.mrf.mxu0
    %v7605 = vadd.f32 %v7508, %v7604
    %v7606 = vpop.f32.mrf.mxu0
    %7607 = vdwg.mxu0
    %7608 = vmatprep.subr.bf16.mxu0 0
    %7609 = vmatpush1.bf16.msra.mxu0 %v5065
    %7610 = vmatprep.subr.bf16.mxu0 0
    %7611 = vmatpush1.bf16.msra.mxu0 %v5064
    %7612 = vmatprep.subr.bf16.mxu0 0
    %7613 = vmatpush1.bf16.msra.mxu0 %v5063
    %7614 = vmatprep.subr.bf16.mxu0 0
    %7615 = vmatpush1.bf16.msra.mxu0 %v5062
    %7616 = vmatprep.subr.bf16.mxu0 0
    %7617 = vmatpush1.bf16.msra.mxu0 %v5061
    %7618 = vmatprep.subr.bf16.mxu0 0
    %7619 = vmatpush1.bf16.msra.mxu0 %v5060
    %7620 = vmatprep.subr.bf16.mxu0 0
    %7621 = vmatpush1.bf16.msra.mxu0 %v5059
    %7622 = vmatprep.subr.bf16.mxu0 0
    %7623 = vmatpush1.bf16.msra.mxu0 %v5058
    %7624 = vmatprep.subr.bf16.mxu0 0
    %7625 = vmatpush2.bf16.msra.mxu0 %v5073
    %7626 = vmatprep.subr.bf16.mxu0 0
    %7627 = vmatpush2.bf16.msra.mxu0 %v5072
    %7628 = vmatprep.subr.bf16.mxu0 0
    %7629 = vmatpush2.bf16.msra.mxu0 %v5071
    %7630 = vmatprep.subr.bf16.mxu0 0
    %7631 = vmatpush2.bf16.msra.mxu0 %v5070
    %7632 = vmatprep.subr.bf16.mxu0 0
    %7633 = vmatpush2.bf16.msra.mxu0 %v5069
    %7634 = vmatprep.subr.bf16.mxu0 0
    %7635 = vmatpush2.bf16.msra.mxu0 %v5068
    %7636 = vmatprep.subr.bf16.mxu0 0
    %7637 = vmatpush2.bf16.msra.mxu0 %v5067
    %7638 = vmatprep.subr.bf16.mxu0 0
    %7639 = vmatpush2.bf16.msra.mxu0 %v5066
    %7640 = vmatprep.mubr.bf16.mxu0 %v2447
    %7641 = vmatmul.mubr.bf16.gmra.mxu0 %v2446
    %v7642 = vpop.f32.mrf.mxu0
    %v7643 = vadd.f32 %v7546, %v7642
    %v7644 = vpop.f32.mrf.mxu0
    %v7645 = vpop.f32.mrf.mxu0
    %v7646 = vadd.f32 %v7549, %v7645
    %v7647 = vpop.f32.mrf.mxu0
    %7648 = vmatprep.mubr.bf16.mxu0 %v2495
    %7649 = vmatmul.mubr.bf16.gmra.mxu0 %v2494
    %v7650 = vpop.f32.mrf.mxu0
    %v7651 = vadd.f32 %v7554, %v7650
    %v7652 = vpop.f32.mrf.mxu0
    %v7653 = vpop.f32.mrf.mxu0
    %v7654 = vadd.f32 %v7557, %v7653
    %v7655 = vpop.f32.mrf.mxu0
    %7656 = vmatprep.mubr.bf16.mxu0 %v2543
    %7657 = vmatmul.mubr.bf16.gmra.mxu0 %v2542
    %v7658 = vpop.f32.mrf.mxu0
    %v7659 = vadd.f32 %v7562, %v7658
    %v7660 = vpop.f32.mrf.mxu0
    %v7661 = vpop.f32.mrf.mxu0
    %v7662 = vadd.f32 %v7565, %v7661
    %v7663 = vpop.f32.mrf.mxu0
    %7664 = vmatprep.mubr.bf16.mxu0 %v2591
    %7665 = vmatmul.mubr.bf16.gmra.mxu0 %v2590
    %v7666 = vpop.f32.mrf.mxu0
    %v7667 = vadd.f32 %v7570, %v7666
    %v7668 = vpop.f32.mrf.mxu0
    %v7669 = vpop.f32.mrf.mxu0
    %v7670 = vadd.f32 %v7573, %v7669
    %v7671 = vpop.f32.mrf.mxu0
    %7672 = vmatprep.mubr.bf16.mxu0 %v2639
    %7673 = vmatmul.mubr.bf16.gmra.mxu0 %v2638
    %v7674 = vpop.f32.mrf.mxu0
    %v7675 = vadd.f32 %v7578, %v7674
    %v7676 = vpop.f32.mrf.mxu0
    %v7677 = vpop.f32.mrf.mxu0
    %v7678 = vadd.f32 %v7581, %v7677
    %v7679 = vpop.f32.mrf.mxu0
    %7680 = vmatprep.mubr.bf16.mxu0 %v2687
    %7681 = vmatmul.mubr.bf16.gmra.mxu0 %v2686
    %v7682 = vpop.f32.mrf.mxu0
    %v7683 = vadd.f32 %v7586, %v7682
    %v7684 = vpop.f32.mrf.mxu0
    %v7685 = vpop.f32.mrf.mxu0
    %v7686 = vadd.f32 %v7589, %v7685
    %v7687 = vpop.f32.mrf.mxu0
    %7688 = vmatprep.mubr.bf16.mxu0 %v2735
    %7689 = vmatmul.mubr.bf16.gmra.mxu0 %v2734
    %v7690 = vpop.f32.mrf.mxu0
    %v7691 = vadd.f32 %v7594, %v7690
    %v7692 = vpop.f32.mrf.mxu0
    %v7693 = vpop.f32.mrf.mxu0
    %v7694 = vadd.f32 %v7597, %v7693
    %v7695 = vpop.f32.mrf.mxu0
    %7696 = vmatprep.mubr.bf16.mxu0 %v2783
    %7697 = vmatmul.mubr.bf16.gmra.mxu0 %v2782
    %v7698 = vpop.f32.mrf.mxu0
    %v7699 = vadd.f32 %v7602, %v7698
    %v7700 = vpop.f32.mrf.mxu0
    %v7701 = vpop.f32.mrf.mxu0
    %v7702 = vadd.f32 %v7605, %v7701
    %v7703 = vpop.f32.mrf.mxu0
    %7704 = vdwg.mxu0
    %7705 = vmatprep.subr.bf16.mxu0 0
    %7706 = vmatpush1.bf16.msra.mxu0 %v5081
    %7707 = vmatprep.subr.bf16.mxu0 0
    %7708 = vmatpush1.bf16.msra.mxu0 %v5080
    %7709 = vmatprep.subr.bf16.mxu0 0
    %7710 = vmatpush1.bf16.msra.mxu0 %v5079
    %7711 = vmatprep.subr.bf16.mxu0 0
    %7712 = vmatpush1.bf16.msra.mxu0 %v5078
    %7713 = vmatprep.subr.bf16.mxu0 0
    %7714 = vmatpush1.bf16.msra.mxu0 %v5077
    %7715 = vmatprep.subr.bf16.mxu0 0
    %7716 = vmatpush1.bf16.msra.mxu0 %v5076
    %7717 = vmatprep.subr.bf16.mxu0 0
    %7718 = vmatpush1.bf16.msra.mxu0 %v5075
    %7719 = vmatprep.subr.bf16.mxu0 0
    %7720 = vmatpush1.bf16.msra.mxu0 %v5074
    %7721 = vmatprep.subr.bf16.mxu0 0
    %7722 = vmatpush2.bf16.msra.mxu0 %v5089
    %7723 = vmatprep.subr.bf16.mxu0 0
    %7724 = vmatpush2.bf16.msra.mxu0 %v5088
    %7725 = vmatprep.subr.bf16.mxu0 0
    %7726 = vmatpush2.bf16.msra.mxu0 %v5087
    %7727 = vmatprep.subr.bf16.mxu0 0
    %7728 = vmatpush2.bf16.msra.mxu0 %v5086
    %7729 = vmatprep.subr.bf16.mxu0 0
    %7730 = vmatpush2.bf16.msra.mxu0 %v5085
    %7731 = vmatprep.subr.bf16.mxu0 0
    %7732 = vmatpush2.bf16.msra.mxu0 %v5084
    %7733 = vmatprep.subr.bf16.mxu0 0
    %7734 = vmatpush2.bf16.msra.mxu0 %v5083
    %7735 = vmatprep.subr.bf16.mxu0 0
    %7736 = vmatpush2.bf16.msra.mxu0 %v5082
    %7737 = vmatprep.mubr.bf16.mxu0 %v2449
    %7738 = vmatmul.mubr.bf16.gmra.mxu0 %v2448
    %v7739 = vpop.f32.mrf.mxu0
    %v7740 = vadd.f32 %v7643, %v7739
    %v7741 = vpop.f32.mrf.mxu0
    %v7742 = vpop.f32.mrf.mxu0
    %v7743 = vadd.f32 %v7646, %v7742
    %v7744 = vpop.f32.mrf.mxu0
    %7745 = vmatprep.mubr.bf16.mxu0 %v2497
    %7746 = vmatmul.mubr.bf16.gmra.mxu0 %v2496
    %v7747 = vpop.f32.mrf.mxu0
    %v7748 = vadd.f32 %v7651, %v7747
    %v7749 = vpop.f32.mrf.mxu0
    %v7750 = vpop.f32.mrf.mxu0
    %v7751 = vadd.f32 %v7654, %v7750
    %v7752 = vpop.f32.mrf.mxu0
    %7753 = vmatprep.mubr.bf16.mxu0 %v2545
    %7754 = vmatmul.mubr.bf16.gmra.mxu0 %v2544
    %v7755 = vpop.f32.mrf.mxu0
    %v7756 = vadd.f32 %v7659, %v7755
    %v7757 = vpop.f32.mrf.mxu0
    %v7758 = vpop.f32.mrf.mxu0
    %v7759 = vadd.f32 %v7662, %v7758
    %v7760 = vpop.f32.mrf.mxu0
    %7761 = vmatprep.mubr.bf16.mxu0 %v2593
    %7762 = vmatmul.mubr.bf16.gmra.mxu0 %v2592
    %v7763 = vpop.f32.mrf.mxu0
    %v7764 = vadd.f32 %v7667, %v7763
    %v7765 = vpop.f32.mrf.mxu0
    %v7766 = vpop.f32.mrf.mxu0
    %v7767 = vadd.f32 %v7670, %v7766
    %v7768 = vpop.f32.mrf.mxu0
    %7769 = vmatprep.mubr.bf16.mxu0 %v2641
    %7770 = vmatmul.mubr.bf16.gmra.mxu0 %v2640
    %v7771 = vpop.f32.mrf.mxu0
    %v7772 = vadd.f32 %v7675, %v7771
    %v7773 = vpop.f32.mrf.mxu0
    %v7774 = vpop.f32.mrf.mxu0
    %v7775 = vadd.f32 %v7678, %v7774
    %v7776 = vpop.f32.mrf.mxu0
    %7777 = vmatprep.mubr.bf16.mxu0 %v2689
    %7778 = vmatmul.mubr.bf16.gmra.mxu0 %v2688
    %v7779 = vpop.f32.mrf.mxu0
    %v7780 = vadd.f32 %v7683, %v7779
    %v7781 = vpop.f32.mrf.mxu0
    %v7782 = vpop.f32.mrf.mxu0
    %v7783 = vadd.f32 %v7686, %v7782
    %v7784 = vpop.f32.mrf.mxu0
    %7785 = vmatprep.mubr.bf16.mxu0 %v2737
    %7786 = vmatmul.mubr.bf16.gmra.mxu0 %v2736
    %v7787 = vpop.f32.mrf.mxu0
    %v7788 = vadd.f32 %v7691, %v7787
    %v7789 = vpop.f32.mrf.mxu0
    %v7790 = vpop.f32.mrf.mxu0
    %v7791 = vadd.f32 %v7694, %v7790
    %v7792 = vpop.f32.mrf.mxu0
    %7793 = vmatprep.mubr.bf16.mxu0 %v2785
    %7794 = vmatmul.mubr.bf16.gmra.mxu0 %v2784
    %v7795 = vpop.f32.mrf.mxu0
    %v7796 = vadd.f32 %v7699, %v7795
    %v7797 = vpop.f32.mrf.mxu0
    %v7798 = vpop.f32.mrf.mxu0
    %v7799 = vadd.f32 %v7702, %v7798
    %v7800 = vpop.f32.mrf.mxu0
    %7801 = vdwg.mxu0
    %v7802 = vmax.f32 %v7740, 0.0
    %v7803 = vmax.f32 %v7743, 0.0
    %v7804 = vmax.f32 %v7748, 0.0
    %v7805 = vmax.f32 %v7751, 0.0
    %v7806 = vmax.f32 %v7756, 0.0
    %v7807 = vmax.f32 %v7759, 0.0
    %v7808 = vmax.f32 %v7764, 0.0
    %v7809 = vmax.f32 %v7767, 0.0
    %v7810 = vmax.f32 %v7772, 0.0
    %v7811 = vmax.f32 %v7775, 0.0
    %v7812 = vmax.f32 %v7780, 0.0
    %v7813 = vmax.f32 %v7783, 0.0
    %v7814 = vmax.f32 %v7788, 0.0
    %v7815 = vmax.f32 %v7791, 0.0
    %v7816 = vmax.f32 %v7796, 0.0
    %v7817 = vmax.f32 %v7799, 0.0
    %v7818 = vpack.c.bf16 %v7803, %v7802
    %v7819 = vpack.c.bf16 %v7805, %v7804
    %v7820 = vpack.c.bf16 %v7807, %v7806
    %v7821 = vpack.c.bf16 %v7809, %v7808
    %v7822 = vpack.c.bf16 %v7811, %v7810
    %v7823 = vpack.c.bf16 %v7813, %v7812
    %v7824 = vpack.c.bf16 %v7815, %v7814
    %v7825 = vpack.c.bf16 %v7817, %v7816
    %v7826 = vld [vmem:[%s3] sm:$0xf]
    %v7827 = vld [vmem:[%s3 + $0x4] sm:$0xf]
    %v7828 = vld [vmem:[%s3 + $0x8] sm:$0xf]
    %v7829 = vld [vmem:[%s3 + $0xc] sm:$0xf]
    %v7830 = vld [vmem:[%s3 + $0x10] sm:$0xf]
    %v7831 = vld [vmem:[%s3 + $0x14] sm:$0xf]
    %v7832 = vld [vmem:[%s3 + $0x18] sm:$0xf]
    %v7833 = vld [vmem:[%s3 + $0x1c] sm:$0xf]
    %v7834 = vld [vmem:[%s3 + $0x20] sm:$0xf]
    %v7835 = vld [vmem:[%s3 + $0x24] sm:$0xf]
    %v7836 = vld [vmem:[%s3 + $0x28] sm:$0xf]
    %v7837 = vld [vmem:[%s3 + $0x2c] sm:$0xf]
    %v7838 = vld [vmem:[%s3 + $0x30] sm:$0xf]
    %v7839 = vld [vmem:[%s3 + $0x34] sm:$0xf]
    %v7840 = vld [vmem:[%s3 + $0x38] sm:$0xf]
    %v7841 = vld [vmem:[%s3 + $0x3c] sm:$0xf]
    %v7842 = vld [vmem:[#allocation8] sm:$0x1]
    %v7844 = vlaneseq
    %v7845 = vshrl.u32 %v7844, 7
    %v7846 = vsub.s32 0, %v7845
    %v7847 = vrot.slane %v7842, %v7846
    %v7865 = vunpack.c.l.b16 %v7826
    %v7866 = vunpack.c.l.b16 %v7827
    %v7867 = vunpack.c.l.b16 %v7828
    %v7868 = vunpack.c.l.b16 %v7829
    %v7869 = vunpack.c.l.b16 %v7830
    %v7870 = vunpack.c.l.b16 %v7831
    %v7871 = vunpack.c.l.b16 %v7832
    %v7872 = vunpack.c.l.b16 %v7833
    %v7873 = vunpack.c.l.b16 %v7834
    %v7874 = vunpack.c.l.b16 %v7835
    %v7875 = vunpack.c.l.b16 %v7836
    %v7876 = vunpack.c.l.b16 %v7837
    %v7877 = vunpack.c.l.b16 %v7838
    %v7878 = vunpack.c.l.b16 %v7839
    %v7879 = vunpack.c.l.b16 %v7840
    %v7880 = vunpack.c.l.b16 %v7841
    %v7881 = vpack.c.b16 %v7866, %v7865
    %v7882 = vpack.c.b16 %v7868, %v7867
    %v7883 = vpack.c.b16 %v7870, %v7869
    %v7884 = vpack.c.b16 %v7872, %v7871
    %v7885 = vpack.c.b16 %v7874, %v7873
    %v7886 = vpack.c.b16 %v7876, %v7875
    %v7887 = vpack.c.b16 %v7878, %v7877
    %v7888 = vpack.c.b16 %v7880, %v7879
    %7897 = vmatprep.subr.bf16.mxu0 0
    %7898 = vmatpush1.bf16.msra.mxu0 %v7888
    %7899 = vmatprep.subr.bf16.mxu0 0
    %7900 = vmatpush1.bf16.msra.mxu0 %v7887
    %7901 = vmatprep.subr.bf16.mxu0 0
    %7902 = vmatpush1.bf16.msra.mxu0 %v7886
    %7903 = vmatprep.subr.bf16.mxu0 0
    %7904 = vmatpush1.bf16.msra.mxu0 %v7885
    %7905 = vmatprep.subr.bf16.mxu0 0
    %7906 = vmatpush1.bf16.msra.mxu0 %v7884
    %7907 = vmatprep.subr.bf16.mxu0 0
    %7908 = vmatpush1.bf16.msra.mxu0 %v7883
    %7909 = vmatprep.subr.bf16.mxu0 0
    %7910 = vmatpush1.bf16.msra.mxu0 %v7882
    %7911 = vmatprep.subr.bf16.mxu0 0
    %7912 = vmatpush1.bf16.msra.mxu0 %v7881
    %7913 = vmatprep.subr.bf16.mxu0 0
    %7914 = vmatpush2.bf16.msra.mxu0 0
    %7915 = vmatprep.subr.bf16.mxu0 0
    %7916 = vmatpush2.bf16.msra.mxu0 0
    %7917 = vmatprep.subr.bf16.mxu0 0
    %7918 = vmatpush2.bf16.msra.mxu0 0
    %7919 = vmatprep.subr.bf16.mxu0 0
    %7920 = vmatpush2.bf16.msra.mxu0 0
    %7921 = vmatprep.subr.bf16.mxu0 0
    %7922 = vmatpush2.bf16.msra.mxu0 0
    %7923 = vmatprep.subr.bf16.mxu0 0
    %7924 = vmatpush2.bf16.msra.mxu0 0
    %7925 = vmatprep.subr.bf16.mxu0 0
    %7926 = vmatpush2.bf16.msra.mxu0 0
    %7927 = vmatprep.subr.bf16.mxu0 0
    %7928 = vmatpush2.bf16.msra.mxu0 0
    %7929 = vmatprep.mubr.bf16.mxu0 0
    %7930 = vmatmul.mubr.bf16.gmra.mxu0 %v7818
    %v7931 = vpop.f32.mrf.mxu0
    %v7932 = vadd.f32 %v7847, %v7931
    %v7933 = vpop.f32.mrf.mxu0
    %v7934 = vpop.f32.mrf.mxu0
    %v7935 = vadd.f32 %v7847, %v7934
    %v7936 = vpop.f32.mrf.mxu0
    %7937 = vmatprep.mubr.bf16.mxu0 0
    %7938 = vmatmul.mubr.bf16.gmra.mxu0 %v7819
    %v7939 = vpop.f32.mrf.mxu0
    %v7940 = vadd.f32 %v7847, %v7939
    %v7941 = vpop.f32.mrf.mxu0
    %v7942 = vpop.f32.mrf.mxu0
    %v7943 = vadd.f32 %v7847, %v7942
    %v7944 = vpop.f32.mrf.mxu0
    %7945 = vmatprep.mubr.bf16.mxu0 0
    %7946 = vmatmul.mubr.bf16.gmra.mxu0 %v7820
    %v7947 = vpop.f32.mrf.mxu0
    %v7948 = vadd.f32 %v7847, %v7947
    %v7949 = vpop.f32.mrf.mxu0
    %v7950 = vpop.f32.mrf.mxu0
    %v7951 = vadd.f32 %v7847, %v7950
    %v7952 = vpop.f32.mrf.mxu0
    %7953 = vmatprep.mubr.bf16.mxu0 0
    %7954 = vmatmul.mubr.bf16.gmra.mxu0 %v7821
    %v7955 = vpop.f32.mrf.mxu0
    %v7956 = vadd.f32 %v7847, %v7955
    %v7957 = vpop.f32.mrf.mxu0
    %v7958 = vpop.f32.mrf.mxu0
    %v7959 = vadd.f32 %v7847, %v7958
    %v7960 = vpop.f32.mrf.mxu0
    %7961 = vmatprep.mubr.bf16.mxu0 0
    %7962 = vmatmul.mubr.bf16.gmra.mxu0 %v7822
    %v7963 = vpop.f32.mrf.mxu0
    %v7964 = vadd.f32 %v7847, %v7963
    %v7965 = vpop.f32.mrf.mxu0
    %v7966 = vpop.f32.mrf.mxu0
    %v7967 = vadd.f32 %v7847, %v7966
    %v7968 = vpop.f32.mrf.mxu0
    %7969 = vmatprep.mubr.bf16.mxu0 0
    %7970 = vmatmul.mubr.bf16.gmra.mxu0 %v7823
    %v7971 = vpop.f32.mrf.mxu0
    %v7972 = vadd.f32 %v7847, %v7971
    %v7973 = vpop.f32.mrf.mxu0
    %v7974 = vpop.f32.mrf.mxu0
    %v7975 = vadd.f32 %v7847, %v7974
    %v7976 = vpop.f32.mrf.mxu0
    %7977 = vmatprep.mubr.bf16.mxu0 0
    %7978 = vmatmul.mubr.bf16.gmra.mxu0 %v7824
    %v7979 = vpop.f32.mrf.mxu0
    %v7980 = vadd.f32 %v7847, %v7979
    %v7981 = vpop.f32.mrf.mxu0
    %v7982 = vpop.f32.mrf.mxu0
    %v7983 = vadd.f32 %v7847, %v7982
    %v7984 = vpop.f32.mrf.mxu0
    %7985 = vmatprep.mubr.bf16.mxu0 0
    %7986 = vmatmul.mubr.bf16.gmra.mxu0 %v7825
    %v7987 = vpop.f32.mrf.mxu0
    %v7988 = vadd.f32 %v7847, %v7987
    %v7989 = vpop.f32.mrf.mxu0
    %v7990 = vpop.f32.mrf.mxu0
    %v7991 = vadd.f32 %v7847, %v7990
    %v7992 = vpop.f32.mrf.mxu0
    %7993 = vdwg.mxu0
    %v7994 = vmax.f32 %v7932, 0.0
    %v7995 = vmax.f32 %v7935, 0.0
    %v7996 = vmax.f32 %v7940, 0.0
    %v7997 = vmax.f32 %v7943, 0.0
    %v7998 = vmax.f32 %v7948, 0.0
    %v7999 = vmax.f32 %v7951, 0.0
    %v8000 = vmax.f32 %v7956, 0.0
    %v8001 = vmax.f32 %v7959, 0.0
    %v8002 = vmax.f32 %v7964, 0.0
    %v8003 = vmax.f32 %v7967, 0.0
    %v8004 = vmax.f32 %v7972, 0.0
    %v8005 = vmax.f32 %v7975, 0.0
    %v8006 = vmax.f32 %v7980, 0.0
    %v8007 = vmax.f32 %v7983, 0.0
    %v8008 = vmax.f32 %v7988, 0.0
    %v8009 = vmax.f32 %v7991, 0.0
    %v8010 = vld [vmem:[#allocation10] sm:$0x1]
    %v8012 = vlaneseq
    %v8013 = vshrl.u32 %v8012, 7
    %v8014 = vsub.s32 0, %v8013
    %v8015 = vrot.slane %v8010, %v8014
    %v8017 = vmul.f32 %v7994, %v8015
    %v8018 = vmul.f32 %v7995, %v8015
    %v8019 = vmul.f32 %v7996, %v8015
    %v8020 = vmul.f32 %v7997, %v8015
    %v8021 = vmul.f32 %v7998, %v8015
    %v8022 = vmul.f32 %v7999, %v8015
    %v8023 = vmul.f32 %v8000, %v8015
    %v8024 = vmul.f32 %v8001, %v8015
    %v8025 = vmul.f32 %v8002, %v8015
    %v8026 = vmul.f32 %v8003, %v8015
    %v8027 = vmul.f32 %v8004, %v8015
    %v8028 = vmul.f32 %v8005, %v8015
    %v8029 = vmul.f32 %v8006, %v8015
    %v8030 = vmul.f32 %v8007, %v8015
    %v8031 = vmul.f32 %v8008, %v8015
    %v8032 = vmul.f32 %v8009, %v8015
    %vm8033 = vcmask 523264
    %v8034 = vsel %vm8033, %v8017, 0.0
    %8035 = vadd.xlane.f32.xlu0 %v8034
    %v8036 = vpop.xlane.xlu0 %8035
    %v8037 = vsel %vm8033, %v8018, 0.0
    %8038 = vadd.xlane.f32.xlu0 %v8037
    %v8039 = vpop.xlane.xlu0 %8038
    %v8040 = vsel %vm8033, %v8019, 0.0
    %8041 = vadd.xlane.f32.xlu0 %v8040
    %v8042 = vpop.xlane.xlu0 %8041
    %v8043 = vsel %vm8033, %v8020, 0.0
    %8044 = vadd.xlane.f32.xlu0 %v8043
    %v8045 = vpop.xlane.xlu0 %8044
    %v8046 = vsel %vm8033, %v8021, 0.0
    %8047 = vadd.xlane.f32.xlu0 %v8046
    %v8048 = vpop.xlane.xlu0 %8047
    %v8049 = vsel %vm8033, %v8022, 0.0
    %8050 = vadd.xlane.f32.xlu0 %v8049
    %v8051 = vpop.xlane.xlu0 %8050
    %v8052 = vsel %vm8033, %v8023, 0.0
    %8053 = vadd.xlane.f32.xlu0 %v8052
    %v8054 = vpop.xlane.xlu0 %8053
    %v8055 = vsel %vm8033, %v8024, 0.0
    %8056 = vadd.xlane.f32.xlu0 %v8055
    %v8057 = vpop.xlane.xlu0 %8056
    %v8058 = vsel %vm8033, %v8025, 0.0
    %8059 = vadd.xlane.f32.xlu0 %v8058
    %v8060 = vpop.xlane.xlu0 %8059
    %v8061 = vsel %vm8033, %v8026, 0.0
    %8062 = vadd.xlane.f32.xlu0 %v8061
    %v8063 = vpop.xlane.xlu0 %8062
    %v8064 = vsel %vm8033, %v8027, 0.0
    %8065 = vadd.xlane.f32.xlu0 %v8064
    %v8066 = vpop.xlane.xlu0 %8065
    %v8067 = vsel %vm8033, %v8028, 0.0
    %8068 = vadd.xlane.f32.xlu0 %v8067
    %v8069 = vpop.xlane.xlu0 %8068
    %v8070 = vsel %vm8033, %v8029, 0.0
    %8071 = vadd.xlane.f32.xlu0 %v8070
    %v8072 = vpop.xlane.xlu0 %8071
    %v8073 = vsel %vm8033, %v8030, 0.0
    %8074 = vadd.xlane.f32.xlu0 %v8073
    %v8075 = vpop.xlane.xlu0 %8074
    %v8076 = vsel %vm8033, %v8031, 0.0
    %8077 = vadd.xlane.f32.xlu0 %v8076
    %v8078 = vpop.xlane.xlu0 %8077
    %v8079 = vsel %vm8033, %v8032, 0.0
    %8080 = vadd.xlane.f32.xlu0 %v8079
    %v8081 = vpop.xlane.xlu0 %8080
    %v8082 = vld [vmem:[#allocation2] sm:$0x1]
    %v8084 = vlaneseq
    %v8085 = vshrl.u32 %v8084, 7
    %v8086 = vsub.s32 0, %v8085
    %v8087 = vrot.slane %v8082, %v8086
    %v8089 = vadd.f32 %v8036, %v8087
    %v8090 = vadd.f32 %v8039, %v8087
    %v8091 = vadd.f32 %v8042, %v8087
    %v8092 = vadd.f32 %v8045, %v8087
    %v8093 = vadd.f32 %v8048, %v8087
    %v8094 = vadd.f32 %v8051, %v8087
    %v8095 = vadd.f32 %v8054, %v8087
    %v8096 = vadd.f32 %v8057, %v8087
    %v8097 = vadd.f32 %v8060, %v8087
    %v8098 = vadd.f32 %v8063, %v8087
    %v8099 = vadd.f32 %v8066, %v8087
    %v8100 = vadd.f32 %v8069, %v8087
    %v8101 = vadd.f32 %v8072, %v8087
    %v8102 = vadd.f32 %v8075, %v8087
    %v8103 = vadd.f32 %v8078, %v8087
    %v8104 = vadd.f32 %v8081, %v8087
    %vm8105 = vcmask 7168
    %8106 = vst.msk [vmem:[%s7] sm:$0xff] %vm8105, %v8089
    %8107 = vst.msk [vmem:[%s7 + $0x8] sm:$0xff] %vm8105, %v8090
    %8108 = vst.msk [vmem:[%s7 + $0x10] sm:$0xff] %vm8105, %v8091
    %8109 = vst.msk [vmem:[%s7 + $0x18] sm:$0xff] %vm8105, %v8092
    %8110 = vst.msk [vmem:[%s7 + $0x20] sm:$0xff] %vm8105, %v8093
    %8111 = vst.msk [vmem:[%s7 + $0x28] sm:$0xff] %vm8105, %v8094
    %8112 = vst.msk [vmem:[%s7 + $0x30] sm:$0xff] %vm8105, %v8095
    %8113 = vst.msk [vmem:[%s7 + $0x38] sm:$0xff] %vm8105, %v8096
    %8114 = vst.msk [vmem:[%s7 + $0x40] sm:$0xff] %vm8105, %v8097
    %8115 = vst.msk [vmem:[%s7 + $0x48] sm:$0xff] %vm8105, %v8098
    %8116 = vst.msk [vmem:[%s7 + $0x50] sm:$0xff] %vm8105, %v8099
    %8117 = vst.msk [vmem:[%s7 + $0x58] sm:$0xff] %vm8105, %v8100
    %8118 = vst.msk [vmem:[%s7 + $0x60] sm:$0xff] %vm8105, %v8101
    %8119 = vst.msk [vmem:[%s7 + $0x68] sm:$0xff] %vm8105, %v8102
    %8120 = vst.msk [vmem:[%s7 + $0x70] sm:$0xff] %vm8105, %v8103
    %8121 = vst.msk [vmem:[%s7 + $0x78] sm:$0xff] %vm8105, %v8104
    // Predicated region
    $region50: #{tpu_custom_call.1} parent=1 // pred_check
      _
    $region51: #{tpu_custom_call.1} parent=1 // pred_check_branch
      %8123 = sbr.rel (0) target = $region53
    $region52: #{tpu_custom_call.1} parent=1 // pred_region
      _
    $region53: #{tpu_custom_call.1} parent=1 // pred_fallthru
      _
    // Predicated region
    $region54: #{tpu_custom_call.1} parent=1 // pred_check
      _
    $region55: #{tpu_custom_call.1} parent=1 // pred_check_branch
      %8125 = sbr.rel (0) target = $region57
    $region56: #{tpu_custom_call.1} parent=1 // pred_region
      _
    $region57: #{tpu_custom_call.1} parent=1 // pred_fallthru
      _
    %8126 = vsyncpa [#allocation4], 1
    %8127 = vsyncpa [#allocation6], 1
    %8128 = vsyncpa [#allocation9], 1

</llo_original>
